<compile_context>
chip_gen: v7x
topology: tpu7x:2x2x1
jax: 0.10.0
libtpu: 0.0.40
codegen_flags: <defaults>
</compile_context>

<pallas_src>
import jax
import jax.numpy as jnp
from jax.experimental import pallas as pl
from jax.experimental.pallas import tpu as pltpu

EPS = 1e-5


def _fused_relu_conv1x1_bn_kernel(x_ref, w_ref, gamma_ref, beta_ref, o_ref):
    # x_ref:     (M, Cin)    f32  flattened NHWC activations
    # w_ref:     (Cin, Cout) bf16 1x1-conv weight (pre-transposed at init)
    # gamma_ref: (1, Cout)   f32  BN affine scale
    # beta_ref:  (1, Cout)   f32  BN affine shift
    # o_ref:     (M, Cout)   f32
    # ReLU on the VPU in f32, then cast to bf16 so the matmul runs at native MXU
    # rate; accumulate in f32 via preferred_element_type.
    x = jnp.maximum(x_ref[...], 0.0).astype(jnp.bfloat16)
    y = jnp.dot(x, w_ref[...], preferred_element_type=jnp.float32)    # (M, Cout) f32

    # BatchNorm2d (training mode): per-channel mean/var over all rows (= N*H*W).
    # Valid only because the single block covers the entire M axis (asserted in
    # the wrapper); tiling M would require a two-pass sum/sumsq accumulation.
    inv_m = 1.0 / jnp.float32(y.shape[0])
    mean = jnp.sum(y, axis=0, keepdims=True) * inv_m                   # (1, Cout)
    centered = y - mean
    var = jnp.sum(centered * centered, axis=0, keepdims=True) * inv_m  # biased var
    scale = jax.lax.rsqrt(var + EPS) * gamma_ref[...]                  # f32 epilogue
    o_ref[...] = centered * scale + beta_ref[...]


def prepare_params(conv_w_oi, bn_gamma, bn_beta):
    """One-time (init-style) parameter prep: transpose the 1x1 weight to
    (Cin, Cout) and cast to bf16; BN affine params stay f32, shaped (1, Cout)."""
    cout, _ = conv_w_oi.shape
    w_t = jnp.transpose(conv_w_oi, (1, 0)).astype(jnp.bfloat16)
    gamma2d = bn_gamma.reshape(1, cout).astype(jnp.float32)
    beta2d = bn_beta.reshape(1, cout).astype(jnp.float32)
    return w_t, gamma2d, beta2d


def fused_relu_conv1x1_bn_nhwc(x_nhwc, w_t_bf16, gamma2d, beta2d):
    """x_nhwc: (N, H, W, Cin) f32 -> (N, H, W, Cout) f32.

    Mathematically identical to the NCHW torch module (ReLU -> Conv2d 1x1 no-bias
    -> BatchNorm2d training-mode normalization); only the memory layout differs,
    which removes every per-call transpose from the hot path."""
    n, h, w, cin = x_nhwc.shape
    cin_w, cout = w_t_bf16.shape
    assert cin == cin_w
    m_rows = n * h * w
    assert m_rows % 8 == 0, "N*H*W must be a multiple of 8 for the (8,128) tiling"

    # Single-block VMEM footprint guard (x2 for double buffering + params).
    # Keeps the kernel portable to v7x's 64 MiB physical VMEM / 32 MiB scoped default.
    est_bytes = 2 * (x_nhwc.size * 4 + w_t_bf16.size * 2 + m_rows * cout * 4 + 2 * cout * 4)
    assert est_bytes < 28 * 1024 * 1024, (
        "shape too large for the single-block fused kernel; an M-tiled two-pass BN "
        "(sum/sumsq accumulation, then a parallel normalize pass) is required")

    x2d = x_nhwc.reshape(m_rows, cin)  # contiguous reshape: no data movement

    out2d = pl.pallas_call(
        _fused_relu_conv1x1_bn_kernel,
        out_shape=jax.ShapeDtypeStruct((m_rows, cout), jnp.float32),
        grid=(1,),
        in_specs=[
            pl.BlockSpec((m_rows, cin), lambda i: (0, 0)),
            pl.BlockSpec((cin, cout), lambda i: (0, 0)),
            pl.BlockSpec((1, cout), lambda i: (0, 0)),
            pl.BlockSpec((1, cout), lambda i: (0, 0)),
        ],
        out_specs=pl.BlockSpec((m_rows, cout), lambda i: (0, 0)),
        # No vmem_limit_bytes override: the default scoped limit covers the ~10 MB
        # working set on v5e/v6e/v7x without claiming all of v7x's physical VMEM.
        compiler_params=pltpu.CompilerParams(
            dimension_semantics=("arbitrary",),
        ),
    )(x2d, w_t_bf16, gamma2d, beta2d)

    return out2d.reshape(n, h, w, cout)


if __name__ == "__main__":
    # Module shape: ReLU -> Conv2d(672, 672, 1x1, bias=False) -> BatchNorm2d(672)
    # on a (1, 672, 28, 28) input; kept NHWC end-to-end: (1, 28, 28, 672).
    N, H, W, C = 1, 28, 28, 672

    key = jax.random.PRNGKey(0)
    kx, kw = jax.random.split(key)

    x_nhwc = jax.random.normal(kx, (N, H, W, C), dtype=jnp.float32)
    conv_w = jax.random.normal(kw, (C, C), dtype=jnp.float32) * 0.02   # (Cout, Cin)
    bn_gamma = jnp.ones((C,), dtype=jnp.float32)   # torch BatchNorm2d default affine init
    bn_beta = jnp.zeros((C,), dtype=jnp.float32)

    # Init-time param prep (weight transpose + bf16 cast happen once, not per call).
    w_t_bf16, gamma2d, beta2d = prepare_params(conv_w, bn_gamma, bn_beta)

    out = fused_relu_conv1x1_bn_nhwc(x_nhwc, w_t_bf16, gamma2d, beta2d)
    out = jax.block_until_ready(out)

    # Reference in plain JAX with the same bf16 matmul operands / f32 accumulation
    # and training-mode BN (biased variance).
    x2d = x_nhwc.reshape(-1, C)
    xr = jnp.maximum(x2d, 0.0).astype(jnp.bfloat16)
    y_ref = jnp.dot(xr, w_t_bf16, preferred_element_type=jnp.float32)
    mu = jnp.mean(y_ref, axis=0, keepdims=True)
    var = jnp.mean((y_ref - mu) ** 2, axis=0, keepdims=True)
    ref2d = (y_ref - mu) * jax.lax.rsqrt(var + EPS) * bn_gamma + bn_beta
    ref = ref2d.reshape(N, H, W, C)

    assert jnp.allclose(out, ref, atol=1e-2, rtol=1e-2), "mismatch vs reference"
    print("KERNEL_OK")
</pallas_src>

<mosaic_0001>
module attributes {stable_mosaic.version = 11 : i64} {
  func.func @_fused_relu_conv1x1_bn_kernel(%arg0: i32, %arg1: memref<784x672xf32, #tpu.memory_space<vmem>>, %arg2: memref<672x672xbf16, #tpu.memory_space<vmem>>, %arg3: memref<1x672xf32, #tpu.memory_space<vmem>>, %arg4: memref<1x672xf32, #tpu.memory_space<vmem>>, %arg5: memref<784x672xf32, #tpu.memory_space<vmem>>) attributes {dimension_semantics = [#tpu.dimension_semantics<arbitrary>], iteration_bounds = array<i64: 1>, scalar_prefetch = 0 : i64, scratch_operands = 0 : i64, tpu.core_type = #tpu.core_type<tc>, window_params = [{pipeline_mode = #tpu.pipeline_mode<synchronous>, transform_indices = @transform_0, window_bounds = array<i64: 784, 672>}, {pipeline_mode = #tpu.pipeline_mode<synchronous>, transform_indices = @transform_1, window_bounds = array<i64: 672, 672>}, {pipeline_mode = #tpu.pipeline_mode<synchronous>, transform_indices = @transform_2, window_bounds = array<i64: 1, 672>}, {pipeline_mode = #tpu.pipeline_mode<synchronous>, transform_indices = @transform_3, window_bounds = array<i64: 1, 672>}, {pipeline_mode = #tpu.pipeline_mode<synchronous>, transform_indices = @transform_4, window_bounds = array<i64: 784, 672>}]} {
    %c0 = arith.constant 0 : index
    %c0_0 = arith.constant 0 : index
    %0 = vector.load %arg1[%c0, %c0_0] : memref<784x672xf32, #tpu.memory_space<vmem>>, vector<784x672xf32>
    %cst = arith.constant 0.000000e+00 : f32
    %1 = vector.broadcast %cst : f32 to vector<784x672xf32>
    %2 = arith.maximumf %0, %1 : vector<784x672xf32>
    %3 = arith.truncf %2 : vector<784x672xf32> to vector<784x672xbf16>
    %c0_1 = arith.constant 0 : index
    %c0_2 = arith.constant 0 : index
    %4 = vector.load %arg2[%c0_1, %c0_2] : memref<672x672xbf16, #tpu.memory_space<vmem>>, vector<672x672xbf16>
    %cst_3 = arith.constant dense<0.000000e+00> : vector<784x672xf32>
    %5 = tpu.matmul %3, %4, %cst_3 {dimension_numbers = #tpu.dot_dimension_numbers<[1], [0], [0], [1], [0, 0, 1, 1], [], []>} : vector<784x672xbf16>, vector<672x672xbf16>, vector<784x672xf32> -> vector<784x672xf32>
    %cst_4 = arith.constant 1.000000e+00 : f32
    %cst_5 = arith.constant 7.840000e+02 : f32
    %6 = arith.divf %cst_4, %cst_5 : f32
    %cst_6 = arith.constant dense<0.000000e+00> : vector<672xf32>
    %7 = vector.multi_reduction <add>, %5, %cst_6 [0] : vector<784x672xf32> to vector<672xf32>
    %8 = vector.shape_cast %7 : vector<672xf32> to vector<1x672xf32>
    %9 = vector.broadcast %6 : f32 to vector<1x672xf32>
    %10 = arith.mulf %8, %9 : vector<1x672xf32>
    %11 = vector.broadcast %10 : vector<1x672xf32> to vector<784x672xf32>
    %12 = arith.subf %5, %11 : vector<784x672xf32>
    %13 = arith.mulf %12, %12 : vector<784x672xf32>
    %cst_7 = arith.constant dense<0.000000e+00> : vector<672xf32>
    %14 = vector.multi_reduction <add>, %13, %cst_7 [0] : vector<784x672xf32> to vector<672xf32>
    %15 = vector.shape_cast %14 : vector<672xf32> to vector<1x672xf32>
    %16 = vector.broadcast %6 : f32 to vector<1x672xf32>
    %17 = arith.mulf %15, %16 : vector<1x672xf32>
    %cst_8 = arith.constant 9.99999974E-6 : f32
    %18 = vector.broadcast %cst_8 : f32 to vector<1x672xf32>
    %19 = arith.addf %17, %18 : vector<1x672xf32>
    %20 = math.rsqrt %19 : vector<1x672xf32>
    %c0_9 = arith.constant 0 : index
    %c0_10 = arith.constant 0 : index
    %21 = vector.load %arg3[%c0_9, %c0_10] : memref<1x672xf32, #tpu.memory_space<vmem>>, vector<1x672xf32>
    %22 = arith.mulf %20, %21 : vector<1x672xf32>
    %23 = vector.broadcast %22 : vector<1x672xf32> to vector<784x672xf32>
    %24 = arith.mulf %12, %23 : vector<784x672xf32>
    %c0_11 = arith.constant 0 : index
    %c0_12 = arith.constant 0 : index
    %25 = vector.load %arg4[%c0_11, %c0_12] : memref<1x672xf32, #tpu.memory_space<vmem>>, vector<1x672xf32>
    %26 = vector.broadcast %25 : vector<1x672xf32> to vector<784x672xf32>
    %27 = arith.addf %24, %26 : vector<784x672xf32>
    %c0_13 = arith.constant 0 : index
    %c0_14 = arith.constant 0 : index
    %28 = vector.load %arg5[%c0_13, %c0_14] : memref<784x672xf32, #tpu.memory_space<vmem>>, vector<784x672xf32>
    tpu.vector_store %arg5[%c0_13, %c0_14], %27 {strides = array<i32>} : memref<784x672xf32, #tpu.memory_space<vmem>>, vector<784x672xf32>,
    return
  }
  func.func @transform_0(%arg0: i32) -> (i32, i32) {
    %c0_i32 = arith.constant 0 : i32
    %c0_i32_0 = arith.constant 0 : i32
    %c0_i32_1 = arith.constant 0 : i32
    return %c0_i32, %c0_i32_0 : i32, i32
  }
  func.func @transform_1(%arg0: i32) -> (i32, i32) {
    %c0_i32 = arith.constant 0 : i32
    %c0_i32_0 = arith.constant 0 : i32
    %c0_i32_1 = arith.constant 0 : i32
    return %c0_i32, %c0_i32_0 : i32, i32
  }
  func.func @transform_2(%arg0: i32) -> (i32, i32) {
    %c0_i32 = arith.constant 0 : i32
    %c0_i32_0 = arith.constant 0 : i32
    %c0_i32_1 = arith.constant 0 : i32
    return %c0_i32, %c0_i32_0 : i32, i32
  }
  func.func @transform_3(%arg0: i32) -> (i32, i32) {
    %c0_i32 = arith.constant 0 : i32
    %c0_i32_0 = arith.constant 0 : i32
    %c0_i32_1 = arith.constant 0 : i32
    return %c0_i32, %c0_i32_0 : i32, i32
  }
  func.func @transform_4(%arg0: i32) -> (i32, i32) {
    %c0_i32 = arith.constant 0 : i32
    %c0_i32_0 = arith.constant 0 : i32
    %c0_i32_1 = arith.constant 0 : i32
    return %c0_i32, %c0_i32_0 : i32, i32
  }
}

</mosaic_0001>

<llo_original>
// kernel: tpu_custom_call.1
$region0: #{tpu_custom_call.1}
  #allocation0 [shape = 'u32[]', space=smem, size = 0x4, offset = 0x4, fixed_abs, tag = 'smem constant byte address 0x4 - core index']
  #allocation1 [shape = 'u32[144,128]{1,0:T(1,128)}', space=vmem, size = 0x12000, scoped, tag = 'internal scratch']
  %s0 = inlined_call_operand.hbm [shape: f32[784,672], index: 0, kind: input, shape index: {}]
  %s1 = inlined_call_operand.hbm [shape: bf16[672,672], index: 1, kind: input, shape index: {}]
  %s2 = inlined_call_operand.hbm [shape: f32[1,672], index: 2, kind: input, shape index: {}]
  %s3 = inlined_call_operand.hbm [shape: f32[1,672], index: 3, kind: input, shape index: {}]
  %s4 = inlined_call_operand.hbm [shape: f32[784,672], index: 4, kind: output, shape index: {}]
  %s5 = sld [smem:[#allocation0]]
  $region42: #{tpu_custom_call.1} parent=0
    _
  %s7 = ssub.s32 1, %s5
  %s8 = scalar_select 0, %s7, %s5
  $region1: #{tpu_custom_call.1} parent=0
    #allocation2 [shape = 'u8[2408448]{0}', space=vmem, size = 0x24c000, scoped, tag = 'input window, operand 0, single buffered']
    #allocation3 [shape = 's32[1]{0}', space=sflag, size = 0x4, scoped, tag = 'scoped memory for tpu_custom_call.1']
    #allocation4 [shape = 's32[1]{0}', space=sflag, size = 0x4, scoped, tag = 'scoped memory for tpu_custom_call.1']
    #allocation5 [shape = 'u8[1032192]{0}', space=vmem, size = 0xfc000, scoped, tag = 'input window, operand 1, single buffered']
    #allocation6 [shape = 's32[1]{0}', space=sflag, size = 0x4, scoped, tag = 'scoped memory for tpu_custom_call.1']
    #allocation7 [shape = 'u8[3072]{0}', space=vmem, size = 0xc00, scoped, tag = 'input window, operand 2, single buffered']
    #allocation8 [shape = 'u8[3072]{0}', space=vmem, size = 0xc00, scoped, tag = 'input window, operand 3, single buffered']
    #allocation9 [shape = 's32[1]{0}', space=sflag, size = 0x4, scoped, tag = 'scoped memory for tpu_custom_call.1']
    #allocation10 [shape = 'u8[2408448]{0}', space=vmem, size = 0x24c000, scoped, tag = 'output window, operand 0, single buffered']
    %9 = vsyncpa [#allocation3], 0
    %10 = vsyncpa [#allocation6], 0
    %11 = vsyncpa [#allocation9], 0
    %12 = vsyncpa [#allocation4], 0
    // Predicated region
    $region2: #{tpu_custom_call.1} parent=1 // pred_check
      _
    $region3: #{tpu_custom_call.1} parent=1 // pred_check_branch
      %14 = sbr.rel (0) target = $region5
    $region4: #{tpu_custom_call.1} parent=1 // pred_region
      %s16 = ssub.s32 75264, 75264
      %17 = vsyncadd [#allocation3], %s16
      %s18 = sshll.u32 [#allocation2], 4
      %s19 = int_to_ptr.vmem [resolvable:$true] %s18
      %24 = dma.hbm_to_vmem [thread:$0]  %s0, 75264, %s19, [#allocation3], 768, 768, 48
    $region5: #{tpu_custom_call.1} parent=1 // pred_fallthru
      _
    // Predicated region
    $region6: #{tpu_custom_call.1} parent=1 // pred_check
      _
    $region7: #{tpu_custom_call.1} parent=1 // pred_check_branch
      %26 = sbr.rel (0) target = $region9
    $region8: #{tpu_custom_call.1} parent=1 // pred_region
      %s28 = ssub.s32 32256, 32256
      %29 = vsyncadd [#allocation6], %s28
      %s30 = sshll.u32 [#allocation5], 4
      %s31 = int_to_ptr.vmem [resolvable:$true] %s30
      %36 = dma.hbm_to_vmem [thread:$0]  %s1, 32256, %s31, [#allocation6], 384, 384, 24
    $region9: #{tpu_custom_call.1} parent=1 // pred_fallthru
      _
    // Predicated region
    $region10: #{tpu_custom_call.1} parent=1 // pred_check
      _
    $region11: #{tpu_custom_call.1} parent=1 // pred_check_branch
      %38 = sbr.rel (0) target = $region13
    $region12: #{tpu_custom_call.1} parent=1 // pred_region
      %s40 = ssub.s32 96, 96
      %41 = vsyncadd [#allocation6], %s40
      %s43 = sshll.u32 [#allocation7], 4
      %s44 = int_to_ptr.vmem [resolvable:$true] %s43
      %46 = dma.hbm_to_vmem [thread:$0]  %s2, 96, %s44, [#allocation6]
    $region13: #{tpu_custom_call.1} parent=1 // pred_fallthru
      _
    // Predicated region
    $region14: #{tpu_custom_call.1} parent=1 // pred_check
      _
    $region15: #{tpu_custom_call.1} parent=1 // pred_check_branch
      %48 = sbr.rel (0) target = $region17
    $region16: #{tpu_custom_call.1} parent=1 // pred_region
      %s50 = ssub.s32 96, 96
      %51 = vsyncadd [#allocation9], %s50
      %s53 = sshll.u32 [#allocation8], 4
      %s54 = int_to_ptr.vmem [resolvable:$true] %s53
      %56 = dma.hbm_to_vmem [thread:$0]  %s3, 96, %s54, [#allocation9]
    $region17: #{tpu_custom_call.1} parent=1 // pred_fallthru
      _
    // Predicated region
    $region18: #{tpu_custom_call.1} parent=1 // pred_check
      _
    $region19: #{tpu_custom_call.1} parent=1 // pred_check_branch
      %58 = sbr.rel (0) target = $region21
    $region20: #{tpu_custom_call.1} parent=1 // pred_region
      %59 = dma.done [#allocation3], 75264
    $region21: #{tpu_custom_call.1} parent=1 // pred_fallthru
      _
    // Predicated region
    $region22: #{tpu_custom_call.1} parent=1 // pred_check
      _
    $region23: #{tpu_custom_call.1} parent=1 // pred_check_branch
      %61 = sbr.rel (0) target = $region25
    $region24: #{tpu_custom_call.1} parent=1 // pred_region
      %62 = dma.done [#allocation6], 32256
    $region25: #{tpu_custom_call.1} parent=1 // pred_fallthru
      _
    // Predicated region
    $region26: #{tpu_custom_call.1} parent=1 // pred_check
      _
    $region27: #{tpu_custom_call.1} parent=1 // pred_check_branch
      %64 = sbr.rel (0) target = $region29
    $region28: #{tpu_custom_call.1} parent=1 // pred_region
      %65 = dma.done [#allocation6], 96
    $region29: #{tpu_custom_call.1} parent=1 // pred_fallthru
      _
    // Predicated region
    $region30: #{tpu_custom_call.1} parent=1 // pred_check
      _
    $region31: #{tpu_custom_call.1} parent=1 // pred_check_branch
      %67 = sbr.rel (0) target = $region33
    $region32: #{tpu_custom_call.1} parent=1 // pred_region
      %68 = dma.done [#allocation9], 96
    $region33: #{tpu_custom_call.1} parent=1 // pred_fallthru
      _
    %v70 = vld [vmem:[#allocation2] sm:$0xff]
    %v71 = vld [vmem:[#allocation2 + $0x8] sm:$0xff]
    %v72 = vld [vmem:[#allocation2 + $0x10] sm:$0xff]
    %v73 = vld [vmem:[#allocation2 + $0x18] sm:$0xff]
    %v74 = vld [vmem:[#allocation2 + $0x20] sm:$0xff]
    %v75 = vld [vmem:[#allocation2 + $0x28] sm:$0xff]
    %v76 = vld [vmem:[#allocation2 + $0x30] sm:$0xff]
    %v77 = vld [vmem:[#allocation2 + $0x38] sm:$0xff]
    %v78 = vld [vmem:[#allocation2 + $0x40] sm:$0xff]
    %v79 = vld [vmem:[#allocation2 + $0x48] sm:$0xff]
    %v80 = vld [vmem:[#allocation2 + $0x50] sm:$0xff]
    %v81 = vld [vmem:[#allocation2 + $0x58] sm:$0xff]
    %v82 = vld [vmem:[#allocation2 + $0x60] sm:$0xff]
    %v83 = vld [vmem:[#allocation2 + $0x68] sm:$0xff]
    %v84 = vld [vmem:[#allocation2 + $0x70] sm:$0xff]
    %v85 = vld [vmem:[#allocation2 + $0x78] sm:$0xff]
    %v86 = vld [vmem:[#allocation2 + $0x80] sm:$0xff]
    %v87 = vld [vmem:[#allocation2 + $0x88] sm:$0xff]
    %v88 = vld [vmem:[#allocation2 + $0x90] sm:$0xff]
    %v89 = vld [vmem:[#allocation2 + $0x98] sm:$0xff]
    %v90 = vld [vmem:[#allocation2 + $0xa0] sm:$0xff]
    %v91 = vld [vmem:[#allocation2 + $0xa8] sm:$0xff]
    %v92 = vld [vmem:[#allocation2 + $0xb0] sm:$0xff]
    %v93 = vld [vmem:[#allocation2 + $0xb8] sm:$0xff]
    %v94 = vld [vmem:[#allocation2 + $0xc0] sm:$0xff]
    %v95 = vld [vmem:[#allocation2 + $0xc8] sm:$0xff]
    %v96 = vld [vmem:[#allocation2 + $0xd0] sm:$0xff]
    %v97 = vld [vmem:[#allocation2 + $0xd8] sm:$0xff]
    %v98 = vld [vmem:[#allocation2 + $0xe0] sm:$0xff]
    %v99 = vld [vmem:[#allocation2 + $0xe8] sm:$0xff]
    %v100 = vld [vmem:[#allocation2 + $0xf0] sm:$0xff]
    %v101 = vld [vmem:[#allocation2 + $0xf8] sm:$0xff]
    %v102 = vld [vmem:[#allocation2 + $0x100] sm:$0xff]
    %v103 = vld [vmem:[#allocation2 + $0x108] sm:$0xff]
    %v104 = vld [vmem:[#allocation2 + $0x110] sm:$0xff]
    %v105 = vld [vmem:[#allocation2 + $0x118] sm:$0xff]
    %v106 = vld [vmem:[#allocation2 + $0x120] sm:$0xff]
    %v107 = vld [vmem:[#allocation2 + $0x128] sm:$0xff]
    %v108 = vld [vmem:[#allocation2 + $0x130] sm:$0xff]
    %v109 = vld [vmem:[#allocation2 + $0x138] sm:$0xff]
    %v110 = vld [vmem:[#allocation2 + $0x140] sm:$0xff]
    %v111 = vld [vmem:[#allocation2 + $0x148] sm:$0xff]
    %v112 = vld [vmem:[#allocation2 + $0x150] sm:$0xff]
    %v113 = vld [vmem:[#allocation2 + $0x158] sm:$0xff]
    %v114 = vld [vmem:[#allocation2 + $0x160] sm:$0xff]
    %v115 = vld [vmem:[#allocation2 + $0x168] sm:$0xff]
    %v116 = vld [vmem:[#allocation2 + $0x170] sm:$0xff]
    %v117 = vld [vmem:[#allocation2 + $0x178] sm:$0xff]
    %v118 = vld [vmem:[#allocation2 + $0x180] sm:$0xff]
    %v119 = vld [vmem:[#allocation2 + $0x188] sm:$0xff]
    %v120 = vld [vmem:[#allocation2 + $0x190] sm:$0xff]
    %v121 = vld [vmem:[#allocation2 + $0x198] sm:$0xff]
    %v122 = vld [vmem:[#allocation2 + $0x1a0] sm:$0xff]
    %v123 = vld [vmem:[#allocation2 + $0x1a8] sm:$0xff]
    %v124 = vld [vmem:[#allocation2 + $0x1b0] sm:$0xff]
    %v125 = vld [vmem:[#allocation2 + $0x1b8] sm:$0xff]
    %v126 = vld [vmem:[#allocation2 + $0x1c0] sm:$0xff]
    %v127 = vld [vmem:[#allocation2 + $0x1c8] sm:$0xff]
    %v128 = vld [vmem:[#allocation2 + $0x1d0] sm:$0xff]
    %v129 = vld [vmem:[#allocation2 + $0x1d8] sm:$0xff]
    %v130 = vld [vmem:[#allocation2 + $0x1e0] sm:$0xff]
    %v131 = vld [vmem:[#allocation2 + $0x1e8] sm:$0xff]
    %v132 = vld [vmem:[#allocation2 + $0x1f0] sm:$0xff]
    %v133 = vld [vmem:[#allocation2 + $0x1f8] sm:$0xff]
    %v134 = vld [vmem:[#allocation2 + $0x200] sm:$0xff]
    %v135 = vld [vmem:[#allocation2 + $0x208] sm:$0xff]
    %v136 = vld [vmem:[#allocation2 + $0x210] sm:$0xff]
    %v137 = vld [vmem:[#allocation2 + $0x218] sm:$0xff]
    %v138 = vld [vmem:[#allocation2 + $0x220] sm:$0xff]
    %v139 = vld [vmem:[#allocation2 + $0x228] sm:$0xff]
    %v140 = vld [vmem:[#allocation2 + $0x230] sm:$0xff]
    %v141 = vld [vmem:[#allocation2 + $0x238] sm:$0xff]
    %v142 = vld [vmem:[#allocation2 + $0x240] sm:$0xff]
    %v143 = vld [vmem:[#allocation2 + $0x248] sm:$0xff]
    %v144 = vld [vmem:[#allocation2 + $0x250] sm:$0xff]
    %v145 = vld [vmem:[#allocation2 + $0x258] sm:$0xff]
    %v146 = vld [vmem:[#allocation2 + $0x260] sm:$0xff]
    %v147 = vld [vmem:[#allocation2 + $0x268] sm:$0xff]
    %v148 = vld [vmem:[#allocation2 + $0x270] sm:$0xff]
    %v149 = vld [vmem:[#allocation2 + $0x278] sm:$0xff]
    %v150 = vld [vmem:[#allocation2 + $0x280] sm:$0xff]
    %v151 = vld [vmem:[#allocation2 + $0x288] sm:$0xff]
    %v152 = vld [vmem:[#allocation2 + $0x290] sm:$0xff]
    %v153 = vld [vmem:[#allocation2 + $0x298] sm:$0xff]
    %v154 = vld [vmem:[#allocation2 + $0x2a0] sm:$0xff]
    %v155 = vld [vmem:[#allocation2 + $0x2a8] sm:$0xff]
    %v156 = vld [vmem:[#allocation2 + $0x2b0] sm:$0xff]
    %v157 = vld [vmem:[#allocation2 + $0x2b8] sm:$0xff]
    %v158 = vld [vmem:[#allocation2 + $0x2c0] sm:$0xff]
    %v159 = vld [vmem:[#allocation2 + $0x2c8] sm:$0xff]
    %v160 = vld [vmem:[#allocation2 + $0x2d0] sm:$0xff]
    %v161 = vld [vmem:[#allocation2 + $0x2d8] sm:$0xff]
    %v162 = vld [vmem:[#allocation2 + $0x2e0] sm:$0xff]
    %v163 = vld [vmem:[#allocation2 + $0x2e8] sm:$0xff]
    %v164 = vld [vmem:[#allocation2 + $0x2f0] sm:$0xff]
    %v165 = vld [vmem:[#allocation2 + $0x2f8] sm:$0xff]
    %v166 = vld [vmem:[#allocation2 + $0x300] sm:$0xff]
    %v167 = vld [vmem:[#allocation2 + $0x308] sm:$0xff]
    %v168 = vld [vmem:[#allocation2 + $0x310] sm:$0xff]
    %v169 = vld [vmem:[#allocation2 + $0x318] sm:$0xff]
    %v170 = vld [vmem:[#allocation2 + $0x320] sm:$0xff]
    %v171 = vld [vmem:[#allocation2 + $0x328] sm:$0xff]
    %v172 = vld [vmem:[#allocation2 + $0x330] sm:$0xff]
    %v173 = vld [vmem:[#allocation2 + $0x338] sm:$0xff]
    %v174 = vld [vmem:[#allocation2 + $0x340] sm:$0xff]
    %v175 = vld [vmem:[#allocation2 + $0x348] sm:$0xff]
    %v176 = vld [vmem:[#allocation2 + $0x350] sm:$0xff]
    %v177 = vld [vmem:[#allocation2 + $0x358] sm:$0xff]
    %v178 = vld [vmem:[#allocation2 + $0x360] sm:$0xff]
    %v179 = vld [vmem:[#allocation2 + $0x368] sm:$0xff]
    %v180 = vld [vmem:[#allocation2 + $0x370] sm:$0xff]
    %v181 = vld [vmem:[#allocation2 + $0x378] sm:$0xff]
    %v182 = vld [vmem:[#allocation2 + $0x380] sm:$0xff]
    %v183 = vld [vmem:[#allocation2 + $0x388] sm:$0xff]
    %v184 = vld [vmem:[#allocation2 + $0x390] sm:$0xff]
    %v185 = vld [vmem:[#allocation2 + $0x398] sm:$0xff]
    %v186 = vld [vmem:[#allocation2 + $0x3a0] sm:$0xff]
    %v187 = vld [vmem:[#allocation2 + $0x3a8] sm:$0xff]
    %v188 = vld [vmem:[#allocation2 + $0x3b0] sm:$0xff]
    %v189 = vld [vmem:[#allocation2 + $0x3b8] sm:$0xff]
    %v190 = vld [vmem:[#allocation2 + $0x3c0] sm:$0xff]
    %v191 = vld [vmem:[#allocation2 + $0x3c8] sm:$0xff]
    %v192 = vld [vmem:[#allocation2 + $0x3d0] sm:$0xff]
    %v193 = vld [vmem:[#allocation2 + $0x3d8] sm:$0xff]
    %v194 = vld [vmem:[#allocation2 + $0x3e0] sm:$0xff]
    %v195 = vld [vmem:[#allocation2 + $0x3e8] sm:$0xff]
    %v196 = vld [vmem:[#allocation2 + $0x3f0] sm:$0xff]
    %v197 = vld [vmem:[#allocation2 + $0x3f8] sm:$0xff]
    %v198 = vld [vmem:[#allocation2 + $0x400] sm:$0xff]
    %v199 = vld [vmem:[#allocation2 + $0x408] sm:$0xff]
    %v200 = vld [vmem:[#allocation2 + $0x410] sm:$0xff]
    %v201 = vld [vmem:[#allocation2 + $0x418] sm:$0xff]
    %v202 = vld [vmem:[#allocation2 + $0x420] sm:$0xff]
    %v203 = vld [vmem:[#allocation2 + $0x428] sm:$0xff]
    %v204 = vld [vmem:[#allocation2 + $0x430] sm:$0xff]
    %v205 = vld [vmem:[#allocation2 + $0x438] sm:$0xff]
    %v206 = vld [vmem:[#allocation2 + $0x440] sm:$0xff]
    %v207 = vld [vmem:[#allocation2 + $0x448] sm:$0xff]
    %v208 = vld [vmem:[#allocation2 + $0x450] sm:$0xff]
    %v209 = vld [vmem:[#allocation2 + $0x458] sm:$0xff]
    %v210 = vld [vmem:[#allocation2 + $0x460] sm:$0xff]
    %v211 = vld [vmem:[#allocation2 + $0x468] sm:$0xff]
    %v212 = vld [vmem:[#allocation2 + $0x470] sm:$0xff]
    %v213 = vld [vmem:[#allocation2 + $0x478] sm:$0xff]
    %v214 = vld [vmem:[#allocation2 + $0x480] sm:$0xff]
    %v215 = vld [vmem:[#allocation2 + $0x488] sm:$0xff]
    %v216 = vld [vmem:[#allocation2 + $0x490] sm:$0xff]
    %v217 = vld [vmem:[#allocation2 + $0x498] sm:$0xff]
    %v218 = vld [vmem:[#allocation2 + $0x4a0] sm:$0xff]
    %v219 = vld [vmem:[#allocation2 + $0x4a8] sm:$0xff]
    %v220 = vld [vmem:[#allocation2 + $0x4b0] sm:$0xff]
    %v221 = vld [vmem:[#allocation2 + $0x4b8] sm:$0xff]
    %v222 = vld [vmem:[#allocation2 + $0x4c0] sm:$0xff]
    %v223 = vld [vmem:[#allocation2 + $0x4c8] sm:$0xff]
    %v224 = vld [vmem:[#allocation2 + $0x4d0] sm:$0xff]
    %v225 = vld [vmem:[#allocation2 + $0x4d8] sm:$0xff]
    %v226 = vld [vmem:[#allocation2 + $0x4e0] sm:$0xff]
    %v227 = vld [vmem:[#allocation2 + $0x4e8] sm:$0xff]
    %v228 = vld [vmem:[#allocation2 + $0x4f0] sm:$0xff]
    %v229 = vld [vmem:[#allocation2 + $0x4f8] sm:$0xff]
    %v230 = vld [vmem:[#allocation2 + $0x500] sm:$0xff]
    %v231 = vld [vmem:[#allocation2 + $0x508] sm:$0xff]
    %v232 = vld [vmem:[#allocation2 + $0x510] sm:$0xff]
    %v233 = vld [vmem:[#allocation2 + $0x518] sm:$0xff]
    %v234 = vld [vmem:[#allocation2 + $0x520] sm:$0xff]
    %v235 = vld [vmem:[#allocation2 + $0x528] sm:$0xff]
    %v236 = vld [vmem:[#allocation2 + $0x530] sm:$0xff]
    %v237 = vld [vmem:[#allocation2 + $0x538] sm:$0xff]
    %v238 = vld [vmem:[#allocation2 + $0x540] sm:$0xff]
    %v239 = vld [vmem:[#allocation2 + $0x548] sm:$0xff]
    %v240 = vld [vmem:[#allocation2 + $0x550] sm:$0xff]
    %v241 = vld [vmem:[#allocation2 + $0x558] sm:$0xff]
    %v242 = vld [vmem:[#allocation2 + $0x560] sm:$0xff]
    %v243 = vld [vmem:[#allocation2 + $0x568] sm:$0xff]
    %v244 = vld [vmem:[#allocation2 + $0x570] sm:$0xff]
    %v245 = vld [vmem:[#allocation2 + $0x578] sm:$0xff]
    %v246 = vld [vmem:[#allocation2 + $0x580] sm:$0xff]
    %v247 = vld [vmem:[#allocation2 + $0x588] sm:$0xff]
    %v248 = vld [vmem:[#allocation2 + $0x590] sm:$0xff]
    %v249 = vld [vmem:[#allocation2 + $0x598] sm:$0xff]
    %v250 = vld [vmem:[#allocation2 + $0x5a0] sm:$0xff]
    %v251 = vld [vmem:[#allocation2 + $0x5a8] sm:$0xff]
    %v252 = vld [vmem:[#allocation2 + $0x5b0] sm:$0xff]
    %v253 = vld [vmem:[#allocation2 + $0x5b8] sm:$0xff]
    %v254 = vld [vmem:[#allocation2 + $0x5c0] sm:$0xff]
    %v255 = vld [vmem:[#allocation2 + $0x5c8] sm:$0xff]
    %v256 = vld [vmem:[#allocation2 + $0x5d0] sm:$0xff]
    %v257 = vld [vmem:[#allocation2 + $0x5d8] sm:$0xff]
    %v258 = vld [vmem:[#allocation2 + $0x5e0] sm:$0xff]
    %v259 = vld [vmem:[#allocation2 + $0x5e8] sm:$0xff]
    %v260 = vld [vmem:[#allocation2 + $0x5f0] sm:$0xff]
    %v261 = vld [vmem:[#allocation2 + $0x5f8] sm:$0xff]
    %v262 = vld [vmem:[#allocation2 + $0x600] sm:$0xff]
    %v263 = vld [vmem:[#allocation2 + $0x608] sm:$0xff]
    %v264 = vld [vmem:[#allocation2 + $0x610] sm:$0xff]
    %v265 = vld [vmem:[#allocation2 + $0x618] sm:$0xff]
    %v266 = vld [vmem:[#allocation2 + $0x620] sm:$0xff]
    %v267 = vld [vmem:[#allocation2 + $0x628] sm:$0xff]
    %v268 = vld [vmem:[#allocation2 + $0x630] sm:$0xff]
    %v269 = vld [vmem:[#allocation2 + $0x638] sm:$0xff]
    %v270 = vld [vmem:[#allocation2 + $0x640] sm:$0xff]
    %v271 = vld [vmem:[#allocation2 + $0x648] sm:$0xff]
    %v272 = vld [vmem:[#allocation2 + $0x650] sm:$0xff]
    %v273 = vld [vmem:[#allocation2 + $0x658] sm:$0xff]
    %v274 = vld [vmem:[#allocation2 + $0x660] sm:$0xff]
    %v275 = vld [vmem:[#allocation2 + $0x668] sm:$0xff]
    %v276 = vld [vmem:[#allocation2 + $0x670] sm:$0xff]
    %v277 = vld [vmem:[#allocation2 + $0x678] sm:$0xff]
    %v278 = vld [vmem:[#allocation2 + $0x680] sm:$0xff]
    %v279 = vld [vmem:[#allocation2 + $0x688] sm:$0xff]
    %v280 = vld [vmem:[#allocation2 + $0x690] sm:$0xff]
    %v281 = vld [vmem:[#allocation2 + $0x698] sm:$0xff]
    %v282 = vld [vmem:[#allocation2 + $0x6a0] sm:$0xff]
    %v283 = vld [vmem:[#allocation2 + $0x6a8] sm:$0xff]
    %v284 = vld [vmem:[#allocation2 + $0x6b0] sm:$0xff]
    %v285 = vld [vmem:[#allocation2 + $0x6b8] sm:$0xff]
    %v286 = vld [vmem:[#allocation2 + $0x6c0] sm:$0xff]
    %v287 = vld [vmem:[#allocation2 + $0x6c8] sm:$0xff]
    %v288 = vld [vmem:[#allocation2 + $0x6d0] sm:$0xff]
    %v289 = vld [vmem:[#allocation2 + $0x6d8] sm:$0xff]
    %v290 = vld [vmem:[#allocation2 + $0x6e0] sm:$0xff]
    %v291 = vld [vmem:[#allocation2 + $0x6e8] sm:$0xff]
    %v292 = vld [vmem:[#allocation2 + $0x6f0] sm:$0xff]
    %v293 = vld [vmem:[#allocation2 + $0x6f8] sm:$0xff]
    %v294 = vld [vmem:[#allocation2 + $0x700] sm:$0xff]
    %v295 = vld [vmem:[#allocation2 + $0x708] sm:$0xff]
    %v296 = vld [vmem:[#allocation2 + $0x710] sm:$0xff]
    %v297 = vld [vmem:[#allocation2 + $0x718] sm:$0xff]
    %v298 = vld [vmem:[#allocation2 + $0x720] sm:$0xff]
    %v299 = vld [vmem:[#allocation2 + $0x728] sm:$0xff]
    %v300 = vld [vmem:[#allocation2 + $0x730] sm:$0xff]
    %v301 = vld [vmem:[#allocation2 + $0x738] sm:$0xff]
    %v302 = vld [vmem:[#allocation2 + $0x740] sm:$0xff]
    %v303 = vld [vmem:[#allocation2 + $0x748] sm:$0xff]
    %v304 = vld [vmem:[#allocation2 + $0x750] sm:$0xff]
    %v305 = vld [vmem:[#allocation2 + $0x758] sm:$0xff]
    %v306 = vld [vmem:[#allocation2 + $0x760] sm:$0xff]
    %v307 = vld [vmem:[#allocation2 + $0x768] sm:$0xff]
    %v308 = vld [vmem:[#allocation2 + $0x770] sm:$0xff]
    %v309 = vld [vmem:[#allocation2 + $0x778] sm:$0xff]
    %v310 = vld [vmem:[#allocation2 + $0x780] sm:$0xff]
    %v311 = vld [vmem:[#allocation2 + $0x788] sm:$0xff]
    %v312 = vld [vmem:[#allocation2 + $0x790] sm:$0xff]
    %v313 = vld [vmem:[#allocation2 + $0x798] sm:$0xff]
    %v314 = vld [vmem:[#allocation2 + $0x7a0] sm:$0xff]
    %v315 = vld [vmem:[#allocation2 + $0x7a8] sm:$0xff]
    %v316 = vld [vmem:[#allocation2 + $0x7b0] sm:$0xff]
    %v317 = vld [vmem:[#allocation2 + $0x7b8] sm:$0xff]
    %v318 = vld [vmem:[#allocation2 + $0x7c0] sm:$0xff]
    %v319 = vld [vmem:[#allocation2 + $0x7c8] sm:$0xff]
    %v320 = vld [vmem:[#allocation2 + $0x7d0] sm:$0xff]
    %v321 = vld [vmem:[#allocation2 + $0x7d8] sm:$0xff]
    %v322 = vld [vmem:[#allocation2 + $0x7e0] sm:$0xff]
    %v323 = vld [vmem:[#allocation2 + $0x7e8] sm:$0xff]
    %v324 = vld [vmem:[#allocation2 + $0x7f0] sm:$0xff]
    %v325 = vld [vmem:[#allocation2 + $0x7f8] sm:$0xff]
    %v326 = vld [vmem:[#allocation2 + $0x800] sm:$0xff]
    %v327 = vld [vmem:[#allocation2 + $0x808] sm:$0xff]
    %v328 = vld [vmem:[#allocation2 + $0x810] sm:$0xff]
    %v329 = vld [vmem:[#allocation2 + $0x818] sm:$0xff]
    %v330 = vld [vmem:[#allocation2 + $0x820] sm:$0xff]
    %v331 = vld [vmem:[#allocation2 + $0x828] sm:$0xff]
    %v332 = vld [vmem:[#allocation2 + $0x830] sm:$0xff]
    %v333 = vld [vmem:[#allocation2 + $0x838] sm:$0xff]
    %v334 = vld [vmem:[#allocation2 + $0x840] sm:$0xff]
    %v335 = vld [vmem:[#allocation2 + $0x848] sm:$0xff]
    %v336 = vld [vmem:[#allocation2 + $0x850] sm:$0xff]
    %v337 = vld [vmem:[#allocation2 + $0x858] sm:$0xff]
    %v338 = vld [vmem:[#allocation2 + $0x860] sm:$0xff]
    %v339 = vld [vmem:[#allocation2 + $0x868] sm:$0xff]
    %v340 = vld [vmem:[#allocation2 + $0x870] sm:$0xff]
    %v341 = vld [vmem:[#allocation2 + $0x878] sm:$0xff]
    %v342 = vld [vmem:[#allocation2 + $0x880] sm:$0xff]
    %v343 = vld [vmem:[#allocation2 + $0x888] sm:$0xff]
    %v344 = vld [vmem:[#allocation2 + $0x890] sm:$0xff]
    %v345 = vld [vmem:[#allocation2 + $0x898] sm:$0xff]
    %v346 = vld [vmem:[#allocation2 + $0x8a0] sm:$0xff]
    %v347 = vld [vmem:[#allocation2 + $0x8a8] sm:$0xff]
    %v348 = vld [vmem:[#allocation2 + $0x8b0] sm:$0xff]
    %v349 = vld [vmem:[#allocation2 + $0x8b8] sm:$0xff]
    %v350 = vld [vmem:[#allocation2 + $0x8c0] sm:$0xff]
    %v351 = vld [vmem:[#allocation2 + $0x8c8] sm:$0xff]
    %v352 = vld [vmem:[#allocation2 + $0x8d0] sm:$0xff]
    %v353 = vld [vmem:[#allocation2 + $0x8d8] sm:$0xff]
    %v354 = vld [vmem:[#allocation2 + $0x8e0] sm:$0xff]
    %v355 = vld [vmem:[#allocation2 + $0x8e8] sm:$0xff]
    %v356 = vld [vmem:[#allocation2 + $0x8f0] sm:$0xff]
    %v357 = vld [vmem:[#allocation2 + $0x8f8] sm:$0xff]
    %v358 = vld [vmem:[#allocation2 + $0x900] sm:$0xff]
    %v359 = vld [vmem:[#allocation2 + $0x908] sm:$0xff]
    %v360 = vld [vmem:[#allocation2 + $0x910] sm:$0xff]
    %v361 = vld [vmem:[#allocation2 + $0x918] sm:$0xff]
    %v362 = vld [vmem:[#allocation2 + $0x920] sm:$0xff]
    %v363 = vld [vmem:[#allocation2 + $0x928] sm:$0xff]
    %v364 = vld [vmem:[#allocation2 + $0x930] sm:$0xff]
    %v365 = vld [vmem:[#allocation2 + $0x938] sm:$0xff]
    %v366 = vld [vmem:[#allocation2 + $0x940] sm:$0xff]
    %v367 = vld [vmem:[#allocation2 + $0x948] sm:$0xff]
    %v368 = vld [vmem:[#allocation2 + $0x950] sm:$0xff]
    %v369 = vld [vmem:[#allocation2 + $0x958] sm:$0xff]
    %v370 = vld [vmem:[#allocation2 + $0x960] sm:$0xff]
    %v371 = vld [vmem:[#allocation2 + $0x968] sm:$0xff]
    %v372 = vld [vmem:[#allocation2 + $0x970] sm:$0xff]
    %v373 = vld [vmem:[#allocation2 + $0x978] sm:$0xff]
    %v374 = vld [vmem:[#allocation2 + $0x980] sm:$0xff]
    %v375 = vld [vmem:[#allocation2 + $0x988] sm:$0xff]
    %v376 = vld [vmem:[#allocation2 + $0x990] sm:$0xff]
    %v377 = vld [vmem:[#allocation2 + $0x998] sm:$0xff]
    %v378 = vld [vmem:[#allocation2 + $0x9a0] sm:$0xff]
    %v379 = vld [vmem:[#allocation2 + $0x9a8] sm:$0xff]
    %v380 = vld [vmem:[#allocation2 + $0x9b0] sm:$0xff]
    %v381 = vld [vmem:[#allocation2 + $0x9b8] sm:$0xff]
    %v382 = vld [vmem:[#allocation2 + $0x9c0] sm:$0xff]
    %v383 = vld [vmem:[#allocation2 + $0x9c8] sm:$0xff]
    %v384 = vld [vmem:[#allocation2 + $0x9d0] sm:$0xff]
    %v385 = vld [vmem:[#allocation2 + $0x9d8] sm:$0xff]
    %v386 = vld [vmem:[#allocation2 + $0x9e0] sm:$0xff]
    %v387 = vld [vmem:[#allocation2 + $0x9e8] sm:$0xff]
    %v388 = vld [vmem:[#allocation2 + $0x9f0] sm:$0xff]
    %v389 = vld [vmem:[#allocation2 + $0x9f8] sm:$0xff]
    %v390 = vld [vmem:[#allocation2 + $0xa00] sm:$0xff]
    %v391 = vld [vmem:[#allocation2 + $0xa08] sm:$0xff]
    %v392 = vld [vmem:[#allocation2 + $0xa10] sm:$0xff]
    %v393 = vld [vmem:[#allocation2 + $0xa18] sm:$0xff]
    %v394 = vld [vmem:[#allocation2 + $0xa20] sm:$0xff]
    %v395 = vld [vmem:[#allocation2 + $0xa28] sm:$0xff]
    %v396 = vld [vmem:[#allocation2 + $0xa30] sm:$0xff]
    %v397 = vld [vmem:[#allocation2 + $0xa38] sm:$0xff]
    %v398 = vld [vmem:[#allocation2 + $0xa40] sm:$0xff]
    %v399 = vld [vmem:[#allocation2 + $0xa48] sm:$0xff]
    %v400 = vld [vmem:[#allocation2 + $0xa50] sm:$0xff]
    %v401 = vld [vmem:[#allocation2 + $0xa58] sm:$0xff]
    %v402 = vld [vmem:[#allocation2 + $0xa60] sm:$0xff]
    %v403 = vld [vmem:[#allocation2 + $0xa68] sm:$0xff]
    %v404 = vld [vmem:[#allocation2 + $0xa70] sm:$0xff]
    %v405 = vld [vmem:[#allocation2 + $0xa78] sm:$0xff]
    %v406 = vld [vmem:[#allocation2 + $0xa80] sm:$0xff]
    %v407 = vld [vmem:[#allocation2 + $0xa88] sm:$0xff]
    %v408 = vld [vmem:[#allocation2 + $0xa90] sm:$0xff]
    %v409 = vld [vmem:[#allocation2 + $0xa98] sm:$0xff]
    %v410 = vld [vmem:[#allocation2 + $0xaa0] sm:$0xff]
    %v411 = vld [vmem:[#allocation2 + $0xaa8] sm:$0xff]
    %v412 = vld [vmem:[#allocation2 + $0xab0] sm:$0xff]
    %v413 = vld [vmem:[#allocation2 + $0xab8] sm:$0xff]
    %v414 = vld [vmem:[#allocation2 + $0xac0] sm:$0xff]
    %v415 = vld [vmem:[#allocation2 + $0xac8] sm:$0xff]
    %v416 = vld [vmem:[#allocation2 + $0xad0] sm:$0xff]
    %v417 = vld [vmem:[#allocation2 + $0xad8] sm:$0xff]
    %v418 = vld [vmem:[#allocation2 + $0xae0] sm:$0xff]
    %v419 = vld [vmem:[#allocation2 + $0xae8] sm:$0xff]
    %v420 = vld [vmem:[#allocation2 + $0xaf0] sm:$0xff]
    %v421 = vld [vmem:[#allocation2 + $0xaf8] sm:$0xff]
    %v422 = vld [vmem:[#allocation2 + $0xb00] sm:$0xff]
    %v423 = vld [vmem:[#allocation2 + $0xb08] sm:$0xff]
    %v424 = vld [vmem:[#allocation2 + $0xb10] sm:$0xff]
    %v425 = vld [vmem:[#allocation2 + $0xb18] sm:$0xff]
    %v426 = vld [vmem:[#allocation2 + $0xb20] sm:$0xff]
    %v427 = vld [vmem:[#allocation2 + $0xb28] sm:$0xff]
    %v428 = vld [vmem:[#allocation2 + $0xb30] sm:$0xff]
    %v429 = vld [vmem:[#allocation2 + $0xb38] sm:$0xff]
    %v430 = vld [vmem:[#allocation2 + $0xb40] sm:$0xff]
    %v431 = vld [vmem:[#allocation2 + $0xb48] sm:$0xff]
    %v432 = vld [vmem:[#allocation2 + $0xb50] sm:$0xff]
    %v433 = vld [vmem:[#allocation2 + $0xb58] sm:$0xff]
    %v434 = vld [vmem:[#allocation2 + $0xb60] sm:$0xff]
    %v435 = vld [vmem:[#allocation2 + $0xb68] sm:$0xff]
    %v436 = vld [vmem:[#allocation2 + $0xb70] sm:$0xff]
    %v437 = vld [vmem:[#allocation2 + $0xb78] sm:$0xff]
    %v438 = vld [vmem:[#allocation2 + $0xb80] sm:$0xff]
    %v439 = vld [vmem:[#allocation2 + $0xb88] sm:$0xff]
    %v440 = vld [vmem:[#allocation2 + $0xb90] sm:$0xff]
    %v441 = vld [vmem:[#allocation2 + $0xb98] sm:$0xff]
    %v442 = vld [vmem:[#allocation2 + $0xba0] sm:$0xff]
    %v443 = vld [vmem:[#allocation2 + $0xba8] sm:$0xff]
    %v444 = vld [vmem:[#allocation2 + $0xbb0] sm:$0xff]
    %v445 = vld [vmem:[#allocation2 + $0xbb8] sm:$0xff]
    %v446 = vld [vmem:[#allocation2 + $0xbc0] sm:$0xff]
    %v447 = vld [vmem:[#allocation2 + $0xbc8] sm:$0xff]
    %v448 = vld [vmem:[#allocation2 + $0xbd0] sm:$0xff]
    %v449 = vld [vmem:[#allocation2 + $0xbd8] sm:$0xff]
    %v450 = vld [vmem:[#allocation2 + $0xbe0] sm:$0xff]
    %v451 = vld [vmem:[#allocation2 + $0xbe8] sm:$0xff]
    %v452 = vld [vmem:[#allocation2 + $0xbf0] sm:$0xff]
    %v453 = vld [vmem:[#allocation2 + $0xbf8] sm:$0xff]
    %v454 = vld [vmem:[#allocation2 + $0xc00] sm:$0xff]
    %v455 = vld [vmem:[#allocation2 + $0xc08] sm:$0xff]
    %v456 = vld [vmem:[#allocation2 + $0xc10] sm:$0xff]
    %v457 = vld [vmem:[#allocation2 + $0xc18] sm:$0xff]
    %v458 = vld [vmem:[#allocation2 + $0xc20] sm:$0xff]
    %v459 = vld [vmem:[#allocation2 + $0xc28] sm:$0xff]
    %v460 = vld [vmem:[#allocation2 + $0xc30] sm:$0xff]
    %v461 = vld [vmem:[#allocation2 + $0xc38] sm:$0xff]
    %v462 = vld [vmem:[#allocation2 + $0xc40] sm:$0xff]
    %v463 = vld [vmem:[#allocation2 + $0xc48] sm:$0xff]
    %v464 = vld [vmem:[#allocation2 + $0xc50] sm:$0xff]
    %v465 = vld [vmem:[#allocation2 + $0xc58] sm:$0xff]
    %v466 = vld [vmem:[#allocation2 + $0xc60] sm:$0xff]
    %v467 = vld [vmem:[#allocation2 + $0xc68] sm:$0xff]
    %v468 = vld [vmem:[#allocation2 + $0xc70] sm:$0xff]
    %v469 = vld [vmem:[#allocation2 + $0xc78] sm:$0xff]
    %v470 = vld [vmem:[#allocation2 + $0xc80] sm:$0xff]
    %v471 = vld [vmem:[#allocation2 + $0xc88] sm:$0xff]
    %v472 = vld [vmem:[#allocation2 + $0xc90] sm:$0xff]
    %v473 = vld [vmem:[#allocation2 + $0xc98] sm:$0xff]
    %v474 = vld [vmem:[#allocation2 + $0xca0] sm:$0xff]
    %v475 = vld [vmem:[#allocation2 + $0xca8] sm:$0xff]
    %v476 = vld [vmem:[#allocation2 + $0xcb0] sm:$0xff]
    %v477 = vld [vmem:[#allocation2 + $0xcb8] sm:$0xff]
    %v478 = vld [vmem:[#allocation2 + $0xcc0] sm:$0xff]
    %v479 = vld [vmem:[#allocation2 + $0xcc8] sm:$0xff]
    %v480 = vld [vmem:[#allocation2 + $0xcd0] sm:$0xff]
    %v481 = vld [vmem:[#allocation2 + $0xcd8] sm:$0xff]
    %v482 = vld [vmem:[#allocation2 + $0xce0] sm:$0xff]
    %v483 = vld [vmem:[#allocation2 + $0xce8] sm:$0xff]
    %v484 = vld [vmem:[#allocation2 + $0xcf0] sm:$0xff]
    %v485 = vld [vmem:[#allocation2 + $0xcf8] sm:$0xff]
    %v486 = vld [vmem:[#allocation2 + $0xd00] sm:$0xff]
    %v487 = vld [vmem:[#allocation2 + $0xd08] sm:$0xff]
    %v488 = vld [vmem:[#allocation2 + $0xd10] sm:$0xff]
    %v489 = vld [vmem:[#allocation2 + $0xd18] sm:$0xff]
    %v490 = vld [vmem:[#allocation2 + $0xd20] sm:$0xff]
    %v491 = vld [vmem:[#allocation2 + $0xd28] sm:$0xff]
    %v492 = vld [vmem:[#allocation2 + $0xd30] sm:$0xff]
    %v493 = vld [vmem:[#allocation2 + $0xd38] sm:$0xff]
    %v494 = vld [vmem:[#allocation2 + $0xd40] sm:$0xff]
    %v495 = vld [vmem:[#allocation2 + $0xd48] sm:$0xff]
    %v496 = vld [vmem:[#allocation2 + $0xd50] sm:$0xff]
    %v497 = vld [vmem:[#allocation2 + $0xd58] sm:$0xff]
    %v498 = vld [vmem:[#allocation2 + $0xd60] sm:$0xff]
    %v499 = vld [vmem:[#allocation2 + $0xd68] sm:$0xff]
    %v500 = vld [vmem:[#allocation2 + $0xd70] sm:$0xff]
    %v501 = vld [vmem:[#allocation2 + $0xd78] sm:$0xff]
    %v502 = vld [vmem:[#allocation2 + $0xd80] sm:$0xff]
    %v503 = vld [vmem:[#allocation2 + $0xd88] sm:$0xff]
    %v504 = vld [vmem:[#allocation2 + $0xd90] sm:$0xff]
    %v505 = vld [vmem:[#allocation2 + $0xd98] sm:$0xff]
    %v506 = vld [vmem:[#allocation2 + $0xda0] sm:$0xff]
    %v507 = vld [vmem:[#allocation2 + $0xda8] sm:$0xff]
    %v508 = vld [vmem:[#allocation2 + $0xdb0] sm:$0xff]
    %v509 = vld [vmem:[#allocation2 + $0xdb8] sm:$0xff]
    %v510 = vld [vmem:[#allocation2 + $0xdc0] sm:$0xff]
    %v511 = vld [vmem:[#allocation2 + $0xdc8] sm:$0xff]
    %v512 = vld [vmem:[#allocation2 + $0xdd0] sm:$0xff]
    %v513 = vld [vmem:[#allocation2 + $0xdd8] sm:$0xff]
    %v514 = vld [vmem:[#allocation2 + $0xde0] sm:$0xff]
    %v515 = vld [vmem:[#allocation2 + $0xde8] sm:$0xff]
    %v516 = vld [vmem:[#allocation2 + $0xdf0] sm:$0xff]
    %v517 = vld [vmem:[#allocation2 + $0xdf8] sm:$0xff]
    %v518 = vld [vmem:[#allocation2 + $0xe00] sm:$0xff]
    %v519 = vld [vmem:[#allocation2 + $0xe08] sm:$0xff]
    %v520 = vld [vmem:[#allocation2 + $0xe10] sm:$0xff]
    %v521 = vld [vmem:[#allocation2 + $0xe18] sm:$0xff]
    %v522 = vld [vmem:[#allocation2 + $0xe20] sm:$0xff]
    %v523 = vld [vmem:[#allocation2 + $0xe28] sm:$0xff]
    %v524 = vld [vmem:[#allocation2 + $0xe30] sm:$0xff]
    %v525 = vld [vmem:[#allocation2 + $0xe38] sm:$0xff]
    %v526 = vld [vmem:[#allocation2 + $0xe40] sm:$0xff]
    %v527 = vld [vmem:[#allocation2 + $0xe48] sm:$0xff]
    %v528 = vld [vmem:[#allocation2 + $0xe50] sm:$0xff]
    %v529 = vld [vmem:[#allocation2 + $0xe58] sm:$0xff]
    %v530 = vld [vmem:[#allocation2 + $0xe60] sm:$0xff]
    %v531 = vld [vmem:[#allocation2 + $0xe68] sm:$0xff]
    %v532 = vld [vmem:[#allocation2 + $0xe70] sm:$0xff]
    %v533 = vld [vmem:[#allocation2 + $0xe78] sm:$0xff]
    %v534 = vld [vmem:[#allocation2 + $0xe80] sm:$0xff]
    %v535 = vld [vmem:[#allocation2 + $0xe88] sm:$0xff]
    %v536 = vld [vmem:[#allocation2 + $0xe90] sm:$0xff]
    %v537 = vld [vmem:[#allocation2 + $0xe98] sm:$0xff]
    %v538 = vld [vmem:[#allocation2 + $0xea0] sm:$0xff]
    %v539 = vld [vmem:[#allocation2 + $0xea8] sm:$0xff]
    %v540 = vld [vmem:[#allocation2 + $0xeb0] sm:$0xff]
    %v541 = vld [vmem:[#allocation2 + $0xeb8] sm:$0xff]
    %v542 = vld [vmem:[#allocation2 + $0xec0] sm:$0xff]
    %v543 = vld [vmem:[#allocation2 + $0xec8] sm:$0xff]
    %v544 = vld [vmem:[#allocation2 + $0xed0] sm:$0xff]
    %v545 = vld [vmem:[#allocation2 + $0xed8] sm:$0xff]
    %v546 = vld [vmem:[#allocation2 + $0xee0] sm:$0xff]
    %v547 = vld [vmem:[#allocation2 + $0xee8] sm:$0xff]
    %v548 = vld [vmem:[#allocation2 + $0xef0] sm:$0xff]
    %v549 = vld [vmem:[#allocation2 + $0xef8] sm:$0xff]
    %v550 = vld [vmem:[#allocation2 + $0xf00] sm:$0xff]
    %v551 = vld [vmem:[#allocation2 + $0xf08] sm:$0xff]
    %v552 = vld [vmem:[#allocation2 + $0xf10] sm:$0xff]
    %v553 = vld [vmem:[#allocation2 + $0xf18] sm:$0xff]
    %v554 = vld [vmem:[#allocation2 + $0xf20] sm:$0xff]
    %v555 = vld [vmem:[#allocation2 + $0xf28] sm:$0xff]
    %v556 = vld [vmem:[#allocation2 + $0xf30] sm:$0xff]
    %v557 = vld [vmem:[#allocation2 + $0xf38] sm:$0xff]
    %v558 = vld [vmem:[#allocation2 + $0xf40] sm:$0xff]
    %v559 = vld [vmem:[#allocation2 + $0xf48] sm:$0xff]
    %v560 = vld [vmem:[#allocation2 + $0xf50] sm:$0xff]
    %v561 = vld [vmem:[#allocation2 + $0xf58] sm:$0xff]
    %v562 = vld [vmem:[#allocation2 + $0xf60] sm:$0xff]
    %v563 = vld [vmem:[#allocation2 + $0xf68] sm:$0xff]
    %v564 = vld [vmem:[#allocation2 + $0xf70] sm:$0xff]
    %v565 = vld [vmem:[#allocation2 + $0xf78] sm:$0xff]
    %v566 = vld [vmem:[#allocation2 + $0xf80] sm:$0xff]
    %v567 = vld [vmem:[#allocation2 + $0xf88] sm:$0xff]
    %v568 = vld [vmem:[#allocation2 + $0xf90] sm:$0xff]
    %v569 = vld [vmem:[#allocation2 + $0xf98] sm:$0xff]
    %v570 = vld [vmem:[#allocation2 + $0xfa0] sm:$0xff]
    %v571 = vld [vmem:[#allocation2 + $0xfa8] sm:$0xff]
    %v572 = vld [vmem:[#allocation2 + $0xfb0] sm:$0xff]
    %v573 = vld [vmem:[#allocation2 + $0xfb8] sm:$0xff]
    %v574 = vld [vmem:[#allocation2 + $0xfc0] sm:$0xff]
    %v575 = vld [vmem:[#allocation2 + $0xfc8] sm:$0xff]
    %v576 = vld [vmem:[#allocation2 + $0xfd0] sm:$0xff]
    %v577 = vld [vmem:[#allocation2 + $0xfd8] sm:$0xff]
    %v578 = vld [vmem:[#allocation2 + $0xfe0] sm:$0xff]
    %v579 = vld [vmem:[#allocation2 + $0xfe8] sm:$0xff]
    %v580 = vld [vmem:[#allocation2 + $0xff0] sm:$0xff]
    %v581 = vld [vmem:[#allocation2 + $0xff8] sm:$0xff]
    %v582 = vld [vmem:[#allocation2 + $0x1000] sm:$0xff]
    %v583 = vld [vmem:[#allocation2 + $0x1008] sm:$0xff]
    %v584 = vld [vmem:[#allocation2 + $0x1010] sm:$0xff]
    %v585 = vld [vmem:[#allocation2 + $0x1018] sm:$0xff]
    %v586 = vld [vmem:[#allocation2 + $0x1020] sm:$0xff]
    %v587 = vld [vmem:[#allocation2 + $0x1028] sm:$0xff]
    %v588 = vld [vmem:[#allocation2 + $0x1030] sm:$0xff]
    %v589 = vld [vmem:[#allocation2 + $0x1038] sm:$0xff]
    %v590 = vld [vmem:[#allocation2 + $0x1040] sm:$0xff]
    %v591 = vld [vmem:[#allocation2 + $0x1048] sm:$0xff]
    %v592 = vld [vmem:[#allocation2 + $0x1050] sm:$0xff]
    %v593 = vld [vmem:[#allocation2 + $0x1058] sm:$0xff]
    %v594 = vld [vmem:[#allocation2 + $0x1060] sm:$0xff]
    %v595 = vld [vmem:[#allocation2 + $0x1068] sm:$0xff]
    %v596 = vld [vmem:[#allocation2 + $0x1070] sm:$0xff]
    %v597 = vld [vmem:[#allocation2 + $0x1078] sm:$0xff]
    %v598 = vld [vmem:[#allocation2 + $0x1080] sm:$0xff]
    %v599 = vld [vmem:[#allocation2 + $0x1088] sm:$0xff]
    %v600 = vld [vmem:[#allocation2 + $0x1090] sm:$0xff]
    %v601 = vld [vmem:[#allocation2 + $0x1098] sm:$0xff]
    %v602 = vld [vmem:[#allocation2 + $0x10a0] sm:$0xff]
    %v603 = vld [vmem:[#allocation2 + $0x10a8] sm:$0xff]
    %v604 = vld [vmem:[#allocation2 + $0x10b0] sm:$0xff]
    %v605 = vld [vmem:[#allocation2 + $0x10b8] sm:$0xff]
    %v606 = vld [vmem:[#allocation2 + $0x10c0] sm:$0xff]
    %v607 = vld [vmem:[#allocation2 + $0x10c8] sm:$0xff]
    %v608 = vld [vmem:[#allocation2 + $0x10d0] sm:$0xff]
    %v609 = vld [vmem:[#allocation2 + $0x10d8] sm:$0xff]
    %v610 = vld [vmem:[#allocation2 + $0x10e0] sm:$0xff]
    %v611 = vld [vmem:[#allocation2 + $0x10e8] sm:$0xff]
    %v612 = vld [vmem:[#allocation2 + $0x10f0] sm:$0xff]
    %v613 = vld [vmem:[#allocation2 + $0x10f8] sm:$0xff]
    %v614 = vld [vmem:[#allocation2 + $0x1100] sm:$0xff]
    %v615 = vld [vmem:[#allocation2 + $0x1108] sm:$0xff]
    %v616 = vld [vmem:[#allocation2 + $0x1110] sm:$0xff]
    %v617 = vld [vmem:[#allocation2 + $0x1118] sm:$0xff]
    %v618 = vld [vmem:[#allocation2 + $0x1120] sm:$0xff]
    %v619 = vld [vmem:[#allocation2 + $0x1128] sm:$0xff]
    %v620 = vld [vmem:[#allocation2 + $0x1130] sm:$0xff]
    %v621 = vld [vmem:[#allocation2 + $0x1138] sm:$0xff]
    %v622 = vld [vmem:[#allocation2 + $0x1140] sm:$0xff]
    %v623 = vld [vmem:[#allocation2 + $0x1148] sm:$0xff]
    %v624 = vld [vmem:[#allocation2 + $0x1150] sm:$0xff]
    %v625 = vld [vmem:[#allocation2 + $0x1158] sm:$0xff]
    %v626 = vld [vmem:[#allocation2 + $0x1160] sm:$0xff]
    %v627 = vld [vmem:[#allocation2 + $0x1168] sm:$0xff]
    %v628 = vld [vmem:[#allocation2 + $0x1170] sm:$0xff]
    %v629 = vld [vmem:[#allocation2 + $0x1178] sm:$0xff]
    %v630 = vld [vmem:[#allocation2 + $0x1180] sm:$0xff]
    %v631 = vld [vmem:[#allocation2 + $0x1188] sm:$0xff]
    %v632 = vld [vmem:[#allocation2 + $0x1190] sm:$0xff]
    %v633 = vld [vmem:[#allocation2 + $0x1198] sm:$0xff]
    %v634 = vld [vmem:[#allocation2 + $0x11a0] sm:$0xff]
    %v635 = vld [vmem:[#allocation2 + $0x11a8] sm:$0xff]
    %v636 = vld [vmem:[#allocation2 + $0x11b0] sm:$0xff]
    %v637 = vld [vmem:[#allocation2 + $0x11b8] sm:$0xff]
    %v638 = vld [vmem:[#allocation2 + $0x11c0] sm:$0xff]
    %v639 = vld [vmem:[#allocation2 + $0x11c8] sm:$0xff]
    %v640 = vld [vmem:[#allocation2 + $0x11d0] sm:$0xff]
    %v641 = vld [vmem:[#allocation2 + $0x11d8] sm:$0xff]
    %v642 = vld [vmem:[#allocation2 + $0x11e0] sm:$0xff]
    %v643 = vld [vmem:[#allocation2 + $0x11e8] sm:$0xff]
    %v644 = vld [vmem:[#allocation2 + $0x11f0] sm:$0xff]
    %v645 = vld [vmem:[#allocation2 + $0x11f8] sm:$0xff]
    %v646 = vld [vmem:[#allocation2 + $0x1200] sm:$0xff]
    %v647 = vld [vmem:[#allocation2 + $0x1208] sm:$0xff]
    %v648 = vld [vmem:[#allocation2 + $0x1210] sm:$0xff]
    %v649 = vld [vmem:[#allocation2 + $0x1218] sm:$0xff]
    %v650 = vld [vmem:[#allocation2 + $0x1220] sm:$0xff]
    %v651 = vld [vmem:[#allocation2 + $0x1228] sm:$0xff]
    %v652 = vld [vmem:[#allocation2 + $0x1230] sm:$0xff]
    %v653 = vld [vmem:[#allocation2 + $0x1238] sm:$0xff]
    %v654 = vld [vmem:[#allocation2 + $0x1240] sm:$0xff]
    %v655 = vld [vmem:[#allocation2 + $0x1248] sm:$0xff]
    %v656 = vld [vmem:[#allocation2 + $0x1250] sm:$0xff]
    %v657 = vld [vmem:[#allocation2 + $0x1258] sm:$0xff]
    %v658 = vmax.f32 %v70, 0.0
    %v659 = vmax.f32 %v71, 0.0
    %v660 = vmax.f32 %v72, 0.0
    %v661 = vmax.f32 %v73, 0.0
    %v662 = vmax.f32 %v74, 0.0
    %v663 = vmax.f32 %v75, 0.0
    %v664 = vmax.f32 %v76, 0.0
    %v665 = vmax.f32 %v77, 0.0
    %v666 = vmax.f32 %v78, 0.0
    %v667 = vmax.f32 %v79, 0.0
    %v668 = vmax.f32 %v80, 0.0
    %v669 = vmax.f32 %v81, 0.0
    %v670 = vmax.f32 %v82, 0.0
    %v671 = vmax.f32 %v83, 0.0
    %v672 = vmax.f32 %v84, 0.0
    %v673 = vmax.f32 %v85, 0.0
    %v674 = vmax.f32 %v86, 0.0
    %v675 = vmax.f32 %v87, 0.0
    %v676 = vmax.f32 %v88, 0.0
    %v677 = vmax.f32 %v89, 0.0
    %v678 = vmax.f32 %v90, 0.0
    %v679 = vmax.f32 %v91, 0.0
    %v680 = vmax.f32 %v92, 0.0
    %v681 = vmax.f32 %v93, 0.0
    %v682 = vmax.f32 %v94, 0.0
    %v683 = vmax.f32 %v95, 0.0
    %v684 = vmax.f32 %v96, 0.0
    %v685 = vmax.f32 %v97, 0.0
    %v686 = vmax.f32 %v98, 0.0
    %v687 = vmax.f32 %v99, 0.0
    %v688 = vmax.f32 %v100, 0.0
    %v689 = vmax.f32 %v101, 0.0
    %v690 = vmax.f32 %v102, 0.0
    %v691 = vmax.f32 %v103, 0.0
    %v692 = vmax.f32 %v104, 0.0
    %v693 = vmax.f32 %v105, 0.0
    %v694 = vmax.f32 %v106, 0.0
    %v695 = vmax.f32 %v107, 0.0
    %v696 = vmax.f32 %v108, 0.0
    %v697 = vmax.f32 %v109, 0.0
    %v698 = vmax.f32 %v110, 0.0
    %v699 = vmax.f32 %v111, 0.0
    %v700 = vmax.f32 %v112, 0.0
    %v701 = vmax.f32 %v113, 0.0
    %v702 = vmax.f32 %v114, 0.0
    %v703 = vmax.f32 %v115, 0.0
    %v704 = vmax.f32 %v116, 0.0
    %v705 = vmax.f32 %v117, 0.0
    %v706 = vmax.f32 %v118, 0.0
    %v707 = vmax.f32 %v119, 0.0
    %v708 = vmax.f32 %v120, 0.0
    %v709 = vmax.f32 %v121, 0.0
    %v710 = vmax.f32 %v122, 0.0
    %v711 = vmax.f32 %v123, 0.0
    %v712 = vmax.f32 %v124, 0.0
    %v713 = vmax.f32 %v125, 0.0
    %v714 = vmax.f32 %v126, 0.0
    %v715 = vmax.f32 %v127, 0.0
    %v716 = vmax.f32 %v128, 0.0
    %v717 = vmax.f32 %v129, 0.0
    %v718 = vmax.f32 %v130, 0.0
    %v719 = vmax.f32 %v131, 0.0
    %v720 = vmax.f32 %v132, 0.0
    %v721 = vmax.f32 %v133, 0.0
    %v722 = vmax.f32 %v134, 0.0
    %v723 = vmax.f32 %v135, 0.0
    %v724 = vmax.f32 %v136, 0.0
    %v725 = vmax.f32 %v137, 0.0
    %v726 = vmax.f32 %v138, 0.0
    %v727 = vmax.f32 %v139, 0.0
    %v728 = vmax.f32 %v140, 0.0
    %v729 = vmax.f32 %v141, 0.0
    %v730 = vmax.f32 %v142, 0.0
    %v731 = vmax.f32 %v143, 0.0
    %v732 = vmax.f32 %v144, 0.0
    %v733 = vmax.f32 %v145, 0.0
    %v734 = vmax.f32 %v146, 0.0
    %v735 = vmax.f32 %v147, 0.0
    %v736 = vmax.f32 %v148, 0.0
    %v737 = vmax.f32 %v149, 0.0
    %v738 = vmax.f32 %v150, 0.0
    %v739 = vmax.f32 %v151, 0.0
    %v740 = vmax.f32 %v152, 0.0
    %v741 = vmax.f32 %v153, 0.0
    %v742 = vmax.f32 %v154, 0.0
    %v743 = vmax.f32 %v155, 0.0
    %v744 = vmax.f32 %v156, 0.0
    %v745 = vmax.f32 %v157, 0.0
    %v746 = vmax.f32 %v158, 0.0
    %v747 = vmax.f32 %v159, 0.0
    %v748 = vmax.f32 %v160, 0.0
    %v749 = vmax.f32 %v161, 0.0
    %v750 = vmax.f32 %v162, 0.0
    %v751 = vmax.f32 %v163, 0.0
    %v752 = vmax.f32 %v164, 0.0
    %v753 = vmax.f32 %v165, 0.0
    %v754 = vmax.f32 %v166, 0.0
    %v755 = vmax.f32 %v167, 0.0
    %v756 = vmax.f32 %v168, 0.0
    %v757 = vmax.f32 %v169, 0.0
    %v758 = vmax.f32 %v170, 0.0
    %v759 = vmax.f32 %v171, 0.0
    %v760 = vmax.f32 %v172, 0.0
    %v761 = vmax.f32 %v173, 0.0
    %v762 = vmax.f32 %v174, 0.0
    %v763 = vmax.f32 %v175, 0.0
    %v764 = vmax.f32 %v176, 0.0
    %v765 = vmax.f32 %v177, 0.0
    %v766 = vmax.f32 %v178, 0.0
    %v767 = vmax.f32 %v179, 0.0
    %v768 = vmax.f32 %v180, 0.0
    %v769 = vmax.f32 %v181, 0.0
    %v770 = vmax.f32 %v182, 0.0
    %v771 = vmax.f32 %v183, 0.0
    %v772 = vmax.f32 %v184, 0.0
    %v773 = vmax.f32 %v185, 0.0
    %v774 = vmax.f32 %v186, 0.0
    %v775 = vmax.f32 %v187, 0.0
    %v776 = vmax.f32 %v188, 0.0
    %v777 = vmax.f32 %v189, 0.0
    %v778 = vmax.f32 %v190, 0.0
    %v779 = vmax.f32 %v191, 0.0
    %v780 = vmax.f32 %v192, 0.0
    %v781 = vmax.f32 %v193, 0.0
    %v782 = vmax.f32 %v194, 0.0
    %v783 = vmax.f32 %v195, 0.0
    %v784 = vmax.f32 %v196, 0.0
    %v785 = vmax.f32 %v197, 0.0
    %v786 = vmax.f32 %v198, 0.0
    %v787 = vmax.f32 %v199, 0.0
    %v788 = vmax.f32 %v200, 0.0
    %v789 = vmax.f32 %v201, 0.0
    %v790 = vmax.f32 %v202, 0.0
    %v791 = vmax.f32 %v203, 0.0
    %v792 = vmax.f32 %v204, 0.0
    %v793 = vmax.f32 %v205, 0.0
    %v794 = vmax.f32 %v206, 0.0
    %v795 = vmax.f32 %v207, 0.0
    %v796 = vmax.f32 %v208, 0.0
    %v797 = vmax.f32 %v209, 0.0
    %v798 = vmax.f32 %v210, 0.0
    %v799 = vmax.f32 %v211, 0.0
    %v800 = vmax.f32 %v212, 0.0
    %v801 = vmax.f32 %v213, 0.0
    %v802 = vmax.f32 %v214, 0.0
    %v803 = vmax.f32 %v215, 0.0
    %v804 = vmax.f32 %v216, 0.0
    %v805 = vmax.f32 %v217, 0.0
    %v806 = vmax.f32 %v218, 0.0
    %v807 = vmax.f32 %v219, 0.0
    %v808 = vmax.f32 %v220, 0.0
    %v809 = vmax.f32 %v221, 0.0
    %v810 = vmax.f32 %v222, 0.0
    %v811 = vmax.f32 %v223, 0.0
    %v812 = vmax.f32 %v224, 0.0
    %v813 = vmax.f32 %v225, 0.0
    %v814 = vmax.f32 %v226, 0.0
    %v815 = vmax.f32 %v227, 0.0
    %v816 = vmax.f32 %v228, 0.0
    %v817 = vmax.f32 %v229, 0.0
    %v818 = vmax.f32 %v230, 0.0
    %v819 = vmax.f32 %v231, 0.0
    %v820 = vmax.f32 %v232, 0.0
    %v821 = vmax.f32 %v233, 0.0
    %v822 = vmax.f32 %v234, 0.0
    %v823 = vmax.f32 %v235, 0.0
    %v824 = vmax.f32 %v236, 0.0
    %v825 = vmax.f32 %v237, 0.0
    %v826 = vmax.f32 %v238, 0.0
    %v827 = vmax.f32 %v239, 0.0
    %v828 = vmax.f32 %v240, 0.0
    %v829 = vmax.f32 %v241, 0.0
    %v830 = vmax.f32 %v242, 0.0
    %v831 = vmax.f32 %v243, 0.0
    %v832 = vmax.f32 %v244, 0.0
    %v833 = vmax.f32 %v245, 0.0
    %v834 = vmax.f32 %v246, 0.0
    %v835 = vmax.f32 %v247, 0.0
    %v836 = vmax.f32 %v248, 0.0
    %v837 = vmax.f32 %v249, 0.0
    %v838 = vmax.f32 %v250, 0.0
    %v839 = vmax.f32 %v251, 0.0
    %v840 = vmax.f32 %v252, 0.0
    %v841 = vmax.f32 %v253, 0.0
    %v842 = vmax.f32 %v254, 0.0
    %v843 = vmax.f32 %v255, 0.0
    %v844 = vmax.f32 %v256, 0.0
    %v845 = vmax.f32 %v257, 0.0
    %v846 = vmax.f32 %v258, 0.0
    %v847 = vmax.f32 %v259, 0.0
    %v848 = vmax.f32 %v260, 0.0
    %v849 = vmax.f32 %v261, 0.0
    %v850 = vmax.f32 %v262, 0.0
    %v851 = vmax.f32 %v263, 0.0
    %v852 = vmax.f32 %v264, 0.0
    %v853 = vmax.f32 %v265, 0.0
    %v854 = vmax.f32 %v266, 0.0
    %v855 = vmax.f32 %v267, 0.0
    %v856 = vmax.f32 %v268, 0.0
    %v857 = vmax.f32 %v269, 0.0
    %v858 = vmax.f32 %v270, 0.0
    %v859 = vmax.f32 %v271, 0.0
    %v860 = vmax.f32 %v272, 0.0
    %v861 = vmax.f32 %v273, 0.0
    %v862 = vmax.f32 %v274, 0.0
    %v863 = vmax.f32 %v275, 0.0
    %v864 = vmax.f32 %v276, 0.0
    %v865 = vmax.f32 %v277, 0.0
    %v866 = vmax.f32 %v278, 0.0
    %v867 = vmax.f32 %v279, 0.0
    %v868 = vmax.f32 %v280, 0.0
    %v869 = vmax.f32 %v281, 0.0
    %v870 = vmax.f32 %v282, 0.0
    %v871 = vmax.f32 %v283, 0.0
    %v872 = vmax.f32 %v284, 0.0
    %v873 = vmax.f32 %v285, 0.0
    %v874 = vmax.f32 %v286, 0.0
    %v875 = vmax.f32 %v287, 0.0
    %v876 = vmax.f32 %v288, 0.0
    %v877 = vmax.f32 %v289, 0.0
    %v878 = vmax.f32 %v290, 0.0
    %v879 = vmax.f32 %v291, 0.0
    %v880 = vmax.f32 %v292, 0.0
    %v881 = vmax.f32 %v293, 0.0
    %v882 = vmax.f32 %v294, 0.0
    %v883 = vmax.f32 %v295, 0.0
    %v884 = vmax.f32 %v296, 0.0
    %v885 = vmax.f32 %v297, 0.0
    %v886 = vmax.f32 %v298, 0.0
    %v887 = vmax.f32 %v299, 0.0
    %v888 = vmax.f32 %v300, 0.0
    %v889 = vmax.f32 %v301, 0.0
    %v890 = vmax.f32 %v302, 0.0
    %v891 = vmax.f32 %v303, 0.0
    %v892 = vmax.f32 %v304, 0.0
    %v893 = vmax.f32 %v305, 0.0
    %v894 = vmax.f32 %v306, 0.0
    %v895 = vmax.f32 %v307, 0.0
    %v896 = vmax.f32 %v308, 0.0
    %v897 = vmax.f32 %v309, 0.0
    %v898 = vmax.f32 %v310, 0.0
    %v899 = vmax.f32 %v311, 0.0
    %v900 = vmax.f32 %v312, 0.0
    %v901 = vmax.f32 %v313, 0.0
    %v902 = vmax.f32 %v314, 0.0
    %v903 = vmax.f32 %v315, 0.0
    %v904 = vmax.f32 %v316, 0.0
    %v905 = vmax.f32 %v317, 0.0
    %v906 = vmax.f32 %v318, 0.0
    %v907 = vmax.f32 %v319, 0.0
    %v908 = vmax.f32 %v320, 0.0
    %v909 = vmax.f32 %v321, 0.0
    %v910 = vmax.f32 %v322, 0.0
    %v911 = vmax.f32 %v323, 0.0
    %v912 = vmax.f32 %v324, 0.0
    %v913 = vmax.f32 %v325, 0.0
    %v914 = vmax.f32 %v326, 0.0
    %v915 = vmax.f32 %v327, 0.0
    %v916 = vmax.f32 %v328, 0.0
    %v917 = vmax.f32 %v329, 0.0
    %v918 = vmax.f32 %v330, 0.0
    %v919 = vmax.f32 %v331, 0.0
    %v920 = vmax.f32 %v332, 0.0
    %v921 = vmax.f32 %v333, 0.0
    %v922 = vmax.f32 %v334, 0.0
    %v923 = vmax.f32 %v335, 0.0
    %v924 = vmax.f32 %v336, 0.0
    %v925 = vmax.f32 %v337, 0.0
    %v926 = vmax.f32 %v338, 0.0
    %v927 = vmax.f32 %v339, 0.0
    %v928 = vmax.f32 %v340, 0.0
    %v929 = vmax.f32 %v341, 0.0
    %v930 = vmax.f32 %v342, 0.0
    %v931 = vmax.f32 %v343, 0.0
    %v932 = vmax.f32 %v344, 0.0
    %v933 = vmax.f32 %v345, 0.0
    %v934 = vmax.f32 %v346, 0.0
    %v935 = vmax.f32 %v347, 0.0
    %v936 = vmax.f32 %v348, 0.0
    %v937 = vmax.f32 %v349, 0.0
    %v938 = vmax.f32 %v350, 0.0
    %v939 = vmax.f32 %v351, 0.0
    %v940 = vmax.f32 %v352, 0.0
    %v941 = vmax.f32 %v353, 0.0
    %v942 = vmax.f32 %v354, 0.0
    %v943 = vmax.f32 %v355, 0.0
    %v944 = vmax.f32 %v356, 0.0
    %v945 = vmax.f32 %v357, 0.0
    %v946 = vmax.f32 %v358, 0.0
    %v947 = vmax.f32 %v359, 0.0
    %v948 = vmax.f32 %v360, 0.0
    %v949 = vmax.f32 %v361, 0.0
    %v950 = vmax.f32 %v362, 0.0
    %v951 = vmax.f32 %v363, 0.0
    %v952 = vmax.f32 %v364, 0.0
    %v953 = vmax.f32 %v365, 0.0
    %v954 = vmax.f32 %v366, 0.0
    %v955 = vmax.f32 %v367, 0.0
    %v956 = vmax.f32 %v368, 0.0
    %v957 = vmax.f32 %v369, 0.0
    %v958 = vmax.f32 %v370, 0.0
    %v959 = vmax.f32 %v371, 0.0
    %v960 = vmax.f32 %v372, 0.0
    %v961 = vmax.f32 %v373, 0.0
    %v962 = vmax.f32 %v374, 0.0
    %v963 = vmax.f32 %v375, 0.0
    %v964 = vmax.f32 %v376, 0.0
    %v965 = vmax.f32 %v377, 0.0
    %v966 = vmax.f32 %v378, 0.0
    %v967 = vmax.f32 %v379, 0.0
    %v968 = vmax.f32 %v380, 0.0
    %v969 = vmax.f32 %v381, 0.0
    %v970 = vmax.f32 %v382, 0.0
    %v971 = vmax.f32 %v383, 0.0
    %v972 = vmax.f32 %v384, 0.0
    %v973 = vmax.f32 %v385, 0.0
    %v974 = vmax.f32 %v386, 0.0
    %v975 = vmax.f32 %v387, 0.0
    %v976 = vmax.f32 %v388, 0.0
    %v977 = vmax.f32 %v389, 0.0
    %v978 = vmax.f32 %v390, 0.0
    %v979 = vmax.f32 %v391, 0.0
    %v980 = vmax.f32 %v392, 0.0
    %v981 = vmax.f32 %v393, 0.0
    %v982 = vmax.f32 %v394, 0.0
    %v983 = vmax.f32 %v395, 0.0
    %v984 = vmax.f32 %v396, 0.0
    %v985 = vmax.f32 %v397, 0.0
    %v986 = vmax.f32 %v398, 0.0
    %v987 = vmax.f32 %v399, 0.0
    %v988 = vmax.f32 %v400, 0.0
    %v989 = vmax.f32 %v401, 0.0
    %v990 = vmax.f32 %v402, 0.0
    %v991 = vmax.f32 %v403, 0.0
    %v992 = vmax.f32 %v404, 0.0
    %v993 = vmax.f32 %v405, 0.0
    %v994 = vmax.f32 %v406, 0.0
    %v995 = vmax.f32 %v407, 0.0
    %v996 = vmax.f32 %v408, 0.0
    %v997 = vmax.f32 %v409, 0.0
    %v998 = vmax.f32 %v410, 0.0
    %v999 = vmax.f32 %v411, 0.0
    %v1000 = vmax.f32 %v412, 0.0
    %v1001 = vmax.f32 %v413, 0.0
    %v1002 = vmax.f32 %v414, 0.0
    %v1003 = vmax.f32 %v415, 0.0
    %v1004 = vmax.f32 %v416, 0.0
    %v1005 = vmax.f32 %v417, 0.0
    %v1006 = vmax.f32 %v418, 0.0
    %v1007 = vmax.f32 %v419, 0.0
    %v1008 = vmax.f32 %v420, 0.0
    %v1009 = vmax.f32 %v421, 0.0
    %v1010 = vmax.f32 %v422, 0.0
    %v1011 = vmax.f32 %v423, 0.0
    %v1012 = vmax.f32 %v424, 0.0
    %v1013 = vmax.f32 %v425, 0.0
    %v1014 = vmax.f32 %v426, 0.0
    %v1015 = vmax.f32 %v427, 0.0
    %v1016 = vmax.f32 %v428, 0.0
    %v1017 = vmax.f32 %v429, 0.0
    %v1018 = vmax.f32 %v430, 0.0
    %v1019 = vmax.f32 %v431, 0.0
    %v1020 = vmax.f32 %v432, 0.0
    %v1021 = vmax.f32 %v433, 0.0
    %v1022 = vmax.f32 %v434, 0.0
    %v1023 = vmax.f32 %v435, 0.0
    %v1024 = vmax.f32 %v436, 0.0
    %v1025 = vmax.f32 %v437, 0.0
    %v1026 = vmax.f32 %v438, 0.0
    %v1027 = vmax.f32 %v439, 0.0
    %v1028 = vmax.f32 %v440, 0.0
    %v1029 = vmax.f32 %v441, 0.0
    %v1030 = vmax.f32 %v442, 0.0
    %v1031 = vmax.f32 %v443, 0.0
    %v1032 = vmax.f32 %v444, 0.0
    %v1033 = vmax.f32 %v445, 0.0
    %v1034 = vmax.f32 %v446, 0.0
    %v1035 = vmax.f32 %v447, 0.0
    %v1036 = vmax.f32 %v448, 0.0
    %v1037 = vmax.f32 %v449, 0.0
    %v1038 = vmax.f32 %v450, 0.0
    %v1039 = vmax.f32 %v451, 0.0
    %v1040 = vmax.f32 %v452, 0.0
    %v1041 = vmax.f32 %v453, 0.0
    %v1042 = vmax.f32 %v454, 0.0
    %v1043 = vmax.f32 %v455, 0.0
    %v1044 = vmax.f32 %v456, 0.0
    %v1045 = vmax.f32 %v457, 0.0
    %v1046 = vmax.f32 %v458, 0.0
    %v1047 = vmax.f32 %v459, 0.0
    %v1048 = vmax.f32 %v460, 0.0
    %v1049 = vmax.f32 %v461, 0.0
    %v1050 = vmax.f32 %v462, 0.0
    %v1051 = vmax.f32 %v463, 0.0
    %v1052 = vmax.f32 %v464, 0.0
    %v1053 = vmax.f32 %v465, 0.0
    %v1054 = vmax.f32 %v466, 0.0
    %v1055 = vmax.f32 %v467, 0.0
    %v1056 = vmax.f32 %v468, 0.0
    %v1057 = vmax.f32 %v469, 0.0
    %v1058 = vmax.f32 %v470, 0.0
    %v1059 = vmax.f32 %v471, 0.0
    %v1060 = vmax.f32 %v472, 0.0
    %v1061 = vmax.f32 %v473, 0.0
    %v1062 = vmax.f32 %v474, 0.0
    %v1063 = vmax.f32 %v475, 0.0
    %v1064 = vmax.f32 %v476, 0.0
    %v1065 = vmax.f32 %v477, 0.0
    %v1066 = vmax.f32 %v478, 0.0
    %v1067 = vmax.f32 %v479, 0.0
    %v1068 = vmax.f32 %v480, 0.0
    %v1069 = vmax.f32 %v481, 0.0
    %v1070 = vmax.f32 %v482, 0.0
    %v1071 = vmax.f32 %v483, 0.0
    %v1072 = vmax.f32 %v484, 0.0
    %v1073 = vmax.f32 %v485, 0.0
    %v1074 = vmax.f32 %v486, 0.0
    %v1075 = vmax.f32 %v487, 0.0
    %v1076 = vmax.f32 %v488, 0.0
    %v1077 = vmax.f32 %v489, 0.0
    %v1078 = vmax.f32 %v490, 0.0
    %v1079 = vmax.f32 %v491, 0.0
    %v1080 = vmax.f32 %v492, 0.0
    %v1081 = vmax.f32 %v493, 0.0
    %v1082 = vmax.f32 %v494, 0.0
    %v1083 = vmax.f32 %v495, 0.0
    %v1084 = vmax.f32 %v496, 0.0
    %v1085 = vmax.f32 %v497, 0.0
    %v1086 = vmax.f32 %v498, 0.0
    %v1087 = vmax.f32 %v499, 0.0
    %v1088 = vmax.f32 %v500, 0.0
    %v1089 = vmax.f32 %v501, 0.0
    %v1090 = vmax.f32 %v502, 0.0
    %v1091 = vmax.f32 %v503, 0.0
    %v1092 = vmax.f32 %v504, 0.0
    %v1093 = vmax.f32 %v505, 0.0
    %v1094 = vmax.f32 %v506, 0.0
    %v1095 = vmax.f32 %v507, 0.0
    %v1096 = vmax.f32 %v508, 0.0
    %v1097 = vmax.f32 %v509, 0.0
    %v1098 = vmax.f32 %v510, 0.0
    %v1099 = vmax.f32 %v511, 0.0
    %v1100 = vmax.f32 %v512, 0.0
    %v1101 = vmax.f32 %v513, 0.0
    %v1102 = vmax.f32 %v514, 0.0
    %v1103 = vmax.f32 %v515, 0.0
    %v1104 = vmax.f32 %v516, 0.0
    %v1105 = vmax.f32 %v517, 0.0
    %v1106 = vmax.f32 %v518, 0.0
    %v1107 = vmax.f32 %v519, 0.0
    %v1108 = vmax.f32 %v520, 0.0
    %v1109 = vmax.f32 %v521, 0.0
    %v1110 = vmax.f32 %v522, 0.0
    %v1111 = vmax.f32 %v523, 0.0
    %v1112 = vmax.f32 %v524, 0.0
    %v1113 = vmax.f32 %v525, 0.0
    %v1114 = vmax.f32 %v526, 0.0
    %v1115 = vmax.f32 %v527, 0.0
    %v1116 = vmax.f32 %v528, 0.0
    %v1117 = vmax.f32 %v529, 0.0
    %v1118 = vmax.f32 %v530, 0.0
    %v1119 = vmax.f32 %v531, 0.0
    %v1120 = vmax.f32 %v532, 0.0
    %v1121 = vmax.f32 %v533, 0.0
    %v1122 = vmax.f32 %v534, 0.0
    %v1123 = vmax.f32 %v535, 0.0
    %v1124 = vmax.f32 %v536, 0.0
    %v1125 = vmax.f32 %v537, 0.0
    %v1126 = vmax.f32 %v538, 0.0
    %v1127 = vmax.f32 %v539, 0.0
    %v1128 = vmax.f32 %v540, 0.0
    %v1129 = vmax.f32 %v541, 0.0
    %v1130 = vmax.f32 %v542, 0.0
    %v1131 = vmax.f32 %v543, 0.0
    %v1132 = vmax.f32 %v544, 0.0
    %v1133 = vmax.f32 %v545, 0.0
    %v1134 = vmax.f32 %v546, 0.0
    %v1135 = vmax.f32 %v547, 0.0
    %v1136 = vmax.f32 %v548, 0.0
    %v1137 = vmax.f32 %v549, 0.0
    %v1138 = vmax.f32 %v550, 0.0
    %v1139 = vmax.f32 %v551, 0.0
    %v1140 = vmax.f32 %v552, 0.0
    %v1141 = vmax.f32 %v553, 0.0
    %v1142 = vmax.f32 %v554, 0.0
    %v1143 = vmax.f32 %v555, 0.0
    %v1144 = vmax.f32 %v556, 0.0
    %v1145 = vmax.f32 %v557, 0.0
    %v1146 = vmax.f32 %v558, 0.0
    %v1147 = vmax.f32 %v559, 0.0
    %v1148 = vmax.f32 %v560, 0.0
    %v1149 = vmax.f32 %v561, 0.0
    %v1150 = vmax.f32 %v562, 0.0
    %v1151 = vmax.f32 %v563, 0.0
    %v1152 = vmax.f32 %v564, 0.0
    %v1153 = vmax.f32 %v565, 0.0
    %v1154 = vmax.f32 %v566, 0.0
    %v1155 = vmax.f32 %v567, 0.0
    %v1156 = vmax.f32 %v568, 0.0
    %v1157 = vmax.f32 %v569, 0.0
    %v1158 = vmax.f32 %v570, 0.0
    %v1159 = vmax.f32 %v571, 0.0
    %v1160 = vmax.f32 %v572, 0.0
    %v1161 = vmax.f32 %v573, 0.0
    %v1162 = vmax.f32 %v574, 0.0
    %v1163 = vmax.f32 %v575, 0.0
    %v1164 = vmax.f32 %v576, 0.0
    %v1165 = vmax.f32 %v577, 0.0
    %v1166 = vmax.f32 %v578, 0.0
    %v1167 = vmax.f32 %v579, 0.0
    %v1168 = vmax.f32 %v580, 0.0
    %v1169 = vmax.f32 %v581, 0.0
    %v1170 = vmax.f32 %v582, 0.0
    %v1171 = vmax.f32 %v583, 0.0
    %v1172 = vmax.f32 %v584, 0.0
    %v1173 = vmax.f32 %v585, 0.0
    %v1174 = vmax.f32 %v586, 0.0
    %v1175 = vmax.f32 %v587, 0.0
    %v1176 = vmax.f32 %v588, 0.0
    %v1177 = vmax.f32 %v589, 0.0
    %v1178 = vmax.f32 %v590, 0.0
    %v1179 = vmax.f32 %v591, 0.0
    %v1180 = vmax.f32 %v592, 0.0
    %v1181 = vmax.f32 %v593, 0.0
    %v1182 = vmax.f32 %v594, 0.0
    %v1183 = vmax.f32 %v595, 0.0
    %v1184 = vmax.f32 %v596, 0.0
    %v1185 = vmax.f32 %v597, 0.0
    %v1186 = vmax.f32 %v598, 0.0
    %v1187 = vmax.f32 %v599, 0.0
    %v1188 = vmax.f32 %v600, 0.0
    %v1189 = vmax.f32 %v601, 0.0
    %v1190 = vmax.f32 %v602, 0.0
    %v1191 = vmax.f32 %v603, 0.0
    %v1192 = vmax.f32 %v604, 0.0
    %v1193 = vmax.f32 %v605, 0.0
    %v1194 = vmax.f32 %v606, 0.0
    %v1195 = vmax.f32 %v607, 0.0
    %v1196 = vmax.f32 %v608, 0.0
    %v1197 = vmax.f32 %v609, 0.0
    %v1198 = vmax.f32 %v610, 0.0
    %v1199 = vmax.f32 %v611, 0.0
    %v1200 = vmax.f32 %v612, 0.0
    %v1201 = vmax.f32 %v613, 0.0
    %v1202 = vmax.f32 %v614, 0.0
    %v1203 = vmax.f32 %v615, 0.0
    %v1204 = vmax.f32 %v616, 0.0
    %v1205 = vmax.f32 %v617, 0.0
    %v1206 = vmax.f32 %v618, 0.0
    %v1207 = vmax.f32 %v619, 0.0
    %v1208 = vmax.f32 %v620, 0.0
    %v1209 = vmax.f32 %v621, 0.0
    %v1210 = vmax.f32 %v622, 0.0
    %v1211 = vmax.f32 %v623, 0.0
    %v1212 = vmax.f32 %v624, 0.0
    %v1213 = vmax.f32 %v625, 0.0
    %v1214 = vmax.f32 %v626, 0.0
    %v1215 = vmax.f32 %v627, 0.0
    %v1216 = vmax.f32 %v628, 0.0
    %v1217 = vmax.f32 %v629, 0.0
    %v1218 = vmax.f32 %v630, 0.0
    %v1219 = vmax.f32 %v631, 0.0
    %v1220 = vmax.f32 %v632, 0.0
    %v1221 = vmax.f32 %v633, 0.0
    %v1222 = vmax.f32 %v634, 0.0
    %v1223 = vmax.f32 %v635, 0.0
    %v1224 = vmax.f32 %v636, 0.0
    %v1225 = vmax.f32 %v637, 0.0
    %v1226 = vmax.f32 %v638, 0.0
    %v1227 = vmax.f32 %v639, 0.0
    %v1228 = vmax.f32 %v640, 0.0
    %v1229 = vmax.f32 %v641, 0.0
    %v1230 = vmax.f32 %v642, 0.0
    %v1231 = vmax.f32 %v643, 0.0
    %v1232 = vmax.f32 %v644, 0.0
    %v1233 = vmax.f32 %v645, 0.0
    %v1234 = vmax.f32 %v646, 0.0
    %v1235 = vmax.f32 %v647, 0.0
    %v1236 = vmax.f32 %v648, 0.0
    %v1237 = vmax.f32 %v649, 0.0
    %v1238 = vmax.f32 %v650, 0.0
    %v1239 = vmax.f32 %v651, 0.0
    %v1240 = vmax.f32 %v652, 0.0
    %v1241 = vmax.f32 %v653, 0.0
    %v1242 = vmax.f32 %v654, 0.0
    %v1243 = vmax.f32 %v655, 0.0
    %v1244 = vmax.f32 %v656, 0.0
    %v1245 = vmax.f32 %v657, 0.0
    %v1246 = vpack.c.bf16 %v664, %v658
    %v1247 = vpack.c.bf16 %v665, %v659
    %v1248 = vpack.c.bf16 %v666, %v660
    %v1249 = vpack.c.bf16 %v667, %v661
    %v1250 = vpack.c.bf16 %v668, %v662
    %v1251 = vpack.c.bf16 %v669, %v663
    %v1252 = vpack.c.bf16 %v676, %v670
    %v1253 = vpack.c.bf16 %v677, %v671
    %v1254 = vpack.c.bf16 %v678, %v672
    %v1255 = vpack.c.bf16 %v679, %v673
    %v1256 = vpack.c.bf16 %v680, %v674
    %v1257 = vpack.c.bf16 %v681, %v675
    %v1258 = vpack.c.bf16 %v688, %v682
    %v1259 = vpack.c.bf16 %v689, %v683
    %v1260 = vpack.c.bf16 %v690, %v684
    %v1261 = vpack.c.bf16 %v691, %v685
    %v1262 = vpack.c.bf16 %v692, %v686
    %v1263 = vpack.c.bf16 %v693, %v687
    %v1264 = vpack.c.bf16 %v700, %v694
    %v1265 = vpack.c.bf16 %v701, %v695
    %v1266 = vpack.c.bf16 %v702, %v696
    %v1267 = vpack.c.bf16 %v703, %v697
    %v1268 = vpack.c.bf16 %v704, %v698
    %v1269 = vpack.c.bf16 %v705, %v699
    %v1270 = vpack.c.bf16 %v712, %v706
    %v1271 = vpack.c.bf16 %v713, %v707
    %v1272 = vpack.c.bf16 %v714, %v708
    %v1273 = vpack.c.bf16 %v715, %v709
    %v1274 = vpack.c.bf16 %v716, %v710
    %v1275 = vpack.c.bf16 %v717, %v711
    %v1276 = vpack.c.bf16 %v724, %v718
    %v1277 = vpack.c.bf16 %v725, %v719
    %v1278 = vpack.c.bf16 %v726, %v720
    %v1279 = vpack.c.bf16 %v727, %v721
    %v1280 = vpack.c.bf16 %v728, %v722
    %v1281 = vpack.c.bf16 %v729, %v723
    %v1282 = vpack.c.bf16 %v736, %v730
    %v1283 = vpack.c.bf16 %v737, %v731
    %v1284 = vpack.c.bf16 %v738, %v732
    %v1285 = vpack.c.bf16 %v739, %v733
    %v1286 = vpack.c.bf16 %v740, %v734
    %v1287 = vpack.c.bf16 %v741, %v735
    %v1288 = vpack.c.bf16 %v748, %v742
    %v1289 = vpack.c.bf16 %v749, %v743
    %v1290 = vpack.c.bf16 %v750, %v744
    %v1291 = vpack.c.bf16 %v751, %v745
    %v1292 = vpack.c.bf16 %v752, %v746
    %v1293 = vpack.c.bf16 %v753, %v747
    %v1294 = vpack.c.bf16 %v760, %v754
    %v1295 = vpack.c.bf16 %v761, %v755
    %v1296 = vpack.c.bf16 %v762, %v756
    %v1297 = vpack.c.bf16 %v763, %v757
    %v1298 = vpack.c.bf16 %v764, %v758
    %v1299 = vpack.c.bf16 %v765, %v759
    %v1300 = vpack.c.bf16 %v772, %v766
    %v1301 = vpack.c.bf16 %v773, %v767
    %v1302 = vpack.c.bf16 %v774, %v768
    %v1303 = vpack.c.bf16 %v775, %v769
    %v1304 = vpack.c.bf16 %v776, %v770
    %v1305 = vpack.c.bf16 %v777, %v771
    %v1306 = vpack.c.bf16 %v784, %v778
    %v1307 = vpack.c.bf16 %v785, %v779
    %v1308 = vpack.c.bf16 %v786, %v780
    %v1309 = vpack.c.bf16 %v787, %v781
    %v1310 = vpack.c.bf16 %v788, %v782
    %v1311 = vpack.c.bf16 %v789, %v783
    %v1312 = vpack.c.bf16 %v796, %v790
    %v1313 = vpack.c.bf16 %v797, %v791
    %v1314 = vpack.c.bf16 %v798, %v792
    %v1315 = vpack.c.bf16 %v799, %v793
    %v1316 = vpack.c.bf16 %v800, %v794
    %v1317 = vpack.c.bf16 %v801, %v795
    %v1318 = vpack.c.bf16 %v808, %v802
    %v1319 = vpack.c.bf16 %v809, %v803
    %v1320 = vpack.c.bf16 %v810, %v804
    %v1321 = vpack.c.bf16 %v811, %v805
    %v1322 = vpack.c.bf16 %v812, %v806
    %v1323 = vpack.c.bf16 %v813, %v807
    %v1324 = vpack.c.bf16 %v820, %v814
    %v1325 = vpack.c.bf16 %v821, %v815
    %v1326 = vpack.c.bf16 %v822, %v816
    %v1327 = vpack.c.bf16 %v823, %v817
    %v1328 = vpack.c.bf16 %v824, %v818
    %v1329 = vpack.c.bf16 %v825, %v819
    %v1330 = vpack.c.bf16 %v832, %v826
    %v1331 = vpack.c.bf16 %v833, %v827
    %v1332 = vpack.c.bf16 %v834, %v828
    %v1333 = vpack.c.bf16 %v835, %v829
    %v1334 = vpack.c.bf16 %v836, %v830
    %v1335 = vpack.c.bf16 %v837, %v831
    %v1336 = vpack.c.bf16 %v844, %v838
    %v1337 = vpack.c.bf16 %v845, %v839
    %v1338 = vpack.c.bf16 %v846, %v840
    %v1339 = vpack.c.bf16 %v847, %v841
    %v1340 = vpack.c.bf16 %v848, %v842
    %v1341 = vpack.c.bf16 %v849, %v843
    %v1342 = vpack.c.bf16 %v856, %v850
    %v1343 = vpack.c.bf16 %v857, %v851
    %v1344 = vpack.c.bf16 %v858, %v852
    %v1345 = vpack.c.bf16 %v859, %v853
    %v1346 = vpack.c.bf16 %v860, %v854
    %v1347 = vpack.c.bf16 %v861, %v855
    %v1348 = vpack.c.bf16 %v868, %v862
    %v1349 = vpack.c.bf16 %v869, %v863
    %v1350 = vpack.c.bf16 %v870, %v864
    %v1351 = vpack.c.bf16 %v871, %v865
    %v1352 = vpack.c.bf16 %v872, %v866
    %v1353 = vpack.c.bf16 %v873, %v867
    %v1354 = vpack.c.bf16 %v880, %v874
    %v1355 = vpack.c.bf16 %v881, %v875
    %v1356 = vpack.c.bf16 %v882, %v876
    %v1357 = vpack.c.bf16 %v883, %v877
    %v1358 = vpack.c.bf16 %v884, %v878
    %v1359 = vpack.c.bf16 %v885, %v879
    %v1360 = vpack.c.bf16 %v892, %v886
    %v1361 = vpack.c.bf16 %v893, %v887
    %v1362 = vpack.c.bf16 %v894, %v888
    %v1363 = vpack.c.bf16 %v895, %v889
    %v1364 = vpack.c.bf16 %v896, %v890
    %v1365 = vpack.c.bf16 %v897, %v891
    %v1366 = vpack.c.bf16 %v904, %v898
    %v1367 = vpack.c.bf16 %v905, %v899
    %v1368 = vpack.c.bf16 %v906, %v900
    %v1369 = vpack.c.bf16 %v907, %v901
    %v1370 = vpack.c.bf16 %v908, %v902
    %v1371 = vpack.c.bf16 %v909, %v903
    %v1372 = vpack.c.bf16 %v916, %v910
    %v1373 = vpack.c.bf16 %v917, %v911
    %v1374 = vpack.c.bf16 %v918, %v912
    %v1375 = vpack.c.bf16 %v919, %v913
    %v1376 = vpack.c.bf16 %v920, %v914
    %v1377 = vpack.c.bf16 %v921, %v915
    %v1378 = vpack.c.bf16 %v928, %v922
    %v1379 = vpack.c.bf16 %v929, %v923
    %v1380 = vpack.c.bf16 %v930, %v924
    %v1381 = vpack.c.bf16 %v931, %v925
    %v1382 = vpack.c.bf16 %v932, %v926
    %v1383 = vpack.c.bf16 %v933, %v927
    %v1384 = vpack.c.bf16 %v940, %v934
    %v1385 = vpack.c.bf16 %v941, %v935
    %v1386 = vpack.c.bf16 %v942, %v936
    %v1387 = vpack.c.bf16 %v943, %v937
    %v1388 = vpack.c.bf16 %v944, %v938
    %v1389 = vpack.c.bf16 %v945, %v939
    %v1390 = vpack.c.bf16 %v952, %v946
    %v1391 = vpack.c.bf16 %v953, %v947
    %v1392 = vpack.c.bf16 %v954, %v948
    %v1393 = vpack.c.bf16 %v955, %v949
    %v1394 = vpack.c.bf16 %v956, %v950
    %v1395 = vpack.c.bf16 %v957, %v951
    %v1396 = vpack.c.bf16 %v964, %v958
    %v1397 = vpack.c.bf16 %v965, %v959
    %v1398 = vpack.c.bf16 %v966, %v960
    %v1399 = vpack.c.bf16 %v967, %v961
    %v1400 = vpack.c.bf16 %v968, %v962
    %v1401 = vpack.c.bf16 %v969, %v963
    %v1402 = vpack.c.bf16 %v976, %v970
    %v1403 = vpack.c.bf16 %v977, %v971
    %v1404 = vpack.c.bf16 %v978, %v972
    %v1405 = vpack.c.bf16 %v979, %v973
    %v1406 = vpack.c.bf16 %v980, %v974
    %v1407 = vpack.c.bf16 %v981, %v975
    %v1408 = vpack.c.bf16 %v988, %v982
    %v1409 = vpack.c.bf16 %v989, %v983
    %v1410 = vpack.c.bf16 %v990, %v984
    %v1411 = vpack.c.bf16 %v991, %v985
    %v1412 = vpack.c.bf16 %v992, %v986
    %v1413 = vpack.c.bf16 %v993, %v987
    %v1414 = vpack.c.bf16 %v1000, %v994
    %v1415 = vpack.c.bf16 %v1001, %v995
    %v1416 = vpack.c.bf16 %v1002, %v996
    %v1417 = vpack.c.bf16 %v1003, %v997
    %v1418 = vpack.c.bf16 %v1004, %v998
    %v1419 = vpack.c.bf16 %v1005, %v999
    %v1420 = vpack.c.bf16 %v1012, %v1006
    %v1421 = vpack.c.bf16 %v1013, %v1007
    %v1422 = vpack.c.bf16 %v1014, %v1008
    %v1423 = vpack.c.bf16 %v1015, %v1009
    %v1424 = vpack.c.bf16 %v1016, %v1010
    %v1425 = vpack.c.bf16 %v1017, %v1011
    %v1426 = vpack.c.bf16 %v1024, %v1018
    %v1427 = vpack.c.bf16 %v1025, %v1019
    %v1428 = vpack.c.bf16 %v1026, %v1020
    %v1429 = vpack.c.bf16 %v1027, %v1021
    %v1430 = vpack.c.bf16 %v1028, %v1022
    %v1431 = vpack.c.bf16 %v1029, %v1023
    %v1432 = vpack.c.bf16 %v1036, %v1030
    %v1433 = vpack.c.bf16 %v1037, %v1031
    %v1434 = vpack.c.bf16 %v1038, %v1032
    %v1435 = vpack.c.bf16 %v1039, %v1033
    %v1436 = vpack.c.bf16 %v1040, %v1034
    %v1437 = vpack.c.bf16 %v1041, %v1035
    %v1438 = vpack.c.bf16 %v1048, %v1042
    %v1439 = vpack.c.bf16 %v1049, %v1043
    %v1440 = vpack.c.bf16 %v1050, %v1044
    %v1441 = vpack.c.bf16 %v1051, %v1045
    %v1442 = vpack.c.bf16 %v1052, %v1046
    %v1443 = vpack.c.bf16 %v1053, %v1047
    %v1444 = vpack.c.bf16 %v1060, %v1054
    %v1445 = vpack.c.bf16 %v1061, %v1055
    %v1446 = vpack.c.bf16 %v1062, %v1056
    %v1447 = vpack.c.bf16 %v1063, %v1057
    %v1448 = vpack.c.bf16 %v1064, %v1058
    %v1449 = vpack.c.bf16 %v1065, %v1059
    %v1450 = vpack.c.bf16 %v1072, %v1066
    %v1451 = vpack.c.bf16 %v1073, %v1067
    %v1452 = vpack.c.bf16 %v1074, %v1068
    %v1453 = vpack.c.bf16 %v1075, %v1069
    %v1454 = vpack.c.bf16 %v1076, %v1070
    %v1455 = vpack.c.bf16 %v1077, %v1071
    %v1456 = vpack.c.bf16 %v1084, %v1078
    %v1457 = vpack.c.bf16 %v1085, %v1079
    %v1458 = vpack.c.bf16 %v1086, %v1080
    %v1459 = vpack.c.bf16 %v1087, %v1081
    %v1460 = vpack.c.bf16 %v1088, %v1082
    %v1461 = vpack.c.bf16 %v1089, %v1083
    %v1462 = vpack.c.bf16 %v1096, %v1090
    %v1463 = vpack.c.bf16 %v1097, %v1091
    %v1464 = vpack.c.bf16 %v1098, %v1092
    %v1465 = vpack.c.bf16 %v1099, %v1093
    %v1466 = vpack.c.bf16 %v1100, %v1094
    %v1467 = vpack.c.bf16 %v1101, %v1095
    %v1468 = vpack.c.bf16 %v1108, %v1102
    %v1469 = vpack.c.bf16 %v1109, %v1103
    %v1470 = vpack.c.bf16 %v1110, %v1104
    %v1471 = vpack.c.bf16 %v1111, %v1105
    %v1472 = vpack.c.bf16 %v1112, %v1106
    %v1473 = vpack.c.bf16 %v1113, %v1107
    %v1474 = vpack.c.bf16 %v1120, %v1114
    %v1475 = vpack.c.bf16 %v1121, %v1115
    %v1476 = vpack.c.bf16 %v1122, %v1116
    %v1477 = vpack.c.bf16 %v1123, %v1117
    %v1478 = vpack.c.bf16 %v1124, %v1118
    %v1479 = vpack.c.bf16 %v1125, %v1119
    %v1480 = vpack.c.bf16 %v1132, %v1126
    %v1481 = vpack.c.bf16 %v1133, %v1127
    %v1482 = vpack.c.bf16 %v1134, %v1128
    %v1483 = vpack.c.bf16 %v1135, %v1129
    %v1484 = vpack.c.bf16 %v1136, %v1130
    %v1485 = vpack.c.bf16 %v1137, %v1131
    %v1486 = vpack.c.bf16 %v1144, %v1138
    %v1487 = vpack.c.bf16 %v1145, %v1139
    %v1488 = vpack.c.bf16 %v1146, %v1140
    %v1489 = vpack.c.bf16 %v1147, %v1141
    %v1490 = vpack.c.bf16 %v1148, %v1142
    %v1491 = vpack.c.bf16 %v1149, %v1143
    %v1492 = vpack.c.bf16 %v1156, %v1150
    %v1493 = vpack.c.bf16 %v1157, %v1151
    %v1494 = vpack.c.bf16 %v1158, %v1152
    %v1495 = vpack.c.bf16 %v1159, %v1153
    %v1496 = vpack.c.bf16 %v1160, %v1154
    %v1497 = vpack.c.bf16 %v1161, %v1155
    %v1498 = vpack.c.bf16 %v1168, %v1162
    %v1499 = vpack.c.bf16 %v1169, %v1163
    %v1500 = vpack.c.bf16 %v1170, %v1164
    %v1501 = vpack.c.bf16 %v1171, %v1165
    %v1502 = vpack.c.bf16 %v1172, %v1166
    %v1503 = vpack.c.bf16 %v1173, %v1167
    %v1504 = vpack.c.bf16 %v1180, %v1174
    %v1505 = vpack.c.bf16 %v1181, %v1175
    %v1506 = vpack.c.bf16 %v1182, %v1176
    %v1507 = vpack.c.bf16 %v1183, %v1177
    %v1508 = vpack.c.bf16 %v1184, %v1178
    %v1509 = vpack.c.bf16 %v1185, %v1179
    %v1510 = vpack.c.bf16 %v1192, %v1186
    %v1511 = vpack.c.bf16 %v1193, %v1187
    %v1512 = vpack.c.bf16 %v1194, %v1188
    %v1513 = vpack.c.bf16 %v1195, %v1189
    %v1514 = vpack.c.bf16 %v1196, %v1190
    %v1515 = vpack.c.bf16 %v1197, %v1191
    %v1516 = vpack.c.bf16 %v1204, %v1198
    %v1517 = vpack.c.bf16 %v1205, %v1199
    %v1518 = vpack.c.bf16 %v1206, %v1200
    %v1519 = vpack.c.bf16 %v1207, %v1201
    %v1520 = vpack.c.bf16 %v1208, %v1202
    %v1521 = vpack.c.bf16 %v1209, %v1203
    %v1522 = vpack.c.bf16 %v1216, %v1210
    %v1523 = vpack.c.bf16 %v1217, %v1211
    %v1524 = vpack.c.bf16 %v1218, %v1212
    %v1525 = vpack.c.bf16 %v1219, %v1213
    %v1526 = vpack.c.bf16 %v1220, %v1214
    %v1527 = vpack.c.bf16 %v1221, %v1215
    %v1528 = vpack.c.bf16 %v1228, %v1222
    %v1529 = vpack.c.bf16 %v1229, %v1223
    %v1530 = vpack.c.bf16 %v1230, %v1224
    %v1531 = vpack.c.bf16 %v1231, %v1225
    %v1532 = vpack.c.bf16 %v1232, %v1226
    %v1533 = vpack.c.bf16 %v1233, %v1227
    %v1534 = vpack.c.bf16 %v1240, %v1234
    %v1535 = vpack.c.bf16 %v1241, %v1235
    %v1536 = vpack.c.bf16 %v1242, %v1236
    %v1537 = vpack.c.bf16 %v1243, %v1237
    %v1538 = vpack.c.bf16 %v1244, %v1238
    %v1539 = vpack.c.bf16 %v1245, %v1239
    %v1540 = vld [vmem:[#allocation5] sm:$0xff]
    %v1541 = vld [vmem:[#allocation5 + $0x8] sm:$0xff]
    %v1542 = vld [vmem:[#allocation5 + $0x10] sm:$0xff]
    %v1543 = vld [vmem:[#allocation5 + $0x18] sm:$0xff]
    %v1544 = vld [vmem:[#allocation5 + $0x20] sm:$0xff]
    %v1545 = vld [vmem:[#allocation5 + $0x28] sm:$0xff]
    %v1546 = vld [vmem:[#allocation5 + $0x30] sm:$0xff]
    %v1547 = vld [vmem:[#allocation5 + $0x38] sm:$0xff]
    %v1548 = vld [vmem:[#allocation5 + $0x40] sm:$0xff]
    %v1549 = vld [vmem:[#allocation5 + $0x48] sm:$0xff]
    %v1550 = vld [vmem:[#allocation5 + $0x50] sm:$0xff]
    %v1551 = vld [vmem:[#allocation5 + $0x58] sm:$0xff]
    %v1552 = vld [vmem:[#allocation5 + $0x60] sm:$0xff]
    %v1553 = vld [vmem:[#allocation5 + $0x68] sm:$0xff]
    %v1554 = vld [vmem:[#allocation5 + $0x70] sm:$0xff]
    %v1555 = vld [vmem:[#allocation5 + $0x78] sm:$0xff]
    %v1556 = vld [vmem:[#allocation5 + $0x80] sm:$0xff]
    %v1557 = vld [vmem:[#allocation5 + $0x88] sm:$0xff]
    %v1558 = vld [vmem:[#allocation5 + $0x90] sm:$0xff]
    %v1559 = vld [vmem:[#allocation5 + $0x98] sm:$0xff]
    %v1560 = vld [vmem:[#allocation5 + $0xa0] sm:$0xff]
    %v1561 = vld [vmem:[#allocation5 + $0xa8] sm:$0xff]
    %v1562 = vld [vmem:[#allocation5 + $0xb0] sm:$0xff]
    %v1563 = vld [vmem:[#allocation5 + $0xb8] sm:$0xff]
    %v1564 = vld [vmem:[#allocation5 + $0xc0] sm:$0xff]
    %v1565 = vld [vmem:[#allocation5 + $0xc8] sm:$0xff]
    %v1566 = vld [vmem:[#allocation5 + $0xd0] sm:$0xff]
    %v1567 = vld [vmem:[#allocation5 + $0xd8] sm:$0xff]
    %v1568 = vld [vmem:[#allocation5 + $0xe0] sm:$0xff]
    %v1569 = vld [vmem:[#allocation5 + $0xe8] sm:$0xff]
    %v1570 = vld [vmem:[#allocation5 + $0xf0] sm:$0xff]
    %v1571 = vld [vmem:[#allocation5 + $0xf8] sm:$0xff]
    %v1572 = vld [vmem:[#allocation5 + $0x100] sm:$0xff]
    %v1573 = vld [vmem:[#allocation5 + $0x108] sm:$0xff]
    %v1574 = vld [vmem:[#allocation5 + $0x110] sm:$0xff]
    %v1575 = vld [vmem:[#allocation5 + $0x118] sm:$0xff]
    %v1576 = vld [vmem:[#allocation5 + $0x120] sm:$0xff]
    %v1577 = vld [vmem:[#allocation5 + $0x128] sm:$0xff]
    %v1578 = vld [vmem:[#allocation5 + $0x130] sm:$0xff]
    %v1579 = vld [vmem:[#allocation5 + $0x138] sm:$0xff]
    %v1580 = vld [vmem:[#allocation5 + $0x140] sm:$0xff]
    %v1581 = vld [vmem:[#allocation5 + $0x148] sm:$0xff]
    %v1582 = vld [vmem:[#allocation5 + $0x150] sm:$0xff]
    %v1583 = vld [vmem:[#allocation5 + $0x158] sm:$0xff]
    %v1584 = vld [vmem:[#allocation5 + $0x160] sm:$0xff]
    %v1585 = vld [vmem:[#allocation5 + $0x168] sm:$0xff]
    %v1586 = vld [vmem:[#allocation5 + $0x170] sm:$0xff]
    %v1587 = vld [vmem:[#allocation5 + $0x178] sm:$0xff]
    %v1588 = vld [vmem:[#allocation5 + $0x180] sm:$0xff]
    %v1589 = vld [vmem:[#allocation5 + $0x188] sm:$0xff]
    %v1590 = vld [vmem:[#allocation5 + $0x190] sm:$0xff]
    %v1591 = vld [vmem:[#allocation5 + $0x198] sm:$0xff]
    %v1592 = vld [vmem:[#allocation5 + $0x1a0] sm:$0xff]
    %v1593 = vld [vmem:[#allocation5 + $0x1a8] sm:$0xff]
    %v1594 = vld [vmem:[#allocation5 + $0x1b0] sm:$0xff]
    %v1595 = vld [vmem:[#allocation5 + $0x1b8] sm:$0xff]
    %v1596 = vld [vmem:[#allocation5 + $0x1c0] sm:$0xff]
    %v1597 = vld [vmem:[#allocation5 + $0x1c8] sm:$0xff]
    %v1598 = vld [vmem:[#allocation5 + $0x1d0] sm:$0xff]
    %v1599 = vld [vmem:[#allocation5 + $0x1d8] sm:$0xff]
    %v1600 = vld [vmem:[#allocation5 + $0x1e0] sm:$0xff]
    %v1601 = vld [vmem:[#allocation5 + $0x1e8] sm:$0xff]
    %v1602 = vld [vmem:[#allocation5 + $0x1f0] sm:$0xff]
    %v1603 = vld [vmem:[#allocation5 + $0x1f8] sm:$0xff]
    %v1604 = vld [vmem:[#allocation5 + $0x200] sm:$0xff]
    %v1605 = vld [vmem:[#allocation5 + $0x208] sm:$0xff]
    %v1606 = vld [vmem:[#allocation5 + $0x210] sm:$0xff]
    %v1607 = vld [vmem:[#allocation5 + $0x218] sm:$0xff]
    %v1608 = vld [vmem:[#allocation5 + $0x220] sm:$0xff]
    %v1609 = vld [vmem:[#allocation5 + $0x228] sm:$0xff]
    %v1610 = vld [vmem:[#allocation5 + $0x230] sm:$0xff]
    %v1611 = vld [vmem:[#allocation5 + $0x238] sm:$0xff]
    %v1612 = vld [vmem:[#allocation5 + $0x240] sm:$0xff]
    %v1613 = vld [vmem:[#allocation5 + $0x248] sm:$0xff]
    %v1614 = vld [vmem:[#allocation5 + $0x250] sm:$0xff]
    %v1615 = vld [vmem:[#allocation5 + $0x258] sm:$0xff]
    %v1616 = vld [vmem:[#allocation5 + $0x260] sm:$0xff]
    %v1617 = vld [vmem:[#allocation5 + $0x268] sm:$0xff]
    %v1618 = vld [vmem:[#allocation5 + $0x270] sm:$0xff]
    %v1619 = vld [vmem:[#allocation5 + $0x278] sm:$0xff]
    %v1620 = vld [vmem:[#allocation5 + $0x280] sm:$0xff]
    %v1621 = vld [vmem:[#allocation5 + $0x288] sm:$0xff]
    %v1622 = vld [vmem:[#allocation5 + $0x290] sm:$0xff]
    %v1623 = vld [vmem:[#allocation5 + $0x298] sm:$0xff]
    %v1624 = vld [vmem:[#allocation5 + $0x2a0] sm:$0xff]
    %v1625 = vld [vmem:[#allocation5 + $0x2a8] sm:$0xff]
    %v1626 = vld [vmem:[#allocation5 + $0x2b0] sm:$0xff]
    %v1627 = vld [vmem:[#allocation5 + $0x2b8] sm:$0xff]
    %v1628 = vld [vmem:[#allocation5 + $0x2c0] sm:$0xff]
    %v1629 = vld [vmem:[#allocation5 + $0x2c8] sm:$0xff]
    %v1630 = vld [vmem:[#allocation5 + $0x2d0] sm:$0xff]
    %v1631 = vld [vmem:[#allocation5 + $0x2d8] sm:$0xff]
    %v1632 = vld [vmem:[#allocation5 + $0x2e0] sm:$0xff]
    %v1633 = vld [vmem:[#allocation5 + $0x2e8] sm:$0xff]
    %v1634 = vld [vmem:[#allocation5 + $0x2f0] sm:$0xff]
    %v1635 = vld [vmem:[#allocation5 + $0x2f8] sm:$0xff]
    %v1636 = vld [vmem:[#allocation5 + $0x300] sm:$0xff]
    %v1637 = vld [vmem:[#allocation5 + $0x308] sm:$0xff]
    %v1638 = vld [vmem:[#allocation5 + $0x310] sm:$0xff]
    %v1639 = vld [vmem:[#allocation5 + $0x318] sm:$0xff]
    %v1640 = vld [vmem:[#allocation5 + $0x320] sm:$0xff]
    %v1641 = vld [vmem:[#allocation5 + $0x328] sm:$0xff]
    %v1642 = vld [vmem:[#allocation5 + $0x330] sm:$0xff]
    %v1643 = vld [vmem:[#allocation5 + $0x338] sm:$0xff]
    %v1644 = vld [vmem:[#allocation5 + $0x340] sm:$0xff]
    %v1645 = vld [vmem:[#allocation5 + $0x348] sm:$0xff]
    %v1646 = vld [vmem:[#allocation5 + $0x350] sm:$0xff]
    %v1647 = vld [vmem:[#allocation5 + $0x358] sm:$0xff]
    %v1648 = vld [vmem:[#allocation5 + $0x360] sm:$0xff]
    %v1649 = vld [vmem:[#allocation5 + $0x368] sm:$0xff]
    %v1650 = vld [vmem:[#allocation5 + $0x370] sm:$0xff]
    %v1651 = vld [vmem:[#allocation5 + $0x378] sm:$0xff]
    %v1652 = vld [vmem:[#allocation5 + $0x380] sm:$0xff]
    %v1653 = vld [vmem:[#allocation5 + $0x388] sm:$0xff]
    %v1654 = vld [vmem:[#allocation5 + $0x390] sm:$0xff]
    %v1655 = vld [vmem:[#allocation5 + $0x398] sm:$0xff]
    %v1656 = vld [vmem:[#allocation5 + $0x3a0] sm:$0xff]
    %v1657 = vld [vmem:[#allocation5 + $0x3a8] sm:$0xff]
    %v1658 = vld [vmem:[#allocation5 + $0x3b0] sm:$0xff]
    %v1659 = vld [vmem:[#allocation5 + $0x3b8] sm:$0xff]
    %v1660 = vld [vmem:[#allocation5 + $0x3c0] sm:$0xff]
    %v1661 = vld [vmem:[#allocation5 + $0x3c8] sm:$0xff]
    %v1662 = vld [vmem:[#allocation5 + $0x3d0] sm:$0xff]
    %v1663 = vld [vmem:[#allocation5 + $0x3d8] sm:$0xff]
    %v1664 = vld [vmem:[#allocation5 + $0x3e0] sm:$0xff]
    %v1665 = vld [vmem:[#allocation5 + $0x3e8] sm:$0xff]
    %v1666 = vld [vmem:[#allocation5 + $0x3f0] sm:$0xff]
    %v1667 = vld [vmem:[#allocation5 + $0x3f8] sm:$0xff]
    %v1668 = vld [vmem:[#allocation5 + $0x400] sm:$0xff]
    %v1669 = vld [vmem:[#allocation5 + $0x408] sm:$0xff]
    %v1670 = vld [vmem:[#allocation5 + $0x410] sm:$0xff]
    %v1671 = vld [vmem:[#allocation5 + $0x418] sm:$0xff]
    %v1672 = vld [vmem:[#allocation5 + $0x420] sm:$0xff]
    %v1673 = vld [vmem:[#allocation5 + $0x428] sm:$0xff]
    %v1674 = vld [vmem:[#allocation5 + $0x430] sm:$0xff]
    %v1675 = vld [vmem:[#allocation5 + $0x438] sm:$0xff]
    %v1676 = vld [vmem:[#allocation5 + $0x440] sm:$0xff]
    %v1677 = vld [vmem:[#allocation5 + $0x448] sm:$0xff]
    %v1678 = vld [vmem:[#allocation5 + $0x450] sm:$0xff]
    %v1679 = vld [vmem:[#allocation5 + $0x458] sm:$0xff]
    %v1680 = vld [vmem:[#allocation5 + $0x460] sm:$0xff]
    %v1681 = vld [vmem:[#allocation5 + $0x468] sm:$0xff]
    %v1682 = vld [vmem:[#allocation5 + $0x470] sm:$0xff]
    %v1683 = vld [vmem:[#allocation5 + $0x478] sm:$0xff]
    %v1684 = vld [vmem:[#allocation5 + $0x480] sm:$0xff]
    %v1685 = vld [vmem:[#allocation5 + $0x488] sm:$0xff]
    %v1686 = vld [vmem:[#allocation5 + $0x490] sm:$0xff]
    %v1687 = vld [vmem:[#allocation5 + $0x498] sm:$0xff]
    %v1688 = vld [vmem:[#allocation5 + $0x4a0] sm:$0xff]
    %v1689 = vld [vmem:[#allocation5 + $0x4a8] sm:$0xff]
    %v1690 = vld [vmem:[#allocation5 + $0x4b0] sm:$0xff]
    %v1691 = vld [vmem:[#allocation5 + $0x4b8] sm:$0xff]
    %v1692 = vld [vmem:[#allocation5 + $0x4c0] sm:$0xff]
    %v1693 = vld [vmem:[#allocation5 + $0x4c8] sm:$0xff]
    %v1694 = vld [vmem:[#allocation5 + $0x4d0] sm:$0xff]
    %v1695 = vld [vmem:[#allocation5 + $0x4d8] sm:$0xff]
    %v1696 = vld [vmem:[#allocation5 + $0x4e0] sm:$0xff]
    %v1697 = vld [vmem:[#allocation5 + $0x4e8] sm:$0xff]
    %v1698 = vld [vmem:[#allocation5 + $0x4f0] sm:$0xff]
    %v1699 = vld [vmem:[#allocation5 + $0x4f8] sm:$0xff]
    %v1700 = vld [vmem:[#allocation5 + $0x500] sm:$0xff]
    %v1701 = vld [vmem:[#allocation5 + $0x508] sm:$0xff]
    %v1702 = vld [vmem:[#allocation5 + $0x510] sm:$0xff]
    %v1703 = vld [vmem:[#allocation5 + $0x518] sm:$0xff]
    %v1704 = vld [vmem:[#allocation5 + $0x520] sm:$0xff]
    %v1705 = vld [vmem:[#allocation5 + $0x528] sm:$0xff]
    %v1706 = vld [vmem:[#allocation5 + $0x530] sm:$0xff]
    %v1707 = vld [vmem:[#allocation5 + $0x538] sm:$0xff]
    %v1708 = vld [vmem:[#allocation5 + $0x540] sm:$0xff]
    %v1709 = vld [vmem:[#allocation5 + $0x548] sm:$0xff]
    %v1710 = vld [vmem:[#allocation5 + $0x550] sm:$0xff]
    %v1711 = vld [vmem:[#allocation5 + $0x558] sm:$0xff]
    %v1712 = vld [vmem:[#allocation5 + $0x560] sm:$0xff]
    %v1713 = vld [vmem:[#allocation5 + $0x568] sm:$0xff]
    %v1714 = vld [vmem:[#allocation5 + $0x570] sm:$0xff]
    %v1715 = vld [vmem:[#allocation5 + $0x578] sm:$0xff]
    %v1716 = vld [vmem:[#allocation5 + $0x580] sm:$0xff]
    %v1717 = vld [vmem:[#allocation5 + $0x588] sm:$0xff]
    %v1718 = vld [vmem:[#allocation5 + $0x590] sm:$0xff]
    %v1719 = vld [vmem:[#allocation5 + $0x598] sm:$0xff]
    %v1720 = vld [vmem:[#allocation5 + $0x5a0] sm:$0xff]
    %v1721 = vld [vmem:[#allocation5 + $0x5a8] sm:$0xff]
    %v1722 = vld [vmem:[#allocation5 + $0x5b0] sm:$0xff]
    %v1723 = vld [vmem:[#allocation5 + $0x5b8] sm:$0xff]
    %v1724 = vld [vmem:[#allocation5 + $0x5c0] sm:$0xff]
    %v1725 = vld [vmem:[#allocation5 + $0x5c8] sm:$0xff]
    %v1726 = vld [vmem:[#allocation5 + $0x5d0] sm:$0xff]
    %v1727 = vld [vmem:[#allocation5 + $0x5d8] sm:$0xff]
    %v1728 = vld [vmem:[#allocation5 + $0x5e0] sm:$0xff]
    %v1729 = vld [vmem:[#allocation5 + $0x5e8] sm:$0xff]
    %v1730 = vld [vmem:[#allocation5 + $0x5f0] sm:$0xff]
    %v1731 = vld [vmem:[#allocation5 + $0x5f8] sm:$0xff]
    %v1732 = vld [vmem:[#allocation5 + $0x600] sm:$0xff]
    %v1733 = vld [vmem:[#allocation5 + $0x608] sm:$0xff]
    %v1734 = vld [vmem:[#allocation5 + $0x610] sm:$0xff]
    %v1735 = vld [vmem:[#allocation5 + $0x618] sm:$0xff]
    %v1736 = vld [vmem:[#allocation5 + $0x620] sm:$0xff]
    %v1737 = vld [vmem:[#allocation5 + $0x628] sm:$0xff]
    %v1738 = vld [vmem:[#allocation5 + $0x630] sm:$0xff]
    %v1739 = vld [vmem:[#allocation5 + $0x638] sm:$0xff]
    %v1740 = vld [vmem:[#allocation5 + $0x640] sm:$0xff]
    %v1741 = vld [vmem:[#allocation5 + $0x648] sm:$0xff]
    %v1742 = vld [vmem:[#allocation5 + $0x650] sm:$0xff]
    %v1743 = vld [vmem:[#allocation5 + $0x658] sm:$0xff]
    %v1744 = vld [vmem:[#allocation5 + $0x660] sm:$0xff]
    %v1745 = vld [vmem:[#allocation5 + $0x668] sm:$0xff]
    %v1746 = vld [vmem:[#allocation5 + $0x670] sm:$0xff]
    %v1747 = vld [vmem:[#allocation5 + $0x678] sm:$0xff]
    %v1748 = vld [vmem:[#allocation5 + $0x680] sm:$0xff]
    %v1749 = vld [vmem:[#allocation5 + $0x688] sm:$0xff]
    %v1750 = vld [vmem:[#allocation5 + $0x690] sm:$0xff]
    %v1751 = vld [vmem:[#allocation5 + $0x698] sm:$0xff]
    %v1752 = vld [vmem:[#allocation5 + $0x6a0] sm:$0xff]
    %v1753 = vld [vmem:[#allocation5 + $0x6a8] sm:$0xff]
    %v1754 = vld [vmem:[#allocation5 + $0x6b0] sm:$0xff]
    %v1755 = vld [vmem:[#allocation5 + $0x6b8] sm:$0xff]
    %v1756 = vld [vmem:[#allocation5 + $0x6c0] sm:$0xff]
    %v1757 = vld [vmem:[#allocation5 + $0x6c8] sm:$0xff]
    %v1758 = vld [vmem:[#allocation5 + $0x6d0] sm:$0xff]
    %v1759 = vld [vmem:[#allocation5 + $0x6d8] sm:$0xff]
    %v1760 = vld [vmem:[#allocation5 + $0x6e0] sm:$0xff]
    %v1761 = vld [vmem:[#allocation5 + $0x6e8] sm:$0xff]
    %v1762 = vld [vmem:[#allocation5 + $0x6f0] sm:$0xff]
    %v1763 = vld [vmem:[#allocation5 + $0x6f8] sm:$0xff]
    %v1764 = vld [vmem:[#allocation5 + $0x700] sm:$0xff]
    %v1765 = vld [vmem:[#allocation5 + $0x708] sm:$0xff]
    %v1766 = vld [vmem:[#allocation5 + $0x710] sm:$0xff]
    %v1767 = vld [vmem:[#allocation5 + $0x718] sm:$0xff]
    %v1768 = vld [vmem:[#allocation5 + $0x720] sm:$0xff]
    %v1769 = vld [vmem:[#allocation5 + $0x728] sm:$0xff]
    %v1770 = vld [vmem:[#allocation5 + $0x730] sm:$0xff]
    %v1771 = vld [vmem:[#allocation5 + $0x738] sm:$0xff]
    %v1772 = vld [vmem:[#allocation5 + $0x740] sm:$0xff]
    %v1773 = vld [vmem:[#allocation5 + $0x748] sm:$0xff]
    %v1774 = vld [vmem:[#allocation5 + $0x750] sm:$0xff]
    %v1775 = vld [vmem:[#allocation5 + $0x758] sm:$0xff]
    %v1776 = vld [vmem:[#allocation5 + $0x760] sm:$0xff]
    %v1777 = vld [vmem:[#allocation5 + $0x768] sm:$0xff]
    %v1778 = vld [vmem:[#allocation5 + $0x770] sm:$0xff]
    %v1779 = vld [vmem:[#allocation5 + $0x778] sm:$0xff]
    %v1780 = vld [vmem:[#allocation5 + $0x780] sm:$0xff]
    %v1781 = vld [vmem:[#allocation5 + $0x788] sm:$0xff]
    %v1782 = vld [vmem:[#allocation5 + $0x790] sm:$0xff]
    %v1783 = vld [vmem:[#allocation5 + $0x798] sm:$0xff]
    %v1784 = vld [vmem:[#allocation5 + $0x7a0] sm:$0xff]
    %v1785 = vld [vmem:[#allocation5 + $0x7a8] sm:$0xff]
    %v1786 = vld [vmem:[#allocation5 + $0x7b0] sm:$0xff]
    %v1787 = vld [vmem:[#allocation5 + $0x7b8] sm:$0xff]
    %v1788 = vld [vmem:[#allocation5 + $0x7c0] sm:$0xff]
    %v1789 = vld [vmem:[#allocation5 + $0x7c8] sm:$0xff]
    %v1790 = vld [vmem:[#allocation5 + $0x7d0] sm:$0xff]
    %v1791 = vld [vmem:[#allocation5 + $0x7d8] sm:$0xff]
    %v2044 = vunpack.c.l.b16 %v1540
    %v2045 = vunpack.c.h.b16 %v1540
    %v2046 = vunpack.c.l.b16 %v1541
    %v2047 = vunpack.c.h.b16 %v1541
    %v2048 = vunpack.c.l.b16 %v1542
    %v2049 = vunpack.c.h.b16 %v1542
    %v2050 = vunpack.c.l.b16 %v1543
    %v2051 = vunpack.c.h.b16 %v1543
    %v2052 = vunpack.c.l.b16 %v1544
    %v2053 = vunpack.c.h.b16 %v1544
    %v2054 = vunpack.c.l.b16 %v1545
    %v2055 = vunpack.c.h.b16 %v1545
    %v2056 = vunpack.c.l.b16 %v1546
    %v2057 = vunpack.c.h.b16 %v1546
    %v2058 = vunpack.c.l.b16 %v1547
    %v2059 = vunpack.c.h.b16 %v1547
    %v2060 = vunpack.c.l.b16 %v1548
    %v2061 = vunpack.c.h.b16 %v1548
    %v2062 = vunpack.c.l.b16 %v1549
    %v2063 = vunpack.c.h.b16 %v1549
    %v2064 = vunpack.c.l.b16 %v1550
    %v2065 = vunpack.c.h.b16 %v1550
    %v2066 = vunpack.c.l.b16 %v1551
    %v2067 = vunpack.c.h.b16 %v1551
    %v2068 = vunpack.c.l.b16 %v1552
    %v2069 = vunpack.c.h.b16 %v1552
    %v2070 = vunpack.c.l.b16 %v1553
    %v2071 = vunpack.c.h.b16 %v1553
    %v2072 = vunpack.c.l.b16 %v1554
    %v2073 = vunpack.c.h.b16 %v1554
    %v2074 = vunpack.c.l.b16 %v1555
    %v2075 = vunpack.c.h.b16 %v1555
    %v2076 = vunpack.c.l.b16 %v1556
    %v2077 = vunpack.c.h.b16 %v1556
    %v2078 = vunpack.c.l.b16 %v1557
    %v2079 = vunpack.c.h.b16 %v1557
    %v2080 = vunpack.c.l.b16 %v1558
    %v2081 = vunpack.c.h.b16 %v1558
    %v2082 = vunpack.c.l.b16 %v1559
    %v2083 = vunpack.c.h.b16 %v1559
    %v2084 = vunpack.c.l.b16 %v1560
    %v2085 = vunpack.c.h.b16 %v1560
    %v2086 = vunpack.c.l.b16 %v1561
    %v2087 = vunpack.c.h.b16 %v1561
    %v2088 = vunpack.c.l.b16 %v1562
    %v2089 = vunpack.c.h.b16 %v1562
    %v2090 = vunpack.c.l.b16 %v1563
    %v2091 = vunpack.c.h.b16 %v1563
    %v2092 = vunpack.c.l.b16 %v1564
    %v2093 = vunpack.c.h.b16 %v1564
    %v2094 = vunpack.c.l.b16 %v1565
    %v2095 = vunpack.c.h.b16 %v1565
    %v2096 = vunpack.c.l.b16 %v1566
    %v2097 = vunpack.c.h.b16 %v1566
    %v2098 = vunpack.c.l.b16 %v1567
    %v2099 = vunpack.c.h.b16 %v1567
    %v2100 = vunpack.c.l.b16 %v1568
    %v2101 = vunpack.c.h.b16 %v1568
    %v2102 = vunpack.c.l.b16 %v1569
    %v2103 = vunpack.c.h.b16 %v1569
    %v2104 = vunpack.c.l.b16 %v1570
    %v2105 = vunpack.c.h.b16 %v1570
    %v2106 = vunpack.c.l.b16 %v1571
    %v2107 = vunpack.c.h.b16 %v1571
    %v2108 = vunpack.c.l.b16 %v1572
    %v2109 = vunpack.c.h.b16 %v1572
    %v2110 = vunpack.c.l.b16 %v1573
    %v2111 = vunpack.c.h.b16 %v1573
    %v2112 = vunpack.c.l.b16 %v1574
    %v2113 = vunpack.c.h.b16 %v1574
    %v2114 = vunpack.c.l.b16 %v1575
    %v2115 = vunpack.c.h.b16 %v1575
    %v2116 = vunpack.c.l.b16 %v1576
    %v2117 = vunpack.c.h.b16 %v1576
    %v2118 = vunpack.c.l.b16 %v1577
    %v2119 = vunpack.c.h.b16 %v1577
    %v2120 = vunpack.c.l.b16 %v1578
    %v2121 = vunpack.c.h.b16 %v1578
    %v2122 = vunpack.c.l.b16 %v1579
    %v2123 = vunpack.c.h.b16 %v1579
    %v2124 = vunpack.c.l.b16 %v1580
    %v2125 = vunpack.c.h.b16 %v1580
    %v2126 = vunpack.c.l.b16 %v1581
    %v2127 = vunpack.c.h.b16 %v1581
    %v2128 = vunpack.c.l.b16 %v1582
    %v2129 = vunpack.c.h.b16 %v1582
    %v2130 = vunpack.c.l.b16 %v1583
    %v2131 = vunpack.c.h.b16 %v1583
    %v2132 = vunpack.c.l.b16 %v1584
    %v2133 = vunpack.c.h.b16 %v1584
    %v2134 = vunpack.c.l.b16 %v1585
    %v2135 = vunpack.c.h.b16 %v1585
    %v2136 = vunpack.c.l.b16 %v1586
    %v2137 = vunpack.c.h.b16 %v1586
    %v2138 = vunpack.c.l.b16 %v1587
    %v2139 = vunpack.c.h.b16 %v1587
    %v2140 = vunpack.c.l.b16 %v1588
    %v2141 = vunpack.c.h.b16 %v1588
    %v2142 = vunpack.c.l.b16 %v1589
    %v2143 = vunpack.c.h.b16 %v1589
    %v2144 = vunpack.c.l.b16 %v1590
    %v2145 = vunpack.c.h.b16 %v1590
    %v2146 = vunpack.c.l.b16 %v1591
    %v2147 = vunpack.c.h.b16 %v1591
    %v2148 = vunpack.c.l.b16 %v1592
    %v2149 = vunpack.c.h.b16 %v1592
    %v2150 = vunpack.c.l.b16 %v1593
    %v2151 = vunpack.c.h.b16 %v1593
    %v2152 = vunpack.c.l.b16 %v1594
    %v2153 = vunpack.c.h.b16 %v1594
    %v2154 = vunpack.c.l.b16 %v1595
    %v2155 = vunpack.c.h.b16 %v1595
    %v2156 = vunpack.c.l.b16 %v1596
    %v2157 = vunpack.c.h.b16 %v1596
    %v2158 = vunpack.c.l.b16 %v1597
    %v2159 = vunpack.c.h.b16 %v1597
    %v2160 = vunpack.c.l.b16 %v1598
    %v2161 = vunpack.c.h.b16 %v1598
    %v2162 = vunpack.c.l.b16 %v1599
    %v2163 = vunpack.c.h.b16 %v1599
    %v2164 = vunpack.c.l.b16 %v1600
    %v2165 = vunpack.c.h.b16 %v1600
    %v2166 = vunpack.c.l.b16 %v1601
    %v2167 = vunpack.c.h.b16 %v1601
    %v2168 = vunpack.c.l.b16 %v1602
    %v2169 = vunpack.c.h.b16 %v1602
    %v2170 = vunpack.c.l.b16 %v1603
    %v2171 = vunpack.c.h.b16 %v1603
    %v2172 = vunpack.c.l.b16 %v1604
    %v2173 = vunpack.c.h.b16 %v1604
    %v2174 = vunpack.c.l.b16 %v1605
    %v2175 = vunpack.c.h.b16 %v1605
    %v2176 = vunpack.c.l.b16 %v1606
    %v2177 = vunpack.c.h.b16 %v1606
    %v2178 = vunpack.c.l.b16 %v1607
    %v2179 = vunpack.c.h.b16 %v1607
    %v2180 = vunpack.c.l.b16 %v1608
    %v2181 = vunpack.c.h.b16 %v1608
    %v2182 = vunpack.c.l.b16 %v1609
    %v2183 = vunpack.c.h.b16 %v1609
    %v2184 = vunpack.c.l.b16 %v1610
    %v2185 = vunpack.c.h.b16 %v1610
    %v2186 = vunpack.c.l.b16 %v1611
    %v2187 = vunpack.c.h.b16 %v1611
    %v2188 = vunpack.c.l.b16 %v1612
    %v2189 = vunpack.c.h.b16 %v1612
    %v2190 = vunpack.c.l.b16 %v1613
    %v2191 = vunpack.c.h.b16 %v1613
    %v2192 = vunpack.c.l.b16 %v1614
    %v2193 = vunpack.c.h.b16 %v1614
    %v2194 = vunpack.c.l.b16 %v1615
    %v2195 = vunpack.c.h.b16 %v1615
    %v2196 = vunpack.c.l.b16 %v1616
    %v2197 = vunpack.c.h.b16 %v1616
    %v2198 = vunpack.c.l.b16 %v1617
    %v2199 = vunpack.c.h.b16 %v1617
    %v2200 = vunpack.c.l.b16 %v1618
    %v2201 = vunpack.c.h.b16 %v1618
    %v2202 = vunpack.c.l.b16 %v1619
    %v2203 = vunpack.c.h.b16 %v1619
    %v2204 = vunpack.c.l.b16 %v1620
    %v2205 = vunpack.c.h.b16 %v1620
    %v2206 = vunpack.c.l.b16 %v1621
    %v2207 = vunpack.c.h.b16 %v1621
    %v2208 = vunpack.c.l.b16 %v1622
    %v2209 = vunpack.c.h.b16 %v1622
    %v2210 = vunpack.c.l.b16 %v1623
    %v2211 = vunpack.c.h.b16 %v1623
    %v2212 = vunpack.c.l.b16 %v1624
    %v2213 = vunpack.c.h.b16 %v1624
    %v2214 = vunpack.c.l.b16 %v1625
    %v2215 = vunpack.c.h.b16 %v1625
    %v2216 = vunpack.c.l.b16 %v1626
    %v2217 = vunpack.c.h.b16 %v1626
    %v2218 = vunpack.c.l.b16 %v1627
    %v2219 = vunpack.c.h.b16 %v1627
    %v2220 = vunpack.c.l.b16 %v1628
    %v2221 = vunpack.c.h.b16 %v1628
    %v2222 = vunpack.c.l.b16 %v1629
    %v2223 = vunpack.c.h.b16 %v1629
    %v2224 = vunpack.c.l.b16 %v1630
    %v2225 = vunpack.c.h.b16 %v1630
    %v2226 = vunpack.c.l.b16 %v1631
    %v2227 = vunpack.c.h.b16 %v1631
    %v2228 = vunpack.c.l.b16 %v1632
    %v2229 = vunpack.c.h.b16 %v1632
    %v2230 = vunpack.c.l.b16 %v1633
    %v2231 = vunpack.c.h.b16 %v1633
    %v2232 = vunpack.c.l.b16 %v1634
    %v2233 = vunpack.c.h.b16 %v1634
    %v2234 = vunpack.c.l.b16 %v1635
    %v2235 = vunpack.c.h.b16 %v1635
    %v2236 = vunpack.c.l.b16 %v1636
    %v2237 = vunpack.c.h.b16 %v1636
    %v2238 = vunpack.c.l.b16 %v1637
    %v2239 = vunpack.c.h.b16 %v1637
    %v2240 = vunpack.c.l.b16 %v1638
    %v2241 = vunpack.c.h.b16 %v1638
    %v2242 = vunpack.c.l.b16 %v1639
    %v2243 = vunpack.c.h.b16 %v1639
    %v2244 = vunpack.c.l.b16 %v1640
    %v2245 = vunpack.c.h.b16 %v1640
    %v2246 = vunpack.c.l.b16 %v1641
    %v2247 = vunpack.c.h.b16 %v1641
    %v2248 = vunpack.c.l.b16 %v1642
    %v2249 = vunpack.c.h.b16 %v1642
    %v2250 = vunpack.c.l.b16 %v1643
    %v2251 = vunpack.c.h.b16 %v1643
    %v2252 = vunpack.c.l.b16 %v1644
    %v2253 = vunpack.c.h.b16 %v1644
    %v2254 = vunpack.c.l.b16 %v1645
    %v2255 = vunpack.c.h.b16 %v1645
    %v2256 = vunpack.c.l.b16 %v1646
    %v2257 = vunpack.c.h.b16 %v1646
    %v2258 = vunpack.c.l.b16 %v1647
    %v2259 = vunpack.c.h.b16 %v1647
    %v2260 = vunpack.c.l.b16 %v1648
    %v2261 = vunpack.c.h.b16 %v1648
    %v2262 = vunpack.c.l.b16 %v1649
    %v2263 = vunpack.c.h.b16 %v1649
    %v2264 = vunpack.c.l.b16 %v1650
    %v2265 = vunpack.c.h.b16 %v1650
    %v2266 = vunpack.c.l.b16 %v1651
    %v2267 = vunpack.c.h.b16 %v1651
    %v2268 = vunpack.c.l.b16 %v1652
    %v2269 = vunpack.c.h.b16 %v1652
    %v2270 = vunpack.c.l.b16 %v1653
    %v2271 = vunpack.c.h.b16 %v1653
    %v2272 = vunpack.c.l.b16 %v1654
    %v2273 = vunpack.c.h.b16 %v1654
    %v2274 = vunpack.c.l.b16 %v1655
    %v2275 = vunpack.c.h.b16 %v1655
    %v2276 = vunpack.c.l.b16 %v1656
    %v2277 = vunpack.c.h.b16 %v1656
    %v2278 = vunpack.c.l.b16 %v1657
    %v2279 = vunpack.c.h.b16 %v1657
    %v2280 = vunpack.c.l.b16 %v1658
    %v2281 = vunpack.c.h.b16 %v1658
    %v2282 = vunpack.c.l.b16 %v1659
    %v2283 = vunpack.c.h.b16 %v1659
    %v2284 = vunpack.c.l.b16 %v1660
    %v2285 = vunpack.c.h.b16 %v1660
    %v2286 = vunpack.c.l.b16 %v1661
    %v2287 = vunpack.c.h.b16 %v1661
    %v2288 = vunpack.c.l.b16 %v1662
    %v2289 = vunpack.c.h.b16 %v1662
    %v2290 = vunpack.c.l.b16 %v1663
    %v2291 = vunpack.c.h.b16 %v1663
    %v2292 = vunpack.c.l.b16 %v1664
    %v2293 = vunpack.c.h.b16 %v1664
    %v2294 = vunpack.c.l.b16 %v1665
    %v2295 = vunpack.c.h.b16 %v1665
    %v2296 = vunpack.c.l.b16 %v1666
    %v2297 = vunpack.c.h.b16 %v1666
    %v2298 = vunpack.c.l.b16 %v1667
    %v2299 = vunpack.c.h.b16 %v1667
    %v2300 = vunpack.c.l.b16 %v1668
    %v2301 = vunpack.c.h.b16 %v1668
    %v2302 = vunpack.c.l.b16 %v1669
    %v2303 = vunpack.c.h.b16 %v1669
    %v2304 = vunpack.c.l.b16 %v1670
    %v2305 = vunpack.c.h.b16 %v1670
    %v2306 = vunpack.c.l.b16 %v1671
    %v2307 = vunpack.c.h.b16 %v1671
    %v2308 = vunpack.c.l.b16 %v1672
    %v2309 = vunpack.c.h.b16 %v1672
    %v2310 = vunpack.c.l.b16 %v1673
    %v2311 = vunpack.c.h.b16 %v1673
    %v2312 = vunpack.c.l.b16 %v1674
    %v2313 = vunpack.c.h.b16 %v1674
    %v2314 = vunpack.c.l.b16 %v1675
    %v2315 = vunpack.c.h.b16 %v1675
    %v2316 = vunpack.c.l.b16 %v1676
    %v2317 = vunpack.c.h.b16 %v1676
    %v2318 = vunpack.c.l.b16 %v1677
    %v2319 = vunpack.c.h.b16 %v1677
    %v2320 = vunpack.c.l.b16 %v1678
    %v2321 = vunpack.c.h.b16 %v1678
    %v2322 = vunpack.c.l.b16 %v1679
    %v2323 = vunpack.c.h.b16 %v1679
    %v2324 = vunpack.c.l.b16 %v1680
    %v2325 = vunpack.c.h.b16 %v1680
    %v2326 = vunpack.c.l.b16 %v1681
    %v2327 = vunpack.c.h.b16 %v1681
    %v2328 = vunpack.c.l.b16 %v1682
    %v2329 = vunpack.c.h.b16 %v1682
    %v2330 = vunpack.c.l.b16 %v1683
    %v2331 = vunpack.c.h.b16 %v1683
    %v2332 = vunpack.c.l.b16 %v1684
    %v2333 = vunpack.c.h.b16 %v1684
    %v2334 = vunpack.c.l.b16 %v1685
    %v2335 = vunpack.c.h.b16 %v1685
    %v2336 = vunpack.c.l.b16 %v1686
    %v2337 = vunpack.c.h.b16 %v1686
    %v2338 = vunpack.c.l.b16 %v1687
    %v2339 = vunpack.c.h.b16 %v1687
    %v2340 = vunpack.c.l.b16 %v1688
    %v2341 = vunpack.c.h.b16 %v1688
    %v2342 = vunpack.c.l.b16 %v1689
    %v2343 = vunpack.c.h.b16 %v1689
    %v2344 = vunpack.c.l.b16 %v1690
    %v2345 = vunpack.c.h.b16 %v1690
    %v2346 = vunpack.c.l.b16 %v1691
    %v2347 = vunpack.c.h.b16 %v1691
    %v2348 = vunpack.c.l.b16 %v1692
    %v2349 = vunpack.c.h.b16 %v1692
    %v2350 = vunpack.c.l.b16 %v1693
    %v2351 = vunpack.c.h.b16 %v1693
    %v2352 = vunpack.c.l.b16 %v1694
    %v2353 = vunpack.c.h.b16 %v1694
    %v2354 = vunpack.c.l.b16 %v1695
    %v2355 = vunpack.c.h.b16 %v1695
    %v2356 = vunpack.c.l.b16 %v1696
    %v2357 = vunpack.c.h.b16 %v1696
    %v2358 = vunpack.c.l.b16 %v1697
    %v2359 = vunpack.c.h.b16 %v1697
    %v2360 = vunpack.c.l.b16 %v1698
    %v2361 = vunpack.c.h.b16 %v1698
    %v2362 = vunpack.c.l.b16 %v1699
    %v2363 = vunpack.c.h.b16 %v1699
    %v2364 = vunpack.c.l.b16 %v1700
    %v2365 = vunpack.c.h.b16 %v1700
    %v2366 = vunpack.c.l.b16 %v1701
    %v2367 = vunpack.c.h.b16 %v1701
    %v2368 = vunpack.c.l.b16 %v1702
    %v2369 = vunpack.c.h.b16 %v1702
    %v2370 = vunpack.c.l.b16 %v1703
    %v2371 = vunpack.c.h.b16 %v1703
    %v2372 = vunpack.c.l.b16 %v1704
    %v2373 = vunpack.c.h.b16 %v1704
    %v2374 = vunpack.c.l.b16 %v1705
    %v2375 = vunpack.c.h.b16 %v1705
    %v2376 = vunpack.c.l.b16 %v1706
    %v2377 = vunpack.c.h.b16 %v1706
    %v2378 = vunpack.c.l.b16 %v1707
    %v2379 = vunpack.c.h.b16 %v1707
    %v2380 = vunpack.c.l.b16 %v1708
    %v2381 = vunpack.c.h.b16 %v1708
    %v2382 = vunpack.c.l.b16 %v1709
    %v2383 = vunpack.c.h.b16 %v1709
    %v2384 = vunpack.c.l.b16 %v1710
    %v2385 = vunpack.c.h.b16 %v1710
    %v2386 = vunpack.c.l.b16 %v1711
    %v2387 = vunpack.c.h.b16 %v1711
    %v2388 = vunpack.c.l.b16 %v1712
    %v2389 = vunpack.c.h.b16 %v1712
    %v2390 = vunpack.c.l.b16 %v1713
    %v2391 = vunpack.c.h.b16 %v1713
    %v2392 = vunpack.c.l.b16 %v1714
    %v2393 = vunpack.c.h.b16 %v1714
    %v2394 = vunpack.c.l.b16 %v1715
    %v2395 = vunpack.c.h.b16 %v1715
    %v2396 = vunpack.c.l.b16 %v1716
    %v2397 = vunpack.c.h.b16 %v1716
    %v2398 = vunpack.c.l.b16 %v1717
    %v2399 = vunpack.c.h.b16 %v1717
    %v2400 = vunpack.c.l.b16 %v1718
    %v2401 = vunpack.c.h.b16 %v1718
    %v2402 = vunpack.c.l.b16 %v1719
    %v2403 = vunpack.c.h.b16 %v1719
    %v2404 = vunpack.c.l.b16 %v1720
    %v2405 = vunpack.c.h.b16 %v1720
    %v2406 = vunpack.c.l.b16 %v1721
    %v2407 = vunpack.c.h.b16 %v1721
    %v2408 = vunpack.c.l.b16 %v1722
    %v2409 = vunpack.c.h.b16 %v1722
    %v2410 = vunpack.c.l.b16 %v1723
    %v2411 = vunpack.c.h.b16 %v1723
    %v2412 = vunpack.c.l.b16 %v1724
    %v2413 = vunpack.c.h.b16 %v1724
    %v2414 = vunpack.c.l.b16 %v1725
    %v2415 = vunpack.c.h.b16 %v1725
    %v2416 = vunpack.c.l.b16 %v1726
    %v2417 = vunpack.c.h.b16 %v1726
    %v2418 = vunpack.c.l.b16 %v1727
    %v2419 = vunpack.c.h.b16 %v1727
    %v2420 = vunpack.c.l.b16 %v1728
    %v2421 = vunpack.c.h.b16 %v1728
    %v2422 = vunpack.c.l.b16 %v1729
    %v2423 = vunpack.c.h.b16 %v1729
    %v2424 = vunpack.c.l.b16 %v1730
    %v2425 = vunpack.c.h.b16 %v1730
    %v2426 = vunpack.c.l.b16 %v1731
    %v2427 = vunpack.c.h.b16 %v1731
    %v2428 = vunpack.c.l.b16 %v1732
    %v2429 = vunpack.c.h.b16 %v1732
    %v2430 = vunpack.c.l.b16 %v1733
    %v2431 = vunpack.c.h.b16 %v1733
    %v2432 = vunpack.c.l.b16 %v1734
    %v2433 = vunpack.c.h.b16 %v1734
    %v2434 = vunpack.c.l.b16 %v1735
    %v2435 = vunpack.c.h.b16 %v1735
    %v2436 = vunpack.c.l.b16 %v1736
    %v2437 = vunpack.c.h.b16 %v1736
    %v2438 = vunpack.c.l.b16 %v1737
    %v2439 = vunpack.c.h.b16 %v1737
    %v2440 = vunpack.c.l.b16 %v1738
    %v2441 = vunpack.c.h.b16 %v1738
    %v2442 = vunpack.c.l.b16 %v1739
    %v2443 = vunpack.c.h.b16 %v1739
    %v2444 = vunpack.c.l.b16 %v1740
    %v2445 = vunpack.c.h.b16 %v1740
    %v2446 = vunpack.c.l.b16 %v1741
    %v2447 = vunpack.c.h.b16 %v1741
    %v2448 = vunpack.c.l.b16 %v1742
    %v2449 = vunpack.c.h.b16 %v1742
    %v2450 = vunpack.c.l.b16 %v1743
    %v2451 = vunpack.c.h.b16 %v1743
    %v2452 = vunpack.c.l.b16 %v1744
    %v2453 = vunpack.c.h.b16 %v1744
    %v2454 = vunpack.c.l.b16 %v1745
    %v2455 = vunpack.c.h.b16 %v1745
    %v2456 = vunpack.c.l.b16 %v1746
    %v2457 = vunpack.c.h.b16 %v1746
    %v2458 = vunpack.c.l.b16 %v1747
    %v2459 = vunpack.c.h.b16 %v1747
    %v2460 = vunpack.c.l.b16 %v1748
    %v2461 = vunpack.c.h.b16 %v1748
    %v2462 = vunpack.c.l.b16 %v1749
    %v2463 = vunpack.c.h.b16 %v1749
    %v2464 = vunpack.c.l.b16 %v1750
    %v2465 = vunpack.c.h.b16 %v1750
    %v2466 = vunpack.c.l.b16 %v1751
    %v2467 = vunpack.c.h.b16 %v1751
    %v2468 = vunpack.c.l.b16 %v1752
    %v2469 = vunpack.c.h.b16 %v1752
    %v2470 = vunpack.c.l.b16 %v1753
    %v2471 = vunpack.c.h.b16 %v1753
    %v2472 = vunpack.c.l.b16 %v1754
    %v2473 = vunpack.c.h.b16 %v1754
    %v2474 = vunpack.c.l.b16 %v1755
    %v2475 = vunpack.c.h.b16 %v1755
    %v2476 = vunpack.c.l.b16 %v1756
    %v2477 = vunpack.c.h.b16 %v1756
    %v2478 = vunpack.c.l.b16 %v1757
    %v2479 = vunpack.c.h.b16 %v1757
    %v2480 = vunpack.c.l.b16 %v1758
    %v2481 = vunpack.c.h.b16 %v1758
    %v2482 = vunpack.c.l.b16 %v1759
    %v2483 = vunpack.c.h.b16 %v1759
    %v2484 = vunpack.c.l.b16 %v1760
    %v2485 = vunpack.c.h.b16 %v1760
    %v2486 = vunpack.c.l.b16 %v1761
    %v2487 = vunpack.c.h.b16 %v1761
    %v2488 = vunpack.c.l.b16 %v1762
    %v2489 = vunpack.c.h.b16 %v1762
    %v2490 = vunpack.c.l.b16 %v1763
    %v2491 = vunpack.c.h.b16 %v1763
    %v2492 = vunpack.c.l.b16 %v1764
    %v2493 = vunpack.c.h.b16 %v1764
    %v2494 = vunpack.c.l.b16 %v1765
    %v2495 = vunpack.c.h.b16 %v1765
    %v2496 = vunpack.c.l.b16 %v1766
    %v2497 = vunpack.c.h.b16 %v1766
    %v2498 = vunpack.c.l.b16 %v1767
    %v2499 = vunpack.c.h.b16 %v1767
    %v2500 = vunpack.c.l.b16 %v1768
    %v2501 = vunpack.c.h.b16 %v1768
    %v2502 = vunpack.c.l.b16 %v1769
    %v2503 = vunpack.c.h.b16 %v1769
    %v2504 = vunpack.c.l.b16 %v1770
    %v2505 = vunpack.c.h.b16 %v1770
    %v2506 = vunpack.c.l.b16 %v1771
    %v2507 = vunpack.c.h.b16 %v1771
    %v2508 = vunpack.c.l.b16 %v1772
    %v2509 = vunpack.c.h.b16 %v1772
    %v2510 = vunpack.c.l.b16 %v1773
    %v2511 = vunpack.c.h.b16 %v1773
    %v2512 = vunpack.c.l.b16 %v1774
    %v2513 = vunpack.c.h.b16 %v1774
    %v2514 = vunpack.c.l.b16 %v1775
    %v2515 = vunpack.c.h.b16 %v1775
    %v2516 = vunpack.c.l.b16 %v1776
    %v2517 = vunpack.c.h.b16 %v1776
    %v2518 = vunpack.c.l.b16 %v1777
    %v2519 = vunpack.c.h.b16 %v1777
    %v2520 = vunpack.c.l.b16 %v1778
    %v2521 = vunpack.c.h.b16 %v1778
    %v2522 = vunpack.c.l.b16 %v1779
    %v2523 = vunpack.c.h.b16 %v1779
    %v2524 = vunpack.c.l.b16 %v1780
    %v2525 = vunpack.c.h.b16 %v1780
    %v2526 = vunpack.c.l.b16 %v1781
    %v2527 = vunpack.c.h.b16 %v1781
    %v2528 = vunpack.c.l.b16 %v1782
    %v2529 = vunpack.c.h.b16 %v1782
    %v2530 = vunpack.c.l.b16 %v1783
    %v2531 = vunpack.c.h.b16 %v1783
    %v2532 = vunpack.c.l.b16 %v1784
    %v2533 = vunpack.c.h.b16 %v1784
    %v2534 = vunpack.c.l.b16 %v1785
    %v2535 = vunpack.c.h.b16 %v1785
    %v2536 = vunpack.c.l.b16 %v1786
    %v2537 = vunpack.c.h.b16 %v1786
    %v2538 = vunpack.c.l.b16 %v1787
    %v2539 = vunpack.c.h.b16 %v1787
    %v2540 = vunpack.c.l.b16 %v1788
    %v2541 = vunpack.c.h.b16 %v1788
    %v2542 = vunpack.c.l.b16 %v1789
    %v2543 = vunpack.c.h.b16 %v1789
    %v2544 = vunpack.c.l.b16 %v1790
    %v2545 = vunpack.c.h.b16 %v1790
    %v2546 = vunpack.c.l.b16 %v1791
    %v2547 = vunpack.c.h.b16 %v1791
    %v2548 = vpack.c.b16 %v2050, %v2044
    %v2549 = vpack.c.b16 %v2051, %v2045
    %v2550 = vpack.c.b16 %v2052, %v2046
    %v2551 = vpack.c.b16 %v2053, %v2047
    %v2552 = vpack.c.b16 %v2054, %v2048
    %v2553 = vpack.c.b16 %v2055, %v2049
    %v2554 = vpack.c.b16 %v2062, %v2056
    %v2555 = vpack.c.b16 %v2063, %v2057
    %v2556 = vpack.c.b16 %v2064, %v2058
    %v2557 = vpack.c.b16 %v2065, %v2059
    %v2558 = vpack.c.b16 %v2066, %v2060
    %v2559 = vpack.c.b16 %v2067, %v2061
    %v2560 = vpack.c.b16 %v2074, %v2068
    %v2561 = vpack.c.b16 %v2075, %v2069
    %v2562 = vpack.c.b16 %v2076, %v2070
    %v2563 = vpack.c.b16 %v2077, %v2071
    %v2564 = vpack.c.b16 %v2078, %v2072
    %v2565 = vpack.c.b16 %v2079, %v2073
    %v2566 = vpack.c.b16 %v2086, %v2080
    %v2567 = vpack.c.b16 %v2087, %v2081
    %v2568 = vpack.c.b16 %v2088, %v2082
    %v2569 = vpack.c.b16 %v2089, %v2083
    %v2570 = vpack.c.b16 %v2090, %v2084
    %v2571 = vpack.c.b16 %v2091, %v2085
    %v2572 = vpack.c.b16 %v2098, %v2092
    %v2573 = vpack.c.b16 %v2099, %v2093
    %v2574 = vpack.c.b16 %v2100, %v2094
    %v2575 = vpack.c.b16 %v2101, %v2095
    %v2576 = vpack.c.b16 %v2102, %v2096
    %v2577 = vpack.c.b16 %v2103, %v2097
    %v2578 = vpack.c.b16 %v2110, %v2104
    %v2579 = vpack.c.b16 %v2111, %v2105
    %v2580 = vpack.c.b16 %v2112, %v2106
    %v2581 = vpack.c.b16 %v2113, %v2107
    %v2582 = vpack.c.b16 %v2114, %v2108
    %v2583 = vpack.c.b16 %v2115, %v2109
    %v2584 = vpack.c.b16 %v2122, %v2116
    %v2585 = vpack.c.b16 %v2123, %v2117
    %v2586 = vpack.c.b16 %v2124, %v2118
    %v2587 = vpack.c.b16 %v2125, %v2119
    %v2588 = vpack.c.b16 %v2126, %v2120
    %v2589 = vpack.c.b16 %v2127, %v2121
    %v2590 = vpack.c.b16 %v2134, %v2128
    %v2591 = vpack.c.b16 %v2135, %v2129
    %v2592 = vpack.c.b16 %v2136, %v2130
    %v2593 = vpack.c.b16 %v2137, %v2131
    %v2594 = vpack.c.b16 %v2138, %v2132
    %v2595 = vpack.c.b16 %v2139, %v2133
    %v2596 = vpack.c.b16 %v2146, %v2140
    %v2597 = vpack.c.b16 %v2147, %v2141
    %v2598 = vpack.c.b16 %v2148, %v2142
    %v2599 = vpack.c.b16 %v2149, %v2143
    %v2600 = vpack.c.b16 %v2150, %v2144
    %v2601 = vpack.c.b16 %v2151, %v2145
    %v2602 = vpack.c.b16 %v2158, %v2152
    %v2603 = vpack.c.b16 %v2159, %v2153
    %v2604 = vpack.c.b16 %v2160, %v2154
    %v2605 = vpack.c.b16 %v2161, %v2155
    %v2606 = vpack.c.b16 %v2162, %v2156
    %v2607 = vpack.c.b16 %v2163, %v2157
    %v2608 = vpack.c.b16 %v2170, %v2164
    %v2609 = vpack.c.b16 %v2171, %v2165
    %v2610 = vpack.c.b16 %v2172, %v2166
    %v2611 = vpack.c.b16 %v2173, %v2167
    %v2612 = vpack.c.b16 %v2174, %v2168
    %v2613 = vpack.c.b16 %v2175, %v2169
    %v2614 = vpack.c.b16 %v2182, %v2176
    %v2615 = vpack.c.b16 %v2183, %v2177
    %v2616 = vpack.c.b16 %v2184, %v2178
    %v2617 = vpack.c.b16 %v2185, %v2179
    %v2618 = vpack.c.b16 %v2186, %v2180
    %v2619 = vpack.c.b16 %v2187, %v2181
    %v2620 = vpack.c.b16 %v2194, %v2188
    %v2621 = vpack.c.b16 %v2195, %v2189
    %v2622 = vpack.c.b16 %v2196, %v2190
    %v2623 = vpack.c.b16 %v2197, %v2191
    %v2624 = vpack.c.b16 %v2198, %v2192
    %v2625 = vpack.c.b16 %v2199, %v2193
    %v2626 = vpack.c.b16 %v2206, %v2200
    %v2627 = vpack.c.b16 %v2207, %v2201
    %v2628 = vpack.c.b16 %v2208, %v2202
    %v2629 = vpack.c.b16 %v2209, %v2203
    %v2630 = vpack.c.b16 %v2210, %v2204
    %v2631 = vpack.c.b16 %v2211, %v2205
    %v2632 = vpack.c.b16 %v2218, %v2212
    %v2633 = vpack.c.b16 %v2219, %v2213
    %v2634 = vpack.c.b16 %v2220, %v2214
    %v2635 = vpack.c.b16 %v2221, %v2215
    %v2636 = vpack.c.b16 %v2222, %v2216
    %v2637 = vpack.c.b16 %v2223, %v2217
    %v2638 = vpack.c.b16 %v2230, %v2224
    %v2639 = vpack.c.b16 %v2231, %v2225
    %v2640 = vpack.c.b16 %v2232, %v2226
    %v2641 = vpack.c.b16 %v2233, %v2227
    %v2642 = vpack.c.b16 %v2234, %v2228
    %v2643 = vpack.c.b16 %v2235, %v2229
    %v2644 = vpack.c.b16 %v2242, %v2236
    %v2645 = vpack.c.b16 %v2243, %v2237
    %v2646 = vpack.c.b16 %v2244, %v2238
    %v2647 = vpack.c.b16 %v2245, %v2239
    %v2648 = vpack.c.b16 %v2246, %v2240
    %v2649 = vpack.c.b16 %v2247, %v2241
    %v2650 = vpack.c.b16 %v2254, %v2248
    %v2651 = vpack.c.b16 %v2255, %v2249
    %v2652 = vpack.c.b16 %v2256, %v2250
    %v2653 = vpack.c.b16 %v2257, %v2251
    %v2654 = vpack.c.b16 %v2258, %v2252
    %v2655 = vpack.c.b16 %v2259, %v2253
    %v2656 = vpack.c.b16 %v2266, %v2260
    %v2657 = vpack.c.b16 %v2267, %v2261
    %v2658 = vpack.c.b16 %v2268, %v2262
    %v2659 = vpack.c.b16 %v2269, %v2263
    %v2660 = vpack.c.b16 %v2270, %v2264
    %v2661 = vpack.c.b16 %v2271, %v2265
    %v2662 = vpack.c.b16 %v2278, %v2272
    %v2663 = vpack.c.b16 %v2279, %v2273
    %v2664 = vpack.c.b16 %v2280, %v2274
    %v2665 = vpack.c.b16 %v2281, %v2275
    %v2666 = vpack.c.b16 %v2282, %v2276
    %v2667 = vpack.c.b16 %v2283, %v2277
    %v2668 = vpack.c.b16 %v2290, %v2284
    %v2669 = vpack.c.b16 %v2291, %v2285
    %v2670 = vpack.c.b16 %v2292, %v2286
    %v2671 = vpack.c.b16 %v2293, %v2287
    %v2672 = vpack.c.b16 %v2294, %v2288
    %v2673 = vpack.c.b16 %v2295, %v2289
    %v2674 = vpack.c.b16 %v2302, %v2296
    %v2675 = vpack.c.b16 %v2303, %v2297
    %v2676 = vpack.c.b16 %v2304, %v2298
    %v2677 = vpack.c.b16 %v2305, %v2299
    %v2678 = vpack.c.b16 %v2306, %v2300
    %v2679 = vpack.c.b16 %v2307, %v2301
    %v2680 = vpack.c.b16 %v2314, %v2308
    %v2681 = vpack.c.b16 %v2315, %v2309
    %v2682 = vpack.c.b16 %v2316, %v2310
    %v2683 = vpack.c.b16 %v2317, %v2311
    %v2684 = vpack.c.b16 %v2318, %v2312
    %v2685 = vpack.c.b16 %v2319, %v2313
    %v2686 = vpack.c.b16 %v2326, %v2320
    %v2687 = vpack.c.b16 %v2327, %v2321
    %v2688 = vpack.c.b16 %v2328, %v2322
    %v2689 = vpack.c.b16 %v2329, %v2323
    %v2690 = vpack.c.b16 %v2330, %v2324
    %v2691 = vpack.c.b16 %v2331, %v2325
    %v2692 = vpack.c.b16 %v2338, %v2332
    %v2693 = vpack.c.b16 %v2339, %v2333
    %v2694 = vpack.c.b16 %v2340, %v2334
    %v2695 = vpack.c.b16 %v2341, %v2335
    %v2696 = vpack.c.b16 %v2342, %v2336
    %v2697 = vpack.c.b16 %v2343, %v2337
    %v2698 = vpack.c.b16 %v2350, %v2344
    %v2699 = vpack.c.b16 %v2351, %v2345
    %v2700 = vpack.c.b16 %v2352, %v2346
    %v2701 = vpack.c.b16 %v2353, %v2347
    %v2702 = vpack.c.b16 %v2354, %v2348
    %v2703 = vpack.c.b16 %v2355, %v2349
    %v2704 = vpack.c.b16 %v2362, %v2356
    %v2705 = vpack.c.b16 %v2363, %v2357
    %v2706 = vpack.c.b16 %v2364, %v2358
    %v2707 = vpack.c.b16 %v2365, %v2359
    %v2708 = vpack.c.b16 %v2366, %v2360
    %v2709 = vpack.c.b16 %v2367, %v2361
    %v2710 = vpack.c.b16 %v2374, %v2368
    %v2711 = vpack.c.b16 %v2375, %v2369
    %v2712 = vpack.c.b16 %v2376, %v2370
    %v2713 = vpack.c.b16 %v2377, %v2371
    %v2714 = vpack.c.b16 %v2378, %v2372
    %v2715 = vpack.c.b16 %v2379, %v2373
    %v2716 = vpack.c.b16 %v2386, %v2380
    %v2717 = vpack.c.b16 %v2387, %v2381
    %v2718 = vpack.c.b16 %v2388, %v2382
    %v2719 = vpack.c.b16 %v2389, %v2383
    %v2720 = vpack.c.b16 %v2390, %v2384
    %v2721 = vpack.c.b16 %v2391, %v2385
    %v2722 = vpack.c.b16 %v2398, %v2392
    %v2723 = vpack.c.b16 %v2399, %v2393
    %v2724 = vpack.c.b16 %v2400, %v2394
    %v2725 = vpack.c.b16 %v2401, %v2395
    %v2726 = vpack.c.b16 %v2402, %v2396
    %v2727 = vpack.c.b16 %v2403, %v2397
    %v2728 = vpack.c.b16 %v2410, %v2404
    %v2729 = vpack.c.b16 %v2411, %v2405
    %v2730 = vpack.c.b16 %v2412, %v2406
    %v2731 = vpack.c.b16 %v2413, %v2407
    %v2732 = vpack.c.b16 %v2414, %v2408
    %v2733 = vpack.c.b16 %v2415, %v2409
    %v2734 = vpack.c.b16 %v2422, %v2416
    %v2735 = vpack.c.b16 %v2423, %v2417
    %v2736 = vpack.c.b16 %v2424, %v2418
    %v2737 = vpack.c.b16 %v2425, %v2419
    %v2738 = vpack.c.b16 %v2426, %v2420
    %v2739 = vpack.c.b16 %v2427, %v2421
    %v2740 = vpack.c.b16 %v2434, %v2428
    %v2741 = vpack.c.b16 %v2435, %v2429
    %v2742 = vpack.c.b16 %v2436, %v2430
    %v2743 = vpack.c.b16 %v2437, %v2431
    %v2744 = vpack.c.b16 %v2438, %v2432
    %v2745 = vpack.c.b16 %v2439, %v2433
    %v2746 = vpack.c.b16 %v2446, %v2440
    %v2747 = vpack.c.b16 %v2447, %v2441
    %v2748 = vpack.c.b16 %v2448, %v2442
    %v2749 = vpack.c.b16 %v2449, %v2443
    %v2750 = vpack.c.b16 %v2450, %v2444
    %v2751 = vpack.c.b16 %v2451, %v2445
    %v2752 = vpack.c.b16 %v2458, %v2452
    %v2753 = vpack.c.b16 %v2459, %v2453
    %v2754 = vpack.c.b16 %v2460, %v2454
    %v2755 = vpack.c.b16 %v2461, %v2455
    %v2756 = vpack.c.b16 %v2462, %v2456
    %v2757 = vpack.c.b16 %v2463, %v2457
    %v2758 = vpack.c.b16 %v2470, %v2464
    %v2759 = vpack.c.b16 %v2471, %v2465
    %v2760 = vpack.c.b16 %v2472, %v2466
    %v2761 = vpack.c.b16 %v2473, %v2467
    %v2762 = vpack.c.b16 %v2474, %v2468
    %v2763 = vpack.c.b16 %v2475, %v2469
    %v2764 = vpack.c.b16 %v2482, %v2476
    %v2765 = vpack.c.b16 %v2483, %v2477
    %v2766 = vpack.c.b16 %v2484, %v2478
    %v2767 = vpack.c.b16 %v2485, %v2479
    %v2768 = vpack.c.b16 %v2486, %v2480
    %v2769 = vpack.c.b16 %v2487, %v2481
    %v2770 = vpack.c.b16 %v2494, %v2488
    %v2771 = vpack.c.b16 %v2495, %v2489
    %v2772 = vpack.c.b16 %v2496, %v2490
    %v2773 = vpack.c.b16 %v2497, %v2491
    %v2774 = vpack.c.b16 %v2498, %v2492
    %v2775 = vpack.c.b16 %v2499, %v2493
    %v2776 = vpack.c.b16 %v2506, %v2500
    %v2777 = vpack.c.b16 %v2507, %v2501
    %v2778 = vpack.c.b16 %v2508, %v2502
    %v2779 = vpack.c.b16 %v2509, %v2503
    %v2780 = vpack.c.b16 %v2510, %v2504
    %v2781 = vpack.c.b16 %v2511, %v2505
    %v2782 = vpack.c.b16 %v2518, %v2512
    %v2783 = vpack.c.b16 %v2519, %v2513
    %v2784 = vpack.c.b16 %v2520, %v2514
    %v2785 = vpack.c.b16 %v2521, %v2515
    %v2786 = vpack.c.b16 %v2522, %v2516
    %v2787 = vpack.c.b16 %v2523, %v2517
    %v2788 = vpack.c.b16 %v2530, %v2524
    %v2789 = vpack.c.b16 %v2531, %v2525
    %v2790 = vpack.c.b16 %v2532, %v2526
    %v2791 = vpack.c.b16 %v2533, %v2527
    %v2792 = vpack.c.b16 %v2534, %v2528
    %v2793 = vpack.c.b16 %v2535, %v2529
    %v2794 = vpack.c.b16 %v2542, %v2536
    %v2795 = vpack.c.b16 %v2543, %v2537
    %v2796 = vpack.c.b16 %v2544, %v2538
    %v2797 = vpack.c.b16 %v2545, %v2539
    %v2798 = vpack.c.b16 %v2546, %v2540
    %v2799 = vpack.c.b16 %v2547, %v2541
    %vm3052 = vcmask 261120
    %v3054 = vsel %vm3052, %v1251, 0
    %v3057 = vsel %vm3052, %v1257, 0
    %v3060 = vsel %vm3052, %v1263, 0
    %v3063 = vsel %vm3052, %v1269, 0
    %v3066 = vsel %vm3052, %v1275, 0
    %v3069 = vsel %vm3052, %v1281, 0
    %v3072 = vsel %vm3052, %v1287, 0
    %v3075 = vsel %vm3052, %v1293, 0
    %v3078 = vsel %vm3052, %v1299, 0
    %v3081 = vsel %vm3052, %v1305, 0
    %v3084 = vsel %vm3052, %v1311, 0
    %v3087 = vsel %vm3052, %v1317, 0
    %v3090 = vsel %vm3052, %v1323, 0
    %v3093 = vsel %vm3052, %v1329, 0
    %v3096 = vsel %vm3052, %v1335, 0
    %v3099 = vsel %vm3052, %v1341, 0
    %v3102 = vsel %vm3052, %v1347, 0
    %v3105 = vsel %vm3052, %v1353, 0
    %v3108 = vsel %vm3052, %v1359, 0
    %v3111 = vsel %vm3052, %v1365, 0
    %v3114 = vsel %vm3052, %v1371, 0
    %v3117 = vsel %vm3052, %v1377, 0
    %v3120 = vsel %vm3052, %v1383, 0
    %v3123 = vsel %vm3052, %v1389, 0
    %v3126 = vsel %vm3052, %v1395, 0
    %v3129 = vsel %vm3052, %v1401, 0
    %v3132 = vsel %vm3052, %v1407, 0
    %v3135 = vsel %vm3052, %v1413, 0
    %v3138 = vsel %vm3052, %v1419, 0
    %v3141 = vsel %vm3052, %v1425, 0
    %v3144 = vsel %vm3052, %v1431, 0
    %v3147 = vsel %vm3052, %v1437, 0
    %v3150 = vsel %vm3052, %v1443, 0
    %v3153 = vsel %vm3052, %v1449, 0
    %v3156 = vsel %vm3052, %v1455, 0
    %v3159 = vsel %vm3052, %v1461, 0
    %v3162 = vsel %vm3052, %v1467, 0
    %v3165 = vsel %vm3052, %v1473, 0
    %v3168 = vsel %vm3052, %v1479, 0
    %v3171 = vsel %vm3052, %v1485, 0
    %v3174 = vsel %vm3052, %v1491, 0
    %v3177 = vsel %vm3052, %v1497, 0
    %v3180 = vsel %vm3052, %v1503, 0
    %v3183 = vsel %vm3052, %v1509, 0
    %v3186 = vsel %vm3052, %v1515, 0
    %v3189 = vsel %vm3052, %v1521, 0
    %v3192 = vsel %vm3052, %v1527, 0
    %v3195 = vsel %vm3052, %v1533, 0
    %v3198 = vsel %vm3052, %v1539, 0
    %3200 = vmatprep.subr.bf16.mxu0 %v2549
    %3201 = vmatpush1.bf16.msra.mxu0 %v2548
    %3202 = vmatprep.subr.bf16.mxu0 %v2555
    %3203 = vmatpush1.bf16.msra.mxu0 %v2554
    %3204 = vmatprep.subr.bf16.mxu0 %v2561
    %3205 = vmatpush1.bf16.msra.mxu0 %v2560
    %3206 = vmatprep.subr.bf16.mxu0 %v2567
    %3207 = vmatpush1.bf16.msra.mxu0 %v2566
    %3208 = vmatprep.subr.bf16.mxu0 %v2573
    %3209 = vmatpush1.bf16.msra.mxu0 %v2572
    %3210 = vmatprep.subr.bf16.mxu0 %v2579
    %3211 = vmatpush1.bf16.msra.mxu0 %v2578
    %3212 = vmatprep.subr.bf16.mxu0 %v2585
    %3213 = vmatpush1.bf16.msra.mxu0 %v2584
    %3214 = vmatprep.subr.bf16.mxu0 %v2591
    %3215 = vmatpush1.bf16.msra.mxu0 %v2590
    %3216 = vmatprep.subr.bf16.mxu0 %v2597
    %3217 = vmatpush1.bf16.msra.mxu0 %v2596
    %3218 = vmatprep.subr.bf16.mxu0 %v2603
    %3219 = vmatpush1.bf16.msra.mxu0 %v2602
    %3220 = vmatprep.subr.bf16.mxu0 %v2609
    %3221 = vmatpush1.bf16.msra.mxu0 %v2608
    %3222 = vmatprep.subr.bf16.mxu0 %v2615
    %3223 = vmatpush1.bf16.msra.mxu0 %v2614
    %3224 = vmatprep.subr.bf16.mxu0 %v2621
    %3225 = vmatpush1.bf16.msra.mxu0 %v2620
    %3226 = vmatprep.subr.bf16.mxu0 %v2627
    %3227 = vmatpush1.bf16.msra.mxu0 %v2626
    %3228 = vmatprep.subr.bf16.mxu0 %v2633
    %3229 = vmatpush1.bf16.msra.mxu0 %v2632
    %3230 = vmatprep.subr.bf16.mxu0 %v2639
    %3231 = vmatpush1.bf16.msra.mxu0 %v2638
    %3232 = vmatprep.mubr.bf16.mxu0 %v1247
    %3233 = vmatmul.mubr.bf16.gmra.mrb[0].mxu0 %v1246
    %v3234 = vpop.f32.mrb[0].mxu0
    %v3235 = vadd.f32 0.0, %v3234
    %v3236 = vpop.f32.mrb[0].mxu0
    %v3237 = vadd.f32 0.0, %v3236
    %v3238 = vpop.f32.mrb[0].mxu0
    %v3239 = vadd.f32 0.0, %v3238
    %v3240 = vpop.f32.mrb[0].mxu0
    %v3241 = vadd.f32 0.0, %v3240
    %3242 = vmatprep.mubr.bf16.mxu0 %v1253
    %3243 = vmatmul.mubr.bf16.gmra.mrb[0].mxu0 %v1252
    %v3244 = vpop.f32.mrb[0].mxu0
    %v3245 = vadd.f32 0.0, %v3244
    %v3246 = vpop.f32.mrb[0].mxu0
    %v3247 = vadd.f32 0.0, %v3246
    %v3248 = vpop.f32.mrb[0].mxu0
    %v3249 = vadd.f32 0.0, %v3248
    %v3250 = vpop.f32.mrb[0].mxu0
    %v3251 = vadd.f32 0.0, %v3250
    %3252 = vmatprep.mubr.bf16.mxu0 %v1259
    %3253 = vmatmul.mubr.bf16.gmra.mrb[0].mxu0 %v1258
    %v3254 = vpop.f32.mrb[0].mxu0
    %v3255 = vadd.f32 0.0, %v3254
    %v3256 = vpop.f32.mrb[0].mxu0
    %v3257 = vadd.f32 0.0, %v3256
    %v3258 = vpop.f32.mrb[0].mxu0
    %v3259 = vadd.f32 0.0, %v3258
    %v3260 = vpop.f32.mrb[0].mxu0
    %v3261 = vadd.f32 0.0, %v3260
    %3262 = vmatprep.mubr.bf16.mxu0 %v1265
    %3263 = vmatmul.mubr.bf16.gmra.mrb[0].mxu0 %v1264
    %v3264 = vpop.f32.mrb[0].mxu0
    %v3265 = vadd.f32 0.0, %v3264
    %v3266 = vpop.f32.mrb[0].mxu0
    %v3267 = vadd.f32 0.0, %v3266
    %v3268 = vpop.f32.mrb[0].mxu0
    %v3269 = vadd.f32 0.0, %v3268
    %v3270 = vpop.f32.mrb[0].mxu0
    %v3271 = vadd.f32 0.0, %v3270
    %3272 = vmatprep.mubr.bf16.mxu0 %v1271
    %3273 = vmatmul.mubr.bf16.gmra.mrb[0].mxu0 %v1270
    %v3274 = vpop.f32.mrb[0].mxu0
    %v3275 = vadd.f32 0.0, %v3274
    %v3276 = vpop.f32.mrb[0].mxu0
    %v3277 = vadd.f32 0.0, %v3276
    %v3278 = vpop.f32.mrb[0].mxu0
    %v3279 = vadd.f32 0.0, %v3278
    %v3280 = vpop.f32.mrb[0].mxu0
    %v3281 = vadd.f32 0.0, %v3280
    %3282 = vmatprep.mubr.bf16.mxu0 %v1277
    %3283 = vmatmul.mubr.bf16.gmra.mrb[0].mxu0 %v1276
    %v3284 = vpop.f32.mrb[0].mxu0
    %v3285 = vadd.f32 0.0, %v3284
    %v3286 = vpop.f32.mrb[0].mxu0
    %v3287 = vadd.f32 0.0, %v3286
    %v3288 = vpop.f32.mrb[0].mxu0
    %v3289 = vadd.f32 0.0, %v3288
    %v3290 = vpop.f32.mrb[0].mxu0
    %v3291 = vadd.f32 0.0, %v3290
    %3292 = vmatprep.mubr.bf16.mxu0 %v1283
    %3293 = vmatmul.mubr.bf16.gmra.mrb[0].mxu0 %v1282
    %v3294 = vpop.f32.mrb[0].mxu0
    %v3295 = vadd.f32 0.0, %v3294
    %v3296 = vpop.f32.mrb[0].mxu0
    %v3297 = vadd.f32 0.0, %v3296
    %v3298 = vpop.f32.mrb[0].mxu0
    %v3299 = vadd.f32 0.0, %v3298
    %v3300 = vpop.f32.mrb[0].mxu0
    %v3301 = vadd.f32 0.0, %v3300
    %3302 = vmatprep.mubr.bf16.mxu0 %v1289
    %3303 = vmatmul.mubr.bf16.gmra.mrb[0].mxu0 %v1288
    %v3304 = vpop.f32.mrb[0].mxu0
    %v3305 = vadd.f32 0.0, %v3304
    %v3306 = vpop.f32.mrb[0].mxu0
    %v3307 = vadd.f32 0.0, %v3306
    %v3308 = vpop.f32.mrb[0].mxu0
    %v3309 = vadd.f32 0.0, %v3308
    %v3310 = vpop.f32.mrb[0].mxu0
    %v3311 = vadd.f32 0.0, %v3310
    %3312 = vmatprep.mubr.bf16.mxu0 %v1295
    %3313 = vmatmul.mubr.bf16.gmra.mrb[0].mxu0 %v1294
    %v3314 = vpop.f32.mrb[0].mxu0
    %v3315 = vadd.f32 0.0, %v3314
    %v3316 = vpop.f32.mrb[0].mxu0
    %v3317 = vadd.f32 0.0, %v3316
    %v3318 = vpop.f32.mrb[0].mxu0
    %v3319 = vadd.f32 0.0, %v3318
    %v3320 = vpop.f32.mrb[0].mxu0
    %v3321 = vadd.f32 0.0, %v3320
    %3322 = vmatprep.mubr.bf16.mxu0 %v1301
    %3323 = vmatmul.mubr.bf16.gmra.mrb[0].mxu0 %v1300
    %v3324 = vpop.f32.mrb[0].mxu0
    %v3325 = vadd.f32 0.0, %v3324
    %v3326 = vpop.f32.mrb[0].mxu0
    %v3327 = vadd.f32 0.0, %v3326
    %v3328 = vpop.f32.mrb[0].mxu0
    %v3329 = vadd.f32 0.0, %v3328
    %v3330 = vpop.f32.mrb[0].mxu0
    %v3331 = vadd.f32 0.0, %v3330
    %3332 = vmatprep.mubr.bf16.mxu0 %v1307
    %3333 = vmatmul.mubr.bf16.gmra.mrb[0].mxu0 %v1306
    %v3334 = vpop.f32.mrb[0].mxu0
    %v3335 = vadd.f32 0.0, %v3334
    %v3336 = vpop.f32.mrb[0].mxu0
    %v3337 = vadd.f32 0.0, %v3336
    %v3338 = vpop.f32.mrb[0].mxu0
    %v3339 = vadd.f32 0.0, %v3338
    %v3340 = vpop.f32.mrb[0].mxu0
    %v3341 = vadd.f32 0.0, %v3340
    %3342 = vmatprep.mubr.bf16.mxu0 %v1313
    %3343 = vmatmul.mubr.bf16.gmra.mrb[0].mxu0 %v1312
    %v3344 = vpop.f32.mrb[0].mxu0
    %v3345 = vadd.f32 0.0, %v3344
    %v3346 = vpop.f32.mrb[0].mxu0
    %v3347 = vadd.f32 0.0, %v3346
    %v3348 = vpop.f32.mrb[0].mxu0
    %v3349 = vadd.f32 0.0, %v3348
    %v3350 = vpop.f32.mrb[0].mxu0
    %v3351 = vadd.f32 0.0, %v3350
    %3352 = vmatprep.mubr.bf16.mxu0 %v1319
    %3353 = vmatmul.mubr.bf16.gmra.mrb[0].mxu0 %v1318
    %v3354 = vpop.f32.mrb[0].mxu0
    %v3355 = vadd.f32 0.0, %v3354
    %v3356 = vpop.f32.mrb[0].mxu0
    %v3357 = vadd.f32 0.0, %v3356
    %v3358 = vpop.f32.mrb[0].mxu0
    %v3359 = vadd.f32 0.0, %v3358
    %v3360 = vpop.f32.mrb[0].mxu0
    %v3361 = vadd.f32 0.0, %v3360
    %3362 = vmatprep.mubr.bf16.mxu0 %v1325
    %3363 = vmatmul.mubr.bf16.gmra.mrb[0].mxu0 %v1324
    %v3364 = vpop.f32.mrb[0].mxu0
    %v3365 = vadd.f32 0.0, %v3364
    %v3366 = vpop.f32.mrb[0].mxu0
    %v3367 = vadd.f32 0.0, %v3366
    %v3368 = vpop.f32.mrb[0].mxu0
    %v3369 = vadd.f32 0.0, %v3368
    %v3370 = vpop.f32.mrb[0].mxu0
    %v3371 = vadd.f32 0.0, %v3370
    %3372 = vmatprep.mubr.bf16.mxu0 %v1331
    %3373 = vmatmul.mubr.bf16.gmra.mrb[0].mxu0 %v1330
    %v3374 = vpop.f32.mrb[0].mxu0
    %v3375 = vadd.f32 0.0, %v3374
    %v3376 = vpop.f32.mrb[0].mxu0
    %v3377 = vadd.f32 0.0, %v3376
    %v3378 = vpop.f32.mrb[0].mxu0
    %v3379 = vadd.f32 0.0, %v3378
    %v3380 = vpop.f32.mrb[0].mxu0
    %v3381 = vadd.f32 0.0, %v3380
    %3382 = vmatprep.mubr.bf16.mxu0 %v1337
    %3383 = vmatmul.mubr.bf16.gmra.mrb[0].mxu0 %v1336
    %v3384 = vpop.f32.mrb[0].mxu0
    %v3385 = vadd.f32 0.0, %v3384
    %v3386 = vpop.f32.mrb[0].mxu0
    %v3387 = vadd.f32 0.0, %v3386
    %v3388 = vpop.f32.mrb[0].mxu0
    %v3389 = vadd.f32 0.0, %v3388
    %v3390 = vpop.f32.mrb[0].mxu0
    %v3391 = vadd.f32 0.0, %v3390
    %3392 = vmatprep.mubr.bf16.mxu0 %v1343
    %3393 = vmatmul.mubr.bf16.gmra.mrb[0].mxu0 %v1342
    %v3394 = vpop.f32.mrb[0].mxu0
    %v3395 = vadd.f32 0.0, %v3394
    %v3396 = vpop.f32.mrb[0].mxu0
    %v3397 = vadd.f32 0.0, %v3396
    %v3398 = vpop.f32.mrb[0].mxu0
    %v3399 = vadd.f32 0.0, %v3398
    %v3400 = vpop.f32.mrb[0].mxu0
    %v3401 = vadd.f32 0.0, %v3400
    %3402 = vmatprep.mubr.bf16.mxu0 %v1349
    %3403 = vmatmul.mubr.bf16.gmra.mrb[0].mxu0 %v1348
    %v3404 = vpop.f32.mrb[0].mxu0
    %v3405 = vadd.f32 0.0, %v3404
    %v3406 = vpop.f32.mrb[0].mxu0
    %v3407 = vadd.f32 0.0, %v3406
    %v3408 = vpop.f32.mrb[0].mxu0
    %v3409 = vadd.f32 0.0, %v3408
    %v3410 = vpop.f32.mrb[0].mxu0
    %v3411 = vadd.f32 0.0, %v3410
    %3412 = vmatprep.mubr.bf16.mxu0 %v1355
    %3413 = vmatmul.mubr.bf16.gmra.mrb[0].mxu0 %v1354
    %v3414 = vpop.f32.mrb[0].mxu0
    %v3415 = vadd.f32 0.0, %v3414
    %v3416 = vpop.f32.mrb[0].mxu0
    %v3417 = vadd.f32 0.0, %v3416
    %v3418 = vpop.f32.mrb[0].mxu0
    %v3419 = vadd.f32 0.0, %v3418
    %v3420 = vpop.f32.mrb[0].mxu0
    %v3421 = vadd.f32 0.0, %v3420
    %3422 = vmatprep.mubr.bf16.mxu0 %v1361
    %3423 = vmatmul.mubr.bf16.gmra.mrb[0].mxu0 %v1360
    %v3424 = vpop.f32.mrb[0].mxu0
    %v3425 = vadd.f32 0.0, %v3424
    %v3426 = vpop.f32.mrb[0].mxu0
    %v3427 = vadd.f32 0.0, %v3426
    %v3428 = vpop.f32.mrb[0].mxu0
    %v3429 = vadd.f32 0.0, %v3428
    %v3430 = vpop.f32.mrb[0].mxu0
    %v3431 = vadd.f32 0.0, %v3430
    %3432 = vmatprep.mubr.bf16.mxu0 %v1367
    %3433 = vmatmul.mubr.bf16.gmra.mrb[0].mxu0 %v1366
    %v3434 = vpop.f32.mrb[0].mxu0
    %v3435 = vadd.f32 0.0, %v3434
    %v3436 = vpop.f32.mrb[0].mxu0
    %v3437 = vadd.f32 0.0, %v3436
    %v3438 = vpop.f32.mrb[0].mxu0
    %v3439 = vadd.f32 0.0, %v3438
    %v3440 = vpop.f32.mrb[0].mxu0
    %v3441 = vadd.f32 0.0, %v3440
    %3442 = vmatprep.mubr.bf16.mxu0 %v1373
    %3443 = vmatmul.mubr.bf16.gmra.mrb[0].mxu0 %v1372
    %v3444 = vpop.f32.mrb[0].mxu0
    %v3445 = vadd.f32 0.0, %v3444
    %v3446 = vpop.f32.mrb[0].mxu0
    %v3447 = vadd.f32 0.0, %v3446
    %v3448 = vpop.f32.mrb[0].mxu0
    %v3449 = vadd.f32 0.0, %v3448
    %v3450 = vpop.f32.mrb[0].mxu0
    %v3451 = vadd.f32 0.0, %v3450
    %3452 = vmatprep.mubr.bf16.mxu0 %v1379
    %3453 = vmatmul.mubr.bf16.gmra.mrb[0].mxu0 %v1378
    %v3454 = vpop.f32.mrb[0].mxu0
    %v3455 = vadd.f32 0.0, %v3454
    %v3456 = vpop.f32.mrb[0].mxu0
    %v3457 = vadd.f32 0.0, %v3456
    %v3458 = vpop.f32.mrb[0].mxu0
    %v3459 = vadd.f32 0.0, %v3458
    %v3460 = vpop.f32.mrb[0].mxu0
    %v3461 = vadd.f32 0.0, %v3460
    %3462 = vmatprep.mubr.bf16.mxu0 %v1385
    %3463 = vmatmul.mubr.bf16.gmra.mrb[0].mxu0 %v1384
    %v3464 = vpop.f32.mrb[0].mxu0
    %v3465 = vadd.f32 0.0, %v3464
    %v3466 = vpop.f32.mrb[0].mxu0
    %v3467 = vadd.f32 0.0, %v3466
    %v3468 = vpop.f32.mrb[0].mxu0
    %v3469 = vadd.f32 0.0, %v3468
    %v3470 = vpop.f32.mrb[0].mxu0
    %v3471 = vadd.f32 0.0, %v3470
    %3472 = vmatprep.mubr.bf16.mxu0 %v1391
    %3473 = vmatmul.mubr.bf16.gmra.mrb[0].mxu0 %v1390
    %v3474 = vpop.f32.mrb[0].mxu0
    %v3475 = vadd.f32 0.0, %v3474
    %v3476 = vpop.f32.mrb[0].mxu0
    %v3477 = vadd.f32 0.0, %v3476
    %v3478 = vpop.f32.mrb[0].mxu0
    %v3479 = vadd.f32 0.0, %v3478
    %v3480 = vpop.f32.mrb[0].mxu0
    %v3481 = vadd.f32 0.0, %v3480
    %3482 = vmatprep.mubr.bf16.mxu0 %v1397
    %3483 = vmatmul.mubr.bf16.gmra.mrb[0].mxu0 %v1396
    %v3484 = vpop.f32.mrb[0].mxu0
    %v3485 = vadd.f32 0.0, %v3484
    %v3486 = vpop.f32.mrb[0].mxu0
    %v3487 = vadd.f32 0.0, %v3486
    %v3488 = vpop.f32.mrb[0].mxu0
    %v3489 = vadd.f32 0.0, %v3488
    %v3490 = vpop.f32.mrb[0].mxu0
    %v3491 = vadd.f32 0.0, %v3490
    %3492 = vmatprep.mubr.bf16.mxu0 %v1403
    %3493 = vmatmul.mubr.bf16.gmra.mrb[0].mxu0 %v1402
    %v3494 = vpop.f32.mrb[0].mxu0
    %v3495 = vadd.f32 0.0, %v3494
    %v3496 = vpop.f32.mrb[0].mxu0
    %v3497 = vadd.f32 0.0, %v3496
    %v3498 = vpop.f32.mrb[0].mxu0
    %v3499 = vadd.f32 0.0, %v3498
    %v3500 = vpop.f32.mrb[0].mxu0
    %v3501 = vadd.f32 0.0, %v3500
    %3502 = vmatprep.mubr.bf16.mxu0 %v1409
    %3503 = vmatmul.mubr.bf16.gmra.mrb[0].mxu0 %v1408
    %v3504 = vpop.f32.mrb[0].mxu0
    %v3505 = vadd.f32 0.0, %v3504
    %v3506 = vpop.f32.mrb[0].mxu0
    %v3507 = vadd.f32 0.0, %v3506
    %v3508 = vpop.f32.mrb[0].mxu0
    %v3509 = vadd.f32 0.0, %v3508
    %v3510 = vpop.f32.mrb[0].mxu0
    %v3511 = vadd.f32 0.0, %v3510
    %3512 = vmatprep.mubr.bf16.mxu0 %v1415
    %3513 = vmatmul.mubr.bf16.gmra.mrb[0].mxu0 %v1414
    %v3514 = vpop.f32.mrb[0].mxu0
    %v3515 = vadd.f32 0.0, %v3514
    %v3516 = vpop.f32.mrb[0].mxu0
    %v3517 = vadd.f32 0.0, %v3516
    %v3518 = vpop.f32.mrb[0].mxu0
    %v3519 = vadd.f32 0.0, %v3518
    %v3520 = vpop.f32.mrb[0].mxu0
    %v3521 = vadd.f32 0.0, %v3520
    %3522 = vmatprep.mubr.bf16.mxu0 %v1421
    %3523 = vmatmul.mubr.bf16.gmra.mrb[0].mxu0 %v1420
    %v3524 = vpop.f32.mrb[0].mxu0
    %v3525 = vadd.f32 0.0, %v3524
    %v3526 = vpop.f32.mrb[0].mxu0
    %v3527 = vadd.f32 0.0, %v3526
    %v3528 = vpop.f32.mrb[0].mxu0
    %v3529 = vadd.f32 0.0, %v3528
    %v3530 = vpop.f32.mrb[0].mxu0
    %v3531 = vadd.f32 0.0, %v3530
    %3532 = vmatprep.mubr.bf16.mxu0 %v1427
    %3533 = vmatmul.mubr.bf16.gmra.mrb[0].mxu0 %v1426
    %v3534 = vpop.f32.mrb[0].mxu0
    %v3535 = vadd.f32 0.0, %v3534
    %v3536 = vpop.f32.mrb[0].mxu0
    %v3537 = vadd.f32 0.0, %v3536
    %v3538 = vpop.f32.mrb[0].mxu0
    %v3539 = vadd.f32 0.0, %v3538
    %v3540 = vpop.f32.mrb[0].mxu0
    %v3541 = vadd.f32 0.0, %v3540
    %3542 = vmatprep.mubr.bf16.mxu0 %v1433
    %3543 = vmatmul.mubr.bf16.gmra.mrb[0].mxu0 %v1432
    %v3544 = vpop.f32.mrb[0].mxu0
    %v3545 = vadd.f32 0.0, %v3544
    %v3546 = vpop.f32.mrb[0].mxu0
    %v3547 = vadd.f32 0.0, %v3546
    %v3548 = vpop.f32.mrb[0].mxu0
    %v3549 = vadd.f32 0.0, %v3548
    %v3550 = vpop.f32.mrb[0].mxu0
    %v3551 = vadd.f32 0.0, %v3550
    %3552 = vmatprep.mubr.bf16.mxu0 %v1439
    %3553 = vmatmul.mubr.bf16.gmra.mrb[0].mxu0 %v1438
    %v3554 = vpop.f32.mrb[0].mxu0
    %v3555 = vadd.f32 0.0, %v3554
    %v3556 = vpop.f32.mrb[0].mxu0
    %v3557 = vadd.f32 0.0, %v3556
    %v3558 = vpop.f32.mrb[0].mxu0
    %v3559 = vadd.f32 0.0, %v3558
    %v3560 = vpop.f32.mrb[0].mxu0
    %v3561 = vadd.f32 0.0, %v3560
    %3562 = vmatprep.mubr.bf16.mxu0 %v1445
    %3563 = vmatmul.mubr.bf16.gmra.mrb[0].mxu0 %v1444
    %v3564 = vpop.f32.mrb[0].mxu0
    %v3565 = vadd.f32 0.0, %v3564
    %v3566 = vpop.f32.mrb[0].mxu0
    %v3567 = vadd.f32 0.0, %v3566
    %v3568 = vpop.f32.mrb[0].mxu0
    %v3569 = vadd.f32 0.0, %v3568
    %v3570 = vpop.f32.mrb[0].mxu0
    %v3571 = vadd.f32 0.0, %v3570
    %3572 = vmatprep.mubr.bf16.mxu0 %v1451
    %3573 = vmatmul.mubr.bf16.gmra.mrb[0].mxu0 %v1450
    %v3574 = vpop.f32.mrb[0].mxu0
    %v3575 = vadd.f32 0.0, %v3574
    %v3576 = vpop.f32.mrb[0].mxu0
    %v3577 = vadd.f32 0.0, %v3576
    %v3578 = vpop.f32.mrb[0].mxu0
    %v3579 = vadd.f32 0.0, %v3578
    %v3580 = vpop.f32.mrb[0].mxu0
    %v3581 = vadd.f32 0.0, %v3580
    %3582 = vmatprep.mubr.bf16.mxu0 %v1457
    %3583 = vmatmul.mubr.bf16.gmra.mrb[0].mxu0 %v1456
    %v3584 = vpop.f32.mrb[0].mxu0
    %v3585 = vadd.f32 0.0, %v3584
    %v3586 = vpop.f32.mrb[0].mxu0
    %v3587 = vadd.f32 0.0, %v3586
    %v3588 = vpop.f32.mrb[0].mxu0
    %v3589 = vadd.f32 0.0, %v3588
    %v3590 = vpop.f32.mrb[0].mxu0
    %v3591 = vadd.f32 0.0, %v3590
    %3592 = vmatprep.mubr.bf16.mxu0 %v1463
    %3593 = vmatmul.mubr.bf16.gmra.mrb[0].mxu0 %v1462
    %v3594 = vpop.f32.mrb[0].mxu0
    %v3595 = vadd.f32 0.0, %v3594
    %v3596 = vpop.f32.mrb[0].mxu0
    %v3597 = vadd.f32 0.0, %v3596
    %v3598 = vpop.f32.mrb[0].mxu0
    %v3599 = vadd.f32 0.0, %v3598
    %v3600 = vpop.f32.mrb[0].mxu0
    %v3601 = vadd.f32 0.0, %v3600
    %3602 = vmatprep.mubr.bf16.mxu0 %v1469
    %3603 = vmatmul.mubr.bf16.gmra.mrb[0].mxu0 %v1468
    %v3604 = vpop.f32.mrb[0].mxu0
    %v3605 = vadd.f32 0.0, %v3604
    %v3606 = vpop.f32.mrb[0].mxu0
    %v3607 = vadd.f32 0.0, %v3606
    %v3608 = vpop.f32.mrb[0].mxu0
    %v3609 = vadd.f32 0.0, %v3608
    %v3610 = vpop.f32.mrb[0].mxu0
    %v3611 = vadd.f32 0.0, %v3610
    %3612 = vmatprep.mubr.bf16.mxu0 %v1475
    %3613 = vmatmul.mubr.bf16.gmra.mrb[0].mxu0 %v1474
    %v3614 = vpop.f32.mrb[0].mxu0
    %v3615 = vadd.f32 0.0, %v3614
    %v3616 = vpop.f32.mrb[0].mxu0
    %v3617 = vadd.f32 0.0, %v3616
    %v3618 = vpop.f32.mrb[0].mxu0
    %v3619 = vadd.f32 0.0, %v3618
    %v3620 = vpop.f32.mrb[0].mxu0
    %v3621 = vadd.f32 0.0, %v3620
    %3622 = vmatprep.mubr.bf16.mxu0 %v1481
    %3623 = vmatmul.mubr.bf16.gmra.mrb[0].mxu0 %v1480
    %v3624 = vpop.f32.mrb[0].mxu0
    %v3625 = vadd.f32 0.0, %v3624
    %v3626 = vpop.f32.mrb[0].mxu0
    %v3627 = vadd.f32 0.0, %v3626
    %v3628 = vpop.f32.mrb[0].mxu0
    %v3629 = vadd.f32 0.0, %v3628
    %v3630 = vpop.f32.mrb[0].mxu0
    %v3631 = vadd.f32 0.0, %v3630
    %3632 = vmatprep.mubr.bf16.mxu0 %v1487
    %3633 = vmatmul.mubr.bf16.gmra.mrb[0].mxu0 %v1486
    %v3634 = vpop.f32.mrb[0].mxu0
    %v3635 = vadd.f32 0.0, %v3634
    %v3636 = vpop.f32.mrb[0].mxu0
    %v3637 = vadd.f32 0.0, %v3636
    %v3638 = vpop.f32.mrb[0].mxu0
    %v3639 = vadd.f32 0.0, %v3638
    %v3640 = vpop.f32.mrb[0].mxu0
    %v3641 = vadd.f32 0.0, %v3640
    %3642 = vmatprep.mubr.bf16.mxu0 %v1493
    %3643 = vmatmul.mubr.bf16.gmra.mrb[0].mxu0 %v1492
    %v3644 = vpop.f32.mrb[0].mxu0
    %v3645 = vadd.f32 0.0, %v3644
    %v3646 = vpop.f32.mrb[0].mxu0
    %v3647 = vadd.f32 0.0, %v3646
    %v3648 = vpop.f32.mrb[0].mxu0
    %v3649 = vadd.f32 0.0, %v3648
    %v3650 = vpop.f32.mrb[0].mxu0
    %v3651 = vadd.f32 0.0, %v3650
    %3652 = vmatprep.mubr.bf16.mxu0 %v1499
    %3653 = vmatmul.mubr.bf16.gmra.mrb[0].mxu0 %v1498
    %v3654 = vpop.f32.mrb[0].mxu0
    %v3655 = vadd.f32 0.0, %v3654
    %v3656 = vpop.f32.mrb[0].mxu0
    %v3657 = vadd.f32 0.0, %v3656
    %v3658 = vpop.f32.mrb[0].mxu0
    %v3659 = vadd.f32 0.0, %v3658
    %v3660 = vpop.f32.mrb[0].mxu0
    %v3661 = vadd.f32 0.0, %v3660
    %3662 = vmatprep.mubr.bf16.mxu0 %v1505
    %3663 = vmatmul.mubr.bf16.gmra.mrb[0].mxu0 %v1504
    %v3664 = vpop.f32.mrb[0].mxu0
    %v3665 = vadd.f32 0.0, %v3664
    %v3666 = vpop.f32.mrb[0].mxu0
    %v3667 = vadd.f32 0.0, %v3666
    %v3668 = vpop.f32.mrb[0].mxu0
    %v3669 = vadd.f32 0.0, %v3668
    %v3670 = vpop.f32.mrb[0].mxu0
    %v3671 = vadd.f32 0.0, %v3670
    %3672 = vmatprep.mubr.bf16.mxu0 %v1511
    %3673 = vmatmul.mubr.bf16.gmra.mrb[0].mxu0 %v1510
    %v3674 = vpop.f32.mrb[0].mxu0
    %v3675 = vadd.f32 0.0, %v3674
    %v3676 = vpop.f32.mrb[0].mxu0
    %v3677 = vadd.f32 0.0, %v3676
    %v3678 = vpop.f32.mrb[0].mxu0
    %v3679 = vadd.f32 0.0, %v3678
    %v3680 = vpop.f32.mrb[0].mxu0
    %v3681 = vadd.f32 0.0, %v3680
    %3682 = vmatprep.mubr.bf16.mxu0 %v1517
    %3683 = vmatmul.mubr.bf16.gmra.mrb[0].mxu0 %v1516
    %v3684 = vpop.f32.mrb[0].mxu0
    %v3685 = vadd.f32 0.0, %v3684
    %v3686 = vpop.f32.mrb[0].mxu0
    %v3687 = vadd.f32 0.0, %v3686
    %v3688 = vpop.f32.mrb[0].mxu0
    %v3689 = vadd.f32 0.0, %v3688
    %v3690 = vpop.f32.mrb[0].mxu0
    %v3691 = vadd.f32 0.0, %v3690
    %3692 = vmatprep.mubr.bf16.mxu0 %v1523
    %3693 = vmatmul.mubr.bf16.gmra.mrb[0].mxu0 %v1522
    %v3694 = vpop.f32.mrb[0].mxu0
    %v3695 = vadd.f32 0.0, %v3694
    %v3696 = vpop.f32.mrb[0].mxu0
    %v3697 = vadd.f32 0.0, %v3696
    %v3698 = vpop.f32.mrb[0].mxu0
    %v3699 = vadd.f32 0.0, %v3698
    %v3700 = vpop.f32.mrb[0].mxu0
    %v3701 = vadd.f32 0.0, %v3700
    %3702 = vmatprep.mubr.bf16.mxu0 %v1529
    %3703 = vmatmul.mubr.bf16.gmra.mrb[0].mxu0 %v1528
    %v3704 = vpop.f32.mrb[0].mxu0
    %v3705 = vadd.f32 0.0, %v3704
    %v3706 = vpop.f32.mrb[0].mxu0
    %v3707 = vadd.f32 0.0, %v3706
    %v3708 = vpop.f32.mrb[0].mxu0
    %v3709 = vadd.f32 0.0, %v3708
    %v3710 = vpop.f32.mrb[0].mxu0
    %v3711 = vadd.f32 0.0, %v3710
    %3712 = vmatprep.mubr.bf16.mxu0 %v1535
    %3713 = vmatmul.mubr.bf16.gmra.mrb[0].mxu0 %v1534
    %v3714 = vpop.f32.mrb[0].mxu0
    %v3715 = vadd.f32 0.0, %v3714
    %v3716 = vpop.f32.mrb[0].mxu0
    %v3717 = vadd.f32 0.0, %v3716
    %v3718 = vpop.f32.mrb[0].mxu0
    %v3719 = vadd.f32 0.0, %v3718
    %v3720 = vpop.f32.mrb[0].mxu0
    %v3721 = vadd.f32 0.0, %v3720
    %3722 = vdwg.mxu0
    %3723 = vmatprep.subr.bf16.mxu0 %v2645
    %3724 = vmatpush1.bf16.msra.mxu0 %v2644
    %3725 = vmatprep.subr.bf16.mxu0 %v2651
    %3726 = vmatpush1.bf16.msra.mxu0 %v2650
    %3727 = vmatprep.subr.bf16.mxu0 %v2657
    %3728 = vmatpush1.bf16.msra.mxu0 %v2656
    %3729 = vmatprep.subr.bf16.mxu0 %v2663
    %3730 = vmatpush1.bf16.msra.mxu0 %v2662
    %3731 = vmatprep.subr.bf16.mxu0 %v2669
    %3732 = vmatpush1.bf16.msra.mxu0 %v2668
    %3733 = vmatprep.subr.bf16.mxu0 %v2675
    %3734 = vmatpush1.bf16.msra.mxu0 %v2674
    %3735 = vmatprep.subr.bf16.mxu0 %v2681
    %3736 = vmatpush1.bf16.msra.mxu0 %v2680
    %3737 = vmatprep.subr.bf16.mxu0 %v2687
    %3738 = vmatpush1.bf16.msra.mxu0 %v2686
    %3739 = vmatprep.subr.bf16.mxu0 %v2693
    %3740 = vmatpush1.bf16.msra.mxu0 %v2692
    %3741 = vmatprep.subr.bf16.mxu0 %v2699
    %3742 = vmatpush1.bf16.msra.mxu0 %v2698
    %3743 = vmatprep.subr.bf16.mxu0 %v2705
    %3744 = vmatpush1.bf16.msra.mxu0 %v2704
    %3745 = vmatprep.subr.bf16.mxu0 %v2711
    %3746 = vmatpush1.bf16.msra.mxu0 %v2710
    %3747 = vmatprep.subr.bf16.mxu0 %v2717
    %3748 = vmatpush1.bf16.msra.mxu0 %v2716
    %3749 = vmatprep.subr.bf16.mxu0 %v2723
    %3750 = vmatpush1.bf16.msra.mxu0 %v2722
    %3751 = vmatprep.subr.bf16.mxu0 %v2729
    %3752 = vmatpush1.bf16.msra.mxu0 %v2728
    %3753 = vmatprep.subr.bf16.mxu0 %v2735
    %3754 = vmatpush1.bf16.msra.mxu0 %v2734
    %3755 = vmatprep.mubr.bf16.mxu0 %v1249
    %3756 = vmatmul.mubr.bf16.gmra.mrb[0].mxu0 %v1248
    %v3757 = vpop.f32.mrb[0].mxu0
    %v3758 = vadd.f32 %v3235, %v3757
    %v3759 = vpop.f32.mrb[0].mxu0
    %v3760 = vadd.f32 %v3237, %v3759
    %v3761 = vpop.f32.mrb[0].mxu0
    %v3762 = vadd.f32 %v3239, %v3761
    %v3763 = vpop.f32.mrb[0].mxu0
    %v3764 = vadd.f32 %v3241, %v3763
    %3765 = vmatprep.mubr.bf16.mxu0 %v1255
    %3766 = vmatmul.mubr.bf16.gmra.mrb[0].mxu0 %v1254
    %v3767 = vpop.f32.mrb[0].mxu0
    %v3768 = vadd.f32 %v3245, %v3767
    %v3769 = vpop.f32.mrb[0].mxu0
    %v3770 = vadd.f32 %v3247, %v3769
    %v3771 = vpop.f32.mrb[0].mxu0
    %v3772 = vadd.f32 %v3249, %v3771
    %v3773 = vpop.f32.mrb[0].mxu0
    %v3774 = vadd.f32 %v3251, %v3773
    %3775 = vmatprep.mubr.bf16.mxu0 %v1261
    %3776 = vmatmul.mubr.bf16.gmra.mrb[0].mxu0 %v1260
    %v3777 = vpop.f32.mrb[0].mxu0
    %v3778 = vadd.f32 %v3255, %v3777
    %v3779 = vpop.f32.mrb[0].mxu0
    %v3780 = vadd.f32 %v3257, %v3779
    %v3781 = vpop.f32.mrb[0].mxu0
    %v3782 = vadd.f32 %v3259, %v3781
    %v3783 = vpop.f32.mrb[0].mxu0
    %v3784 = vadd.f32 %v3261, %v3783
    %3785 = vmatprep.mubr.bf16.mxu0 %v1267
    %3786 = vmatmul.mubr.bf16.gmra.mrb[0].mxu0 %v1266
    %v3787 = vpop.f32.mrb[0].mxu0
    %v3788 = vadd.f32 %v3265, %v3787
    %v3789 = vpop.f32.mrb[0].mxu0
    %v3790 = vadd.f32 %v3267, %v3789
    %v3791 = vpop.f32.mrb[0].mxu0
    %v3792 = vadd.f32 %v3269, %v3791
    %v3793 = vpop.f32.mrb[0].mxu0
    %v3794 = vadd.f32 %v3271, %v3793
    %3795 = vmatprep.mubr.bf16.mxu0 %v1273
    %3796 = vmatmul.mubr.bf16.gmra.mrb[0].mxu0 %v1272
    %v3797 = vpop.f32.mrb[0].mxu0
    %v3798 = vadd.f32 %v3275, %v3797
    %v3799 = vpop.f32.mrb[0].mxu0
    %v3800 = vadd.f32 %v3277, %v3799
    %v3801 = vpop.f32.mrb[0].mxu0
    %v3802 = vadd.f32 %v3279, %v3801
    %v3803 = vpop.f32.mrb[0].mxu0
    %v3804 = vadd.f32 %v3281, %v3803
    %3805 = vmatprep.mubr.bf16.mxu0 %v1279
    %3806 = vmatmul.mubr.bf16.gmra.mrb[0].mxu0 %v1278
    %v3807 = vpop.f32.mrb[0].mxu0
    %v3808 = vadd.f32 %v3285, %v3807
    %v3809 = vpop.f32.mrb[0].mxu0
    %v3810 = vadd.f32 %v3287, %v3809
    %v3811 = vpop.f32.mrb[0].mxu0
    %v3812 = vadd.f32 %v3289, %v3811
    %v3813 = vpop.f32.mrb[0].mxu0
    %v3814 = vadd.f32 %v3291, %v3813
    %3815 = vmatprep.mubr.bf16.mxu0 %v1285
    %3816 = vmatmul.mubr.bf16.gmra.mrb[0].mxu0 %v1284
    %v3817 = vpop.f32.mrb[0].mxu0
    %v3818 = vadd.f32 %v3295, %v3817
    %v3819 = vpop.f32.mrb[0].mxu0
    %v3820 = vadd.f32 %v3297, %v3819
    %v3821 = vpop.f32.mrb[0].mxu0
    %v3822 = vadd.f32 %v3299, %v3821
    %v3823 = vpop.f32.mrb[0].mxu0
    %v3824 = vadd.f32 %v3301, %v3823
    %3825 = vmatprep.mubr.bf16.mxu0 %v1291
    %3826 = vmatmul.mubr.bf16.gmra.mrb[0].mxu0 %v1290
    %v3827 = vpop.f32.mrb[0].mxu0
    %v3828 = vadd.f32 %v3305, %v3827
    %v3829 = vpop.f32.mrb[0].mxu0
    %v3830 = vadd.f32 %v3307, %v3829
    %v3831 = vpop.f32.mrb[0].mxu0
    %v3832 = vadd.f32 %v3309, %v3831
    %v3833 = vpop.f32.mrb[0].mxu0
    %v3834 = vadd.f32 %v3311, %v3833
    %3835 = vmatprep.mubr.bf16.mxu0 %v1297
    %3836 = vmatmul.mubr.bf16.gmra.mrb[0].mxu0 %v1296
    %v3837 = vpop.f32.mrb[0].mxu0
    %v3838 = vadd.f32 %v3315, %v3837
    %v3839 = vpop.f32.mrb[0].mxu0
    %v3840 = vadd.f32 %v3317, %v3839
    %v3841 = vpop.f32.mrb[0].mxu0
    %v3842 = vadd.f32 %v3319, %v3841
    %v3843 = vpop.f32.mrb[0].mxu0
    %v3844 = vadd.f32 %v3321, %v3843
    %3845 = vmatprep.mubr.bf16.mxu0 %v1303
    %3846 = vmatmul.mubr.bf16.gmra.mrb[0].mxu0 %v1302
    %v3847 = vpop.f32.mrb[0].mxu0
    %v3848 = vadd.f32 %v3325, %v3847
    %v3849 = vpop.f32.mrb[0].mxu0
    %v3850 = vadd.f32 %v3327, %v3849
    %v3851 = vpop.f32.mrb[0].mxu0
    %v3852 = vadd.f32 %v3329, %v3851
    %v3853 = vpop.f32.mrb[0].mxu0
    %v3854 = vadd.f32 %v3331, %v3853
    %3855 = vmatprep.mubr.bf16.mxu0 %v1309
    %3856 = vmatmul.mubr.bf16.gmra.mrb[0].mxu0 %v1308
    %v3857 = vpop.f32.mrb[0].mxu0
    %v3858 = vadd.f32 %v3335, %v3857
    %v3859 = vpop.f32.mrb[0].mxu0
    %v3860 = vadd.f32 %v3337, %v3859
    %v3861 = vpop.f32.mrb[0].mxu0
    %v3862 = vadd.f32 %v3339, %v3861
    %v3863 = vpop.f32.mrb[0].mxu0
    %v3864 = vadd.f32 %v3341, %v3863
    %3865 = vmatprep.mubr.bf16.mxu0 %v1315
    %3866 = vmatmul.mubr.bf16.gmra.mrb[0].mxu0 %v1314
    %v3867 = vpop.f32.mrb[0].mxu0
    %v3868 = vadd.f32 %v3345, %v3867
    %v3869 = vpop.f32.mrb[0].mxu0
    %v3870 = vadd.f32 %v3347, %v3869
    %v3871 = vpop.f32.mrb[0].mxu0
    %v3872 = vadd.f32 %v3349, %v3871
    %v3873 = vpop.f32.mrb[0].mxu0
    %v3874 = vadd.f32 %v3351, %v3873
    %3875 = vmatprep.mubr.bf16.mxu0 %v1321
    %3876 = vmatmul.mubr.bf16.gmra.mrb[0].mxu0 %v1320
    %v3877 = vpop.f32.mrb[0].mxu0
    %v3878 = vadd.f32 %v3355, %v3877
    %v3879 = vpop.f32.mrb[0].mxu0
    %v3880 = vadd.f32 %v3357, %v3879
    %v3881 = vpop.f32.mrb[0].mxu0
    %v3882 = vadd.f32 %v3359, %v3881
    %v3883 = vpop.f32.mrb[0].mxu0
    %v3884 = vadd.f32 %v3361, %v3883
    %3885 = vmatprep.mubr.bf16.mxu0 %v1327
    %3886 = vmatmul.mubr.bf16.gmra.mrb[0].mxu0 %v1326
    %v3887 = vpop.f32.mrb[0].mxu0
    %v3888 = vadd.f32 %v3365, %v3887
    %v3889 = vpop.f32.mrb[0].mxu0
    %v3890 = vadd.f32 %v3367, %v3889
    %v3891 = vpop.f32.mrb[0].mxu0
    %v3892 = vadd.f32 %v3369, %v3891
    %v3893 = vpop.f32.mrb[0].mxu0
    %v3894 = vadd.f32 %v3371, %v3893
    %3895 = vmatprep.mubr.bf16.mxu0 %v1333
    %3896 = vmatmul.mubr.bf16.gmra.mrb[0].mxu0 %v1332
    %v3897 = vpop.f32.mrb[0].mxu0
    %v3898 = vadd.f32 %v3375, %v3897
    %v3899 = vpop.f32.mrb[0].mxu0
    %v3900 = vadd.f32 %v3377, %v3899
    %v3901 = vpop.f32.mrb[0].mxu0
    %v3902 = vadd.f32 %v3379, %v3901
    %v3903 = vpop.f32.mrb[0].mxu0
    %v3904 = vadd.f32 %v3381, %v3903
    %3905 = vmatprep.mubr.bf16.mxu0 %v1339
    %3906 = vmatmul.mubr.bf16.gmra.mrb[0].mxu0 %v1338
    %v3907 = vpop.f32.mrb[0].mxu0
    %v3908 = vadd.f32 %v3385, %v3907
    %v3909 = vpop.f32.mrb[0].mxu0
    %v3910 = vadd.f32 %v3387, %v3909
    %v3911 = vpop.f32.mrb[0].mxu0
    %v3912 = vadd.f32 %v3389, %v3911
    %v3913 = vpop.f32.mrb[0].mxu0
    %v3914 = vadd.f32 %v3391, %v3913
    %3915 = vmatprep.mubr.bf16.mxu0 %v1345
    %3916 = vmatmul.mubr.bf16.gmra.mrb[0].mxu0 %v1344
    %v3917 = vpop.f32.mrb[0].mxu0
    %v3918 = vadd.f32 %v3395, %v3917
    %v3919 = vpop.f32.mrb[0].mxu0
    %v3920 = vadd.f32 %v3397, %v3919
    %v3921 = vpop.f32.mrb[0].mxu0
    %v3922 = vadd.f32 %v3399, %v3921
    %v3923 = vpop.f32.mrb[0].mxu0
    %v3924 = vadd.f32 %v3401, %v3923
    %3925 = vmatprep.mubr.bf16.mxu0 %v1351
    %3926 = vmatmul.mubr.bf16.gmra.mrb[0].mxu0 %v1350
    %v3927 = vpop.f32.mrb[0].mxu0
    %v3928 = vadd.f32 %v3405, %v3927
    %v3929 = vpop.f32.mrb[0].mxu0
    %v3930 = vadd.f32 %v3407, %v3929
    %v3931 = vpop.f32.mrb[0].mxu0
    %v3932 = vadd.f32 %v3409, %v3931
    %v3933 = vpop.f32.mrb[0].mxu0
    %v3934 = vadd.f32 %v3411, %v3933
    %3935 = vmatprep.mubr.bf16.mxu0 %v1357
    %3936 = vmatmul.mubr.bf16.gmra.mrb[0].mxu0 %v1356
    %v3937 = vpop.f32.mrb[0].mxu0
    %v3938 = vadd.f32 %v3415, %v3937
    %v3939 = vpop.f32.mrb[0].mxu0
    %v3940 = vadd.f32 %v3417, %v3939
    %v3941 = vpop.f32.mrb[0].mxu0
    %v3942 = vadd.f32 %v3419, %v3941
    %v3943 = vpop.f32.mrb[0].mxu0
    %v3944 = vadd.f32 %v3421, %v3943
    %3945 = vmatprep.mubr.bf16.mxu0 %v1363
    %3946 = vmatmul.mubr.bf16.gmra.mrb[0].mxu0 %v1362
    %v3947 = vpop.f32.mrb[0].mxu0
    %v3948 = vadd.f32 %v3425, %v3947
    %v3949 = vpop.f32.mrb[0].mxu0
    %v3950 = vadd.f32 %v3427, %v3949
    %v3951 = vpop.f32.mrb[0].mxu0
    %v3952 = vadd.f32 %v3429, %v3951
    %v3953 = vpop.f32.mrb[0].mxu0
    %v3954 = vadd.f32 %v3431, %v3953
    %3955 = vmatprep.mubr.bf16.mxu0 %v1369
    %3956 = vmatmul.mubr.bf16.gmra.mrb[0].mxu0 %v1368
    %v3957 = vpop.f32.mrb[0].mxu0
    %v3958 = vadd.f32 %v3435, %v3957
    %v3959 = vpop.f32.mrb[0].mxu0
    %v3960 = vadd.f32 %v3437, %v3959
    %v3961 = vpop.f32.mrb[0].mxu0
    %v3962 = vadd.f32 %v3439, %v3961
    %v3963 = vpop.f32.mrb[0].mxu0
    %v3964 = vadd.f32 %v3441, %v3963
    %3965 = vmatprep.mubr.bf16.mxu0 %v1375
    %3966 = vmatmul.mubr.bf16.gmra.mrb[0].mxu0 %v1374
    %v3967 = vpop.f32.mrb[0].mxu0
    %v3968 = vadd.f32 %v3445, %v3967
    %v3969 = vpop.f32.mrb[0].mxu0
    %v3970 = vadd.f32 %v3447, %v3969
    %v3971 = vpop.f32.mrb[0].mxu0
    %v3972 = vadd.f32 %v3449, %v3971
    %v3973 = vpop.f32.mrb[0].mxu0
    %v3974 = vadd.f32 %v3451, %v3973
    %3975 = vmatprep.mubr.bf16.mxu0 %v1381
    %3976 = vmatmul.mubr.bf16.gmra.mrb[0].mxu0 %v1380
    %v3977 = vpop.f32.mrb[0].mxu0
    %v3978 = vadd.f32 %v3455, %v3977
    %v3979 = vpop.f32.mrb[0].mxu0
    %v3980 = vadd.f32 %v3457, %v3979
    %v3981 = vpop.f32.mrb[0].mxu0
    %v3982 = vadd.f32 %v3459, %v3981
    %v3983 = vpop.f32.mrb[0].mxu0
    %v3984 = vadd.f32 %v3461, %v3983
    %3985 = vmatprep.mubr.bf16.mxu0 %v1387
    %3986 = vmatmul.mubr.bf16.gmra.mrb[0].mxu0 %v1386
    %v3987 = vpop.f32.mrb[0].mxu0
    %v3988 = vadd.f32 %v3465, %v3987
    %v3989 = vpop.f32.mrb[0].mxu0
    %v3990 = vadd.f32 %v3467, %v3989
    %v3991 = vpop.f32.mrb[0].mxu0
    %v3992 = vadd.f32 %v3469, %v3991
    %v3993 = vpop.f32.mrb[0].mxu0
    %v3994 = vadd.f32 %v3471, %v3993
    %3995 = vmatprep.mubr.bf16.mxu0 %v1393
    %3996 = vmatmul.mubr.bf16.gmra.mrb[0].mxu0 %v1392
    %v3997 = vpop.f32.mrb[0].mxu0
    %v3998 = vadd.f32 %v3475, %v3997
    %v3999 = vpop.f32.mrb[0].mxu0
    %v4000 = vadd.f32 %v3477, %v3999
    %v4001 = vpop.f32.mrb[0].mxu0
    %v4002 = vadd.f32 %v3479, %v4001
    %v4003 = vpop.f32.mrb[0].mxu0
    %v4004 = vadd.f32 %v3481, %v4003
    %4005 = vmatprep.mubr.bf16.mxu0 %v1399
    %4006 = vmatmul.mubr.bf16.gmra.mrb[0].mxu0 %v1398
    %v4007 = vpop.f32.mrb[0].mxu0
    %v4008 = vadd.f32 %v3485, %v4007
    %v4009 = vpop.f32.mrb[0].mxu0
    %v4010 = vadd.f32 %v3487, %v4009
    %v4011 = vpop.f32.mrb[0].mxu0
    %v4012 = vadd.f32 %v3489, %v4011
    %v4013 = vpop.f32.mrb[0].mxu0
    %v4014 = vadd.f32 %v3491, %v4013
    %4015 = vmatprep.mubr.bf16.mxu0 %v1405
    %4016 = vmatmul.mubr.bf16.gmra.mrb[0].mxu0 %v1404
    %v4017 = vpop.f32.mrb[0].mxu0
    %v4018 = vadd.f32 %v3495, %v4017
    %v4019 = vpop.f32.mrb[0].mxu0
    %v4020 = vadd.f32 %v3497, %v4019
    %v4021 = vpop.f32.mrb[0].mxu0
    %v4022 = vadd.f32 %v3499, %v4021
    %v4023 = vpop.f32.mrb[0].mxu0
    %v4024 = vadd.f32 %v3501, %v4023
    %4025 = vmatprep.mubr.bf16.mxu0 %v1411
    %4026 = vmatmul.mubr.bf16.gmra.mrb[0].mxu0 %v1410
    %v4027 = vpop.f32.mrb[0].mxu0
    %v4028 = vadd.f32 %v3505, %v4027
    %v4029 = vpop.f32.mrb[0].mxu0
    %v4030 = vadd.f32 %v3507, %v4029
    %v4031 = vpop.f32.mrb[0].mxu0
    %v4032 = vadd.f32 %v3509, %v4031
    %v4033 = vpop.f32.mrb[0].mxu0
    %v4034 = vadd.f32 %v3511, %v4033
    %4035 = vmatprep.mubr.bf16.mxu0 %v1417
    %4036 = vmatmul.mubr.bf16.gmra.mrb[0].mxu0 %v1416
    %v4037 = vpop.f32.mrb[0].mxu0
    %v4038 = vadd.f32 %v3515, %v4037
    %v4039 = vpop.f32.mrb[0].mxu0
    %v4040 = vadd.f32 %v3517, %v4039
    %v4041 = vpop.f32.mrb[0].mxu0
    %v4042 = vadd.f32 %v3519, %v4041
    %v4043 = vpop.f32.mrb[0].mxu0
    %v4044 = vadd.f32 %v3521, %v4043
    %4045 = vmatprep.mubr.bf16.mxu0 %v1423
    %4046 = vmatmul.mubr.bf16.gmra.mrb[0].mxu0 %v1422
    %v4047 = vpop.f32.mrb[0].mxu0
    %v4048 = vadd.f32 %v3525, %v4047
    %v4049 = vpop.f32.mrb[0].mxu0
    %v4050 = vadd.f32 %v3527, %v4049
    %v4051 = vpop.f32.mrb[0].mxu0
    %v4052 = vadd.f32 %v3529, %v4051
    %v4053 = vpop.f32.mrb[0].mxu0
    %v4054 = vadd.f32 %v3531, %v4053
    %4055 = vmatprep.mubr.bf16.mxu0 %v1429
    %4056 = vmatmul.mubr.bf16.gmra.mrb[0].mxu0 %v1428
    %v4057 = vpop.f32.mrb[0].mxu0
    %v4058 = vadd.f32 %v3535, %v4057
    %v4059 = vpop.f32.mrb[0].mxu0
    %v4060 = vadd.f32 %v3537, %v4059
    %v4061 = vpop.f32.mrb[0].mxu0
    %v4062 = vadd.f32 %v3539, %v4061
    %v4063 = vpop.f32.mrb[0].mxu0
    %v4064 = vadd.f32 %v3541, %v4063
    %4065 = vmatprep.mubr.bf16.mxu0 %v1435
    %4066 = vmatmul.mubr.bf16.gmra.mrb[0].mxu0 %v1434
    %v4067 = vpop.f32.mrb[0].mxu0
    %v4068 = vadd.f32 %v3545, %v4067
    %v4069 = vpop.f32.mrb[0].mxu0
    %v4070 = vadd.f32 %v3547, %v4069
    %v4071 = vpop.f32.mrb[0].mxu0
    %v4072 = vadd.f32 %v3549, %v4071
    %v4073 = vpop.f32.mrb[0].mxu0
    %v4074 = vadd.f32 %v3551, %v4073
    %4075 = vmatprep.mubr.bf16.mxu0 %v1441
    %4076 = vmatmul.mubr.bf16.gmra.mrb[0].mxu0 %v1440
    %v4077 = vpop.f32.mrb[0].mxu0
    %v4078 = vadd.f32 %v3555, %v4077
    %v4079 = vpop.f32.mrb[0].mxu0
    %v4080 = vadd.f32 %v3557, %v4079
    %v4081 = vpop.f32.mrb[0].mxu0
    %v4082 = vadd.f32 %v3559, %v4081
    %v4083 = vpop.f32.mrb[0].mxu0
    %v4084 = vadd.f32 %v3561, %v4083
    %4085 = vmatprep.mubr.bf16.mxu0 %v1447
    %4086 = vmatmul.mubr.bf16.gmra.mrb[0].mxu0 %v1446
    %v4087 = vpop.f32.mrb[0].mxu0
    %v4088 = vadd.f32 %v3565, %v4087
    %v4089 = vpop.f32.mrb[0].mxu0
    %v4090 = vadd.f32 %v3567, %v4089
    %v4091 = vpop.f32.mrb[0].mxu0
    %v4092 = vadd.f32 %v3569, %v4091
    %v4093 = vpop.f32.mrb[0].mxu0
    %v4094 = vadd.f32 %v3571, %v4093
    %4095 = vmatprep.mubr.bf16.mxu0 %v1453
    %4096 = vmatmul.mubr.bf16.gmra.mrb[0].mxu0 %v1452
    %v4097 = vpop.f32.mrb[0].mxu0
    %v4098 = vadd.f32 %v3575, %v4097
    %v4099 = vpop.f32.mrb[0].mxu0
    %v4100 = vadd.f32 %v3577, %v4099
    %v4101 = vpop.f32.mrb[0].mxu0
    %v4102 = vadd.f32 %v3579, %v4101
    %v4103 = vpop.f32.mrb[0].mxu0
    %v4104 = vadd.f32 %v3581, %v4103
    %4105 = vmatprep.mubr.bf16.mxu0 %v1459
    %4106 = vmatmul.mubr.bf16.gmra.mrb[0].mxu0 %v1458
    %v4107 = vpop.f32.mrb[0].mxu0
    %v4108 = vadd.f32 %v3585, %v4107
    %v4109 = vpop.f32.mrb[0].mxu0
    %v4110 = vadd.f32 %v3587, %v4109
    %v4111 = vpop.f32.mrb[0].mxu0
    %v4112 = vadd.f32 %v3589, %v4111
    %v4113 = vpop.f32.mrb[0].mxu0
    %v4114 = vadd.f32 %v3591, %v4113
    %4115 = vmatprep.mubr.bf16.mxu0 %v1465
    %4116 = vmatmul.mubr.bf16.gmra.mrb[0].mxu0 %v1464
    %v4117 = vpop.f32.mrb[0].mxu0
    %v4118 = vadd.f32 %v3595, %v4117
    %v4119 = vpop.f32.mrb[0].mxu0
    %v4120 = vadd.f32 %v3597, %v4119
    %v4121 = vpop.f32.mrb[0].mxu0
    %v4122 = vadd.f32 %v3599, %v4121
    %v4123 = vpop.f32.mrb[0].mxu0
    %v4124 = vadd.f32 %v3601, %v4123
    %4125 = vmatprep.mubr.bf16.mxu0 %v1471
    %4126 = vmatmul.mubr.bf16.gmra.mrb[0].mxu0 %v1470
    %v4127 = vpop.f32.mrb[0].mxu0
    %v4128 = vadd.f32 %v3605, %v4127
    %v4129 = vpop.f32.mrb[0].mxu0
    %v4130 = vadd.f32 %v3607, %v4129
    %v4131 = vpop.f32.mrb[0].mxu0
    %v4132 = vadd.f32 %v3609, %v4131
    %v4133 = vpop.f32.mrb[0].mxu0
    %v4134 = vadd.f32 %v3611, %v4133
    %4135 = vmatprep.mubr.bf16.mxu0 %v1477
    %4136 = vmatmul.mubr.bf16.gmra.mrb[0].mxu0 %v1476
    %v4137 = vpop.f32.mrb[0].mxu0
    %v4138 = vadd.f32 %v3615, %v4137
    %v4139 = vpop.f32.mrb[0].mxu0
    %v4140 = vadd.f32 %v3617, %v4139
    %v4141 = vpop.f32.mrb[0].mxu0
    %v4142 = vadd.f32 %v3619, %v4141
    %v4143 = vpop.f32.mrb[0].mxu0
    %v4144 = vadd.f32 %v3621, %v4143
    %4145 = vmatprep.mubr.bf16.mxu0 %v1483
    %4146 = vmatmul.mubr.bf16.gmra.mrb[0].mxu0 %v1482
    %v4147 = vpop.f32.mrb[0].mxu0
    %v4148 = vadd.f32 %v3625, %v4147
    %v4149 = vpop.f32.mrb[0].mxu0
    %v4150 = vadd.f32 %v3627, %v4149
    %v4151 = vpop.f32.mrb[0].mxu0
    %v4152 = vadd.f32 %v3629, %v4151
    %v4153 = vpop.f32.mrb[0].mxu0
    %v4154 = vadd.f32 %v3631, %v4153
    %4155 = vmatprep.mubr.bf16.mxu0 %v1489
    %4156 = vmatmul.mubr.bf16.gmra.mrb[0].mxu0 %v1488
    %v4157 = vpop.f32.mrb[0].mxu0
    %v4158 = vadd.f32 %v3635, %v4157
    %v4159 = vpop.f32.mrb[0].mxu0
    %v4160 = vadd.f32 %v3637, %v4159
    %v4161 = vpop.f32.mrb[0].mxu0
    %v4162 = vadd.f32 %v3639, %v4161
    %v4163 = vpop.f32.mrb[0].mxu0
    %v4164 = vadd.f32 %v3641, %v4163
    %4165 = vmatprep.mubr.bf16.mxu0 %v1495
    %4166 = vmatmul.mubr.bf16.gmra.mrb[0].mxu0 %v1494
    %v4167 = vpop.f32.mrb[0].mxu0
    %v4168 = vadd.f32 %v3645, %v4167
    %v4169 = vpop.f32.mrb[0].mxu0
    %v4170 = vadd.f32 %v3647, %v4169
    %v4171 = vpop.f32.mrb[0].mxu0
    %v4172 = vadd.f32 %v3649, %v4171
    %v4173 = vpop.f32.mrb[0].mxu0
    %v4174 = vadd.f32 %v3651, %v4173
    %4175 = vmatprep.mubr.bf16.mxu0 %v1501
    %4176 = vmatmul.mubr.bf16.gmra.mrb[0].mxu0 %v1500
    %v4177 = vpop.f32.mrb[0].mxu0
    %v4178 = vadd.f32 %v3655, %v4177
    %v4179 = vpop.f32.mrb[0].mxu0
    %v4180 = vadd.f32 %v3657, %v4179
    %v4181 = vpop.f32.mrb[0].mxu0
    %v4182 = vadd.f32 %v3659, %v4181
    %v4183 = vpop.f32.mrb[0].mxu0
    %v4184 = vadd.f32 %v3661, %v4183
    %4185 = vmatprep.mubr.bf16.mxu0 %v1507
    %4186 = vmatmul.mubr.bf16.gmra.mrb[0].mxu0 %v1506
    %v4187 = vpop.f32.mrb[0].mxu0
    %v4188 = vadd.f32 %v3665, %v4187
    %v4189 = vpop.f32.mrb[0].mxu0
    %v4190 = vadd.f32 %v3667, %v4189
    %v4191 = vpop.f32.mrb[0].mxu0
    %v4192 = vadd.f32 %v3669, %v4191
    %v4193 = vpop.f32.mrb[0].mxu0
    %v4194 = vadd.f32 %v3671, %v4193
    %4195 = vmatprep.mubr.bf16.mxu0 %v1513
    %4196 = vmatmul.mubr.bf16.gmra.mrb[0].mxu0 %v1512
    %v4197 = vpop.f32.mrb[0].mxu0
    %v4198 = vadd.f32 %v3675, %v4197
    %v4199 = vpop.f32.mrb[0].mxu0
    %v4200 = vadd.f32 %v3677, %v4199
    %v4201 = vpop.f32.mrb[0].mxu0
    %v4202 = vadd.f32 %v3679, %v4201
    %v4203 = vpop.f32.mrb[0].mxu0
    %v4204 = vadd.f32 %v3681, %v4203
    %4205 = vmatprep.mubr.bf16.mxu0 %v1519
    %4206 = vmatmul.mubr.bf16.gmra.mrb[0].mxu0 %v1518
    %v4207 = vpop.f32.mrb[0].mxu0
    %v4208 = vadd.f32 %v3685, %v4207
    %v4209 = vpop.f32.mrb[0].mxu0
    %v4210 = vadd.f32 %v3687, %v4209
    %v4211 = vpop.f32.mrb[0].mxu0
    %v4212 = vadd.f32 %v3689, %v4211
    %v4213 = vpop.f32.mrb[0].mxu0
    %v4214 = vadd.f32 %v3691, %v4213
    %4215 = vmatprep.mubr.bf16.mxu0 %v1525
    %4216 = vmatmul.mubr.bf16.gmra.mrb[0].mxu0 %v1524
    %v4217 = vpop.f32.mrb[0].mxu0
    %v4218 = vadd.f32 %v3695, %v4217
    %v4219 = vpop.f32.mrb[0].mxu0
    %v4220 = vadd.f32 %v3697, %v4219
    %v4221 = vpop.f32.mrb[0].mxu0
    %v4222 = vadd.f32 %v3699, %v4221
    %v4223 = vpop.f32.mrb[0].mxu0
    %v4224 = vadd.f32 %v3701, %v4223
    %4225 = vmatprep.mubr.bf16.mxu0 %v1531
    %4226 = vmatmul.mubr.bf16.gmra.mrb[0].mxu0 %v1530
    %v4227 = vpop.f32.mrb[0].mxu0
    %v4228 = vadd.f32 %v3705, %v4227
    %v4229 = vpop.f32.mrb[0].mxu0
    %v4230 = vadd.f32 %v3707, %v4229
    %v4231 = vpop.f32.mrb[0].mxu0
    %v4232 = vadd.f32 %v3709, %v4231
    %v4233 = vpop.f32.mrb[0].mxu0
    %v4234 = vadd.f32 %v3711, %v4233
    %4235 = vmatprep.mubr.bf16.mxu0 %v1537
    %4236 = vmatmul.mubr.bf16.gmra.mrb[0].mxu0 %v1536
    %v4237 = vpop.f32.mrb[0].mxu0
    %v4238 = vadd.f32 %v3715, %v4237
    %v4239 = vpop.f32.mrb[0].mxu0
    %v4240 = vadd.f32 %v3717, %v4239
    %v4241 = vpop.f32.mrb[0].mxu0
    %v4242 = vadd.f32 %v3719, %v4241
    %v4243 = vpop.f32.mrb[0].mxu0
    %v4244 = vadd.f32 %v3721, %v4243
    %4245 = vdwg.mxu0
    %4246 = vmatprep.subr.bf16.mxu0 %v2741
    %4247 = vmatpush1.bf16.msra.mxu0 %v2740
    %4248 = vmatprep.subr.bf16.mxu0 %v2747
    %4249 = vmatpush1.bf16.msra.mxu0 %v2746
    %4250 = vmatprep.subr.bf16.mxu0 %v2753
    %4251 = vmatpush1.bf16.msra.mxu0 %v2752
    %4252 = vmatprep.subr.bf16.mxu0 %v2759
    %4253 = vmatpush1.bf16.msra.mxu0 %v2758
    %4254 = vmatprep.subr.bf16.mxu0 %v2765
    %4255 = vmatpush1.bf16.msra.mxu0 %v2764
    %4256 = vmatprep.subr.bf16.mxu0 %v2771
    %4257 = vmatpush1.bf16.msra.mxu0 %v2770
    %4258 = vmatprep.subr.bf16.mxu0 %v2777
    %4259 = vmatpush1.bf16.msra.mxu0 %v2776
    %4260 = vmatprep.subr.bf16.mxu0 %v2783
    %4261 = vmatpush1.bf16.msra.mxu0 %v2782
    %4262 = vmatprep.subr.bf16.mxu0 %v2789
    %4263 = vmatpush1.bf16.msra.mxu0 %v2788
    %4264 = vmatprep.subr.bf16.mxu0 %v2795
    %4265 = vmatpush1.bf16.msra.mxu0 %v2794
    %4266 = vmatprep.subr.bf16.mxu0 0
    %4267 = vmatpush1.bf16.msra.mxu0 0
    %4268 = vmatprep.subr.bf16.mxu0 0
    %4269 = vmatpush1.bf16.msra.mxu0 0
    %4270 = vmatprep.subr.bf16.mxu0 0
    %4271 = vmatpush1.bf16.msra.mxu0 0
    %4272 = vmatprep.subr.bf16.mxu0 0
    %4273 = vmatpush1.bf16.msra.mxu0 0
    %4274 = vmatprep.subr.bf16.mxu0 0
    %4275 = vmatpush1.bf16.msra.mxu0 0
    %4276 = vmatprep.subr.bf16.mxu0 0
    %4277 = vmatpush1.bf16.msra.mxu0 0
    %4278 = vmatprep.mubr.bf16.mxu0 %v3054
    %4279 = vmatmul.mubr.bf16.gmra.mrb[0].mxu0 %v1250
    %v4280 = vpop.f32.mrb[0].mxu0
    %v4281 = vadd.f32 %v3758, %v4280
    %v4282 = vpop.f32.mrb[0].mxu0
    %v4283 = vadd.f32 %v3760, %v4282
    %v4284 = vpop.f32.mrb[0].mxu0
    %v4285 = vadd.f32 %v3762, %v4284
    %v4286 = vpop.f32.mrb[0].mxu0
    %v4287 = vadd.f32 %v3764, %v4286
    %4288 = vmatprep.mubr.bf16.mxu0 %v3057
    %4289 = vmatmul.mubr.bf16.gmra.mrb[0].mxu0 %v1256
    %v4290 = vpop.f32.mrb[0].mxu0
    %v4291 = vadd.f32 %v3768, %v4290
    %v4292 = vpop.f32.mrb[0].mxu0
    %v4293 = vadd.f32 %v3770, %v4292
    %v4294 = vpop.f32.mrb[0].mxu0
    %v4295 = vadd.f32 %v3772, %v4294
    %v4296 = vpop.f32.mrb[0].mxu0
    %v4297 = vadd.f32 %v3774, %v4296
    %4298 = vmatprep.mubr.bf16.mxu0 %v3060
    %4299 = vmatmul.mubr.bf16.gmra.mrb[0].mxu0 %v1262
    %v4300 = vpop.f32.mrb[0].mxu0
    %v4301 = vadd.f32 %v3778, %v4300
    %v4302 = vpop.f32.mrb[0].mxu0
    %v4303 = vadd.f32 %v3780, %v4302
    %v4304 = vpop.f32.mrb[0].mxu0
    %v4305 = vadd.f32 %v3782, %v4304
    %v4306 = vpop.f32.mrb[0].mxu0
    %v4307 = vadd.f32 %v3784, %v4306
    %4308 = vmatprep.mubr.bf16.mxu0 %v3063
    %4309 = vmatmul.mubr.bf16.gmra.mrb[0].mxu0 %v1268
    %v4310 = vpop.f32.mrb[0].mxu0
    %v4311 = vadd.f32 %v3788, %v4310
    %v4312 = vpop.f32.mrb[0].mxu0
    %v4313 = vadd.f32 %v3790, %v4312
    %v4314 = vpop.f32.mrb[0].mxu0
    %v4315 = vadd.f32 %v3792, %v4314
    %v4316 = vpop.f32.mrb[0].mxu0
    %v4317 = vadd.f32 %v3794, %v4316
    %4318 = vmatprep.mubr.bf16.mxu0 %v3066
    %4319 = vmatmul.mubr.bf16.gmra.mrb[0].mxu0 %v1274
    %v4320 = vpop.f32.mrb[0].mxu0
    %v4321 = vadd.f32 %v3798, %v4320
    %v4322 = vpop.f32.mrb[0].mxu0
    %v4323 = vadd.f32 %v3800, %v4322
    %v4324 = vpop.f32.mrb[0].mxu0
    %v4325 = vadd.f32 %v3802, %v4324
    %v4326 = vpop.f32.mrb[0].mxu0
    %v4327 = vadd.f32 %v3804, %v4326
    %4328 = vmatprep.mubr.bf16.mxu0 %v3069
    %4329 = vmatmul.mubr.bf16.gmra.mrb[0].mxu0 %v1280
    %v4330 = vpop.f32.mrb[0].mxu0
    %v4331 = vadd.f32 %v3808, %v4330
    %v4332 = vpop.f32.mrb[0].mxu0
    %v4333 = vadd.f32 %v3810, %v4332
    %v4334 = vpop.f32.mrb[0].mxu0
    %v4335 = vadd.f32 %v3812, %v4334
    %v4336 = vpop.f32.mrb[0].mxu0
    %v4337 = vadd.f32 %v3814, %v4336
    %4338 = vmatprep.mubr.bf16.mxu0 %v3072
    %4339 = vmatmul.mubr.bf16.gmra.mrb[0].mxu0 %v1286
    %v4340 = vpop.f32.mrb[0].mxu0
    %v4341 = vadd.f32 %v3818, %v4340
    %v4342 = vpop.f32.mrb[0].mxu0
    %v4343 = vadd.f32 %v3820, %v4342
    %v4344 = vpop.f32.mrb[0].mxu0
    %v4345 = vadd.f32 %v3822, %v4344
    %v4346 = vpop.f32.mrb[0].mxu0
    %v4347 = vadd.f32 %v3824, %v4346
    %4348 = vmatprep.mubr.bf16.mxu0 %v3075
    %4349 = vmatmul.mubr.bf16.gmra.mrb[0].mxu0 %v1292
    %v4350 = vpop.f32.mrb[0].mxu0
    %v4351 = vadd.f32 %v3828, %v4350
    %v4352 = vpop.f32.mrb[0].mxu0
    %v4353 = vadd.f32 %v3830, %v4352
    %v4354 = vpop.f32.mrb[0].mxu0
    %v4355 = vadd.f32 %v3832, %v4354
    %v4356 = vpop.f32.mrb[0].mxu0
    %v4357 = vadd.f32 %v3834, %v4356
    %4358 = vmatprep.mubr.bf16.mxu0 %v3078
    %4359 = vmatmul.mubr.bf16.gmra.mrb[0].mxu0 %v1298
    %v4360 = vpop.f32.mrb[0].mxu0
    %v4361 = vadd.f32 %v3838, %v4360
    %v4362 = vpop.f32.mrb[0].mxu0
    %v4363 = vadd.f32 %v3840, %v4362
    %v4364 = vpop.f32.mrb[0].mxu0
    %v4365 = vadd.f32 %v3842, %v4364
    %v4366 = vpop.f32.mrb[0].mxu0
    %v4367 = vadd.f32 %v3844, %v4366
    %4368 = vmatprep.mubr.bf16.mxu0 %v3081
    %4369 = vmatmul.mubr.bf16.gmra.mrb[0].mxu0 %v1304
    %v4370 = vpop.f32.mrb[0].mxu0
    %v4371 = vadd.f32 %v3848, %v4370
    %v4372 = vpop.f32.mrb[0].mxu0
    %v4373 = vadd.f32 %v3850, %v4372
    %v4374 = vpop.f32.mrb[0].mxu0
    %v4375 = vadd.f32 %v3852, %v4374
    %v4376 = vpop.f32.mrb[0].mxu0
    %v4377 = vadd.f32 %v3854, %v4376
    %4378 = vmatprep.mubr.bf16.mxu0 %v3084
    %4379 = vmatmul.mubr.bf16.gmra.mrb[0].mxu0 %v1310
    %v4380 = vpop.f32.mrb[0].mxu0
    %v4381 = vadd.f32 %v3858, %v4380
    %v4382 = vpop.f32.mrb[0].mxu0
    %v4383 = vadd.f32 %v3860, %v4382
    %v4384 = vpop.f32.mrb[0].mxu0
    %v4385 = vadd.f32 %v3862, %v4384
    %v4386 = vpop.f32.mrb[0].mxu0
    %v4387 = vadd.f32 %v3864, %v4386
    %4388 = vmatprep.mubr.bf16.mxu0 %v3087
    %4389 = vmatmul.mubr.bf16.gmra.mrb[0].mxu0 %v1316
    %v4390 = vpop.f32.mrb[0].mxu0
    %v4391 = vadd.f32 %v3868, %v4390
    %v4392 = vpop.f32.mrb[0].mxu0
    %v4393 = vadd.f32 %v3870, %v4392
    %v4394 = vpop.f32.mrb[0].mxu0
    %v4395 = vadd.f32 %v3872, %v4394
    %v4396 = vpop.f32.mrb[0].mxu0
    %v4397 = vadd.f32 %v3874, %v4396
    %4398 = vmatprep.mubr.bf16.mxu0 %v3090
    %4399 = vmatmul.mubr.bf16.gmra.mrb[0].mxu0 %v1322
    %v4400 = vpop.f32.mrb[0].mxu0
    %v4401 = vadd.f32 %v3878, %v4400
    %v4402 = vpop.f32.mrb[0].mxu0
    %v4403 = vadd.f32 %v3880, %v4402
    %v4404 = vpop.f32.mrb[0].mxu0
    %v4405 = vadd.f32 %v3882, %v4404
    %v4406 = vpop.f32.mrb[0].mxu0
    %v4407 = vadd.f32 %v3884, %v4406
    %4408 = vmatprep.mubr.bf16.mxu0 %v3093
    %4409 = vmatmul.mubr.bf16.gmra.mrb[0].mxu0 %v1328
    %v4410 = vpop.f32.mrb[0].mxu0
    %v4411 = vadd.f32 %v3888, %v4410
    %v4412 = vpop.f32.mrb[0].mxu0
    %v4413 = vadd.f32 %v3890, %v4412
    %v4414 = vpop.f32.mrb[0].mxu0
    %v4415 = vadd.f32 %v3892, %v4414
    %v4416 = vpop.f32.mrb[0].mxu0
    %v4417 = vadd.f32 %v3894, %v4416
    %4418 = vmatprep.mubr.bf16.mxu0 %v3096
    %4419 = vmatmul.mubr.bf16.gmra.mrb[0].mxu0 %v1334
    %v4420 = vpop.f32.mrb[0].mxu0
    %v4421 = vadd.f32 %v3898, %v4420
    %v4422 = vpop.f32.mrb[0].mxu0
    %v4423 = vadd.f32 %v3900, %v4422
    %v4424 = vpop.f32.mrb[0].mxu0
    %v4425 = vadd.f32 %v3902, %v4424
    %v4426 = vpop.f32.mrb[0].mxu0
    %v4427 = vadd.f32 %v3904, %v4426
    %4428 = vmatprep.mubr.bf16.mxu0 %v3099
    %4429 = vmatmul.mubr.bf16.gmra.mrb[0].mxu0 %v1340
    %v4430 = vpop.f32.mrb[0].mxu0
    %v4431 = vadd.f32 %v3908, %v4430
    %v4432 = vpop.f32.mrb[0].mxu0
    %v4433 = vadd.f32 %v3910, %v4432
    %v4434 = vpop.f32.mrb[0].mxu0
    %v4435 = vadd.f32 %v3912, %v4434
    %v4436 = vpop.f32.mrb[0].mxu0
    %v4437 = vadd.f32 %v3914, %v4436
    %4438 = vmatprep.mubr.bf16.mxu0 %v3102
    %4439 = vmatmul.mubr.bf16.gmra.mrb[0].mxu0 %v1346
    %v4440 = vpop.f32.mrb[0].mxu0
    %v4441 = vadd.f32 %v3918, %v4440
    %v4442 = vpop.f32.mrb[0].mxu0
    %v4443 = vadd.f32 %v3920, %v4442
    %v4444 = vpop.f32.mrb[0].mxu0
    %v4445 = vadd.f32 %v3922, %v4444
    %v4446 = vpop.f32.mrb[0].mxu0
    %v4447 = vadd.f32 %v3924, %v4446
    %4448 = vmatprep.mubr.bf16.mxu0 %v3105
    %4449 = vmatmul.mubr.bf16.gmra.mrb[0].mxu0 %v1352
    %v4450 = vpop.f32.mrb[0].mxu0
    %v4451 = vadd.f32 %v3928, %v4450
    %v4452 = vpop.f32.mrb[0].mxu0
    %v4453 = vadd.f32 %v3930, %v4452
    %v4454 = vpop.f32.mrb[0].mxu0
    %v4455 = vadd.f32 %v3932, %v4454
    %v4456 = vpop.f32.mrb[0].mxu0
    %v4457 = vadd.f32 %v3934, %v4456
    %4458 = vmatprep.mubr.bf16.mxu0 %v3108
    %4459 = vmatmul.mubr.bf16.gmra.mrb[0].mxu0 %v1358
    %v4460 = vpop.f32.mrb[0].mxu0
    %v4461 = vadd.f32 %v3938, %v4460
    %v4462 = vpop.f32.mrb[0].mxu0
    %v4463 = vadd.f32 %v3940, %v4462
    %v4464 = vpop.f32.mrb[0].mxu0
    %v4465 = vadd.f32 %v3942, %v4464
    %v4466 = vpop.f32.mrb[0].mxu0
    %v4467 = vadd.f32 %v3944, %v4466
    %4468 = vmatprep.mubr.bf16.mxu0 %v3111
    %4469 = vmatmul.mubr.bf16.gmra.mrb[0].mxu0 %v1364
    %v4470 = vpop.f32.mrb[0].mxu0
    %v4471 = vadd.f32 %v3948, %v4470
    %v4472 = vpop.f32.mrb[0].mxu0
    %v4473 = vadd.f32 %v3950, %v4472
    %v4474 = vpop.f32.mrb[0].mxu0
    %v4475 = vadd.f32 %v3952, %v4474
    %v4476 = vpop.f32.mrb[0].mxu0
    %v4477 = vadd.f32 %v3954, %v4476
    %4478 = vmatprep.mubr.bf16.mxu0 %v3114
    %4479 = vmatmul.mubr.bf16.gmra.mrb[0].mxu0 %v1370
    %v4480 = vpop.f32.mrb[0].mxu0
    %v4481 = vadd.f32 %v3958, %v4480
    %v4482 = vpop.f32.mrb[0].mxu0
    %v4483 = vadd.f32 %v3960, %v4482
    %v4484 = vpop.f32.mrb[0].mxu0
    %v4485 = vadd.f32 %v3962, %v4484
    %v4486 = vpop.f32.mrb[0].mxu0
    %v4487 = vadd.f32 %v3964, %v4486
    %4488 = vmatprep.mubr.bf16.mxu0 %v3117
    %4489 = vmatmul.mubr.bf16.gmra.mrb[0].mxu0 %v1376
    %v4490 = vpop.f32.mrb[0].mxu0
    %v4491 = vadd.f32 %v3968, %v4490
    %v4492 = vpop.f32.mrb[0].mxu0
    %v4493 = vadd.f32 %v3970, %v4492
    %v4494 = vpop.f32.mrb[0].mxu0
    %v4495 = vadd.f32 %v3972, %v4494
    %v4496 = vpop.f32.mrb[0].mxu0
    %v4497 = vadd.f32 %v3974, %v4496
    %4498 = vmatprep.mubr.bf16.mxu0 %v3120
    %4499 = vmatmul.mubr.bf16.gmra.mrb[0].mxu0 %v1382
    %v4500 = vpop.f32.mrb[0].mxu0
    %v4501 = vadd.f32 %v3978, %v4500
    %v4502 = vpop.f32.mrb[0].mxu0
    %v4503 = vadd.f32 %v3980, %v4502
    %v4504 = vpop.f32.mrb[0].mxu0
    %v4505 = vadd.f32 %v3982, %v4504
    %v4506 = vpop.f32.mrb[0].mxu0
    %v4507 = vadd.f32 %v3984, %v4506
    %4508 = vmatprep.mubr.bf16.mxu0 %v3123
    %4509 = vmatmul.mubr.bf16.gmra.mrb[0].mxu0 %v1388
    %v4510 = vpop.f32.mrb[0].mxu0
    %v4511 = vadd.f32 %v3988, %v4510
    %v4512 = vpop.f32.mrb[0].mxu0
    %v4513 = vadd.f32 %v3990, %v4512
    %v4514 = vpop.f32.mrb[0].mxu0
    %v4515 = vadd.f32 %v3992, %v4514
    %v4516 = vpop.f32.mrb[0].mxu0
    %v4517 = vadd.f32 %v3994, %v4516
    %4518 = vmatprep.mubr.bf16.mxu0 %v3126
    %4519 = vmatmul.mubr.bf16.gmra.mrb[0].mxu0 %v1394
    %v4520 = vpop.f32.mrb[0].mxu0
    %v4521 = vadd.f32 %v3998, %v4520
    %v4522 = vpop.f32.mrb[0].mxu0
    %v4523 = vadd.f32 %v4000, %v4522
    %v4524 = vpop.f32.mrb[0].mxu0
    %v4525 = vadd.f32 %v4002, %v4524
    %v4526 = vpop.f32.mrb[0].mxu0
    %v4527 = vadd.f32 %v4004, %v4526
    %4528 = vmatprep.mubr.bf16.mxu0 %v3129
    %4529 = vmatmul.mubr.bf16.gmra.mrb[0].mxu0 %v1400
    %v4530 = vpop.f32.mrb[0].mxu0
    %v4531 = vadd.f32 %v4008, %v4530
    %v4532 = vpop.f32.mrb[0].mxu0
    %v4533 = vadd.f32 %v4010, %v4532
    %v4534 = vpop.f32.mrb[0].mxu0
    %v4535 = vadd.f32 %v4012, %v4534
    %v4536 = vpop.f32.mrb[0].mxu0
    %v4537 = vadd.f32 %v4014, %v4536
    %4538 = vmatprep.mubr.bf16.mxu0 %v3132
    %4539 = vmatmul.mubr.bf16.gmra.mrb[0].mxu0 %v1406
    %v4540 = vpop.f32.mrb[0].mxu0
    %v4541 = vadd.f32 %v4018, %v4540
    %v4542 = vpop.f32.mrb[0].mxu0
    %v4543 = vadd.f32 %v4020, %v4542
    %v4544 = vpop.f32.mrb[0].mxu0
    %v4545 = vadd.f32 %v4022, %v4544
    %v4546 = vpop.f32.mrb[0].mxu0
    %v4547 = vadd.f32 %v4024, %v4546
    %4548 = vmatprep.mubr.bf16.mxu0 %v3135
    %4549 = vmatmul.mubr.bf16.gmra.mrb[0].mxu0 %v1412
    %v4550 = vpop.f32.mrb[0].mxu0
    %v4551 = vadd.f32 %v4028, %v4550
    %v4552 = vpop.f32.mrb[0].mxu0
    %v4553 = vadd.f32 %v4030, %v4552
    %v4554 = vpop.f32.mrb[0].mxu0
    %v4555 = vadd.f32 %v4032, %v4554
    %v4556 = vpop.f32.mrb[0].mxu0
    %v4557 = vadd.f32 %v4034, %v4556
    %4558 = vmatprep.mubr.bf16.mxu0 %v3138
    %4559 = vmatmul.mubr.bf16.gmra.mrb[0].mxu0 %v1418
    %v4560 = vpop.f32.mrb[0].mxu0
    %v4561 = vadd.f32 %v4038, %v4560
    %v4562 = vpop.f32.mrb[0].mxu0
    %v4563 = vadd.f32 %v4040, %v4562
    %v4564 = vpop.f32.mrb[0].mxu0
    %v4565 = vadd.f32 %v4042, %v4564
    %v4566 = vpop.f32.mrb[0].mxu0
    %v4567 = vadd.f32 %v4044, %v4566
    %4568 = vmatprep.mubr.bf16.mxu0 %v3141
    %4569 = vmatmul.mubr.bf16.gmra.mrb[0].mxu0 %v1424
    %v4570 = vpop.f32.mrb[0].mxu0
    %v4571 = vadd.f32 %v4048, %v4570
    %v4572 = vpop.f32.mrb[0].mxu0
    %v4573 = vadd.f32 %v4050, %v4572
    %v4574 = vpop.f32.mrb[0].mxu0
    %v4575 = vadd.f32 %v4052, %v4574
    %v4576 = vpop.f32.mrb[0].mxu0
    %v4577 = vadd.f32 %v4054, %v4576
    %4578 = vmatprep.mubr.bf16.mxu0 %v3144
    %4579 = vmatmul.mubr.bf16.gmra.mrb[0].mxu0 %v1430
    %v4580 = vpop.f32.mrb[0].mxu0
    %v4581 = vadd.f32 %v4058, %v4580
    %v4582 = vpop.f32.mrb[0].mxu0
    %v4583 = vadd.f32 %v4060, %v4582
    %v4584 = vpop.f32.mrb[0].mxu0
    %v4585 = vadd.f32 %v4062, %v4584
    %v4586 = vpop.f32.mrb[0].mxu0
    %v4587 = vadd.f32 %v4064, %v4586
    %4588 = vmatprep.mubr.bf16.mxu0 %v3147
    %4589 = vmatmul.mubr.bf16.gmra.mrb[0].mxu0 %v1436
    %v4590 = vpop.f32.mrb[0].mxu0
    %v4591 = vadd.f32 %v4068, %v4590
    %v4592 = vpop.f32.mrb[0].mxu0
    %v4593 = vadd.f32 %v4070, %v4592
    %v4594 = vpop.f32.mrb[0].mxu0
    %v4595 = vadd.f32 %v4072, %v4594
    %v4596 = vpop.f32.mrb[0].mxu0
    %v4597 = vadd.f32 %v4074, %v4596
    %4598 = vmatprep.mubr.bf16.mxu0 %v3150
    %4599 = vmatmul.mubr.bf16.gmra.mrb[0].mxu0 %v1442
    %v4600 = vpop.f32.mrb[0].mxu0
    %v4601 = vadd.f32 %v4078, %v4600
    %v4602 = vpop.f32.mrb[0].mxu0
    %v4603 = vadd.f32 %v4080, %v4602
    %v4604 = vpop.f32.mrb[0].mxu0
    %v4605 = vadd.f32 %v4082, %v4604
    %v4606 = vpop.f32.mrb[0].mxu0
    %v4607 = vadd.f32 %v4084, %v4606
    %4608 = vmatprep.mubr.bf16.mxu0 %v3153
    %4609 = vmatmul.mubr.bf16.gmra.mrb[0].mxu0 %v1448
    %v4610 = vpop.f32.mrb[0].mxu0
    %v4611 = vadd.f32 %v4088, %v4610
    %v4612 = vpop.f32.mrb[0].mxu0
    %v4613 = vadd.f32 %v4090, %v4612
    %v4614 = vpop.f32.mrb[0].mxu0
    %v4615 = vadd.f32 %v4092, %v4614
    %v4616 = vpop.f32.mrb[0].mxu0
    %v4617 = vadd.f32 %v4094, %v4616
    %4618 = vmatprep.mubr.bf16.mxu0 %v3156
    %4619 = vmatmul.mubr.bf16.gmra.mrb[0].mxu0 %v1454
    %v4620 = vpop.f32.mrb[0].mxu0
    %v4621 = vadd.f32 %v4098, %v4620
    %v4622 = vpop.f32.mrb[0].mxu0
    %v4623 = vadd.f32 %v4100, %v4622
    %v4624 = vpop.f32.mrb[0].mxu0
    %v4625 = vadd.f32 %v4102, %v4624
    %v4626 = vpop.f32.mrb[0].mxu0
    %v4627 = vadd.f32 %v4104, %v4626
    %4628 = vmatprep.mubr.bf16.mxu0 %v3159
    %4629 = vmatmul.mubr.bf16.gmra.mrb[0].mxu0 %v1460
    %v4630 = vpop.f32.mrb[0].mxu0
    %v4631 = vadd.f32 %v4108, %v4630
    %v4632 = vpop.f32.mrb[0].mxu0
    %v4633 = vadd.f32 %v4110, %v4632
    %v4634 = vpop.f32.mrb[0].mxu0
    %v4635 = vadd.f32 %v4112, %v4634
    %v4636 = vpop.f32.mrb[0].mxu0
    %v4637 = vadd.f32 %v4114, %v4636
    %4638 = vmatprep.mubr.bf16.mxu0 %v3162
    %4639 = vmatmul.mubr.bf16.gmra.mrb[0].mxu0 %v1466
    %v4640 = vpop.f32.mrb[0].mxu0
    %v4641 = vadd.f32 %v4118, %v4640
    %v4642 = vpop.f32.mrb[0].mxu0
    %v4643 = vadd.f32 %v4120, %v4642
    %v4644 = vpop.f32.mrb[0].mxu0
    %v4645 = vadd.f32 %v4122, %v4644
    %v4646 = vpop.f32.mrb[0].mxu0
    %v4647 = vadd.f32 %v4124, %v4646
    %4648 = vmatprep.mubr.bf16.mxu0 %v3165
    %4649 = vmatmul.mubr.bf16.gmra.mrb[0].mxu0 %v1472
    %v4650 = vpop.f32.mrb[0].mxu0
    %v4651 = vadd.f32 %v4128, %v4650
    %v4652 = vpop.f32.mrb[0].mxu0
    %v4653 = vadd.f32 %v4130, %v4652
    %v4654 = vpop.f32.mrb[0].mxu0
    %v4655 = vadd.f32 %v4132, %v4654
    %v4656 = vpop.f32.mrb[0].mxu0
    %v4657 = vadd.f32 %v4134, %v4656
    %4658 = vmatprep.mubr.bf16.mxu0 %v3168
    %4659 = vmatmul.mubr.bf16.gmra.mrb[0].mxu0 %v1478
    %v4660 = vpop.f32.mrb[0].mxu0
    %v4661 = vadd.f32 %v4138, %v4660
    %v4662 = vpop.f32.mrb[0].mxu0
    %v4663 = vadd.f32 %v4140, %v4662
    %v4664 = vpop.f32.mrb[0].mxu0
    %v4665 = vadd.f32 %v4142, %v4664
    %v4666 = vpop.f32.mrb[0].mxu0
    %v4667 = vadd.f32 %v4144, %v4666
    %4668 = vmatprep.mubr.bf16.mxu0 %v3171
    %4669 = vmatmul.mubr.bf16.gmra.mrb[0].mxu0 %v1484
    %v4670 = vpop.f32.mrb[0].mxu0
    %v4671 = vadd.f32 %v4148, %v4670
    %v4672 = vpop.f32.mrb[0].mxu0
    %v4673 = vadd.f32 %v4150, %v4672
    %v4674 = vpop.f32.mrb[0].mxu0
    %v4675 = vadd.f32 %v4152, %v4674
    %v4676 = vpop.f32.mrb[0].mxu0
    %v4677 = vadd.f32 %v4154, %v4676
    %4678 = vmatprep.mubr.bf16.mxu0 %v3174
    %4679 = vmatmul.mubr.bf16.gmra.mrb[0].mxu0 %v1490
    %v4680 = vpop.f32.mrb[0].mxu0
    %v4681 = vadd.f32 %v4158, %v4680
    %v4682 = vpop.f32.mrb[0].mxu0
    %v4683 = vadd.f32 %v4160, %v4682
    %v4684 = vpop.f32.mrb[0].mxu0
    %v4685 = vadd.f32 %v4162, %v4684
    %v4686 = vpop.f32.mrb[0].mxu0
    %v4687 = vadd.f32 %v4164, %v4686
    %4688 = vmatprep.mubr.bf16.mxu0 %v3177
    %4689 = vmatmul.mubr.bf16.gmra.mrb[0].mxu0 %v1496
    %v4690 = vpop.f32.mrb[0].mxu0
    %v4691 = vadd.f32 %v4168, %v4690
    %v4692 = vpop.f32.mrb[0].mxu0
    %v4693 = vadd.f32 %v4170, %v4692
    %v4694 = vpop.f32.mrb[0].mxu0
    %v4695 = vadd.f32 %v4172, %v4694
    %v4696 = vpop.f32.mrb[0].mxu0
    %v4697 = vadd.f32 %v4174, %v4696
    %4698 = vmatprep.mubr.bf16.mxu0 %v3180
    %4699 = vmatmul.mubr.bf16.gmra.mrb[0].mxu0 %v1502
    %v4700 = vpop.f32.mrb[0].mxu0
    %v4701 = vadd.f32 %v4178, %v4700
    %v4702 = vpop.f32.mrb[0].mxu0
    %v4703 = vadd.f32 %v4180, %v4702
    %v4704 = vpop.f32.mrb[0].mxu0
    %v4705 = vadd.f32 %v4182, %v4704
    %v4706 = vpop.f32.mrb[0].mxu0
    %v4707 = vadd.f32 %v4184, %v4706
    %4708 = vmatprep.mubr.bf16.mxu0 %v3183
    %4709 = vmatmul.mubr.bf16.gmra.mrb[0].mxu0 %v1508
    %v4710 = vpop.f32.mrb[0].mxu0
    %v4711 = vadd.f32 %v4188, %v4710
    %v4712 = vpop.f32.mrb[0].mxu0
    %v4713 = vadd.f32 %v4190, %v4712
    %v4714 = vpop.f32.mrb[0].mxu0
    %v4715 = vadd.f32 %v4192, %v4714
    %v4716 = vpop.f32.mrb[0].mxu0
    %v4717 = vadd.f32 %v4194, %v4716
    %4718 = vmatprep.mubr.bf16.mxu0 %v3186
    %4719 = vmatmul.mubr.bf16.gmra.mrb[0].mxu0 %v1514
    %v4720 = vpop.f32.mrb[0].mxu0
    %v4721 = vadd.f32 %v4198, %v4720
    %v4722 = vpop.f32.mrb[0].mxu0
    %v4723 = vadd.f32 %v4200, %v4722
    %v4724 = vpop.f32.mrb[0].mxu0
    %v4725 = vadd.f32 %v4202, %v4724
    %v4726 = vpop.f32.mrb[0].mxu0
    %v4727 = vadd.f32 %v4204, %v4726
    %4728 = vmatprep.mubr.bf16.mxu0 %v3189
    %4729 = vmatmul.mubr.bf16.gmra.mrb[0].mxu0 %v1520
    %v4730 = vpop.f32.mrb[0].mxu0
    %v4731 = vadd.f32 %v4208, %v4730
    %v4732 = vpop.f32.mrb[0].mxu0
    %v4733 = vadd.f32 %v4210, %v4732
    %v4734 = vpop.f32.mrb[0].mxu0
    %v4735 = vadd.f32 %v4212, %v4734
    %v4736 = vpop.f32.mrb[0].mxu0
    %v4737 = vadd.f32 %v4214, %v4736
    %4738 = vmatprep.mubr.bf16.mxu0 %v3192
    %4739 = vmatmul.mubr.bf16.gmra.mrb[0].mxu0 %v1526
    %v4740 = vpop.f32.mrb[0].mxu0
    %v4741 = vadd.f32 %v4218, %v4740
    %v4742 = vpop.f32.mrb[0].mxu0
    %v4743 = vadd.f32 %v4220, %v4742
    %v4744 = vpop.f32.mrb[0].mxu0
    %v4745 = vadd.f32 %v4222, %v4744
    %v4746 = vpop.f32.mrb[0].mxu0
    %v4747 = vadd.f32 %v4224, %v4746
    %4748 = vmatprep.mubr.bf16.mxu0 %v3195
    %4749 = vmatmul.mubr.bf16.gmra.mrb[0].mxu0 %v1532
    %v4750 = vpop.f32.mrb[0].mxu0
    %v4751 = vadd.f32 %v4228, %v4750
    %v4752 = vpop.f32.mrb[0].mxu0
    %v4753 = vadd.f32 %v4230, %v4752
    %v4754 = vpop.f32.mrb[0].mxu0
    %v4755 = vadd.f32 %v4232, %v4754
    %v4756 = vpop.f32.mrb[0].mxu0
    %v4757 = vadd.f32 %v4234, %v4756
    %4758 = vmatprep.mubr.bf16.mxu0 %v3198
    %4759 = vmatmul.mubr.bf16.gmra.mrb[0].mxu0 %v1538
    %v4760 = vpop.f32.mrb[0].mxu0
    %v4761 = vadd.f32 %v4238, %v4760
    %v4762 = vpop.f32.mrb[0].mxu0
    %v4763 = vadd.f32 %v4240, %v4762
    %v4764 = vpop.f32.mrb[0].mxu0
    %v4765 = vadd.f32 %v4242, %v4764
    %v4766 = vpop.f32.mrb[0].mxu0
    %v4767 = vadd.f32 %v4244, %v4766
    %4768 = vdwg.mxu0
    %4769 = vmatprep.subr.bf16.mxu0 %v2551
    %4770 = vmatpush1.bf16.msra.mxu0 %v2550
    %4771 = vmatprep.subr.bf16.mxu0 %v2557
    %4772 = vmatpush1.bf16.msra.mxu0 %v2556
    %4773 = vmatprep.subr.bf16.mxu0 %v2563
    %4774 = vmatpush1.bf16.msra.mxu0 %v2562
    %4775 = vmatprep.subr.bf16.mxu0 %v2569
    %4776 = vmatpush1.bf16.msra.mxu0 %v2568
    %4777 = vmatprep.subr.bf16.mxu0 %v2575
    %4778 = vmatpush1.bf16.msra.mxu0 %v2574
    %4779 = vmatprep.subr.bf16.mxu0 %v2581
    %4780 = vmatpush1.bf16.msra.mxu0 %v2580
    %4781 = vmatprep.subr.bf16.mxu0 %v2587
    %4782 = vmatpush1.bf16.msra.mxu0 %v2586
    %4783 = vmatprep.subr.bf16.mxu0 %v2593
    %4784 = vmatpush1.bf16.msra.mxu0 %v2592
    %4785 = vmatprep.subr.bf16.mxu0 %v2599
    %4786 = vmatpush1.bf16.msra.mxu0 %v2598
    %4787 = vmatprep.subr.bf16.mxu0 %v2605
    %4788 = vmatpush1.bf16.msra.mxu0 %v2604
    %4789 = vmatprep.subr.bf16.mxu0 %v2611
    %4790 = vmatpush1.bf16.msra.mxu0 %v2610
    %4791 = vmatprep.subr.bf16.mxu0 %v2617
    %4792 = vmatpush1.bf16.msra.mxu0 %v2616
    %4793 = vmatprep.subr.bf16.mxu0 %v2623
    %4794 = vmatpush1.bf16.msra.mxu0 %v2622
    %4795 = vmatprep.subr.bf16.mxu0 %v2629
    %4796 = vmatpush1.bf16.msra.mxu0 %v2628
    %4797 = vmatprep.subr.bf16.mxu0 %v2635
    %4798 = vmatpush1.bf16.msra.mxu0 %v2634
    %4799 = vmatprep.subr.bf16.mxu0 %v2641
    %4800 = vmatpush1.bf16.msra.mxu0 %v2640
    %4801 = vmatprep.mubr.bf16.mxu0 %v1247
    %4802 = vmatmul.mubr.bf16.gmra.mrb[0].mxu0 %v1246
    %v4803 = vpop.f32.mrb[0].mxu0
    %v4804 = vadd.f32 0.0, %v4803
    %v4805 = vpop.f32.mrb[0].mxu0
    %v4806 = vadd.f32 0.0, %v4805
    %v4807 = vpop.f32.mrb[0].mxu0
    %v4808 = vadd.f32 0.0, %v4807
    %v4809 = vpop.f32.mrb[0].mxu0
    %v4810 = vadd.f32 0.0, %v4809
    %4811 = vmatprep.mubr.bf16.mxu0 %v1253
    %4812 = vmatmul.mubr.bf16.gmra.mrb[0].mxu0 %v1252
    %v4813 = vpop.f32.mrb[0].mxu0
    %v4814 = vadd.f32 0.0, %v4813
    %v4815 = vpop.f32.mrb[0].mxu0
    %v4816 = vadd.f32 0.0, %v4815
    %v4817 = vpop.f32.mrb[0].mxu0
    %v4818 = vadd.f32 0.0, %v4817
    %v4819 = vpop.f32.mrb[0].mxu0
    %v4820 = vadd.f32 0.0, %v4819
    %4821 = vmatprep.mubr.bf16.mxu0 %v1259
    %4822 = vmatmul.mubr.bf16.gmra.mrb[0].mxu0 %v1258
    %v4823 = vpop.f32.mrb[0].mxu0
    %v4824 = vadd.f32 0.0, %v4823
    %v4825 = vpop.f32.mrb[0].mxu0
    %v4826 = vadd.f32 0.0, %v4825
    %v4827 = vpop.f32.mrb[0].mxu0
    %v4828 = vadd.f32 0.0, %v4827
    %v4829 = vpop.f32.mrb[0].mxu0
    %v4830 = vadd.f32 0.0, %v4829
    %4831 = vmatprep.mubr.bf16.mxu0 %v1265
    %4832 = vmatmul.mubr.bf16.gmra.mrb[0].mxu0 %v1264
    %v4833 = vpop.f32.mrb[0].mxu0
    %v4834 = vadd.f32 0.0, %v4833
    %v4835 = vpop.f32.mrb[0].mxu0
    %v4836 = vadd.f32 0.0, %v4835
    %v4837 = vpop.f32.mrb[0].mxu0
    %v4838 = vadd.f32 0.0, %v4837
    %v4839 = vpop.f32.mrb[0].mxu0
    %v4840 = vadd.f32 0.0, %v4839
    %4841 = vmatprep.mubr.bf16.mxu0 %v1271
    %4842 = vmatmul.mubr.bf16.gmra.mrb[0].mxu0 %v1270
    %v4843 = vpop.f32.mrb[0].mxu0
    %v4844 = vadd.f32 0.0, %v4843
    %v4845 = vpop.f32.mrb[0].mxu0
    %v4846 = vadd.f32 0.0, %v4845
    %v4847 = vpop.f32.mrb[0].mxu0
    %v4848 = vadd.f32 0.0, %v4847
    %v4849 = vpop.f32.mrb[0].mxu0
    %v4850 = vadd.f32 0.0, %v4849
    %4851 = vmatprep.mubr.bf16.mxu0 %v1277
    %4852 = vmatmul.mubr.bf16.gmra.mrb[0].mxu0 %v1276
    %v4853 = vpop.f32.mrb[0].mxu0
    %v4854 = vadd.f32 0.0, %v4853
    %v4855 = vpop.f32.mrb[0].mxu0
    %v4856 = vadd.f32 0.0, %v4855
    %v4857 = vpop.f32.mrb[0].mxu0
    %v4858 = vadd.f32 0.0, %v4857
    %v4859 = vpop.f32.mrb[0].mxu0
    %v4860 = vadd.f32 0.0, %v4859
    %4861 = vmatprep.mubr.bf16.mxu0 %v1283
    %4862 = vmatmul.mubr.bf16.gmra.mrb[0].mxu0 %v1282
    %v4863 = vpop.f32.mrb[0].mxu0
    %v4864 = vadd.f32 0.0, %v4863
    %v4865 = vpop.f32.mrb[0].mxu0
    %v4866 = vadd.f32 0.0, %v4865
    %v4867 = vpop.f32.mrb[0].mxu0
    %v4868 = vadd.f32 0.0, %v4867
    %v4869 = vpop.f32.mrb[0].mxu0
    %v4870 = vadd.f32 0.0, %v4869
    %4871 = vmatprep.mubr.bf16.mxu0 %v1289
    %4872 = vmatmul.mubr.bf16.gmra.mrb[0].mxu0 %v1288
    %v4873 = vpop.f32.mrb[0].mxu0
    %v4874 = vadd.f32 0.0, %v4873
    %v4875 = vpop.f32.mrb[0].mxu0
    %v4876 = vadd.f32 0.0, %v4875
    %v4877 = vpop.f32.mrb[0].mxu0
    %v4878 = vadd.f32 0.0, %v4877
    %v4879 = vpop.f32.mrb[0].mxu0
    %v4880 = vadd.f32 0.0, %v4879
    %4881 = vmatprep.mubr.bf16.mxu0 %v1295
    %4882 = vmatmul.mubr.bf16.gmra.mrb[0].mxu0 %v1294
    %v4883 = vpop.f32.mrb[0].mxu0
    %v4884 = vadd.f32 0.0, %v4883
    %v4885 = vpop.f32.mrb[0].mxu0
    %v4886 = vadd.f32 0.0, %v4885
    %v4887 = vpop.f32.mrb[0].mxu0
    %v4888 = vadd.f32 0.0, %v4887
    %v4889 = vpop.f32.mrb[0].mxu0
    %v4890 = vadd.f32 0.0, %v4889
    %4891 = vmatprep.mubr.bf16.mxu0 %v1301
    %4892 = vmatmul.mubr.bf16.gmra.mrb[0].mxu0 %v1300
    %v4893 = vpop.f32.mrb[0].mxu0
    %v4894 = vadd.f32 0.0, %v4893
    %v4895 = vpop.f32.mrb[0].mxu0
    %v4896 = vadd.f32 0.0, %v4895
    %v4897 = vpop.f32.mrb[0].mxu0
    %v4898 = vadd.f32 0.0, %v4897
    %v4899 = vpop.f32.mrb[0].mxu0
    %v4900 = vadd.f32 0.0, %v4899
    %4901 = vmatprep.mubr.bf16.mxu0 %v1307
    %4902 = vmatmul.mubr.bf16.gmra.mrb[0].mxu0 %v1306
    %v4903 = vpop.f32.mrb[0].mxu0
    %v4904 = vadd.f32 0.0, %v4903
    %v4905 = vpop.f32.mrb[0].mxu0
    %v4906 = vadd.f32 0.0, %v4905
    %v4907 = vpop.f32.mrb[0].mxu0
    %v4908 = vadd.f32 0.0, %v4907
    %v4909 = vpop.f32.mrb[0].mxu0
    %v4910 = vadd.f32 0.0, %v4909
    %4911 = vmatprep.mubr.bf16.mxu0 %v1313
    %4912 = vmatmul.mubr.bf16.gmra.mrb[0].mxu0 %v1312
    %v4913 = vpop.f32.mrb[0].mxu0
    %v4914 = vadd.f32 0.0, %v4913
    %v4915 = vpop.f32.mrb[0].mxu0
    %v4916 = vadd.f32 0.0, %v4915
    %v4917 = vpop.f32.mrb[0].mxu0
    %v4918 = vadd.f32 0.0, %v4917
    %v4919 = vpop.f32.mrb[0].mxu0
    %v4920 = vadd.f32 0.0, %v4919
    %4921 = vmatprep.mubr.bf16.mxu0 %v1319
    %4922 = vmatmul.mubr.bf16.gmra.mrb[0].mxu0 %v1318
    %v4923 = vpop.f32.mrb[0].mxu0
    %v4924 = vadd.f32 0.0, %v4923
    %v4925 = vpop.f32.mrb[0].mxu0
    %v4926 = vadd.f32 0.0, %v4925
    %v4927 = vpop.f32.mrb[0].mxu0
    %v4928 = vadd.f32 0.0, %v4927
    %v4929 = vpop.f32.mrb[0].mxu0
    %v4930 = vadd.f32 0.0, %v4929
    %4931 = vmatprep.mubr.bf16.mxu0 %v1325
    %4932 = vmatmul.mubr.bf16.gmra.mrb[0].mxu0 %v1324
    %v4933 = vpop.f32.mrb[0].mxu0
    %v4934 = vadd.f32 0.0, %v4933
    %v4935 = vpop.f32.mrb[0].mxu0
    %v4936 = vadd.f32 0.0, %v4935
    %v4937 = vpop.f32.mrb[0].mxu0
    %v4938 = vadd.f32 0.0, %v4937
    %v4939 = vpop.f32.mrb[0].mxu0
    %v4940 = vadd.f32 0.0, %v4939
    %4941 = vmatprep.mubr.bf16.mxu0 %v1331
    %4942 = vmatmul.mubr.bf16.gmra.mrb[0].mxu0 %v1330
    %v4943 = vpop.f32.mrb[0].mxu0
    %v4944 = vadd.f32 0.0, %v4943
    %v4945 = vpop.f32.mrb[0].mxu0
    %v4946 = vadd.f32 0.0, %v4945
    %v4947 = vpop.f32.mrb[0].mxu0
    %v4948 = vadd.f32 0.0, %v4947
    %v4949 = vpop.f32.mrb[0].mxu0
    %v4950 = vadd.f32 0.0, %v4949
    %4951 = vmatprep.mubr.bf16.mxu0 %v1337
    %4952 = vmatmul.mubr.bf16.gmra.mrb[0].mxu0 %v1336
    %v4953 = vpop.f32.mrb[0].mxu0
    %v4954 = vadd.f32 0.0, %v4953
    %v4955 = vpop.f32.mrb[0].mxu0
    %v4956 = vadd.f32 0.0, %v4955
    %v4957 = vpop.f32.mrb[0].mxu0
    %v4958 = vadd.f32 0.0, %v4957
    %v4959 = vpop.f32.mrb[0].mxu0
    %v4960 = vadd.f32 0.0, %v4959
    %4961 = vmatprep.mubr.bf16.mxu0 %v1343
    %4962 = vmatmul.mubr.bf16.gmra.mrb[0].mxu0 %v1342
    %v4963 = vpop.f32.mrb[0].mxu0
    %v4964 = vadd.f32 0.0, %v4963
    %v4965 = vpop.f32.mrb[0].mxu0
    %v4966 = vadd.f32 0.0, %v4965
    %v4967 = vpop.f32.mrb[0].mxu0
    %v4968 = vadd.f32 0.0, %v4967
    %v4969 = vpop.f32.mrb[0].mxu0
    %v4970 = vadd.f32 0.0, %v4969
    %4971 = vmatprep.mubr.bf16.mxu0 %v1349
    %4972 = vmatmul.mubr.bf16.gmra.mrb[0].mxu0 %v1348
    %v4973 = vpop.f32.mrb[0].mxu0
    %v4974 = vadd.f32 0.0, %v4973
    %v4975 = vpop.f32.mrb[0].mxu0
    %v4976 = vadd.f32 0.0, %v4975
    %v4977 = vpop.f32.mrb[0].mxu0
    %v4978 = vadd.f32 0.0, %v4977
    %v4979 = vpop.f32.mrb[0].mxu0
    %v4980 = vadd.f32 0.0, %v4979
    %4981 = vmatprep.mubr.bf16.mxu0 %v1355
    %4982 = vmatmul.mubr.bf16.gmra.mrb[0].mxu0 %v1354
    %v4983 = vpop.f32.mrb[0].mxu0
    %v4984 = vadd.f32 0.0, %v4983
    %v4985 = vpop.f32.mrb[0].mxu0
    %v4986 = vadd.f32 0.0, %v4985
    %v4987 = vpop.f32.mrb[0].mxu0
    %v4988 = vadd.f32 0.0, %v4987
    %v4989 = vpop.f32.mrb[0].mxu0
    %v4990 = vadd.f32 0.0, %v4989
    %4991 = vmatprep.mubr.bf16.mxu0 %v1361
    %4992 = vmatmul.mubr.bf16.gmra.mrb[0].mxu0 %v1360
    %v4993 = vpop.f32.mrb[0].mxu0
    %v4994 = vadd.f32 0.0, %v4993
    %v4995 = vpop.f32.mrb[0].mxu0
    %v4996 = vadd.f32 0.0, %v4995
    %v4997 = vpop.f32.mrb[0].mxu0
    %v4998 = vadd.f32 0.0, %v4997
    %v4999 = vpop.f32.mrb[0].mxu0
    %v5000 = vadd.f32 0.0, %v4999
    %5001 = vmatprep.mubr.bf16.mxu0 %v1367
    %5002 = vmatmul.mubr.bf16.gmra.mrb[0].mxu0 %v1366
    %v5003 = vpop.f32.mrb[0].mxu0
    %v5004 = vadd.f32 0.0, %v5003
    %v5005 = vpop.f32.mrb[0].mxu0
    %v5006 = vadd.f32 0.0, %v5005
    %v5007 = vpop.f32.mrb[0].mxu0
    %v5008 = vadd.f32 0.0, %v5007
    %v5009 = vpop.f32.mrb[0].mxu0
    %v5010 = vadd.f32 0.0, %v5009
    %5011 = vmatprep.mubr.bf16.mxu0 %v1373
    %5012 = vmatmul.mubr.bf16.gmra.mrb[0].mxu0 %v1372
    %v5013 = vpop.f32.mrb[0].mxu0
    %v5014 = vadd.f32 0.0, %v5013
    %v5015 = vpop.f32.mrb[0].mxu0
    %v5016 = vadd.f32 0.0, %v5015
    %v5017 = vpop.f32.mrb[0].mxu0
    %v5018 = vadd.f32 0.0, %v5017
    %v5019 = vpop.f32.mrb[0].mxu0
    %v5020 = vadd.f32 0.0, %v5019
    %5021 = vmatprep.mubr.bf16.mxu0 %v1379
    %5022 = vmatmul.mubr.bf16.gmra.mrb[0].mxu0 %v1378
    %v5023 = vpop.f32.mrb[0].mxu0
    %v5024 = vadd.f32 0.0, %v5023
    %v5025 = vpop.f32.mrb[0].mxu0
    %v5026 = vadd.f32 0.0, %v5025
    %v5027 = vpop.f32.mrb[0].mxu0
    %v5028 = vadd.f32 0.0, %v5027
    %v5029 = vpop.f32.mrb[0].mxu0
    %v5030 = vadd.f32 0.0, %v5029
    %5031 = vmatprep.mubr.bf16.mxu0 %v1385
    %5032 = vmatmul.mubr.bf16.gmra.mrb[0].mxu0 %v1384
    %v5033 = vpop.f32.mrb[0].mxu0
    %v5034 = vadd.f32 0.0, %v5033
    %v5035 = vpop.f32.mrb[0].mxu0
    %v5036 = vadd.f32 0.0, %v5035
    %v5037 = vpop.f32.mrb[0].mxu0
    %v5038 = vadd.f32 0.0, %v5037
    %v5039 = vpop.f32.mrb[0].mxu0
    %v5040 = vadd.f32 0.0, %v5039
    %5041 = vmatprep.mubr.bf16.mxu0 %v1391
    %5042 = vmatmul.mubr.bf16.gmra.mrb[0].mxu0 %v1390
    %v5043 = vpop.f32.mrb[0].mxu0
    %v5044 = vadd.f32 0.0, %v5043
    %v5045 = vpop.f32.mrb[0].mxu0
    %v5046 = vadd.f32 0.0, %v5045
    %v5047 = vpop.f32.mrb[0].mxu0
    %v5048 = vadd.f32 0.0, %v5047
    %v5049 = vpop.f32.mrb[0].mxu0
    %v5050 = vadd.f32 0.0, %v5049
    %5051 = vmatprep.mubr.bf16.mxu0 %v1397
    %5052 = vmatmul.mubr.bf16.gmra.mrb[0].mxu0 %v1396
    %v5053 = vpop.f32.mrb[0].mxu0
    %v5054 = vadd.f32 0.0, %v5053
    %v5055 = vpop.f32.mrb[0].mxu0
    %v5056 = vadd.f32 0.0, %v5055
    %v5057 = vpop.f32.mrb[0].mxu0
    %v5058 = vadd.f32 0.0, %v5057
    %v5059 = vpop.f32.mrb[0].mxu0
    %v5060 = vadd.f32 0.0, %v5059
    %5061 = vmatprep.mubr.bf16.mxu0 %v1403
    %5062 = vmatmul.mubr.bf16.gmra.mrb[0].mxu0 %v1402
    %v5063 = vpop.f32.mrb[0].mxu0
    %v5064 = vadd.f32 0.0, %v5063
    %v5065 = vpop.f32.mrb[0].mxu0
    %v5066 = vadd.f32 0.0, %v5065
    %v5067 = vpop.f32.mrb[0].mxu0
    %v5068 = vadd.f32 0.0, %v5067
    %v5069 = vpop.f32.mrb[0].mxu0
    %v5070 = vadd.f32 0.0, %v5069
    %5071 = vmatprep.mubr.bf16.mxu0 %v1409
    %5072 = vmatmul.mubr.bf16.gmra.mrb[0].mxu0 %v1408
    %v5073 = vpop.f32.mrb[0].mxu0
    %v5074 = vadd.f32 0.0, %v5073
    %v5075 = vpop.f32.mrb[0].mxu0
    %v5076 = vadd.f32 0.0, %v5075
    %v5077 = vpop.f32.mrb[0].mxu0
    %v5078 = vadd.f32 0.0, %v5077
    %v5079 = vpop.f32.mrb[0].mxu0
    %v5080 = vadd.f32 0.0, %v5079
    %5081 = vmatprep.mubr.bf16.mxu0 %v1415
    %5082 = vmatmul.mubr.bf16.gmra.mrb[0].mxu0 %v1414
    %v5083 = vpop.f32.mrb[0].mxu0
    %v5084 = vadd.f32 0.0, %v5083
    %v5085 = vpop.f32.mrb[0].mxu0
    %v5086 = vadd.f32 0.0, %v5085
    %v5087 = vpop.f32.mrb[0].mxu0
    %v5088 = vadd.f32 0.0, %v5087
    %v5089 = vpop.f32.mrb[0].mxu0
    %v5090 = vadd.f32 0.0, %v5089
    %5091 = vmatprep.mubr.bf16.mxu0 %v1421
    %5092 = vmatmul.mubr.bf16.gmra.mrb[0].mxu0 %v1420
    %v5093 = vpop.f32.mrb[0].mxu0
    %v5094 = vadd.f32 0.0, %v5093
    %v5095 = vpop.f32.mrb[0].mxu0
    %v5096 = vadd.f32 0.0, %v5095
    %v5097 = vpop.f32.mrb[0].mxu0
    %v5098 = vadd.f32 0.0, %v5097
    %v5099 = vpop.f32.mrb[0].mxu0
    %v5100 = vadd.f32 0.0, %v5099
    %5101 = vmatprep.mubr.bf16.mxu0 %v1427
    %5102 = vmatmul.mubr.bf16.gmra.mrb[0].mxu0 %v1426
    %v5103 = vpop.f32.mrb[0].mxu0
    %v5104 = vadd.f32 0.0, %v5103
    %v5105 = vpop.f32.mrb[0].mxu0
    %v5106 = vadd.f32 0.0, %v5105
    %v5107 = vpop.f32.mrb[0].mxu0
    %v5108 = vadd.f32 0.0, %v5107
    %v5109 = vpop.f32.mrb[0].mxu0
    %v5110 = vadd.f32 0.0, %v5109
    %5111 = vmatprep.mubr.bf16.mxu0 %v1433
    %5112 = vmatmul.mubr.bf16.gmra.mrb[0].mxu0 %v1432
    %v5113 = vpop.f32.mrb[0].mxu0
    %v5114 = vadd.f32 0.0, %v5113
    %v5115 = vpop.f32.mrb[0].mxu0
    %v5116 = vadd.f32 0.0, %v5115
    %v5117 = vpop.f32.mrb[0].mxu0
    %v5118 = vadd.f32 0.0, %v5117
    %v5119 = vpop.f32.mrb[0].mxu0
    %v5120 = vadd.f32 0.0, %v5119
    %5121 = vmatprep.mubr.bf16.mxu0 %v1439
    %5122 = vmatmul.mubr.bf16.gmra.mrb[0].mxu0 %v1438
    %v5123 = vpop.f32.mrb[0].mxu0
    %v5124 = vadd.f32 0.0, %v5123
    %v5125 = vpop.f32.mrb[0].mxu0
    %v5126 = vadd.f32 0.0, %v5125
    %v5127 = vpop.f32.mrb[0].mxu0
    %v5128 = vadd.f32 0.0, %v5127
    %v5129 = vpop.f32.mrb[0].mxu0
    %v5130 = vadd.f32 0.0, %v5129
    %5131 = vmatprep.mubr.bf16.mxu0 %v1445
    %5132 = vmatmul.mubr.bf16.gmra.mrb[0].mxu0 %v1444
    %v5133 = vpop.f32.mrb[0].mxu0
    %v5134 = vadd.f32 0.0, %v5133
    %v5135 = vpop.f32.mrb[0].mxu0
    %v5136 = vadd.f32 0.0, %v5135
    %v5137 = vpop.f32.mrb[0].mxu0
    %v5138 = vadd.f32 0.0, %v5137
    %v5139 = vpop.f32.mrb[0].mxu0
    %v5140 = vadd.f32 0.0, %v5139
    %5141 = vmatprep.mubr.bf16.mxu0 %v1451
    %5142 = vmatmul.mubr.bf16.gmra.mrb[0].mxu0 %v1450
    %v5143 = vpop.f32.mrb[0].mxu0
    %v5144 = vadd.f32 0.0, %v5143
    %v5145 = vpop.f32.mrb[0].mxu0
    %v5146 = vadd.f32 0.0, %v5145
    %v5147 = vpop.f32.mrb[0].mxu0
    %v5148 = vadd.f32 0.0, %v5147
    %v5149 = vpop.f32.mrb[0].mxu0
    %v5150 = vadd.f32 0.0, %v5149
    %5151 = vmatprep.mubr.bf16.mxu0 %v1457
    %5152 = vmatmul.mubr.bf16.gmra.mrb[0].mxu0 %v1456
    %v5153 = vpop.f32.mrb[0].mxu0
    %v5154 = vadd.f32 0.0, %v5153
    %v5155 = vpop.f32.mrb[0].mxu0
    %v5156 = vadd.f32 0.0, %v5155
    %v5157 = vpop.f32.mrb[0].mxu0
    %v5158 = vadd.f32 0.0, %v5157
    %v5159 = vpop.f32.mrb[0].mxu0
    %v5160 = vadd.f32 0.0, %v5159
    %5161 = vmatprep.mubr.bf16.mxu0 %v1463
    %5162 = vmatmul.mubr.bf16.gmra.mrb[0].mxu0 %v1462
    %v5163 = vpop.f32.mrb[0].mxu0
    %v5164 = vadd.f32 0.0, %v5163
    %v5165 = vpop.f32.mrb[0].mxu0
    %v5166 = vadd.f32 0.0, %v5165
    %v5167 = vpop.f32.mrb[0].mxu0
    %v5168 = vadd.f32 0.0, %v5167
    %v5169 = vpop.f32.mrb[0].mxu0
    %v5170 = vadd.f32 0.0, %v5169
    %5171 = vmatprep.mubr.bf16.mxu0 %v1469
    %5172 = vmatmul.mubr.bf16.gmra.mrb[0].mxu0 %v1468
    %v5173 = vpop.f32.mrb[0].mxu0
    %v5174 = vadd.f32 0.0, %v5173
    %v5175 = vpop.f32.mrb[0].mxu0
    %v5176 = vadd.f32 0.0, %v5175
    %v5177 = vpop.f32.mrb[0].mxu0
    %v5178 = vadd.f32 0.0, %v5177
    %v5179 = vpop.f32.mrb[0].mxu0
    %v5180 = vadd.f32 0.0, %v5179
    %5181 = vmatprep.mubr.bf16.mxu0 %v1475
    %5182 = vmatmul.mubr.bf16.gmra.mrb[0].mxu0 %v1474
    %v5183 = vpop.f32.mrb[0].mxu0
    %v5184 = vadd.f32 0.0, %v5183
    %v5185 = vpop.f32.mrb[0].mxu0
    %v5186 = vadd.f32 0.0, %v5185
    %v5187 = vpop.f32.mrb[0].mxu0
    %v5188 = vadd.f32 0.0, %v5187
    %v5189 = vpop.f32.mrb[0].mxu0
    %v5190 = vadd.f32 0.0, %v5189
    %5191 = vmatprep.mubr.bf16.mxu0 %v1481
    %5192 = vmatmul.mubr.bf16.gmra.mrb[0].mxu0 %v1480
    %v5193 = vpop.f32.mrb[0].mxu0
    %v5194 = vadd.f32 0.0, %v5193
    %v5195 = vpop.f32.mrb[0].mxu0
    %v5196 = vadd.f32 0.0, %v5195
    %v5197 = vpop.f32.mrb[0].mxu0
    %v5198 = vadd.f32 0.0, %v5197
    %v5199 = vpop.f32.mrb[0].mxu0
    %v5200 = vadd.f32 0.0, %v5199
    %5201 = vmatprep.mubr.bf16.mxu0 %v1487
    %5202 = vmatmul.mubr.bf16.gmra.mrb[0].mxu0 %v1486
    %v5203 = vpop.f32.mrb[0].mxu0
    %v5204 = vadd.f32 0.0, %v5203
    %v5205 = vpop.f32.mrb[0].mxu0
    %v5206 = vadd.f32 0.0, %v5205
    %v5207 = vpop.f32.mrb[0].mxu0
    %v5208 = vadd.f32 0.0, %v5207
    %v5209 = vpop.f32.mrb[0].mxu0
    %v5210 = vadd.f32 0.0, %v5209
    %5211 = vmatprep.mubr.bf16.mxu0 %v1493
    %5212 = vmatmul.mubr.bf16.gmra.mrb[0].mxu0 %v1492
    %v5213 = vpop.f32.mrb[0].mxu0
    %v5214 = vadd.f32 0.0, %v5213
    %v5215 = vpop.f32.mrb[0].mxu0
    %v5216 = vadd.f32 0.0, %v5215
    %v5217 = vpop.f32.mrb[0].mxu0
    %v5218 = vadd.f32 0.0, %v5217
    %v5219 = vpop.f32.mrb[0].mxu0
    %v5220 = vadd.f32 0.0, %v5219
    %5221 = vmatprep.mubr.bf16.mxu0 %v1499
    %5222 = vmatmul.mubr.bf16.gmra.mrb[0].mxu0 %v1498
    %v5223 = vpop.f32.mrb[0].mxu0
    %v5224 = vadd.f32 0.0, %v5223
    %v5225 = vpop.f32.mrb[0].mxu0
    %v5226 = vadd.f32 0.0, %v5225
    %v5227 = vpop.f32.mrb[0].mxu0
    %v5228 = vadd.f32 0.0, %v5227
    %v5229 = vpop.f32.mrb[0].mxu0
    %v5230 = vadd.f32 0.0, %v5229
    %5231 = vmatprep.mubr.bf16.mxu0 %v1505
    %5232 = vmatmul.mubr.bf16.gmra.mrb[0].mxu0 %v1504
    %v5233 = vpop.f32.mrb[0].mxu0
    %v5234 = vadd.f32 0.0, %v5233
    %v5235 = vpop.f32.mrb[0].mxu0
    %v5236 = vadd.f32 0.0, %v5235
    %v5237 = vpop.f32.mrb[0].mxu0
    %v5238 = vadd.f32 0.0, %v5237
    %v5239 = vpop.f32.mrb[0].mxu0
    %v5240 = vadd.f32 0.0, %v5239
    %5241 = vmatprep.mubr.bf16.mxu0 %v1511
    %5242 = vmatmul.mubr.bf16.gmra.mrb[0].mxu0 %v1510
    %v5243 = vpop.f32.mrb[0].mxu0
    %v5244 = vadd.f32 0.0, %v5243
    %v5245 = vpop.f32.mrb[0].mxu0
    %v5246 = vadd.f32 0.0, %v5245
    %v5247 = vpop.f32.mrb[0].mxu0
    %v5248 = vadd.f32 0.0, %v5247
    %v5249 = vpop.f32.mrb[0].mxu0
    %v5250 = vadd.f32 0.0, %v5249
    %5251 = vmatprep.mubr.bf16.mxu0 %v1517
    %5252 = vmatmul.mubr.bf16.gmra.mrb[0].mxu0 %v1516
    %v5253 = vpop.f32.mrb[0].mxu0
    %v5254 = vadd.f32 0.0, %v5253
    %v5255 = vpop.f32.mrb[0].mxu0
    %v5256 = vadd.f32 0.0, %v5255
    %v5257 = vpop.f32.mrb[0].mxu0
    %v5258 = vadd.f32 0.0, %v5257
    %v5259 = vpop.f32.mrb[0].mxu0
    %v5260 = vadd.f32 0.0, %v5259
    %5261 = vmatprep.mubr.bf16.mxu0 %v1523
    %5262 = vmatmul.mubr.bf16.gmra.mrb[0].mxu0 %v1522
    %v5263 = vpop.f32.mrb[0].mxu0
    %v5264 = vadd.f32 0.0, %v5263
    %v5265 = vpop.f32.mrb[0].mxu0
    %v5266 = vadd.f32 0.0, %v5265
    %v5267 = vpop.f32.mrb[0].mxu0
    %v5268 = vadd.f32 0.0, %v5267
    %v5269 = vpop.f32.mrb[0].mxu0
    %v5270 = vadd.f32 0.0, %v5269
    %5271 = vmatprep.mubr.bf16.mxu0 %v1529
    %5272 = vmatmul.mubr.bf16.gmra.mrb[0].mxu0 %v1528
    %v5273 = vpop.f32.mrb[0].mxu0
    %v5274 = vadd.f32 0.0, %v5273
    %v5275 = vpop.f32.mrb[0].mxu0
    %v5276 = vadd.f32 0.0, %v5275
    %v5277 = vpop.f32.mrb[0].mxu0
    %v5278 = vadd.f32 0.0, %v5277
    %v5279 = vpop.f32.mrb[0].mxu0
    %v5280 = vadd.f32 0.0, %v5279
    %5281 = vmatprep.mubr.bf16.mxu0 %v1535
    %5282 = vmatmul.mubr.bf16.gmra.mrb[0].mxu0 %v1534
    %v5283 = vpop.f32.mrb[0].mxu0
    %v5284 = vadd.f32 0.0, %v5283
    %v5285 = vpop.f32.mrb[0].mxu0
    %v5286 = vadd.f32 0.0, %v5285
    %v5287 = vpop.f32.mrb[0].mxu0
    %v5288 = vadd.f32 0.0, %v5287
    %v5289 = vpop.f32.mrb[0].mxu0
    %v5290 = vadd.f32 0.0, %v5289
    %5291 = vdwg.mxu0
    %5292 = vmatprep.subr.bf16.mxu0 %v2647
    %5293 = vmatpush1.bf16.msra.mxu0 %v2646
    %5294 = vmatprep.subr.bf16.mxu0 %v2653
    %5295 = vmatpush1.bf16.msra.mxu0 %v2652
    %5296 = vmatprep.subr.bf16.mxu0 %v2659
    %5297 = vmatpush1.bf16.msra.mxu0 %v2658
    %5298 = vmatprep.subr.bf16.mxu0 %v2665
    %5299 = vmatpush1.bf16.msra.mxu0 %v2664
    %5300 = vmatprep.subr.bf16.mxu0 %v2671
    %5301 = vmatpush1.bf16.msra.mxu0 %v2670
    %5302 = vmatprep.subr.bf16.mxu0 %v2677
    %5303 = vmatpush1.bf16.msra.mxu0 %v2676
    %5304 = vmatprep.subr.bf16.mxu0 %v2683
    %5305 = vmatpush1.bf16.msra.mxu0 %v2682
    %5306 = vmatprep.subr.bf16.mxu0 %v2689
    %5307 = vmatpush1.bf16.msra.mxu0 %v2688
    %5308 = vmatprep.subr.bf16.mxu0 %v2695
    %5309 = vmatpush1.bf16.msra.mxu0 %v2694
    %5310 = vmatprep.subr.bf16.mxu0 %v2701
    %5311 = vmatpush1.bf16.msra.mxu0 %v2700
    %5312 = vmatprep.subr.bf16.mxu0 %v2707
    %5313 = vmatpush1.bf16.msra.mxu0 %v2706
    %5314 = vmatprep.subr.bf16.mxu0 %v2713
    %5315 = vmatpush1.bf16.msra.mxu0 %v2712
    %5316 = vmatprep.subr.bf16.mxu0 %v2719
    %5317 = vmatpush1.bf16.msra.mxu0 %v2718
    %5318 = vmatprep.subr.bf16.mxu0 %v2725
    %5319 = vmatpush1.bf16.msra.mxu0 %v2724
    %5320 = vmatprep.subr.bf16.mxu0 %v2731
    %5321 = vmatpush1.bf16.msra.mxu0 %v2730
    %5322 = vmatprep.subr.bf16.mxu0 %v2737
    %5323 = vmatpush1.bf16.msra.mxu0 %v2736
    %5324 = vmatprep.mubr.bf16.mxu0 %v1249
    %5325 = vmatmul.mubr.bf16.gmra.mrb[0].mxu0 %v1248
    %v5326 = vpop.f32.mrb[0].mxu0
    %v5327 = vadd.f32 %v4804, %v5326
    %v5328 = vpop.f32.mrb[0].mxu0
    %v5329 = vadd.f32 %v4806, %v5328
    %v5330 = vpop.f32.mrb[0].mxu0
    %v5331 = vadd.f32 %v4808, %v5330
    %v5332 = vpop.f32.mrb[0].mxu0
    %v5333 = vadd.f32 %v4810, %v5332
    %5334 = vmatprep.mubr.bf16.mxu0 %v1255
    %5335 = vmatmul.mubr.bf16.gmra.mrb[0].mxu0 %v1254
    %v5336 = vpop.f32.mrb[0].mxu0
    %v5337 = vadd.f32 %v4814, %v5336
    %v5338 = vpop.f32.mrb[0].mxu0
    %v5339 = vadd.f32 %v4816, %v5338
    %v5340 = vpop.f32.mrb[0].mxu0
    %v5341 = vadd.f32 %v4818, %v5340
    %v5342 = vpop.f32.mrb[0].mxu0
    %v5343 = vadd.f32 %v4820, %v5342
    %5344 = vmatprep.mubr.bf16.mxu0 %v1261
    %5345 = vmatmul.mubr.bf16.gmra.mrb[0].mxu0 %v1260
    %v5346 = vpop.f32.mrb[0].mxu0
    %v5347 = vadd.f32 %v4824, %v5346
    %v5348 = vpop.f32.mrb[0].mxu0
    %v5349 = vadd.f32 %v4826, %v5348
    %v5350 = vpop.f32.mrb[0].mxu0
    %v5351 = vadd.f32 %v4828, %v5350
    %v5352 = vpop.f32.mrb[0].mxu0
    %v5353 = vadd.f32 %v4830, %v5352
    %5354 = vmatprep.mubr.bf16.mxu0 %v1267
    %5355 = vmatmul.mubr.bf16.gmra.mrb[0].mxu0 %v1266
    %v5356 = vpop.f32.mrb[0].mxu0
    %v5357 = vadd.f32 %v4834, %v5356
    %v5358 = vpop.f32.mrb[0].mxu0
    %v5359 = vadd.f32 %v4836, %v5358
    %v5360 = vpop.f32.mrb[0].mxu0
    %v5361 = vadd.f32 %v4838, %v5360
    %v5362 = vpop.f32.mrb[0].mxu0
    %v5363 = vadd.f32 %v4840, %v5362
    %5364 = vmatprep.mubr.bf16.mxu0 %v1273
    %5365 = vmatmul.mubr.bf16.gmra.mrb[0].mxu0 %v1272
    %v5366 = vpop.f32.mrb[0].mxu0
    %v5367 = vadd.f32 %v4844, %v5366
    %v5368 = vpop.f32.mrb[0].mxu0
    %v5369 = vadd.f32 %v4846, %v5368
    %v5370 = vpop.f32.mrb[0].mxu0
    %v5371 = vadd.f32 %v4848, %v5370
    %v5372 = vpop.f32.mrb[0].mxu0
    %v5373 = vadd.f32 %v4850, %v5372
    %5374 = vmatprep.mubr.bf16.mxu0 %v1279
    %5375 = vmatmul.mubr.bf16.gmra.mrb[0].mxu0 %v1278
    %v5376 = vpop.f32.mrb[0].mxu0
    %v5377 = vadd.f32 %v4854, %v5376
    %v5378 = vpop.f32.mrb[0].mxu0
    %v5379 = vadd.f32 %v4856, %v5378
    %v5380 = vpop.f32.mrb[0].mxu0
    %v5381 = vadd.f32 %v4858, %v5380
    %v5382 = vpop.f32.mrb[0].mxu0
    %v5383 = vadd.f32 %v4860, %v5382
    %5384 = vmatprep.mubr.bf16.mxu0 %v1285
    %5385 = vmatmul.mubr.bf16.gmra.mrb[0].mxu0 %v1284
    %v5386 = vpop.f32.mrb[0].mxu0
    %v5387 = vadd.f32 %v4864, %v5386
    %v5388 = vpop.f32.mrb[0].mxu0
    %v5389 = vadd.f32 %v4866, %v5388
    %v5390 = vpop.f32.mrb[0].mxu0
    %v5391 = vadd.f32 %v4868, %v5390
    %v5392 = vpop.f32.mrb[0].mxu0
    %v5393 = vadd.f32 %v4870, %v5392
    %5394 = vmatprep.mubr.bf16.mxu0 %v1291
    %5395 = vmatmul.mubr.bf16.gmra.mrb[0].mxu0 %v1290
    %v5396 = vpop.f32.mrb[0].mxu0
    %v5397 = vadd.f32 %v4874, %v5396
    %v5398 = vpop.f32.mrb[0].mxu0
    %v5399 = vadd.f32 %v4876, %v5398
    %v5400 = vpop.f32.mrb[0].mxu0
    %v5401 = vadd.f32 %v4878, %v5400
    %v5402 = vpop.f32.mrb[0].mxu0
    %v5403 = vadd.f32 %v4880, %v5402
    %5404 = vmatprep.mubr.bf16.mxu0 %v1297
    %5405 = vmatmul.mubr.bf16.gmra.mrb[0].mxu0 %v1296
    %v5406 = vpop.f32.mrb[0].mxu0
    %v5407 = vadd.f32 %v4884, %v5406
    %v5408 = vpop.f32.mrb[0].mxu0
    %v5409 = vadd.f32 %v4886, %v5408
    %v5410 = vpop.f32.mrb[0].mxu0
    %v5411 = vadd.f32 %v4888, %v5410
    %v5412 = vpop.f32.mrb[0].mxu0
    %v5413 = vadd.f32 %v4890, %v5412
    %5414 = vmatprep.mubr.bf16.mxu0 %v1303
    %5415 = vmatmul.mubr.bf16.gmra.mrb[0].mxu0 %v1302
    %v5416 = vpop.f32.mrb[0].mxu0
    %v5417 = vadd.f32 %v4894, %v5416
    %v5418 = vpop.f32.mrb[0].mxu0
    %v5419 = vadd.f32 %v4896, %v5418
    %v5420 = vpop.f32.mrb[0].mxu0
    %v5421 = vadd.f32 %v4898, %v5420
    %v5422 = vpop.f32.mrb[0].mxu0
    %v5423 = vadd.f32 %v4900, %v5422
    %5424 = vmatprep.mubr.bf16.mxu0 %v1309
    %5425 = vmatmul.mubr.bf16.gmra.mrb[0].mxu0 %v1308
    %v5426 = vpop.f32.mrb[0].mxu0
    %v5427 = vadd.f32 %v4904, %v5426
    %v5428 = vpop.f32.mrb[0].mxu0
    %v5429 = vadd.f32 %v4906, %v5428
    %v5430 = vpop.f32.mrb[0].mxu0
    %v5431 = vadd.f32 %v4908, %v5430
    %v5432 = vpop.f32.mrb[0].mxu0
    %v5433 = vadd.f32 %v4910, %v5432
    %5434 = vmatprep.mubr.bf16.mxu0 %v1315
    %5435 = vmatmul.mubr.bf16.gmra.mrb[0].mxu0 %v1314
    %v5436 = vpop.f32.mrb[0].mxu0
    %v5437 = vadd.f32 %v4914, %v5436
    %v5438 = vpop.f32.mrb[0].mxu0
    %v5439 = vadd.f32 %v4916, %v5438
    %v5440 = vpop.f32.mrb[0].mxu0
    %v5441 = vadd.f32 %v4918, %v5440
    %v5442 = vpop.f32.mrb[0].mxu0
    %v5443 = vadd.f32 %v4920, %v5442
    %5444 = vmatprep.mubr.bf16.mxu0 %v1321
    %5445 = vmatmul.mubr.bf16.gmra.mrb[0].mxu0 %v1320
    %v5446 = vpop.f32.mrb[0].mxu0
    %v5447 = vadd.f32 %v4924, %v5446
    %v5448 = vpop.f32.mrb[0].mxu0
    %v5449 = vadd.f32 %v4926, %v5448
    %v5450 = vpop.f32.mrb[0].mxu0
    %v5451 = vadd.f32 %v4928, %v5450
    %v5452 = vpop.f32.mrb[0].mxu0
    %v5453 = vadd.f32 %v4930, %v5452
    %5454 = vmatprep.mubr.bf16.mxu0 %v1327
    %5455 = vmatmul.mubr.bf16.gmra.mrb[0].mxu0 %v1326
    %v5456 = vpop.f32.mrb[0].mxu0
    %v5457 = vadd.f32 %v4934, %v5456
    %v5458 = vpop.f32.mrb[0].mxu0
    %v5459 = vadd.f32 %v4936, %v5458
    %v5460 = vpop.f32.mrb[0].mxu0
    %v5461 = vadd.f32 %v4938, %v5460
    %v5462 = vpop.f32.mrb[0].mxu0
    %v5463 = vadd.f32 %v4940, %v5462
    %5464 = vmatprep.mubr.bf16.mxu0 %v1333
    %5465 = vmatmul.mubr.bf16.gmra.mrb[0].mxu0 %v1332
    %v5466 = vpop.f32.mrb[0].mxu0
    %v5467 = vadd.f32 %v4944, %v5466
    %v5468 = vpop.f32.mrb[0].mxu0
    %v5469 = vadd.f32 %v4946, %v5468
    %v5470 = vpop.f32.mrb[0].mxu0
    %v5471 = vadd.f32 %v4948, %v5470
    %v5472 = vpop.f32.mrb[0].mxu0
    %v5473 = vadd.f32 %v4950, %v5472
    %5474 = vmatprep.mubr.bf16.mxu0 %v1339
    %5475 = vmatmul.mubr.bf16.gmra.mrb[0].mxu0 %v1338
    %v5476 = vpop.f32.mrb[0].mxu0
    %v5477 = vadd.f32 %v4954, %v5476
    %v5478 = vpop.f32.mrb[0].mxu0
    %v5479 = vadd.f32 %v4956, %v5478
    %v5480 = vpop.f32.mrb[0].mxu0
    %v5481 = vadd.f32 %v4958, %v5480
    %v5482 = vpop.f32.mrb[0].mxu0
    %v5483 = vadd.f32 %v4960, %v5482
    %5484 = vmatprep.mubr.bf16.mxu0 %v1345
    %5485 = vmatmul.mubr.bf16.gmra.mrb[0].mxu0 %v1344
    %v5486 = vpop.f32.mrb[0].mxu0
    %v5487 = vadd.f32 %v4964, %v5486
    %v5488 = vpop.f32.mrb[0].mxu0
    %v5489 = vadd.f32 %v4966, %v5488
    %v5490 = vpop.f32.mrb[0].mxu0
    %v5491 = vadd.f32 %v4968, %v5490
    %v5492 = vpop.f32.mrb[0].mxu0
    %v5493 = vadd.f32 %v4970, %v5492
    %5494 = vmatprep.mubr.bf16.mxu0 %v1351
    %5495 = vmatmul.mubr.bf16.gmra.mrb[0].mxu0 %v1350
    %v5496 = vpop.f32.mrb[0].mxu0
    %v5497 = vadd.f32 %v4974, %v5496
    %v5498 = vpop.f32.mrb[0].mxu0
    %v5499 = vadd.f32 %v4976, %v5498
    %v5500 = vpop.f32.mrb[0].mxu0
    %v5501 = vadd.f32 %v4978, %v5500
    %v5502 = vpop.f32.mrb[0].mxu0
    %v5503 = vadd.f32 %v4980, %v5502
    %5504 = vmatprep.mubr.bf16.mxu0 %v1357
    %5505 = vmatmul.mubr.bf16.gmra.mrb[0].mxu0 %v1356
    %v5506 = vpop.f32.mrb[0].mxu0
    %v5507 = vadd.f32 %v4984, %v5506
    %v5508 = vpop.f32.mrb[0].mxu0
    %v5509 = vadd.f32 %v4986, %v5508
    %v5510 = vpop.f32.mrb[0].mxu0
    %v5511 = vadd.f32 %v4988, %v5510
    %v5512 = vpop.f32.mrb[0].mxu0
    %v5513 = vadd.f32 %v4990, %v5512
    %5514 = vmatprep.mubr.bf16.mxu0 %v1363
    %5515 = vmatmul.mubr.bf16.gmra.mrb[0].mxu0 %v1362
    %v5516 = vpop.f32.mrb[0].mxu0
    %v5517 = vadd.f32 %v4994, %v5516
    %v5518 = vpop.f32.mrb[0].mxu0
    %v5519 = vadd.f32 %v4996, %v5518
    %v5520 = vpop.f32.mrb[0].mxu0
    %v5521 = vadd.f32 %v4998, %v5520
    %v5522 = vpop.f32.mrb[0].mxu0
    %v5523 = vadd.f32 %v5000, %v5522
    %5524 = vmatprep.mubr.bf16.mxu0 %v1369
    %5525 = vmatmul.mubr.bf16.gmra.mrb[0].mxu0 %v1368
    %v5526 = vpop.f32.mrb[0].mxu0
    %v5527 = vadd.f32 %v5004, %v5526
    %v5528 = vpop.f32.mrb[0].mxu0
    %v5529 = vadd.f32 %v5006, %v5528
    %v5530 = vpop.f32.mrb[0].mxu0
    %v5531 = vadd.f32 %v5008, %v5530
    %v5532 = vpop.f32.mrb[0].mxu0
    %v5533 = vadd.f32 %v5010, %v5532
    %5534 = vmatprep.mubr.bf16.mxu0 %v1375
    %5535 = vmatmul.mubr.bf16.gmra.mrb[0].mxu0 %v1374
    %v5536 = vpop.f32.mrb[0].mxu0
    %v5537 = vadd.f32 %v5014, %v5536
    %v5538 = vpop.f32.mrb[0].mxu0
    %v5539 = vadd.f32 %v5016, %v5538
    %v5540 = vpop.f32.mrb[0].mxu0
    %v5541 = vadd.f32 %v5018, %v5540
    %v5542 = vpop.f32.mrb[0].mxu0
    %v5543 = vadd.f32 %v5020, %v5542
    %5544 = vmatprep.mubr.bf16.mxu0 %v1381
    %5545 = vmatmul.mubr.bf16.gmra.mrb[0].mxu0 %v1380
    %v5546 = vpop.f32.mrb[0].mxu0
    %v5547 = vadd.f32 %v5024, %v5546
    %v5548 = vpop.f32.mrb[0].mxu0
    %v5549 = vadd.f32 %v5026, %v5548
    %v5550 = vpop.f32.mrb[0].mxu0
    %v5551 = vadd.f32 %v5028, %v5550
    %v5552 = vpop.f32.mrb[0].mxu0
    %v5553 = vadd.f32 %v5030, %v5552
    %5554 = vmatprep.mubr.bf16.mxu0 %v1387
    %5555 = vmatmul.mubr.bf16.gmra.mrb[0].mxu0 %v1386
    %v5556 = vpop.f32.mrb[0].mxu0
    %v5557 = vadd.f32 %v5034, %v5556
    %v5558 = vpop.f32.mrb[0].mxu0
    %v5559 = vadd.f32 %v5036, %v5558
    %v5560 = vpop.f32.mrb[0].mxu0
    %v5561 = vadd.f32 %v5038, %v5560
    %v5562 = vpop.f32.mrb[0].mxu0
    %v5563 = vadd.f32 %v5040, %v5562
    %5564 = vmatprep.mubr.bf16.mxu0 %v1393
    %5565 = vmatmul.mubr.bf16.gmra.mrb[0].mxu0 %v1392
    %v5566 = vpop.f32.mrb[0].mxu0
    %v5567 = vadd.f32 %v5044, %v5566
    %v5568 = vpop.f32.mrb[0].mxu0
    %v5569 = vadd.f32 %v5046, %v5568
    %v5570 = vpop.f32.mrb[0].mxu0
    %v5571 = vadd.f32 %v5048, %v5570
    %v5572 = vpop.f32.mrb[0].mxu0
    %v5573 = vadd.f32 %v5050, %v5572
    %5574 = vmatprep.mubr.bf16.mxu0 %v1399
    %5575 = vmatmul.mubr.bf16.gmra.mrb[0].mxu0 %v1398
    %v5576 = vpop.f32.mrb[0].mxu0
    %v5577 = vadd.f32 %v5054, %v5576
    %v5578 = vpop.f32.mrb[0].mxu0
    %v5579 = vadd.f32 %v5056, %v5578
    %v5580 = vpop.f32.mrb[0].mxu0
    %v5581 = vadd.f32 %v5058, %v5580
    %v5582 = vpop.f32.mrb[0].mxu0
    %v5583 = vadd.f32 %v5060, %v5582
    %5584 = vmatprep.mubr.bf16.mxu0 %v1405
    %5585 = vmatmul.mubr.bf16.gmra.mrb[0].mxu0 %v1404
    %v5586 = vpop.f32.mrb[0].mxu0
    %v5587 = vadd.f32 %v5064, %v5586
    %v5588 = vpop.f32.mrb[0].mxu0
    %v5589 = vadd.f32 %v5066, %v5588
    %v5590 = vpop.f32.mrb[0].mxu0
    %v5591 = vadd.f32 %v5068, %v5590
    %v5592 = vpop.f32.mrb[0].mxu0
    %v5593 = vadd.f32 %v5070, %v5592
    %5594 = vmatprep.mubr.bf16.mxu0 %v1411
    %5595 = vmatmul.mubr.bf16.gmra.mrb[0].mxu0 %v1410
    %v5596 = vpop.f32.mrb[0].mxu0
    %v5597 = vadd.f32 %v5074, %v5596
    %v5598 = vpop.f32.mrb[0].mxu0
    %v5599 = vadd.f32 %v5076, %v5598
    %v5600 = vpop.f32.mrb[0].mxu0
    %v5601 = vadd.f32 %v5078, %v5600
    %v5602 = vpop.f32.mrb[0].mxu0
    %v5603 = vadd.f32 %v5080, %v5602
    %5604 = vmatprep.mubr.bf16.mxu0 %v1417
    %5605 = vmatmul.mubr.bf16.gmra.mrb[0].mxu0 %v1416
    %v5606 = vpop.f32.mrb[0].mxu0
    %v5607 = vadd.f32 %v5084, %v5606
    %v5608 = vpop.f32.mrb[0].mxu0
    %v5609 = vadd.f32 %v5086, %v5608
    %v5610 = vpop.f32.mrb[0].mxu0
    %v5611 = vadd.f32 %v5088, %v5610
    %v5612 = vpop.f32.mrb[0].mxu0
    %v5613 = vadd.f32 %v5090, %v5612
    %5614 = vmatprep.mubr.bf16.mxu0 %v1423
    %5615 = vmatmul.mubr.bf16.gmra.mrb[0].mxu0 %v1422
    %v5616 = vpop.f32.mrb[0].mxu0
    %v5617 = vadd.f32 %v5094, %v5616
    %v5618 = vpop.f32.mrb[0].mxu0
    %v5619 = vadd.f32 %v5096, %v5618
    %v5620 = vpop.f32.mrb[0].mxu0
    %v5621 = vadd.f32 %v5098, %v5620
    %v5622 = vpop.f32.mrb[0].mxu0
    %v5623 = vadd.f32 %v5100, %v5622
    %5624 = vmatprep.mubr.bf16.mxu0 %v1429
    %5625 = vmatmul.mubr.bf16.gmra.mrb[0].mxu0 %v1428
    %v5626 = vpop.f32.mrb[0].mxu0
    %v5627 = vadd.f32 %v5104, %v5626
    %v5628 = vpop.f32.mrb[0].mxu0
    %v5629 = vadd.f32 %v5106, %v5628
    %v5630 = vpop.f32.mrb[0].mxu0
    %v5631 = vadd.f32 %v5108, %v5630
    %v5632 = vpop.f32.mrb[0].mxu0
    %v5633 = vadd.f32 %v5110, %v5632
    %5634 = vmatprep.mubr.bf16.mxu0 %v1435
    %5635 = vmatmul.mubr.bf16.gmra.mrb[0].mxu0 %v1434
    %v5636 = vpop.f32.mrb[0].mxu0
    %v5637 = vadd.f32 %v5114, %v5636
    %v5638 = vpop.f32.mrb[0].mxu0
    %v5639 = vadd.f32 %v5116, %v5638
    %v5640 = vpop.f32.mrb[0].mxu0
    %v5641 = vadd.f32 %v5118, %v5640
    %v5642 = vpop.f32.mrb[0].mxu0
    %v5643 = vadd.f32 %v5120, %v5642
    %5644 = vmatprep.mubr.bf16.mxu0 %v1441
    %5645 = vmatmul.mubr.bf16.gmra.mrb[0].mxu0 %v1440
    %v5646 = vpop.f32.mrb[0].mxu0
    %v5647 = vadd.f32 %v5124, %v5646
    %v5648 = vpop.f32.mrb[0].mxu0
    %v5649 = vadd.f32 %v5126, %v5648
    %v5650 = vpop.f32.mrb[0].mxu0
    %v5651 = vadd.f32 %v5128, %v5650
    %v5652 = vpop.f32.mrb[0].mxu0
    %v5653 = vadd.f32 %v5130, %v5652
    %5654 = vmatprep.mubr.bf16.mxu0 %v1447
    %5655 = vmatmul.mubr.bf16.gmra.mrb[0].mxu0 %v1446
    %v5656 = vpop.f32.mrb[0].mxu0
    %v5657 = vadd.f32 %v5134, %v5656
    %v5658 = vpop.f32.mrb[0].mxu0
    %v5659 = vadd.f32 %v5136, %v5658
    %v5660 = vpop.f32.mrb[0].mxu0
    %v5661 = vadd.f32 %v5138, %v5660
    %v5662 = vpop.f32.mrb[0].mxu0
    %v5663 = vadd.f32 %v5140, %v5662
    %5664 = vmatprep.mubr.bf16.mxu0 %v1453
    %5665 = vmatmul.mubr.bf16.gmra.mrb[0].mxu0 %v1452
    %v5666 = vpop.f32.mrb[0].mxu0
    %v5667 = vadd.f32 %v5144, %v5666
    %v5668 = vpop.f32.mrb[0].mxu0
    %v5669 = vadd.f32 %v5146, %v5668
    %v5670 = vpop.f32.mrb[0].mxu0
    %v5671 = vadd.f32 %v5148, %v5670
    %v5672 = vpop.f32.mrb[0].mxu0
    %v5673 = vadd.f32 %v5150, %v5672
    %5674 = vmatprep.mubr.bf16.mxu0 %v1459
    %5675 = vmatmul.mubr.bf16.gmra.mrb[0].mxu0 %v1458
    %v5676 = vpop.f32.mrb[0].mxu0
    %v5677 = vadd.f32 %v5154, %v5676
    %v5678 = vpop.f32.mrb[0].mxu0
    %v5679 = vadd.f32 %v5156, %v5678
    %v5680 = vpop.f32.mrb[0].mxu0
    %v5681 = vadd.f32 %v5158, %v5680
    %v5682 = vpop.f32.mrb[0].mxu0
    %v5683 = vadd.f32 %v5160, %v5682
    %5684 = vmatprep.mubr.bf16.mxu0 %v1465
    %5685 = vmatmul.mubr.bf16.gmra.mrb[0].mxu0 %v1464
    %v5686 = vpop.f32.mrb[0].mxu0
    %v5687 = vadd.f32 %v5164, %v5686
    %v5688 = vpop.f32.mrb[0].mxu0
    %v5689 = vadd.f32 %v5166, %v5688
    %v5690 = vpop.f32.mrb[0].mxu0
    %v5691 = vadd.f32 %v5168, %v5690
    %v5692 = vpop.f32.mrb[0].mxu0
    %v5693 = vadd.f32 %v5170, %v5692
    %5694 = vmatprep.mubr.bf16.mxu0 %v1471
    %5695 = vmatmul.mubr.bf16.gmra.mrb[0].mxu0 %v1470
    %v5696 = vpop.f32.mrb[0].mxu0
    %v5697 = vadd.f32 %v5174, %v5696
    %v5698 = vpop.f32.mrb[0].mxu0
    %v5699 = vadd.f32 %v5176, %v5698
    %v5700 = vpop.f32.mrb[0].mxu0
    %v5701 = vadd.f32 %v5178, %v5700
    %v5702 = vpop.f32.mrb[0].mxu0
    %v5703 = vadd.f32 %v5180, %v5702
    %5704 = vmatprep.mubr.bf16.mxu0 %v1477
    %5705 = vmatmul.mubr.bf16.gmra.mrb[0].mxu0 %v1476
    %v5706 = vpop.f32.mrb[0].mxu0
    %v5707 = vadd.f32 %v5184, %v5706
    %v5708 = vpop.f32.mrb[0].mxu0
    %v5709 = vadd.f32 %v5186, %v5708
    %v5710 = vpop.f32.mrb[0].mxu0
    %v5711 = vadd.f32 %v5188, %v5710
    %v5712 = vpop.f32.mrb[0].mxu0
    %v5713 = vadd.f32 %v5190, %v5712
    %5714 = vmatprep.mubr.bf16.mxu0 %v1483
    %5715 = vmatmul.mubr.bf16.gmra.mrb[0].mxu0 %v1482
    %v5716 = vpop.f32.mrb[0].mxu0
    %v5717 = vadd.f32 %v5194, %v5716
    %v5718 = vpop.f32.mrb[0].mxu0
    %v5719 = vadd.f32 %v5196, %v5718
    %v5720 = vpop.f32.mrb[0].mxu0
    %v5721 = vadd.f32 %v5198, %v5720
    %v5722 = vpop.f32.mrb[0].mxu0
    %v5723 = vadd.f32 %v5200, %v5722
    %5724 = vmatprep.mubr.bf16.mxu0 %v1489
    %5725 = vmatmul.mubr.bf16.gmra.mrb[0].mxu0 %v1488
    %v5726 = vpop.f32.mrb[0].mxu0
    %v5727 = vadd.f32 %v5204, %v5726
    %v5728 = vpop.f32.mrb[0].mxu0
    %v5729 = vadd.f32 %v5206, %v5728
    %v5730 = vpop.f32.mrb[0].mxu0
    %v5731 = vadd.f32 %v5208, %v5730
    %v5732 = vpop.f32.mrb[0].mxu0
    %v5733 = vadd.f32 %v5210, %v5732
    %5734 = vmatprep.mubr.bf16.mxu0 %v1495
    %5735 = vmatmul.mubr.bf16.gmra.mrb[0].mxu0 %v1494
    %v5736 = vpop.f32.mrb[0].mxu0
    %v5737 = vadd.f32 %v5214, %v5736
    %v5738 = vpop.f32.mrb[0].mxu0
    %v5739 = vadd.f32 %v5216, %v5738
    %v5740 = vpop.f32.mrb[0].mxu0
    %v5741 = vadd.f32 %v5218, %v5740
    %v5742 = vpop.f32.mrb[0].mxu0
    %v5743 = vadd.f32 %v5220, %v5742
    %5744 = vmatprep.mubr.bf16.mxu0 %v1501
    %5745 = vmatmul.mubr.bf16.gmra.mrb[0].mxu0 %v1500
    %v5746 = vpop.f32.mrb[0].mxu0
    %v5747 = vadd.f32 %v5224, %v5746
    %v5748 = vpop.f32.mrb[0].mxu0
    %v5749 = vadd.f32 %v5226, %v5748
    %v5750 = vpop.f32.mrb[0].mxu0
    %v5751 = vadd.f32 %v5228, %v5750
    %v5752 = vpop.f32.mrb[0].mxu0
    %v5753 = vadd.f32 %v5230, %v5752
    %5754 = vmatprep.mubr.bf16.mxu0 %v1507
    %5755 = vmatmul.mubr.bf16.gmra.mrb[0].mxu0 %v1506
    %v5756 = vpop.f32.mrb[0].mxu0
    %v5757 = vadd.f32 %v5234, %v5756
    %v5758 = vpop.f32.mrb[0].mxu0
    %v5759 = vadd.f32 %v5236, %v5758
    %v5760 = vpop.f32.mrb[0].mxu0
    %v5761 = vadd.f32 %v5238, %v5760
    %v5762 = vpop.f32.mrb[0].mxu0
    %v5763 = vadd.f32 %v5240, %v5762
    %5764 = vmatprep.mubr.bf16.mxu0 %v1513
    %5765 = vmatmul.mubr.bf16.gmra.mrb[0].mxu0 %v1512
    %v5766 = vpop.f32.mrb[0].mxu0
    %v5767 = vadd.f32 %v5244, %v5766
    %v5768 = vpop.f32.mrb[0].mxu0
    %v5769 = vadd.f32 %v5246, %v5768
    %v5770 = vpop.f32.mrb[0].mxu0
    %v5771 = vadd.f32 %v5248, %v5770
    %v5772 = vpop.f32.mrb[0].mxu0
    %v5773 = vadd.f32 %v5250, %v5772
    %5774 = vmatprep.mubr.bf16.mxu0 %v1519
    %5775 = vmatmul.mubr.bf16.gmra.mrb[0].mxu0 %v1518
    %v5776 = vpop.f32.mrb[0].mxu0
    %v5777 = vadd.f32 %v5254, %v5776
    %v5778 = vpop.f32.mrb[0].mxu0
    %v5779 = vadd.f32 %v5256, %v5778
    %v5780 = vpop.f32.mrb[0].mxu0
    %v5781 = vadd.f32 %v5258, %v5780
    %v5782 = vpop.f32.mrb[0].mxu0
    %v5783 = vadd.f32 %v5260, %v5782
    %5784 = vmatprep.mubr.bf16.mxu0 %v1525
    %5785 = vmatmul.mubr.bf16.gmra.mrb[0].mxu0 %v1524
    %v5786 = vpop.f32.mrb[0].mxu0
    %v5787 = vadd.f32 %v5264, %v5786
    %v5788 = vpop.f32.mrb[0].mxu0
    %v5789 = vadd.f32 %v5266, %v5788
    %v5790 = vpop.f32.mrb[0].mxu0
    %v5791 = vadd.f32 %v5268, %v5790
    %v5792 = vpop.f32.mrb[0].mxu0
    %v5793 = vadd.f32 %v5270, %v5792
    %5794 = vmatprep.mubr.bf16.mxu0 %v1531
    %5795 = vmatmul.mubr.bf16.gmra.mrb[0].mxu0 %v1530
    %v5796 = vpop.f32.mrb[0].mxu0
    %v5797 = vadd.f32 %v5274, %v5796
    %v5798 = vpop.f32.mrb[0].mxu0
    %v5799 = vadd.f32 %v5276, %v5798
    %v5800 = vpop.f32.mrb[0].mxu0
    %v5801 = vadd.f32 %v5278, %v5800
    %v5802 = vpop.f32.mrb[0].mxu0
    %v5803 = vadd.f32 %v5280, %v5802
    %5804 = vmatprep.mubr.bf16.mxu0 %v1537
    %5805 = vmatmul.mubr.bf16.gmra.mrb[0].mxu0 %v1536
    %v5806 = vpop.f32.mrb[0].mxu0
    %v5807 = vadd.f32 %v5284, %v5806
    %v5808 = vpop.f32.mrb[0].mxu0
    %v5809 = vadd.f32 %v5286, %v5808
    %v5810 = vpop.f32.mrb[0].mxu0
    %v5811 = vadd.f32 %v5288, %v5810
    %v5812 = vpop.f32.mrb[0].mxu0
    %v5813 = vadd.f32 %v5290, %v5812
    %5814 = vdwg.mxu0
    %5815 = vmatprep.subr.bf16.mxu0 %v2743
    %5816 = vmatpush1.bf16.msra.mxu0 %v2742
    %5817 = vmatprep.subr.bf16.mxu0 %v2749
    %5818 = vmatpush1.bf16.msra.mxu0 %v2748
    %5819 = vmatprep.subr.bf16.mxu0 %v2755
    %5820 = vmatpush1.bf16.msra.mxu0 %v2754
    %5821 = vmatprep.subr.bf16.mxu0 %v2761
    %5822 = vmatpush1.bf16.msra.mxu0 %v2760
    %5823 = vmatprep.subr.bf16.mxu0 %v2767
    %5824 = vmatpush1.bf16.msra.mxu0 %v2766
    %5825 = vmatprep.subr.bf16.mxu0 %v2773
    %5826 = vmatpush1.bf16.msra.mxu0 %v2772
    %5827 = vmatprep.subr.bf16.mxu0 %v2779
    %5828 = vmatpush1.bf16.msra.mxu0 %v2778
    %5829 = vmatprep.subr.bf16.mxu0 %v2785
    %5830 = vmatpush1.bf16.msra.mxu0 %v2784
    %5831 = vmatprep.subr.bf16.mxu0 %v2791
    %5832 = vmatpush1.bf16.msra.mxu0 %v2790
    %5833 = vmatprep.subr.bf16.mxu0 %v2797
    %5834 = vmatpush1.bf16.msra.mxu0 %v2796
    %5835 = vmatprep.subr.bf16.mxu0 0
    %5836 = vmatpush1.bf16.msra.mxu0 0
    %5837 = vmatprep.subr.bf16.mxu0 0
    %5838 = vmatpush1.bf16.msra.mxu0 0
    %5839 = vmatprep.subr.bf16.mxu0 0
    %5840 = vmatpush1.bf16.msra.mxu0 0
    %5841 = vmatprep.subr.bf16.mxu0 0
    %5842 = vmatpush1.bf16.msra.mxu0 0
    %5843 = vmatprep.subr.bf16.mxu0 0
    %5844 = vmatpush1.bf16.msra.mxu0 0
    %5845 = vmatprep.subr.bf16.mxu0 0
    %5846 = vmatpush1.bf16.msra.mxu0 0
    %5847 = vmatprep.mubr.bf16.mxu0 %v3054
    %5848 = vmatmul.mubr.bf16.gmra.mrb[0].mxu0 %v1250
    %v5849 = vpop.f32.mrb[0].mxu0
    %v5850 = vadd.f32 %v5327, %v5849
    %v5851 = vpop.f32.mrb[0].mxu0
    %v5852 = vadd.f32 %v5329, %v5851
    %v5853 = vpop.f32.mrb[0].mxu0
    %v5854 = vadd.f32 %v5331, %v5853
    %v5855 = vpop.f32.mrb[0].mxu0
    %v5856 = vadd.f32 %v5333, %v5855
    %5857 = vmatprep.mubr.bf16.mxu0 %v3057
    %5858 = vmatmul.mubr.bf16.gmra.mrb[0].mxu0 %v1256
    %v5859 = vpop.f32.mrb[0].mxu0
    %v5860 = vadd.f32 %v5337, %v5859
    %v5861 = vpop.f32.mrb[0].mxu0
    %v5862 = vadd.f32 %v5339, %v5861
    %v5863 = vpop.f32.mrb[0].mxu0
    %v5864 = vadd.f32 %v5341, %v5863
    %v5865 = vpop.f32.mrb[0].mxu0
    %v5866 = vadd.f32 %v5343, %v5865
    %5867 = vmatprep.mubr.bf16.mxu0 %v3060
    %5868 = vmatmul.mubr.bf16.gmra.mrb[0].mxu0 %v1262
    %v5869 = vpop.f32.mrb[0].mxu0
    %v5870 = vadd.f32 %v5347, %v5869
    %v5871 = vpop.f32.mrb[0].mxu0
    %v5872 = vadd.f32 %v5349, %v5871
    %v5873 = vpop.f32.mrb[0].mxu0
    %v5874 = vadd.f32 %v5351, %v5873
    %v5875 = vpop.f32.mrb[0].mxu0
    %v5876 = vadd.f32 %v5353, %v5875
    %5877 = vmatprep.mubr.bf16.mxu0 %v3063
    %5878 = vmatmul.mubr.bf16.gmra.mrb[0].mxu0 %v1268
    %v5879 = vpop.f32.mrb[0].mxu0
    %v5880 = vadd.f32 %v5357, %v5879
    %v5881 = vpop.f32.mrb[0].mxu0
    %v5882 = vadd.f32 %v5359, %v5881
    %v5883 = vpop.f32.mrb[0].mxu0
    %v5884 = vadd.f32 %v5361, %v5883
    %v5885 = vpop.f32.mrb[0].mxu0
    %v5886 = vadd.f32 %v5363, %v5885
    %5887 = vmatprep.mubr.bf16.mxu0 %v3066
    %5888 = vmatmul.mubr.bf16.gmra.mrb[0].mxu0 %v1274
    %v5889 = vpop.f32.mrb[0].mxu0
    %v5890 = vadd.f32 %v5367, %v5889
    %v5891 = vpop.f32.mrb[0].mxu0
    %v5892 = vadd.f32 %v5369, %v5891
    %v5893 = vpop.f32.mrb[0].mxu0
    %v5894 = vadd.f32 %v5371, %v5893
    %v5895 = vpop.f32.mrb[0].mxu0
    %v5896 = vadd.f32 %v5373, %v5895
    %5897 = vmatprep.mubr.bf16.mxu0 %v3069
    %5898 = vmatmul.mubr.bf16.gmra.mrb[0].mxu0 %v1280
    %v5899 = vpop.f32.mrb[0].mxu0
    %v5900 = vadd.f32 %v5377, %v5899
    %v5901 = vpop.f32.mrb[0].mxu0
    %v5902 = vadd.f32 %v5379, %v5901
    %v5903 = vpop.f32.mrb[0].mxu0
    %v5904 = vadd.f32 %v5381, %v5903
    %v5905 = vpop.f32.mrb[0].mxu0
    %v5906 = vadd.f32 %v5383, %v5905
    %5907 = vmatprep.mubr.bf16.mxu0 %v3072
    %5908 = vmatmul.mubr.bf16.gmra.mrb[0].mxu0 %v1286
    %v5909 = vpop.f32.mrb[0].mxu0
    %v5910 = vadd.f32 %v5387, %v5909
    %v5911 = vpop.f32.mrb[0].mxu0
    %v5912 = vadd.f32 %v5389, %v5911
    %v5913 = vpop.f32.mrb[0].mxu0
    %v5914 = vadd.f32 %v5391, %v5913
    %v5915 = vpop.f32.mrb[0].mxu0
    %v5916 = vadd.f32 %v5393, %v5915
    %5917 = vmatprep.mubr.bf16.mxu0 %v3075
    %5918 = vmatmul.mubr.bf16.gmra.mrb[0].mxu0 %v1292
    %v5919 = vpop.f32.mrb[0].mxu0
    %v5920 = vadd.f32 %v5397, %v5919
    %v5921 = vpop.f32.mrb[0].mxu0
    %v5922 = vadd.f32 %v5399, %v5921
    %v5923 = vpop.f32.mrb[0].mxu0
    %v5924 = vadd.f32 %v5401, %v5923
    %v5925 = vpop.f32.mrb[0].mxu0
    %v5926 = vadd.f32 %v5403, %v5925
    %5927 = vmatprep.mubr.bf16.mxu0 %v3078
    %5928 = vmatmul.mubr.bf16.gmra.mrb[0].mxu0 %v1298
    %v5929 = vpop.f32.mrb[0].mxu0
    %v5930 = vadd.f32 %v5407, %v5929
    %v5931 = vpop.f32.mrb[0].mxu0
    %v5932 = vadd.f32 %v5409, %v5931
    %v5933 = vpop.f32.mrb[0].mxu0
    %v5934 = vadd.f32 %v5411, %v5933
    %v5935 = vpop.f32.mrb[0].mxu0
    %v5936 = vadd.f32 %v5413, %v5935
    %5937 = vmatprep.mubr.bf16.mxu0 %v3081
    %5938 = vmatmul.mubr.bf16.gmra.mrb[0].mxu0 %v1304
    %v5939 = vpop.f32.mrb[0].mxu0
    %v5940 = vadd.f32 %v5417, %v5939
    %v5941 = vpop.f32.mrb[0].mxu0
    %v5942 = vadd.f32 %v5419, %v5941
    %v5943 = vpop.f32.mrb[0].mxu0
    %v5944 = vadd.f32 %v5421, %v5943
    %v5945 = vpop.f32.mrb[0].mxu0
    %v5946 = vadd.f32 %v5423, %v5945
    %5947 = vmatprep.mubr.bf16.mxu0 %v3084
    %5948 = vmatmul.mubr.bf16.gmra.mrb[0].mxu0 %v1310
    %v5949 = vpop.f32.mrb[0].mxu0
    %v5950 = vadd.f32 %v5427, %v5949
    %v5951 = vpop.f32.mrb[0].mxu0
    %v5952 = vadd.f32 %v5429, %v5951
    %v5953 = vpop.f32.mrb[0].mxu0
    %v5954 = vadd.f32 %v5431, %v5953
    %v5955 = vpop.f32.mrb[0].mxu0
    %v5956 = vadd.f32 %v5433, %v5955
    %5957 = vmatprep.mubr.bf16.mxu0 %v3087
    %5958 = vmatmul.mubr.bf16.gmra.mrb[0].mxu0 %v1316
    %v5959 = vpop.f32.mrb[0].mxu0
    %v5960 = vadd.f32 %v5437, %v5959
    %v5961 = vpop.f32.mrb[0].mxu0
    %v5962 = vadd.f32 %v5439, %v5961
    %v5963 = vpop.f32.mrb[0].mxu0
    %v5964 = vadd.f32 %v5441, %v5963
    %v5965 = vpop.f32.mrb[0].mxu0
    %v5966 = vadd.f32 %v5443, %v5965
    %5967 = vmatprep.mubr.bf16.mxu0 %v3090
    %5968 = vmatmul.mubr.bf16.gmra.mrb[0].mxu0 %v1322
    %v5969 = vpop.f32.mrb[0].mxu0
    %v5970 = vadd.f32 %v5447, %v5969
    %v5971 = vpop.f32.mrb[0].mxu0
    %v5972 = vadd.f32 %v5449, %v5971
    %v5973 = vpop.f32.mrb[0].mxu0
    %v5974 = vadd.f32 %v5451, %v5973
    %v5975 = vpop.f32.mrb[0].mxu0
    %v5976 = vadd.f32 %v5453, %v5975
    %5977 = vmatprep.mubr.bf16.mxu0 %v3093
    %5978 = vmatmul.mubr.bf16.gmra.mrb[0].mxu0 %v1328
    %v5979 = vpop.f32.mrb[0].mxu0
    %v5980 = vadd.f32 %v5457, %v5979
    %v5981 = vpop.f32.mrb[0].mxu0
    %v5982 = vadd.f32 %v5459, %v5981
    %v5983 = vpop.f32.mrb[0].mxu0
    %v5984 = vadd.f32 %v5461, %v5983
    %v5985 = vpop.f32.mrb[0].mxu0
    %v5986 = vadd.f32 %v5463, %v5985
    %5987 = vmatprep.mubr.bf16.mxu0 %v3096
    %5988 = vmatmul.mubr.bf16.gmra.mrb[0].mxu0 %v1334
    %v5989 = vpop.f32.mrb[0].mxu0
    %v5990 = vadd.f32 %v5467, %v5989
    %v5991 = vpop.f32.mrb[0].mxu0
    %v5992 = vadd.f32 %v5469, %v5991
    %v5993 = vpop.f32.mrb[0].mxu0
    %v5994 = vadd.f32 %v5471, %v5993
    %v5995 = vpop.f32.mrb[0].mxu0
    %v5996 = vadd.f32 %v5473, %v5995
    %5997 = vmatprep.mubr.bf16.mxu0 %v3099
    %5998 = vmatmul.mubr.bf16.gmra.mrb[0].mxu0 %v1340
    %v5999 = vpop.f32.mrb[0].mxu0
    %v6000 = vadd.f32 %v5477, %v5999
    %v6001 = vpop.f32.mrb[0].mxu0
    %v6002 = vadd.f32 %v5479, %v6001
    %v6003 = vpop.f32.mrb[0].mxu0
    %v6004 = vadd.f32 %v5481, %v6003
    %v6005 = vpop.f32.mrb[0].mxu0
    %v6006 = vadd.f32 %v5483, %v6005
    %6007 = vmatprep.mubr.bf16.mxu0 %v3102
    %6008 = vmatmul.mubr.bf16.gmra.mrb[0].mxu0 %v1346
    %v6009 = vpop.f32.mrb[0].mxu0
    %v6010 = vadd.f32 %v5487, %v6009
    %v6011 = vpop.f32.mrb[0].mxu0
    %v6012 = vadd.f32 %v5489, %v6011
    %v6013 = vpop.f32.mrb[0].mxu0
    %v6014 = vadd.f32 %v5491, %v6013
    %v6015 = vpop.f32.mrb[0].mxu0
    %v6016 = vadd.f32 %v5493, %v6015
    %6017 = vmatprep.mubr.bf16.mxu0 %v3105
    %6018 = vmatmul.mubr.bf16.gmra.mrb[0].mxu0 %v1352
    %v6019 = vpop.f32.mrb[0].mxu0
    %v6020 = vadd.f32 %v5497, %v6019
    %v6021 = vpop.f32.mrb[0].mxu0
    %v6022 = vadd.f32 %v5499, %v6021
    %v6023 = vpop.f32.mrb[0].mxu0
    %v6024 = vadd.f32 %v5501, %v6023
    %v6025 = vpop.f32.mrb[0].mxu0
    %v6026 = vadd.f32 %v5503, %v6025
    %6027 = vmatprep.mubr.bf16.mxu0 %v3108
    %6028 = vmatmul.mubr.bf16.gmra.mrb[0].mxu0 %v1358
    %v6029 = vpop.f32.mrb[0].mxu0
    %v6030 = vadd.f32 %v5507, %v6029
    %v6031 = vpop.f32.mrb[0].mxu0
    %v6032 = vadd.f32 %v5509, %v6031
    %v6033 = vpop.f32.mrb[0].mxu0
    %v6034 = vadd.f32 %v5511, %v6033
    %v6035 = vpop.f32.mrb[0].mxu0
    %v6036 = vadd.f32 %v5513, %v6035
    %6037 = vmatprep.mubr.bf16.mxu0 %v3111
    %6038 = vmatmul.mubr.bf16.gmra.mrb[0].mxu0 %v1364
    %v6039 = vpop.f32.mrb[0].mxu0
    %v6040 = vadd.f32 %v5517, %v6039
    %v6041 = vpop.f32.mrb[0].mxu0
    %v6042 = vadd.f32 %v5519, %v6041
    %v6043 = vpop.f32.mrb[0].mxu0
    %v6044 = vadd.f32 %v5521, %v6043
    %v6045 = vpop.f32.mrb[0].mxu0
    %v6046 = vadd.f32 %v5523, %v6045
    %6047 = vmatprep.mubr.bf16.mxu0 %v3114
    %6048 = vmatmul.mubr.bf16.gmra.mrb[0].mxu0 %v1370
    %v6049 = vpop.f32.mrb[0].mxu0
    %v6050 = vadd.f32 %v5527, %v6049
    %v6051 = vpop.f32.mrb[0].mxu0
    %v6052 = vadd.f32 %v5529, %v6051
    %v6053 = vpop.f32.mrb[0].mxu0
    %v6054 = vadd.f32 %v5531, %v6053
    %v6055 = vpop.f32.mrb[0].mxu0
    %v6056 = vadd.f32 %v5533, %v6055
    %6057 = vmatprep.mubr.bf16.mxu0 %v3117
    %6058 = vmatmul.mubr.bf16.gmra.mrb[0].mxu0 %v1376
    %v6059 = vpop.f32.mrb[0].mxu0
    %v6060 = vadd.f32 %v5537, %v6059
    %v6061 = vpop.f32.mrb[0].mxu0
    %v6062 = vadd.f32 %v5539, %v6061
    %v6063 = vpop.f32.mrb[0].mxu0
    %v6064 = vadd.f32 %v5541, %v6063
    %v6065 = vpop.f32.mrb[0].mxu0
    %v6066 = vadd.f32 %v5543, %v6065
    %6067 = vmatprep.mubr.bf16.mxu0 %v3120
    %6068 = vmatmul.mubr.bf16.gmra.mrb[0].mxu0 %v1382
    %v6069 = vpop.f32.mrb[0].mxu0
    %v6070 = vadd.f32 %v5547, %v6069
    %v6071 = vpop.f32.mrb[0].mxu0
    %v6072 = vadd.f32 %v5549, %v6071
    %v6073 = vpop.f32.mrb[0].mxu0
    %v6074 = vadd.f32 %v5551, %v6073
    %v6075 = vpop.f32.mrb[0].mxu0
    %v6076 = vadd.f32 %v5553, %v6075
    %6077 = vmatprep.mubr.bf16.mxu0 %v3123
    %6078 = vmatmul.mubr.bf16.gmra.mrb[0].mxu0 %v1388
    %v6079 = vpop.f32.mrb[0].mxu0
    %v6080 = vadd.f32 %v5557, %v6079
    %v6081 = vpop.f32.mrb[0].mxu0
    %v6082 = vadd.f32 %v5559, %v6081
    %v6083 = vpop.f32.mrb[0].mxu0
    %v6084 = vadd.f32 %v5561, %v6083
    %v6085 = vpop.f32.mrb[0].mxu0
    %v6086 = vadd.f32 %v5563, %v6085
    %6087 = vmatprep.mubr.bf16.mxu0 %v3126
    %6088 = vmatmul.mubr.bf16.gmra.mrb[0].mxu0 %v1394
    %v6089 = vpop.f32.mrb[0].mxu0
    %v6090 = vadd.f32 %v5567, %v6089
    %v6091 = vpop.f32.mrb[0].mxu0
    %v6092 = vadd.f32 %v5569, %v6091
    %v6093 = vpop.f32.mrb[0].mxu0
    %v6094 = vadd.f32 %v5571, %v6093
    %v6095 = vpop.f32.mrb[0].mxu0
    %v6096 = vadd.f32 %v5573, %v6095
    %6097 = vmatprep.mubr.bf16.mxu0 %v3129
    %6098 = vmatmul.mubr.bf16.gmra.mrb[0].mxu0 %v1400
    %v6099 = vpop.f32.mrb[0].mxu0
    %v6100 = vadd.f32 %v5577, %v6099
    %v6101 = vpop.f32.mrb[0].mxu0
    %v6102 = vadd.f32 %v5579, %v6101
    %v6103 = vpop.f32.mrb[0].mxu0
    %v6104 = vadd.f32 %v5581, %v6103
    %v6105 = vpop.f32.mrb[0].mxu0
    %v6106 = vadd.f32 %v5583, %v6105
    %6107 = vmatprep.mubr.bf16.mxu0 %v3132
    %6108 = vmatmul.mubr.bf16.gmra.mrb[0].mxu0 %v1406
    %v6109 = vpop.f32.mrb[0].mxu0
    %v6110 = vadd.f32 %v5587, %v6109
    %v6111 = vpop.f32.mrb[0].mxu0
    %v6112 = vadd.f32 %v5589, %v6111
    %v6113 = vpop.f32.mrb[0].mxu0
    %v6114 = vadd.f32 %v5591, %v6113
    %v6115 = vpop.f32.mrb[0].mxu0
    %v6116 = vadd.f32 %v5593, %v6115
    %6117 = vmatprep.mubr.bf16.mxu0 %v3135
    %6118 = vmatmul.mubr.bf16.gmra.mrb[0].mxu0 %v1412
    %v6119 = vpop.f32.mrb[0].mxu0
    %v6120 = vadd.f32 %v5597, %v6119
    %v6121 = vpop.f32.mrb[0].mxu0
    %v6122 = vadd.f32 %v5599, %v6121
    %v6123 = vpop.f32.mrb[0].mxu0
    %v6124 = vadd.f32 %v5601, %v6123
    %v6125 = vpop.f32.mrb[0].mxu0
    %v6126 = vadd.f32 %v5603, %v6125
    %6127 = vmatprep.mubr.bf16.mxu0 %v3138
    %6128 = vmatmul.mubr.bf16.gmra.mrb[0].mxu0 %v1418
    %v6129 = vpop.f32.mrb[0].mxu0
    %v6130 = vadd.f32 %v5607, %v6129
    %v6131 = vpop.f32.mrb[0].mxu0
    %v6132 = vadd.f32 %v5609, %v6131
    %v6133 = vpop.f32.mrb[0].mxu0
    %v6134 = vadd.f32 %v5611, %v6133
    %v6135 = vpop.f32.mrb[0].mxu0
    %v6136 = vadd.f32 %v5613, %v6135
    %6137 = vmatprep.mubr.bf16.mxu0 %v3141
    %6138 = vmatmul.mubr.bf16.gmra.mrb[0].mxu0 %v1424
    %v6139 = vpop.f32.mrb[0].mxu0
    %v6140 = vadd.f32 %v5617, %v6139
    %v6141 = vpop.f32.mrb[0].mxu0
    %v6142 = vadd.f32 %v5619, %v6141
    %v6143 = vpop.f32.mrb[0].mxu0
    %v6144 = vadd.f32 %v5621, %v6143
    %v6145 = vpop.f32.mrb[0].mxu0
    %v6146 = vadd.f32 %v5623, %v6145
    %6147 = vmatprep.mubr.bf16.mxu0 %v3144
    %6148 = vmatmul.mubr.bf16.gmra.mrb[0].mxu0 %v1430
    %v6149 = vpop.f32.mrb[0].mxu0
    %v6150 = vadd.f32 %v5627, %v6149
    %v6151 = vpop.f32.mrb[0].mxu0
    %v6152 = vadd.f32 %v5629, %v6151
    %v6153 = vpop.f32.mrb[0].mxu0
    %v6154 = vadd.f32 %v5631, %v6153
    %v6155 = vpop.f32.mrb[0].mxu0
    %v6156 = vadd.f32 %v5633, %v6155
    %6157 = vmatprep.mubr.bf16.mxu0 %v3147
    %6158 = vmatmul.mubr.bf16.gmra.mrb[0].mxu0 %v1436
    %v6159 = vpop.f32.mrb[0].mxu0
    %v6160 = vadd.f32 %v5637, %v6159
    %v6161 = vpop.f32.mrb[0].mxu0
    %v6162 = vadd.f32 %v5639, %v6161
    %v6163 = vpop.f32.mrb[0].mxu0
    %v6164 = vadd.f32 %v5641, %v6163
    %v6165 = vpop.f32.mrb[0].mxu0
    %v6166 = vadd.f32 %v5643, %v6165
    %6167 = vmatprep.mubr.bf16.mxu0 %v3150
    %6168 = vmatmul.mubr.bf16.gmra.mrb[0].mxu0 %v1442
    %v6169 = vpop.f32.mrb[0].mxu0
    %v6170 = vadd.f32 %v5647, %v6169
    %v6171 = vpop.f32.mrb[0].mxu0
    %v6172 = vadd.f32 %v5649, %v6171
    %v6173 = vpop.f32.mrb[0].mxu0
    %v6174 = vadd.f32 %v5651, %v6173
    %v6175 = vpop.f32.mrb[0].mxu0
    %v6176 = vadd.f32 %v5653, %v6175
    %6177 = vmatprep.mubr.bf16.mxu0 %v3153
    %6178 = vmatmul.mubr.bf16.gmra.mrb[0].mxu0 %v1448
    %v6179 = vpop.f32.mrb[0].mxu0
    %v6180 = vadd.f32 %v5657, %v6179
    %v6181 = vpop.f32.mrb[0].mxu0
    %v6182 = vadd.f32 %v5659, %v6181
    %v6183 = vpop.f32.mrb[0].mxu0
    %v6184 = vadd.f32 %v5661, %v6183
    %v6185 = vpop.f32.mrb[0].mxu0
    %v6186 = vadd.f32 %v5663, %v6185
    %6187 = vmatprep.mubr.bf16.mxu0 %v3156
    %6188 = vmatmul.mubr.bf16.gmra.mrb[0].mxu0 %v1454
    %v6189 = vpop.f32.mrb[0].mxu0
    %v6190 = vadd.f32 %v5667, %v6189
    %v6191 = vpop.f32.mrb[0].mxu0
    %v6192 = vadd.f32 %v5669, %v6191
    %v6193 = vpop.f32.mrb[0].mxu0
    %v6194 = vadd.f32 %v5671, %v6193
    %v6195 = vpop.f32.mrb[0].mxu0
    %v6196 = vadd.f32 %v5673, %v6195
    %6197 = vmatprep.mubr.bf16.mxu0 %v3159
    %6198 = vmatmul.mubr.bf16.gmra.mrb[0].mxu0 %v1460
    %v6199 = vpop.f32.mrb[0].mxu0
    %v6200 = vadd.f32 %v5677, %v6199
    %v6201 = vpop.f32.mrb[0].mxu0
    %v6202 = vadd.f32 %v5679, %v6201
    %v6203 = vpop.f32.mrb[0].mxu0
    %v6204 = vadd.f32 %v5681, %v6203
    %v6205 = vpop.f32.mrb[0].mxu0
    %v6206 = vadd.f32 %v5683, %v6205
    %6207 = vmatprep.mubr.bf16.mxu0 %v3162
    %6208 = vmatmul.mubr.bf16.gmra.mrb[0].mxu0 %v1466
    %v6209 = vpop.f32.mrb[0].mxu0
    %v6210 = vadd.f32 %v5687, %v6209
    %v6211 = vpop.f32.mrb[0].mxu0
    %v6212 = vadd.f32 %v5689, %v6211
    %v6213 = vpop.f32.mrb[0].mxu0
    %v6214 = vadd.f32 %v5691, %v6213
    %v6215 = vpop.f32.mrb[0].mxu0
    %v6216 = vadd.f32 %v5693, %v6215
    %6217 = vmatprep.mubr.bf16.mxu0 %v3165
    %6218 = vmatmul.mubr.bf16.gmra.mrb[0].mxu0 %v1472
    %v6219 = vpop.f32.mrb[0].mxu0
    %v6220 = vadd.f32 %v5697, %v6219
    %v6221 = vpop.f32.mrb[0].mxu0
    %v6222 = vadd.f32 %v5699, %v6221
    %v6223 = vpop.f32.mrb[0].mxu0
    %v6224 = vadd.f32 %v5701, %v6223
    %v6225 = vpop.f32.mrb[0].mxu0
    %v6226 = vadd.f32 %v5703, %v6225
    %6227 = vmatprep.mubr.bf16.mxu0 %v3168
    %6228 = vmatmul.mubr.bf16.gmra.mrb[0].mxu0 %v1478
    %v6229 = vpop.f32.mrb[0].mxu0
    %v6230 = vadd.f32 %v5707, %v6229
    %v6231 = vpop.f32.mrb[0].mxu0
    %v6232 = vadd.f32 %v5709, %v6231
    %v6233 = vpop.f32.mrb[0].mxu0
    %v6234 = vadd.f32 %v5711, %v6233
    %v6235 = vpop.f32.mrb[0].mxu0
    %v6236 = vadd.f32 %v5713, %v6235
    %6237 = vmatprep.mubr.bf16.mxu0 %v3171
    %6238 = vmatmul.mubr.bf16.gmra.mrb[0].mxu0 %v1484
    %v6239 = vpop.f32.mrb[0].mxu0
    %v6240 = vadd.f32 %v5717, %v6239
    %v6241 = vpop.f32.mrb[0].mxu0
    %v6242 = vadd.f32 %v5719, %v6241
    %v6243 = vpop.f32.mrb[0].mxu0
    %v6244 = vadd.f32 %v5721, %v6243
    %v6245 = vpop.f32.mrb[0].mxu0
    %v6246 = vadd.f32 %v5723, %v6245
    %6247 = vmatprep.mubr.bf16.mxu0 %v3174
    %6248 = vmatmul.mubr.bf16.gmra.mrb[0].mxu0 %v1490
    %v6249 = vpop.f32.mrb[0].mxu0
    %v6250 = vadd.f32 %v5727, %v6249
    %v6251 = vpop.f32.mrb[0].mxu0
    %v6252 = vadd.f32 %v5729, %v6251
    %v6253 = vpop.f32.mrb[0].mxu0
    %v6254 = vadd.f32 %v5731, %v6253
    %v6255 = vpop.f32.mrb[0].mxu0
    %v6256 = vadd.f32 %v5733, %v6255
    %6257 = vmatprep.mubr.bf16.mxu0 %v3177
    %6258 = vmatmul.mubr.bf16.gmra.mrb[0].mxu0 %v1496
    %v6259 = vpop.f32.mrb[0].mxu0
    %v6260 = vadd.f32 %v5737, %v6259
    %v6261 = vpop.f32.mrb[0].mxu0
    %v6262 = vadd.f32 %v5739, %v6261
    %v6263 = vpop.f32.mrb[0].mxu0
    %v6264 = vadd.f32 %v5741, %v6263
    %v6265 = vpop.f32.mrb[0].mxu0
    %v6266 = vadd.f32 %v5743, %v6265
    %6267 = vmatprep.mubr.bf16.mxu0 %v3180
    %6268 = vmatmul.mubr.bf16.gmra.mrb[0].mxu0 %v1502
    %v6269 = vpop.f32.mrb[0].mxu0
    %v6270 = vadd.f32 %v5747, %v6269
    %v6271 = vpop.f32.mrb[0].mxu0
    %v6272 = vadd.f32 %v5749, %v6271
    %v6273 = vpop.f32.mrb[0].mxu0
    %v6274 = vadd.f32 %v5751, %v6273
    %v6275 = vpop.f32.mrb[0].mxu0
    %v6276 = vadd.f32 %v5753, %v6275
    %6277 = vmatprep.mubr.bf16.mxu0 %v3183
    %6278 = vmatmul.mubr.bf16.gmra.mrb[0].mxu0 %v1508
    %v6279 = vpop.f32.mrb[0].mxu0
    %v6280 = vadd.f32 %v5757, %v6279
    %v6281 = vpop.f32.mrb[0].mxu0
    %v6282 = vadd.f32 %v5759, %v6281
    %v6283 = vpop.f32.mrb[0].mxu0
    %v6284 = vadd.f32 %v5761, %v6283
    %v6285 = vpop.f32.mrb[0].mxu0
    %v6286 = vadd.f32 %v5763, %v6285
    %6287 = vmatprep.mubr.bf16.mxu0 %v3186
    %6288 = vmatmul.mubr.bf16.gmra.mrb[0].mxu0 %v1514
    %v6289 = vpop.f32.mrb[0].mxu0
    %v6290 = vadd.f32 %v5767, %v6289
    %v6291 = vpop.f32.mrb[0].mxu0
    %v6292 = vadd.f32 %v5769, %v6291
    %v6293 = vpop.f32.mrb[0].mxu0
    %v6294 = vadd.f32 %v5771, %v6293
    %v6295 = vpop.f32.mrb[0].mxu0
    %v6296 = vadd.f32 %v5773, %v6295
    %6297 = vmatprep.mubr.bf16.mxu0 %v3189
    %6298 = vmatmul.mubr.bf16.gmra.mrb[0].mxu0 %v1520
    %v6299 = vpop.f32.mrb[0].mxu0
    %v6300 = vadd.f32 %v5777, %v6299
    %v6301 = vpop.f32.mrb[0].mxu0
    %v6302 = vadd.f32 %v5779, %v6301
    %v6303 = vpop.f32.mrb[0].mxu0
    %v6304 = vadd.f32 %v5781, %v6303
    %v6305 = vpop.f32.mrb[0].mxu0
    %v6306 = vadd.f32 %v5783, %v6305
    %6307 = vmatprep.mubr.bf16.mxu0 %v3192
    %6308 = vmatmul.mubr.bf16.gmra.mrb[0].mxu0 %v1526
    %v6309 = vpop.f32.mrb[0].mxu0
    %v6310 = vadd.f32 %v5787, %v6309
    %v6311 = vpop.f32.mrb[0].mxu0
    %v6312 = vadd.f32 %v5789, %v6311
    %v6313 = vpop.f32.mrb[0].mxu0
    %v6314 = vadd.f32 %v5791, %v6313
    %v6315 = vpop.f32.mrb[0].mxu0
    %v6316 = vadd.f32 %v5793, %v6315
    %6317 = vmatprep.mubr.bf16.mxu0 %v3195
    %6318 = vmatmul.mubr.bf16.gmra.mrb[0].mxu0 %v1532
    %v6319 = vpop.f32.mrb[0].mxu0
    %v6320 = vadd.f32 %v5797, %v6319
    %v6321 = vpop.f32.mrb[0].mxu0
    %v6322 = vadd.f32 %v5799, %v6321
    %v6323 = vpop.f32.mrb[0].mxu0
    %v6324 = vadd.f32 %v5801, %v6323
    %v6325 = vpop.f32.mrb[0].mxu0
    %v6326 = vadd.f32 %v5803, %v6325
    %6327 = vmatprep.mubr.bf16.mxu0 %v3198
    %6328 = vmatmul.mubr.bf16.gmra.mrb[0].mxu0 %v1538
    %v6329 = vpop.f32.mrb[0].mxu0
    %v6330 = vadd.f32 %v5807, %v6329
    %v6331 = vpop.f32.mrb[0].mxu0
    %v6332 = vadd.f32 %v5809, %v6331
    %v6333 = vpop.f32.mrb[0].mxu0
    %v6334 = vadd.f32 %v5811, %v6333
    %v6335 = vpop.f32.mrb[0].mxu0
    %v6336 = vadd.f32 %v5813, %v6335
    %6337 = vdwg.mxu0
    %6338 = vmatprep.subr.bf16.mxu0 %v2553
    %6339 = vmatpush1.bf16.msra.mxu0 %v2552
    %6340 = vmatprep.subr.bf16.mxu0 %v2559
    %6341 = vmatpush1.bf16.msra.mxu0 %v2558
    %6342 = vmatprep.subr.bf16.mxu0 %v2565
    %6343 = vmatpush1.bf16.msra.mxu0 %v2564
    %6344 = vmatprep.subr.bf16.mxu0 %v2571
    %6345 = vmatpush1.bf16.msra.mxu0 %v2570
    %6346 = vmatprep.subr.bf16.mxu0 %v2577
    %6347 = vmatpush1.bf16.msra.mxu0 %v2576
    %6348 = vmatprep.subr.bf16.mxu0 %v2583
    %6349 = vmatpush1.bf16.msra.mxu0 %v2582
    %6350 = vmatprep.subr.bf16.mxu0 %v2589
    %6351 = vmatpush1.bf16.msra.mxu0 %v2588
    %6352 = vmatprep.subr.bf16.mxu0 %v2595
    %6353 = vmatpush1.bf16.msra.mxu0 %v2594
    %6354 = vmatprep.subr.bf16.mxu0 %v2601
    %6355 = vmatpush1.bf16.msra.mxu0 %v2600
    %6356 = vmatprep.subr.bf16.mxu0 %v2607
    %6357 = vmatpush1.bf16.msra.mxu0 %v2606
    %6358 = vmatprep.subr.bf16.mxu0 %v2613
    %6359 = vmatpush1.bf16.msra.mxu0 %v2612
    %6360 = vmatprep.subr.bf16.mxu0 %v2619
    %6361 = vmatpush1.bf16.msra.mxu0 %v2618
    %6362 = vmatprep.subr.bf16.mxu0 %v2625
    %6363 = vmatpush1.bf16.msra.mxu0 %v2624
    %6364 = vmatprep.subr.bf16.mxu0 %v2631
    %6365 = vmatpush1.bf16.msra.mxu0 %v2630
    %6366 = vmatprep.subr.bf16.mxu0 %v2637
    %6367 = vmatpush1.bf16.msra.mxu0 %v2636
    %6368 = vmatprep.subr.bf16.mxu0 %v2643
    %6369 = vmatpush1.bf16.msra.mxu0 %v2642
    %6370 = vmatprep.mubr.bf16.mxu0 %v1247
    %6371 = vmatmul.mubr.bf16.gmra.mrb[0].mxu0 %v1246
    %v6372 = vpop.f32.mrb[0].mxu0
    %v6373 = vadd.f32 0.0, %v6372
    %v6374 = vpop.f32.mrb[0].mxu0
    %v6375 = vadd.f32 0.0, %v6374
    %v6376 = vpop.f32.mrb[0].mxu0
    %v6377 = vadd.f32 0.0, %v6376
    %v6378 = vpop.f32.mrb[0].mxu0
    %v6379 = vadd.f32 0.0, %v6378
    %6380 = vmatprep.mubr.bf16.mxu0 %v1253
    %6381 = vmatmul.mubr.bf16.gmra.mrb[0].mxu0 %v1252
    %v6382 = vpop.f32.mrb[0].mxu0
    %v6383 = vadd.f32 0.0, %v6382
    %v6384 = vpop.f32.mrb[0].mxu0
    %v6385 = vadd.f32 0.0, %v6384
    %v6386 = vpop.f32.mrb[0].mxu0
    %v6387 = vadd.f32 0.0, %v6386
    %v6388 = vpop.f32.mrb[0].mxu0
    %v6389 = vadd.f32 0.0, %v6388
    %6390 = vmatprep.mubr.bf16.mxu0 %v1259
    %6391 = vmatmul.mubr.bf16.gmra.mrb[0].mxu0 %v1258
    %v6392 = vpop.f32.mrb[0].mxu0
    %v6393 = vadd.f32 0.0, %v6392
    %v6394 = vpop.f32.mrb[0].mxu0
    %v6395 = vadd.f32 0.0, %v6394
    %v6396 = vpop.f32.mrb[0].mxu0
    %v6397 = vadd.f32 0.0, %v6396
    %v6398 = vpop.f32.mrb[0].mxu0
    %v6399 = vadd.f32 0.0, %v6398
    %6400 = vmatprep.mubr.bf16.mxu0 %v1265
    %6401 = vmatmul.mubr.bf16.gmra.mrb[0].mxu0 %v1264
    %v6402 = vpop.f32.mrb[0].mxu0
    %v6403 = vadd.f32 0.0, %v6402
    %v6404 = vpop.f32.mrb[0].mxu0
    %v6405 = vadd.f32 0.0, %v6404
    %v6406 = vpop.f32.mrb[0].mxu0
    %v6407 = vadd.f32 0.0, %v6406
    %v6408 = vpop.f32.mrb[0].mxu0
    %v6409 = vadd.f32 0.0, %v6408
    %6410 = vmatprep.mubr.bf16.mxu0 %v1271
    %6411 = vmatmul.mubr.bf16.gmra.mrb[0].mxu0 %v1270
    %v6412 = vpop.f32.mrb[0].mxu0
    %v6413 = vadd.f32 0.0, %v6412
    %v6414 = vpop.f32.mrb[0].mxu0
    %v6415 = vadd.f32 0.0, %v6414
    %v6416 = vpop.f32.mrb[0].mxu0
    %v6417 = vadd.f32 0.0, %v6416
    %v6418 = vpop.f32.mrb[0].mxu0
    %v6419 = vadd.f32 0.0, %v6418
    %6420 = vmatprep.mubr.bf16.mxu0 %v1277
    %6421 = vmatmul.mubr.bf16.gmra.mrb[0].mxu0 %v1276
    %v6422 = vpop.f32.mrb[0].mxu0
    %v6423 = vadd.f32 0.0, %v6422
    %v6424 = vpop.f32.mrb[0].mxu0
    %v6425 = vadd.f32 0.0, %v6424
    %v6426 = vpop.f32.mrb[0].mxu0
    %v6427 = vadd.f32 0.0, %v6426
    %v6428 = vpop.f32.mrb[0].mxu0
    %v6429 = vadd.f32 0.0, %v6428
    %6430 = vmatprep.mubr.bf16.mxu0 %v1283
    %6431 = vmatmul.mubr.bf16.gmra.mrb[0].mxu0 %v1282
    %v6432 = vpop.f32.mrb[0].mxu0
    %v6433 = vadd.f32 0.0, %v6432
    %v6434 = vpop.f32.mrb[0].mxu0
    %v6435 = vadd.f32 0.0, %v6434
    %v6436 = vpop.f32.mrb[0].mxu0
    %v6437 = vadd.f32 0.0, %v6436
    %v6438 = vpop.f32.mrb[0].mxu0
    %v6439 = vadd.f32 0.0, %v6438
    %6440 = vmatprep.mubr.bf16.mxu0 %v1289
    %6441 = vmatmul.mubr.bf16.gmra.mrb[0].mxu0 %v1288
    %v6442 = vpop.f32.mrb[0].mxu0
    %v6443 = vadd.f32 0.0, %v6442
    %v6444 = vpop.f32.mrb[0].mxu0
    %v6445 = vadd.f32 0.0, %v6444
    %v6446 = vpop.f32.mrb[0].mxu0
    %v6447 = vadd.f32 0.0, %v6446
    %v6448 = vpop.f32.mrb[0].mxu0
    %v6449 = vadd.f32 0.0, %v6448
    %6450 = vmatprep.mubr.bf16.mxu0 %v1295
    %6451 = vmatmul.mubr.bf16.gmra.mrb[0].mxu0 %v1294
    %v6452 = vpop.f32.mrb[0].mxu0
    %v6453 = vadd.f32 0.0, %v6452
    %v6454 = vpop.f32.mrb[0].mxu0
    %v6455 = vadd.f32 0.0, %v6454
    %v6456 = vpop.f32.mrb[0].mxu0
    %v6457 = vadd.f32 0.0, %v6456
    %v6458 = vpop.f32.mrb[0].mxu0
    %v6459 = vadd.f32 0.0, %v6458
    %6460 = vmatprep.mubr.bf16.mxu0 %v1301
    %6461 = vmatmul.mubr.bf16.gmra.mrb[0].mxu0 %v1300
    %v6462 = vpop.f32.mrb[0].mxu0
    %v6463 = vadd.f32 0.0, %v6462
    %v6464 = vpop.f32.mrb[0].mxu0
    %v6465 = vadd.f32 0.0, %v6464
    %v6466 = vpop.f32.mrb[0].mxu0
    %v6467 = vadd.f32 0.0, %v6466
    %v6468 = vpop.f32.mrb[0].mxu0
    %v6469 = vadd.f32 0.0, %v6468
    %6470 = vmatprep.mubr.bf16.mxu0 %v1307
    %6471 = vmatmul.mubr.bf16.gmra.mrb[0].mxu0 %v1306
    %v6472 = vpop.f32.mrb[0].mxu0
    %v6473 = vadd.f32 0.0, %v6472
    %v6474 = vpop.f32.mrb[0].mxu0
    %v6475 = vadd.f32 0.0, %v6474
    %v6476 = vpop.f32.mrb[0].mxu0
    %v6477 = vadd.f32 0.0, %v6476
    %v6478 = vpop.f32.mrb[0].mxu0
    %v6479 = vadd.f32 0.0, %v6478
    %6480 = vmatprep.mubr.bf16.mxu0 %v1313
    %6481 = vmatmul.mubr.bf16.gmra.mrb[0].mxu0 %v1312
    %v6482 = vpop.f32.mrb[0].mxu0
    %v6483 = vadd.f32 0.0, %v6482
    %v6484 = vpop.f32.mrb[0].mxu0
    %v6485 = vadd.f32 0.0, %v6484
    %v6486 = vpop.f32.mrb[0].mxu0
    %v6487 = vadd.f32 0.0, %v6486
    %v6488 = vpop.f32.mrb[0].mxu0
    %v6489 = vadd.f32 0.0, %v6488
    %6490 = vmatprep.mubr.bf16.mxu0 %v1319
    %6491 = vmatmul.mubr.bf16.gmra.mrb[0].mxu0 %v1318
    %v6492 = vpop.f32.mrb[0].mxu0
    %v6493 = vadd.f32 0.0, %v6492
    %v6494 = vpop.f32.mrb[0].mxu0
    %v6495 = vadd.f32 0.0, %v6494
    %v6496 = vpop.f32.mrb[0].mxu0
    %v6497 = vadd.f32 0.0, %v6496
    %v6498 = vpop.f32.mrb[0].mxu0
    %v6499 = vadd.f32 0.0, %v6498
    %6500 = vmatprep.mubr.bf16.mxu0 %v1325
    %6501 = vmatmul.mubr.bf16.gmra.mrb[0].mxu0 %v1324
    %v6502 = vpop.f32.mrb[0].mxu0
    %v6503 = vadd.f32 0.0, %v6502
    %v6504 = vpop.f32.mrb[0].mxu0
    %v6505 = vadd.f32 0.0, %v6504
    %v6506 = vpop.f32.mrb[0].mxu0
    %v6507 = vadd.f32 0.0, %v6506
    %v6508 = vpop.f32.mrb[0].mxu0
    %v6509 = vadd.f32 0.0, %v6508
    %6510 = vmatprep.mubr.bf16.mxu0 %v1331
    %6511 = vmatmul.mubr.bf16.gmra.mrb[0].mxu0 %v1330
    %v6512 = vpop.f32.mrb[0].mxu0
    %v6513 = vadd.f32 0.0, %v6512
    %v6514 = vpop.f32.mrb[0].mxu0
    %v6515 = vadd.f32 0.0, %v6514
    %v6516 = vpop.f32.mrb[0].mxu0
    %v6517 = vadd.f32 0.0, %v6516
    %v6518 = vpop.f32.mrb[0].mxu0
    %v6519 = vadd.f32 0.0, %v6518
    %6520 = vmatprep.mubr.bf16.mxu0 %v1337
    %6521 = vmatmul.mubr.bf16.gmra.mrb[0].mxu0 %v1336
    %v6522 = vpop.f32.mrb[0].mxu0
    %v6523 = vadd.f32 0.0, %v6522
    %v6524 = vpop.f32.mrb[0].mxu0
    %v6525 = vadd.f32 0.0, %v6524
    %v6526 = vpop.f32.mrb[0].mxu0
    %v6527 = vadd.f32 0.0, %v6526
    %v6528 = vpop.f32.mrb[0].mxu0
    %v6529 = vadd.f32 0.0, %v6528
    %6530 = vmatprep.mubr.bf16.mxu0 %v1343
    %6531 = vmatmul.mubr.bf16.gmra.mrb[0].mxu0 %v1342
    %v6532 = vpop.f32.mrb[0].mxu0
    %v6533 = vadd.f32 0.0, %v6532
    %v6534 = vpop.f32.mrb[0].mxu0
    %v6535 = vadd.f32 0.0, %v6534
    %v6536 = vpop.f32.mrb[0].mxu0
    %v6537 = vadd.f32 0.0, %v6536
    %v6538 = vpop.f32.mrb[0].mxu0
    %v6539 = vadd.f32 0.0, %v6538
    %6540 = vmatprep.mubr.bf16.mxu0 %v1349
    %6541 = vmatmul.mubr.bf16.gmra.mrb[0].mxu0 %v1348
    %v6542 = vpop.f32.mrb[0].mxu0
    %v6543 = vadd.f32 0.0, %v6542
    %v6544 = vpop.f32.mrb[0].mxu0
    %v6545 = vadd.f32 0.0, %v6544
    %v6546 = vpop.f32.mrb[0].mxu0
    %v6547 = vadd.f32 0.0, %v6546
    %v6548 = vpop.f32.mrb[0].mxu0
    %v6549 = vadd.f32 0.0, %v6548
    %6550 = vmatprep.mubr.bf16.mxu0 %v1355
    %6551 = vmatmul.mubr.bf16.gmra.mrb[0].mxu0 %v1354
    %v6552 = vpop.f32.mrb[0].mxu0
    %v6553 = vadd.f32 0.0, %v6552
    %v6554 = vpop.f32.mrb[0].mxu0
    %v6555 = vadd.f32 0.0, %v6554
    %v6556 = vpop.f32.mrb[0].mxu0
    %v6557 = vadd.f32 0.0, %v6556
    %v6558 = vpop.f32.mrb[0].mxu0
    %v6559 = vadd.f32 0.0, %v6558
    %6560 = vmatprep.mubr.bf16.mxu0 %v1361
    %6561 = vmatmul.mubr.bf16.gmra.mrb[0].mxu0 %v1360
    %v6562 = vpop.f32.mrb[0].mxu0
    %v6563 = vadd.f32 0.0, %v6562
    %v6564 = vpop.f32.mrb[0].mxu0
    %v6565 = vadd.f32 0.0, %v6564
    %v6566 = vpop.f32.mrb[0].mxu0
    %v6567 = vadd.f32 0.0, %v6566
    %v6568 = vpop.f32.mrb[0].mxu0
    %v6569 = vadd.f32 0.0, %v6568
    %6570 = vmatprep.mubr.bf16.mxu0 %v1367
    %6571 = vmatmul.mubr.bf16.gmra.mrb[0].mxu0 %v1366
    %v6572 = vpop.f32.mrb[0].mxu0
    %v6573 = vadd.f32 0.0, %v6572
    %v6574 = vpop.f32.mrb[0].mxu0
    %v6575 = vadd.f32 0.0, %v6574
    %v6576 = vpop.f32.mrb[0].mxu0
    %v6577 = vadd.f32 0.0, %v6576
    %v6578 = vpop.f32.mrb[0].mxu0
    %v6579 = vadd.f32 0.0, %v6578
    %6580 = vmatprep.mubr.bf16.mxu0 %v1373
    %6581 = vmatmul.mubr.bf16.gmra.mrb[0].mxu0 %v1372
    %v6582 = vpop.f32.mrb[0].mxu0
    %v6583 = vadd.f32 0.0, %v6582
    %v6584 = vpop.f32.mrb[0].mxu0
    %v6585 = vadd.f32 0.0, %v6584
    %v6586 = vpop.f32.mrb[0].mxu0
    %v6587 = vadd.f32 0.0, %v6586
    %v6588 = vpop.f32.mrb[0].mxu0
    %v6589 = vadd.f32 0.0, %v6588
    %6590 = vmatprep.mubr.bf16.mxu0 %v1379
    %6591 = vmatmul.mubr.bf16.gmra.mrb[0].mxu0 %v1378
    %v6592 = vpop.f32.mrb[0].mxu0
    %v6593 = vadd.f32 0.0, %v6592
    %v6594 = vpop.f32.mrb[0].mxu0
    %v6595 = vadd.f32 0.0, %v6594
    %v6596 = vpop.f32.mrb[0].mxu0
    %v6597 = vadd.f32 0.0, %v6596
    %v6598 = vpop.f32.mrb[0].mxu0
    %v6599 = vadd.f32 0.0, %v6598
    %6600 = vmatprep.mubr.bf16.mxu0 %v1385
    %6601 = vmatmul.mubr.bf16.gmra.mrb[0].mxu0 %v1384
    %v6602 = vpop.f32.mrb[0].mxu0
    %v6603 = vadd.f32 0.0, %v6602
    %v6604 = vpop.f32.mrb[0].mxu0
    %v6605 = vadd.f32 0.0, %v6604
    %v6606 = vpop.f32.mrb[0].mxu0
    %v6607 = vadd.f32 0.0, %v6606
    %v6608 = vpop.f32.mrb[0].mxu0
    %v6609 = vadd.f32 0.0, %v6608
    %6610 = vmatprep.mubr.bf16.mxu0 %v1391
    %6611 = vmatmul.mubr.bf16.gmra.mrb[0].mxu0 %v1390
    %v6612 = vpop.f32.mrb[0].mxu0
    %v6613 = vadd.f32 0.0, %v6612
    %v6614 = vpop.f32.mrb[0].mxu0
    %v6615 = vadd.f32 0.0, %v6614
    %v6616 = vpop.f32.mrb[0].mxu0
    %v6617 = vadd.f32 0.0, %v6616
    %v6618 = vpop.f32.mrb[0].mxu0
    %v6619 = vadd.f32 0.0, %v6618
    %6620 = vmatprep.mubr.bf16.mxu0 %v1397
    %6621 = vmatmul.mubr.bf16.gmra.mrb[0].mxu0 %v1396
    %v6622 = vpop.f32.mrb[0].mxu0
    %v6623 = vadd.f32 0.0, %v6622
    %v6624 = vpop.f32.mrb[0].mxu0
    %v6625 = vadd.f32 0.0, %v6624
    %v6626 = vpop.f32.mrb[0].mxu0
    %v6627 = vadd.f32 0.0, %v6626
    %v6628 = vpop.f32.mrb[0].mxu0
    %v6629 = vadd.f32 0.0, %v6628
    %6630 = vmatprep.mubr.bf16.mxu0 %v1403
    %6631 = vmatmul.mubr.bf16.gmra.mrb[0].mxu0 %v1402
    %v6632 = vpop.f32.mrb[0].mxu0
    %v6633 = vadd.f32 0.0, %v6632
    %v6634 = vpop.f32.mrb[0].mxu0
    %v6635 = vadd.f32 0.0, %v6634
    %v6636 = vpop.f32.mrb[0].mxu0
    %v6637 = vadd.f32 0.0, %v6636
    %v6638 = vpop.f32.mrb[0].mxu0
    %v6639 = vadd.f32 0.0, %v6638
    %6640 = vmatprep.mubr.bf16.mxu0 %v1409
    %6641 = vmatmul.mubr.bf16.gmra.mrb[0].mxu0 %v1408
    %v6642 = vpop.f32.mrb[0].mxu0
    %v6643 = vadd.f32 0.0, %v6642
    %v6644 = vpop.f32.mrb[0].mxu0
    %v6645 = vadd.f32 0.0, %v6644
    %v6646 = vpop.f32.mrb[0].mxu0
    %v6647 = vadd.f32 0.0, %v6646
    %v6648 = vpop.f32.mrb[0].mxu0
    %v6649 = vadd.f32 0.0, %v6648
    %6650 = vmatprep.mubr.bf16.mxu0 %v1415
    %6651 = vmatmul.mubr.bf16.gmra.mrb[0].mxu0 %v1414
    %v6652 = vpop.f32.mrb[0].mxu0
    %v6653 = vadd.f32 0.0, %v6652
    %v6654 = vpop.f32.mrb[0].mxu0
    %v6655 = vadd.f32 0.0, %v6654
    %v6656 = vpop.f32.mrb[0].mxu0
    %v6657 = vadd.f32 0.0, %v6656
    %v6658 = vpop.f32.mrb[0].mxu0
    %v6659 = vadd.f32 0.0, %v6658
    %6660 = vmatprep.mubr.bf16.mxu0 %v1421
    %6661 = vmatmul.mubr.bf16.gmra.mrb[0].mxu0 %v1420
    %v6662 = vpop.f32.mrb[0].mxu0
    %v6663 = vadd.f32 0.0, %v6662
    %v6664 = vpop.f32.mrb[0].mxu0
    %v6665 = vadd.f32 0.0, %v6664
    %v6666 = vpop.f32.mrb[0].mxu0
    %v6667 = vadd.f32 0.0, %v6666
    %v6668 = vpop.f32.mrb[0].mxu0
    %v6669 = vadd.f32 0.0, %v6668
    %6670 = vmatprep.mubr.bf16.mxu0 %v1427
    %6671 = vmatmul.mubr.bf16.gmra.mrb[0].mxu0 %v1426
    %v6672 = vpop.f32.mrb[0].mxu0
    %v6673 = vadd.f32 0.0, %v6672
    %v6674 = vpop.f32.mrb[0].mxu0
    %v6675 = vadd.f32 0.0, %v6674
    %v6676 = vpop.f32.mrb[0].mxu0
    %v6677 = vadd.f32 0.0, %v6676
    %v6678 = vpop.f32.mrb[0].mxu0
    %v6679 = vadd.f32 0.0, %v6678
    %6680 = vmatprep.mubr.bf16.mxu0 %v1433
    %6681 = vmatmul.mubr.bf16.gmra.mrb[0].mxu0 %v1432
    %v6682 = vpop.f32.mrb[0].mxu0
    %v6683 = vadd.f32 0.0, %v6682
    %v6684 = vpop.f32.mrb[0].mxu0
    %v6685 = vadd.f32 0.0, %v6684
    %v6686 = vpop.f32.mrb[0].mxu0
    %v6687 = vadd.f32 0.0, %v6686
    %v6688 = vpop.f32.mrb[0].mxu0
    %v6689 = vadd.f32 0.0, %v6688
    %6690 = vmatprep.mubr.bf16.mxu0 %v1439
    %6691 = vmatmul.mubr.bf16.gmra.mrb[0].mxu0 %v1438
    %v6692 = vpop.f32.mrb[0].mxu0
    %v6693 = vadd.f32 0.0, %v6692
    %v6694 = vpop.f32.mrb[0].mxu0
    %v6695 = vadd.f32 0.0, %v6694
    %v6696 = vpop.f32.mrb[0].mxu0
    %v6697 = vadd.f32 0.0, %v6696
    %v6698 = vpop.f32.mrb[0].mxu0
    %v6699 = vadd.f32 0.0, %v6698
    %6700 = vmatprep.mubr.bf16.mxu0 %v1445
    %6701 = vmatmul.mubr.bf16.gmra.mrb[0].mxu0 %v1444
    %v6702 = vpop.f32.mrb[0].mxu0
    %v6703 = vadd.f32 0.0, %v6702
    %v6704 = vpop.f32.mrb[0].mxu0
    %v6705 = vadd.f32 0.0, %v6704
    %v6706 = vpop.f32.mrb[0].mxu0
    %v6707 = vadd.f32 0.0, %v6706
    %v6708 = vpop.f32.mrb[0].mxu0
    %v6709 = vadd.f32 0.0, %v6708
    %6710 = vmatprep.mubr.bf16.mxu0 %v1451
    %6711 = vmatmul.mubr.bf16.gmra.mrb[0].mxu0 %v1450
    %v6712 = vpop.f32.mrb[0].mxu0
    %v6713 = vadd.f32 0.0, %v6712
    %v6714 = vpop.f32.mrb[0].mxu0
    %v6715 = vadd.f32 0.0, %v6714
    %v6716 = vpop.f32.mrb[0].mxu0
    %v6717 = vadd.f32 0.0, %v6716
    %v6718 = vpop.f32.mrb[0].mxu0
    %v6719 = vadd.f32 0.0, %v6718
    %6720 = vmatprep.mubr.bf16.mxu0 %v1457
    %6721 = vmatmul.mubr.bf16.gmra.mrb[0].mxu0 %v1456
    %v6722 = vpop.f32.mrb[0].mxu0
    %v6723 = vadd.f32 0.0, %v6722
    %v6724 = vpop.f32.mrb[0].mxu0
    %v6725 = vadd.f32 0.0, %v6724
    %v6726 = vpop.f32.mrb[0].mxu0
    %v6727 = vadd.f32 0.0, %v6726
    %v6728 = vpop.f32.mrb[0].mxu0
    %v6729 = vadd.f32 0.0, %v6728
    %6730 = vmatprep.mubr.bf16.mxu0 %v1463
    %6731 = vmatmul.mubr.bf16.gmra.mrb[0].mxu0 %v1462
    %v6732 = vpop.f32.mrb[0].mxu0
    %v6733 = vadd.f32 0.0, %v6732
    %v6734 = vpop.f32.mrb[0].mxu0
    %v6735 = vadd.f32 0.0, %v6734
    %v6736 = vpop.f32.mrb[0].mxu0
    %v6737 = vadd.f32 0.0, %v6736
    %v6738 = vpop.f32.mrb[0].mxu0
    %v6739 = vadd.f32 0.0, %v6738
    %6740 = vmatprep.mubr.bf16.mxu0 %v1469
    %6741 = vmatmul.mubr.bf16.gmra.mrb[0].mxu0 %v1468
    %v6742 = vpop.f32.mrb[0].mxu0
    %v6743 = vadd.f32 0.0, %v6742
    %v6744 = vpop.f32.mrb[0].mxu0
    %v6745 = vadd.f32 0.0, %v6744
    %v6746 = vpop.f32.mrb[0].mxu0
    %v6747 = vadd.f32 0.0, %v6746
    %v6748 = vpop.f32.mrb[0].mxu0
    %v6749 = vadd.f32 0.0, %v6748
    %6750 = vmatprep.mubr.bf16.mxu0 %v1475
    %6751 = vmatmul.mubr.bf16.gmra.mrb[0].mxu0 %v1474
    %v6752 = vpop.f32.mrb[0].mxu0
    %v6753 = vadd.f32 0.0, %v6752
    %v6754 = vpop.f32.mrb[0].mxu0
    %v6755 = vadd.f32 0.0, %v6754
    %v6756 = vpop.f32.mrb[0].mxu0
    %v6757 = vadd.f32 0.0, %v6756
    %v6758 = vpop.f32.mrb[0].mxu0
    %v6759 = vadd.f32 0.0, %v6758
    %6760 = vmatprep.mubr.bf16.mxu0 %v1481
    %6761 = vmatmul.mubr.bf16.gmra.mrb[0].mxu0 %v1480
    %v6762 = vpop.f32.mrb[0].mxu0
    %v6763 = vadd.f32 0.0, %v6762
    %v6764 = vpop.f32.mrb[0].mxu0
    %v6765 = vadd.f32 0.0, %v6764
    %v6766 = vpop.f32.mrb[0].mxu0
    %v6767 = vadd.f32 0.0, %v6766
    %v6768 = vpop.f32.mrb[0].mxu0
    %v6769 = vadd.f32 0.0, %v6768
    %6770 = vmatprep.mubr.bf16.mxu0 %v1487
    %6771 = vmatmul.mubr.bf16.gmra.mrb[0].mxu0 %v1486
    %v6772 = vpop.f32.mrb[0].mxu0
    %v6773 = vadd.f32 0.0, %v6772
    %v6774 = vpop.f32.mrb[0].mxu0
    %v6775 = vadd.f32 0.0, %v6774
    %v6776 = vpop.f32.mrb[0].mxu0
    %v6777 = vadd.f32 0.0, %v6776
    %v6778 = vpop.f32.mrb[0].mxu0
    %v6779 = vadd.f32 0.0, %v6778
    %6780 = vmatprep.mubr.bf16.mxu0 %v1493
    %6781 = vmatmul.mubr.bf16.gmra.mrb[0].mxu0 %v1492
    %v6782 = vpop.f32.mrb[0].mxu0
    %v6783 = vadd.f32 0.0, %v6782
    %v6784 = vpop.f32.mrb[0].mxu0
    %v6785 = vadd.f32 0.0, %v6784
    %v6786 = vpop.f32.mrb[0].mxu0
    %v6787 = vadd.f32 0.0, %v6786
    %v6788 = vpop.f32.mrb[0].mxu0
    %v6789 = vadd.f32 0.0, %v6788
    %6790 = vmatprep.mubr.bf16.mxu0 %v1499
    %6791 = vmatmul.mubr.bf16.gmra.mrb[0].mxu0 %v1498
    %v6792 = vpop.f32.mrb[0].mxu0
    %v6793 = vadd.f32 0.0, %v6792
    %v6794 = vpop.f32.mrb[0].mxu0
    %v6795 = vadd.f32 0.0, %v6794
    %v6796 = vpop.f32.mrb[0].mxu0
    %v6797 = vadd.f32 0.0, %v6796
    %v6798 = vpop.f32.mrb[0].mxu0
    %v6799 = vadd.f32 0.0, %v6798
    %6800 = vmatprep.mubr.bf16.mxu0 %v1505
    %6801 = vmatmul.mubr.bf16.gmra.mrb[0].mxu0 %v1504
    %v6802 = vpop.f32.mrb[0].mxu0
    %v6803 = vadd.f32 0.0, %v6802
    %v6804 = vpop.f32.mrb[0].mxu0
    %v6805 = vadd.f32 0.0, %v6804
    %v6806 = vpop.f32.mrb[0].mxu0
    %v6807 = vadd.f32 0.0, %v6806
    %v6808 = vpop.f32.mrb[0].mxu0
    %v6809 = vadd.f32 0.0, %v6808
    %6810 = vmatprep.mubr.bf16.mxu0 %v1511
    %6811 = vmatmul.mubr.bf16.gmra.mrb[0].mxu0 %v1510
    %v6812 = vpop.f32.mrb[0].mxu0
    %v6813 = vadd.f32 0.0, %v6812
    %v6814 = vpop.f32.mrb[0].mxu0
    %v6815 = vadd.f32 0.0, %v6814
    %v6816 = vpop.f32.mrb[0].mxu0
    %v6817 = vadd.f32 0.0, %v6816
    %v6818 = vpop.f32.mrb[0].mxu0
    %v6819 = vadd.f32 0.0, %v6818
    %6820 = vmatprep.mubr.bf16.mxu0 %v1517
    %6821 = vmatmul.mubr.bf16.gmra.mrb[0].mxu0 %v1516
    %v6822 = vpop.f32.mrb[0].mxu0
    %v6823 = vadd.f32 0.0, %v6822
    %v6824 = vpop.f32.mrb[0].mxu0
    %v6825 = vadd.f32 0.0, %v6824
    %v6826 = vpop.f32.mrb[0].mxu0
    %v6827 = vadd.f32 0.0, %v6826
    %v6828 = vpop.f32.mrb[0].mxu0
    %v6829 = vadd.f32 0.0, %v6828
    %6830 = vmatprep.mubr.bf16.mxu0 %v1523
    %6831 = vmatmul.mubr.bf16.gmra.mrb[0].mxu0 %v1522
    %v6832 = vpop.f32.mrb[0].mxu0
    %v6833 = vadd.f32 0.0, %v6832
    %v6834 = vpop.f32.mrb[0].mxu0
    %v6835 = vadd.f32 0.0, %v6834
    %v6836 = vpop.f32.mrb[0].mxu0
    %v6837 = vadd.f32 0.0, %v6836
    %v6838 = vpop.f32.mrb[0].mxu0
    %v6839 = vadd.f32 0.0, %v6838
    %6840 = vmatprep.mubr.bf16.mxu0 %v1529
    %6841 = vmatmul.mubr.bf16.gmra.mrb[0].mxu0 %v1528
    %v6842 = vpop.f32.mrb[0].mxu0
    %v6843 = vadd.f32 0.0, %v6842
    %v6844 = vpop.f32.mrb[0].mxu0
    %v6845 = vadd.f32 0.0, %v6844
    %v6846 = vpop.f32.mrb[0].mxu0
    %v6847 = vadd.f32 0.0, %v6846
    %v6848 = vpop.f32.mrb[0].mxu0
    %v6849 = vadd.f32 0.0, %v6848
    %6850 = vmatprep.mubr.bf16.mxu0 %v1535
    %6851 = vmatmul.mubr.bf16.gmra.mrb[0].mxu0 %v1534
    %v6852 = vpop.f32.mrb[0].mxu0
    %v6853 = vadd.f32 0.0, %v6852
    %v6854 = vpop.f32.mrb[0].mxu0
    %v6855 = vadd.f32 0.0, %v6854
    %v6856 = vpop.f32.mrb[0].mxu0
    %v6857 = vadd.f32 0.0, %v6856
    %v6858 = vpop.f32.mrb[0].mxu0
    %v6859 = vadd.f32 0.0, %v6858
    %6860 = vdwg.mxu0
    %6861 = vmatprep.subr.bf16.mxu0 %v2649
    %6862 = vmatpush1.bf16.msra.mxu0 %v2648
    %6863 = vmatprep.subr.bf16.mxu0 %v2655
    %6864 = vmatpush1.bf16.msra.mxu0 %v2654
    %6865 = vmatprep.subr.bf16.mxu0 %v2661
    %6866 = vmatpush1.bf16.msra.mxu0 %v2660
    %6867 = vmatprep.subr.bf16.mxu0 %v2667
    %6868 = vmatpush1.bf16.msra.mxu0 %v2666
    %6869 = vmatprep.subr.bf16.mxu0 %v2673
    %6870 = vmatpush1.bf16.msra.mxu0 %v2672
    %6871 = vmatprep.subr.bf16.mxu0 %v2679
    %6872 = vmatpush1.bf16.msra.mxu0 %v2678
    %6873 = vmatprep.subr.bf16.mxu0 %v2685
    %6874 = vmatpush1.bf16.msra.mxu0 %v2684
    %6875 = vmatprep.subr.bf16.mxu0 %v2691
    %6876 = vmatpush1.bf16.msra.mxu0 %v2690
    %6877 = vmatprep.subr.bf16.mxu0 %v2697
    %6878 = vmatpush1.bf16.msra.mxu0 %v2696
    %6879 = vmatprep.subr.bf16.mxu0 %v2703
    %6880 = vmatpush1.bf16.msra.mxu0 %v2702
    %6881 = vmatprep.subr.bf16.mxu0 %v2709
    %6882 = vmatpush1.bf16.msra.mxu0 %v2708
    %6883 = vmatprep.subr.bf16.mxu0 %v2715
    %6884 = vmatpush1.bf16.msra.mxu0 %v2714
    %6885 = vmatprep.subr.bf16.mxu0 %v2721
    %6886 = vmatpush1.bf16.msra.mxu0 %v2720
    %6887 = vmatprep.subr.bf16.mxu0 %v2727
    %6888 = vmatpush1.bf16.msra.mxu0 %v2726
    %6889 = vmatprep.subr.bf16.mxu0 %v2733
    %6890 = vmatpush1.bf16.msra.mxu0 %v2732
    %6891 = vmatprep.subr.bf16.mxu0 %v2739
    %6892 = vmatpush1.bf16.msra.mxu0 %v2738
    %6893 = vmatprep.mubr.bf16.mxu0 %v1249
    %6894 = vmatmul.mubr.bf16.gmra.mrb[0].mxu0 %v1248
    %v6895 = vpop.f32.mrb[0].mxu0
    %v6896 = vadd.f32 %v6373, %v6895
    %v6897 = vpop.f32.mrb[0].mxu0
    %v6898 = vadd.f32 %v6375, %v6897
    %v6899 = vpop.f32.mrb[0].mxu0
    %v6900 = vadd.f32 %v6377, %v6899
    %v6901 = vpop.f32.mrb[0].mxu0
    %v6902 = vadd.f32 %v6379, %v6901
    %6903 = vmatprep.mubr.bf16.mxu0 %v1255
    %6904 = vmatmul.mubr.bf16.gmra.mrb[0].mxu0 %v1254
    %v6905 = vpop.f32.mrb[0].mxu0
    %v6906 = vadd.f32 %v6383, %v6905
    %v6907 = vpop.f32.mrb[0].mxu0
    %v6908 = vadd.f32 %v6385, %v6907
    %v6909 = vpop.f32.mrb[0].mxu0
    %v6910 = vadd.f32 %v6387, %v6909
    %v6911 = vpop.f32.mrb[0].mxu0
    %v6912 = vadd.f32 %v6389, %v6911
    %6913 = vmatprep.mubr.bf16.mxu0 %v1261
    %6914 = vmatmul.mubr.bf16.gmra.mrb[0].mxu0 %v1260
    %v6915 = vpop.f32.mrb[0].mxu0
    %v6916 = vadd.f32 %v6393, %v6915
    %v6917 = vpop.f32.mrb[0].mxu0
    %v6918 = vadd.f32 %v6395, %v6917
    %v6919 = vpop.f32.mrb[0].mxu0
    %v6920 = vadd.f32 %v6397, %v6919
    %v6921 = vpop.f32.mrb[0].mxu0
    %v6922 = vadd.f32 %v6399, %v6921
    %6923 = vmatprep.mubr.bf16.mxu0 %v1267
    %6924 = vmatmul.mubr.bf16.gmra.mrb[0].mxu0 %v1266
    %v6925 = vpop.f32.mrb[0].mxu0
    %v6926 = vadd.f32 %v6403, %v6925
    %v6927 = vpop.f32.mrb[0].mxu0
    %v6928 = vadd.f32 %v6405, %v6927
    %v6929 = vpop.f32.mrb[0].mxu0
    %v6930 = vadd.f32 %v6407, %v6929
    %v6931 = vpop.f32.mrb[0].mxu0
    %v6932 = vadd.f32 %v6409, %v6931
    %6933 = vmatprep.mubr.bf16.mxu0 %v1273
    %6934 = vmatmul.mubr.bf16.gmra.mrb[0].mxu0 %v1272
    %v6935 = vpop.f32.mrb[0].mxu0
    %v6936 = vadd.f32 %v6413, %v6935
    %v6937 = vpop.f32.mrb[0].mxu0
    %v6938 = vadd.f32 %v6415, %v6937
    %v6939 = vpop.f32.mrb[0].mxu0
    %v6940 = vadd.f32 %v6417, %v6939
    %v6941 = vpop.f32.mrb[0].mxu0
    %v6942 = vadd.f32 %v6419, %v6941
    %6943 = vmatprep.mubr.bf16.mxu0 %v1279
    %6944 = vmatmul.mubr.bf16.gmra.mrb[0].mxu0 %v1278
    %v6945 = vpop.f32.mrb[0].mxu0
    %v6946 = vadd.f32 %v6423, %v6945
    %v6947 = vpop.f32.mrb[0].mxu0
    %v6948 = vadd.f32 %v6425, %v6947
    %v6949 = vpop.f32.mrb[0].mxu0
    %v6950 = vadd.f32 %v6427, %v6949
    %v6951 = vpop.f32.mrb[0].mxu0
    %v6952 = vadd.f32 %v6429, %v6951
    %6953 = vmatprep.mubr.bf16.mxu0 %v1285
    %6954 = vmatmul.mubr.bf16.gmra.mrb[0].mxu0 %v1284
    %v6955 = vpop.f32.mrb[0].mxu0
    %v6956 = vadd.f32 %v6433, %v6955
    %v6957 = vpop.f32.mrb[0].mxu0
    %v6958 = vadd.f32 %v6435, %v6957
    %v6959 = vpop.f32.mrb[0].mxu0
    %v6960 = vadd.f32 %v6437, %v6959
    %v6961 = vpop.f32.mrb[0].mxu0
    %v6962 = vadd.f32 %v6439, %v6961
    %6963 = vmatprep.mubr.bf16.mxu0 %v1291
    %6964 = vmatmul.mubr.bf16.gmra.mrb[0].mxu0 %v1290
    %v6965 = vpop.f32.mrb[0].mxu0
    %v6966 = vadd.f32 %v6443, %v6965
    %v6967 = vpop.f32.mrb[0].mxu0
    %v6968 = vadd.f32 %v6445, %v6967
    %v6969 = vpop.f32.mrb[0].mxu0
    %v6970 = vadd.f32 %v6447, %v6969
    %v6971 = vpop.f32.mrb[0].mxu0
    %v6972 = vadd.f32 %v6449, %v6971
    %6973 = vmatprep.mubr.bf16.mxu0 %v1297
    %6974 = vmatmul.mubr.bf16.gmra.mrb[0].mxu0 %v1296
    %v6975 = vpop.f32.mrb[0].mxu0
    %v6976 = vadd.f32 %v6453, %v6975
    %v6977 = vpop.f32.mrb[0].mxu0
    %v6978 = vadd.f32 %v6455, %v6977
    %v6979 = vpop.f32.mrb[0].mxu0
    %v6980 = vadd.f32 %v6457, %v6979
    %v6981 = vpop.f32.mrb[0].mxu0
    %v6982 = vadd.f32 %v6459, %v6981
    %6983 = vmatprep.mubr.bf16.mxu0 %v1303
    %6984 = vmatmul.mubr.bf16.gmra.mrb[0].mxu0 %v1302
    %v6985 = vpop.f32.mrb[0].mxu0
    %v6986 = vadd.f32 %v6463, %v6985
    %v6987 = vpop.f32.mrb[0].mxu0
    %v6988 = vadd.f32 %v6465, %v6987
    %v6989 = vpop.f32.mrb[0].mxu0
    %v6990 = vadd.f32 %v6467, %v6989
    %v6991 = vpop.f32.mrb[0].mxu0
    %v6992 = vadd.f32 %v6469, %v6991
    %6993 = vmatprep.mubr.bf16.mxu0 %v1309
    %6994 = vmatmul.mubr.bf16.gmra.mrb[0].mxu0 %v1308
    %v6995 = vpop.f32.mrb[0].mxu0
    %v6996 = vadd.f32 %v6473, %v6995
    %v6997 = vpop.f32.mrb[0].mxu0
    %v6998 = vadd.f32 %v6475, %v6997
    %v6999 = vpop.f32.mrb[0].mxu0
    %v7000 = vadd.f32 %v6477, %v6999
    %v7001 = vpop.f32.mrb[0].mxu0
    %v7002 = vadd.f32 %v6479, %v7001
    %7003 = vmatprep.mubr.bf16.mxu0 %v1315
    %7004 = vmatmul.mubr.bf16.gmra.mrb[0].mxu0 %v1314
    %v7005 = vpop.f32.mrb[0].mxu0
    %v7006 = vadd.f32 %v6483, %v7005
    %v7007 = vpop.f32.mrb[0].mxu0
    %v7008 = vadd.f32 %v6485, %v7007
    %v7009 = vpop.f32.mrb[0].mxu0
    %v7010 = vadd.f32 %v6487, %v7009
    %v7011 = vpop.f32.mrb[0].mxu0
    %v7012 = vadd.f32 %v6489, %v7011
    %7013 = vmatprep.mubr.bf16.mxu0 %v1321
    %7014 = vmatmul.mubr.bf16.gmra.mrb[0].mxu0 %v1320
    %v7015 = vpop.f32.mrb[0].mxu0
    %v7016 = vadd.f32 %v6493, %v7015
    %v7017 = vpop.f32.mrb[0].mxu0
    %v7018 = vadd.f32 %v6495, %v7017
    %v7019 = vpop.f32.mrb[0].mxu0
    %v7020 = vadd.f32 %v6497, %v7019
    %v7021 = vpop.f32.mrb[0].mxu0
    %v7022 = vadd.f32 %v6499, %v7021
    %7023 = vmatprep.mubr.bf16.mxu0 %v1327
    %7024 = vmatmul.mubr.bf16.gmra.mrb[0].mxu0 %v1326
    %v7025 = vpop.f32.mrb[0].mxu0
    %v7026 = vadd.f32 %v6503, %v7025
    %v7027 = vpop.f32.mrb[0].mxu0
    %v7028 = vadd.f32 %v6505, %v7027
    %v7029 = vpop.f32.mrb[0].mxu0
    %v7030 = vadd.f32 %v6507, %v7029
    %v7031 = vpop.f32.mrb[0].mxu0
    %v7032 = vadd.f32 %v6509, %v7031
    %7033 = vmatprep.mubr.bf16.mxu0 %v1333
    %7034 = vmatmul.mubr.bf16.gmra.mrb[0].mxu0 %v1332
    %v7035 = vpop.f32.mrb[0].mxu0
    %v7036 = vadd.f32 %v6513, %v7035
    %v7037 = vpop.f32.mrb[0].mxu0
    %v7038 = vadd.f32 %v6515, %v7037
    %v7039 = vpop.f32.mrb[0].mxu0
    %v7040 = vadd.f32 %v6517, %v7039
    %v7041 = vpop.f32.mrb[0].mxu0
    %v7042 = vadd.f32 %v6519, %v7041
    %7043 = vmatprep.mubr.bf16.mxu0 %v1339
    %7044 = vmatmul.mubr.bf16.gmra.mrb[0].mxu0 %v1338
    %v7045 = vpop.f32.mrb[0].mxu0
    %v7046 = vadd.f32 %v6523, %v7045
    %v7047 = vpop.f32.mrb[0].mxu0
    %v7048 = vadd.f32 %v6525, %v7047
    %v7049 = vpop.f32.mrb[0].mxu0
    %v7050 = vadd.f32 %v6527, %v7049
    %v7051 = vpop.f32.mrb[0].mxu0
    %v7052 = vadd.f32 %v6529, %v7051
    %7053 = vmatprep.mubr.bf16.mxu0 %v1345
    %7054 = vmatmul.mubr.bf16.gmra.mrb[0].mxu0 %v1344
    %v7055 = vpop.f32.mrb[0].mxu0
    %v7056 = vadd.f32 %v6533, %v7055
    %v7057 = vpop.f32.mrb[0].mxu0
    %v7058 = vadd.f32 %v6535, %v7057
    %v7059 = vpop.f32.mrb[0].mxu0
    %v7060 = vadd.f32 %v6537, %v7059
    %v7061 = vpop.f32.mrb[0].mxu0
    %v7062 = vadd.f32 %v6539, %v7061
    %7063 = vmatprep.mubr.bf16.mxu0 %v1351
    %7064 = vmatmul.mubr.bf16.gmra.mrb[0].mxu0 %v1350
    %v7065 = vpop.f32.mrb[0].mxu0
    %v7066 = vadd.f32 %v6543, %v7065
    %v7067 = vpop.f32.mrb[0].mxu0
    %v7068 = vadd.f32 %v6545, %v7067
    %v7069 = vpop.f32.mrb[0].mxu0
    %v7070 = vadd.f32 %v6547, %v7069
    %v7071 = vpop.f32.mrb[0].mxu0
    %v7072 = vadd.f32 %v6549, %v7071
    %7073 = vmatprep.mubr.bf16.mxu0 %v1357
    %7074 = vmatmul.mubr.bf16.gmra.mrb[0].mxu0 %v1356
    %v7075 = vpop.f32.mrb[0].mxu0
    %v7076 = vadd.f32 %v6553, %v7075
    %v7077 = vpop.f32.mrb[0].mxu0
    %v7078 = vadd.f32 %v6555, %v7077
    %v7079 = vpop.f32.mrb[0].mxu0
    %v7080 = vadd.f32 %v6557, %v7079
    %v7081 = vpop.f32.mrb[0].mxu0
    %v7082 = vadd.f32 %v6559, %v7081
    %7083 = vmatprep.mubr.bf16.mxu0 %v1363
    %7084 = vmatmul.mubr.bf16.gmra.mrb[0].mxu0 %v1362
    %v7085 = vpop.f32.mrb[0].mxu0
    %v7086 = vadd.f32 %v6563, %v7085
    %v7087 = vpop.f32.mrb[0].mxu0
    %v7088 = vadd.f32 %v6565, %v7087
    %v7089 = vpop.f32.mrb[0].mxu0
    %v7090 = vadd.f32 %v6567, %v7089
    %v7091 = vpop.f32.mrb[0].mxu0
    %v7092 = vadd.f32 %v6569, %v7091
    %7093 = vmatprep.mubr.bf16.mxu0 %v1369
    %7094 = vmatmul.mubr.bf16.gmra.mrb[0].mxu0 %v1368
    %v7095 = vpop.f32.mrb[0].mxu0
    %v7096 = vadd.f32 %v6573, %v7095
    %v7097 = vpop.f32.mrb[0].mxu0
    %v7098 = vadd.f32 %v6575, %v7097
    %v7099 = vpop.f32.mrb[0].mxu0
    %v7100 = vadd.f32 %v6577, %v7099
    %v7101 = vpop.f32.mrb[0].mxu0
    %v7102 = vadd.f32 %v6579, %v7101
    %7103 = vmatprep.mubr.bf16.mxu0 %v1375
    %7104 = vmatmul.mubr.bf16.gmra.mrb[0].mxu0 %v1374
    %v7105 = vpop.f32.mrb[0].mxu0
    %v7106 = vadd.f32 %v6583, %v7105
    %v7107 = vpop.f32.mrb[0].mxu0
    %v7108 = vadd.f32 %v6585, %v7107
    %v7109 = vpop.f32.mrb[0].mxu0
    %v7110 = vadd.f32 %v6587, %v7109
    %v7111 = vpop.f32.mrb[0].mxu0
    %v7112 = vadd.f32 %v6589, %v7111
    %7113 = vmatprep.mubr.bf16.mxu0 %v1381
    %7114 = vmatmul.mubr.bf16.gmra.mrb[0].mxu0 %v1380
    %v7115 = vpop.f32.mrb[0].mxu0
    %v7116 = vadd.f32 %v6593, %v7115
    %v7117 = vpop.f32.mrb[0].mxu0
    %v7118 = vadd.f32 %v6595, %v7117
    %v7119 = vpop.f32.mrb[0].mxu0
    %v7120 = vadd.f32 %v6597, %v7119
    %v7121 = vpop.f32.mrb[0].mxu0
    %v7122 = vadd.f32 %v6599, %v7121
    %7123 = vmatprep.mubr.bf16.mxu0 %v1387
    %7124 = vmatmul.mubr.bf16.gmra.mrb[0].mxu0 %v1386
    %v7125 = vpop.f32.mrb[0].mxu0
    %v7126 = vadd.f32 %v6603, %v7125
    %v7127 = vpop.f32.mrb[0].mxu0
    %v7128 = vadd.f32 %v6605, %v7127
    %v7129 = vpop.f32.mrb[0].mxu0
    %v7130 = vadd.f32 %v6607, %v7129
    %v7131 = vpop.f32.mrb[0].mxu0
    %v7132 = vadd.f32 %v6609, %v7131
    %7133 = vmatprep.mubr.bf16.mxu0 %v1393
    %7134 = vmatmul.mubr.bf16.gmra.mrb[0].mxu0 %v1392
    %v7135 = vpop.f32.mrb[0].mxu0
    %v7136 = vadd.f32 %v6613, %v7135
    %v7137 = vpop.f32.mrb[0].mxu0
    %v7138 = vadd.f32 %v6615, %v7137
    %v7139 = vpop.f32.mrb[0].mxu0
    %v7140 = vadd.f32 %v6617, %v7139
    %v7141 = vpop.f32.mrb[0].mxu0
    %v7142 = vadd.f32 %v6619, %v7141
    %7143 = vmatprep.mubr.bf16.mxu0 %v1399
    %7144 = vmatmul.mubr.bf16.gmra.mrb[0].mxu0 %v1398
    %v7145 = vpop.f32.mrb[0].mxu0
    %v7146 = vadd.f32 %v6623, %v7145
    %v7147 = vpop.f32.mrb[0].mxu0
    %v7148 = vadd.f32 %v6625, %v7147
    %v7149 = vpop.f32.mrb[0].mxu0
    %v7150 = vadd.f32 %v6627, %v7149
    %v7151 = vpop.f32.mrb[0].mxu0
    %v7152 = vadd.f32 %v6629, %v7151
    %7153 = vmatprep.mubr.bf16.mxu0 %v1405
    %7154 = vmatmul.mubr.bf16.gmra.mrb[0].mxu0 %v1404
    %v7155 = vpop.f32.mrb[0].mxu0
    %v7156 = vadd.f32 %v6633, %v7155
    %v7157 = vpop.f32.mrb[0].mxu0
    %v7158 = vadd.f32 %v6635, %v7157
    %v7159 = vpop.f32.mrb[0].mxu0
    %v7160 = vadd.f32 %v6637, %v7159
    %v7161 = vpop.f32.mrb[0].mxu0
    %v7162 = vadd.f32 %v6639, %v7161
    %7163 = vmatprep.mubr.bf16.mxu0 %v1411
    %7164 = vmatmul.mubr.bf16.gmra.mrb[0].mxu0 %v1410
    %v7165 = vpop.f32.mrb[0].mxu0
    %v7166 = vadd.f32 %v6643, %v7165
    %v7167 = vpop.f32.mrb[0].mxu0
    %v7168 = vadd.f32 %v6645, %v7167
    %v7169 = vpop.f32.mrb[0].mxu0
    %v7170 = vadd.f32 %v6647, %v7169
    %v7171 = vpop.f32.mrb[0].mxu0
    %v7172 = vadd.f32 %v6649, %v7171
    %7173 = vmatprep.mubr.bf16.mxu0 %v1417
    %7174 = vmatmul.mubr.bf16.gmra.mrb[0].mxu0 %v1416
    %v7175 = vpop.f32.mrb[0].mxu0
    %v7176 = vadd.f32 %v6653, %v7175
    %v7177 = vpop.f32.mrb[0].mxu0
    %v7178 = vadd.f32 %v6655, %v7177
    %v7179 = vpop.f32.mrb[0].mxu0
    %v7180 = vadd.f32 %v6657, %v7179
    %v7181 = vpop.f32.mrb[0].mxu0
    %v7182 = vadd.f32 %v6659, %v7181
    %7183 = vmatprep.mubr.bf16.mxu0 %v1423
    %7184 = vmatmul.mubr.bf16.gmra.mrb[0].mxu0 %v1422
    %v7185 = vpop.f32.mrb[0].mxu0
    %v7186 = vadd.f32 %v6663, %v7185
    %v7187 = vpop.f32.mrb[0].mxu0
    %v7188 = vadd.f32 %v6665, %v7187
    %v7189 = vpop.f32.mrb[0].mxu0
    %v7190 = vadd.f32 %v6667, %v7189
    %v7191 = vpop.f32.mrb[0].mxu0
    %v7192 = vadd.f32 %v6669, %v7191
    %7193 = vmatprep.mubr.bf16.mxu0 %v1429
    %7194 = vmatmul.mubr.bf16.gmra.mrb[0].mxu0 %v1428
    %v7195 = vpop.f32.mrb[0].mxu0
    %v7196 = vadd.f32 %v6673, %v7195
    %v7197 = vpop.f32.mrb[0].mxu0
    %v7198 = vadd.f32 %v6675, %v7197
    %v7199 = vpop.f32.mrb[0].mxu0
    %v7200 = vadd.f32 %v6677, %v7199
    %v7201 = vpop.f32.mrb[0].mxu0
    %v7202 = vadd.f32 %v6679, %v7201
    %7203 = vmatprep.mubr.bf16.mxu0 %v1435
    %7204 = vmatmul.mubr.bf16.gmra.mrb[0].mxu0 %v1434
    %v7205 = vpop.f32.mrb[0].mxu0
    %v7206 = vadd.f32 %v6683, %v7205
    %v7207 = vpop.f32.mrb[0].mxu0
    %v7208 = vadd.f32 %v6685, %v7207
    %v7209 = vpop.f32.mrb[0].mxu0
    %v7210 = vadd.f32 %v6687, %v7209
    %v7211 = vpop.f32.mrb[0].mxu0
    %v7212 = vadd.f32 %v6689, %v7211
    %7213 = vmatprep.mubr.bf16.mxu0 %v1441
    %7214 = vmatmul.mubr.bf16.gmra.mrb[0].mxu0 %v1440
    %v7215 = vpop.f32.mrb[0].mxu0
    %v7216 = vadd.f32 %v6693, %v7215
    %v7217 = vpop.f32.mrb[0].mxu0
    %v7218 = vadd.f32 %v6695, %v7217
    %v7219 = vpop.f32.mrb[0].mxu0
    %v7220 = vadd.f32 %v6697, %v7219
    %v7221 = vpop.f32.mrb[0].mxu0
    %v7222 = vadd.f32 %v6699, %v7221
    %7223 = vmatprep.mubr.bf16.mxu0 %v1447
    %7224 = vmatmul.mubr.bf16.gmra.mrb[0].mxu0 %v1446
    %v7225 = vpop.f32.mrb[0].mxu0
    %v7226 = vadd.f32 %v6703, %v7225
    %v7227 = vpop.f32.mrb[0].mxu0
    %v7228 = vadd.f32 %v6705, %v7227
    %v7229 = vpop.f32.mrb[0].mxu0
    %v7230 = vadd.f32 %v6707, %v7229
    %v7231 = vpop.f32.mrb[0].mxu0
    %v7232 = vadd.f32 %v6709, %v7231
    %7233 = vmatprep.mubr.bf16.mxu0 %v1453
    %7234 = vmatmul.mubr.bf16.gmra.mrb[0].mxu0 %v1452
    %v7235 = vpop.f32.mrb[0].mxu0
    %v7236 = vadd.f32 %v6713, %v7235
    %v7237 = vpop.f32.mrb[0].mxu0
    %v7238 = vadd.f32 %v6715, %v7237
    %v7239 = vpop.f32.mrb[0].mxu0
    %v7240 = vadd.f32 %v6717, %v7239
    %v7241 = vpop.f32.mrb[0].mxu0
    %v7242 = vadd.f32 %v6719, %v7241
    %7243 = vmatprep.mubr.bf16.mxu0 %v1459
    %7244 = vmatmul.mubr.bf16.gmra.mrb[0].mxu0 %v1458
    %v7245 = vpop.f32.mrb[0].mxu0
    %v7246 = vadd.f32 %v6723, %v7245
    %v7247 = vpop.f32.mrb[0].mxu0
    %v7248 = vadd.f32 %v6725, %v7247
    %v7249 = vpop.f32.mrb[0].mxu0
    %v7250 = vadd.f32 %v6727, %v7249
    %v7251 = vpop.f32.mrb[0].mxu0
    %v7252 = vadd.f32 %v6729, %v7251
    %7253 = vmatprep.mubr.bf16.mxu0 %v1465
    %7254 = vmatmul.mubr.bf16.gmra.mrb[0].mxu0 %v1464
    %v7255 = vpop.f32.mrb[0].mxu0
    %v7256 = vadd.f32 %v6733, %v7255
    %v7257 = vpop.f32.mrb[0].mxu0
    %v7258 = vadd.f32 %v6735, %v7257
    %v7259 = vpop.f32.mrb[0].mxu0
    %v7260 = vadd.f32 %v6737, %v7259
    %v7261 = vpop.f32.mrb[0].mxu0
    %v7262 = vadd.f32 %v6739, %v7261
    %7263 = vmatprep.mubr.bf16.mxu0 %v1471
    %7264 = vmatmul.mubr.bf16.gmra.mrb[0].mxu0 %v1470
    %v7265 = vpop.f32.mrb[0].mxu0
    %v7266 = vadd.f32 %v6743, %v7265
    %v7267 = vpop.f32.mrb[0].mxu0
    %v7268 = vadd.f32 %v6745, %v7267
    %v7269 = vpop.f32.mrb[0].mxu0
    %v7270 = vadd.f32 %v6747, %v7269
    %v7271 = vpop.f32.mrb[0].mxu0
    %v7272 = vadd.f32 %v6749, %v7271
    %7273 = vmatprep.mubr.bf16.mxu0 %v1477
    %7274 = vmatmul.mubr.bf16.gmra.mrb[0].mxu0 %v1476
    %v7275 = vpop.f32.mrb[0].mxu0
    %v7276 = vadd.f32 %v6753, %v7275
    %v7277 = vpop.f32.mrb[0].mxu0
    %v7278 = vadd.f32 %v6755, %v7277
    %v7279 = vpop.f32.mrb[0].mxu0
    %v7280 = vadd.f32 %v6757, %v7279
    %v7281 = vpop.f32.mrb[0].mxu0
    %v7282 = vadd.f32 %v6759, %v7281
    %7283 = vmatprep.mubr.bf16.mxu0 %v1483
    %7284 = vmatmul.mubr.bf16.gmra.mrb[0].mxu0 %v1482
    %v7285 = vpop.f32.mrb[0].mxu0
    %v7286 = vadd.f32 %v6763, %v7285
    %v7287 = vpop.f32.mrb[0].mxu0
    %v7288 = vadd.f32 %v6765, %v7287
    %v7289 = vpop.f32.mrb[0].mxu0
    %v7290 = vadd.f32 %v6767, %v7289
    %v7291 = vpop.f32.mrb[0].mxu0
    %v7292 = vadd.f32 %v6769, %v7291
    %7293 = vmatprep.mubr.bf16.mxu0 %v1489
    %7294 = vmatmul.mubr.bf16.gmra.mrb[0].mxu0 %v1488
    %v7295 = vpop.f32.mrb[0].mxu0
    %v7296 = vadd.f32 %v6773, %v7295
    %v7297 = vpop.f32.mrb[0].mxu0
    %v7298 = vadd.f32 %v6775, %v7297
    %v7299 = vpop.f32.mrb[0].mxu0
    %v7300 = vadd.f32 %v6777, %v7299
    %v7301 = vpop.f32.mrb[0].mxu0
    %v7302 = vadd.f32 %v6779, %v7301
    %7303 = vmatprep.mubr.bf16.mxu0 %v1495
    %7304 = vmatmul.mubr.bf16.gmra.mrb[0].mxu0 %v1494
    %v7305 = vpop.f32.mrb[0].mxu0
    %v7306 = vadd.f32 %v6783, %v7305
    %v7307 = vpop.f32.mrb[0].mxu0
    %v7308 = vadd.f32 %v6785, %v7307
    %v7309 = vpop.f32.mrb[0].mxu0
    %v7310 = vadd.f32 %v6787, %v7309
    %v7311 = vpop.f32.mrb[0].mxu0
    %v7312 = vadd.f32 %v6789, %v7311
    %7313 = vmatprep.mubr.bf16.mxu0 %v1501
    %7314 = vmatmul.mubr.bf16.gmra.mrb[0].mxu0 %v1500
    %v7315 = vpop.f32.mrb[0].mxu0
    %v7316 = vadd.f32 %v6793, %v7315
    %v7317 = vpop.f32.mrb[0].mxu0
    %v7318 = vadd.f32 %v6795, %v7317
    %v7319 = vpop.f32.mrb[0].mxu0
    %v7320 = vadd.f32 %v6797, %v7319
    %v7321 = vpop.f32.mrb[0].mxu0
    %v7322 = vadd.f32 %v6799, %v7321
    %7323 = vmatprep.mubr.bf16.mxu0 %v1507
    %7324 = vmatmul.mubr.bf16.gmra.mrb[0].mxu0 %v1506
    %v7325 = vpop.f32.mrb[0].mxu0
    %v7326 = vadd.f32 %v6803, %v7325
    %v7327 = vpop.f32.mrb[0].mxu0
    %v7328 = vadd.f32 %v6805, %v7327
    %v7329 = vpop.f32.mrb[0].mxu0
    %v7330 = vadd.f32 %v6807, %v7329
    %v7331 = vpop.f32.mrb[0].mxu0
    %v7332 = vadd.f32 %v6809, %v7331
    %7333 = vmatprep.mubr.bf16.mxu0 %v1513
    %7334 = vmatmul.mubr.bf16.gmra.mrb[0].mxu0 %v1512
    %v7335 = vpop.f32.mrb[0].mxu0
    %v7336 = vadd.f32 %v6813, %v7335
    %v7337 = vpop.f32.mrb[0].mxu0
    %v7338 = vadd.f32 %v6815, %v7337
    %v7339 = vpop.f32.mrb[0].mxu0
    %v7340 = vadd.f32 %v6817, %v7339
    %v7341 = vpop.f32.mrb[0].mxu0
    %v7342 = vadd.f32 %v6819, %v7341
    %7343 = vmatprep.mubr.bf16.mxu0 %v1519
    %7344 = vmatmul.mubr.bf16.gmra.mrb[0].mxu0 %v1518
    %v7345 = vpop.f32.mrb[0].mxu0
    %v7346 = vadd.f32 %v6823, %v7345
    %v7347 = vpop.f32.mrb[0].mxu0
    %v7348 = vadd.f32 %v6825, %v7347
    %v7349 = vpop.f32.mrb[0].mxu0
    %v7350 = vadd.f32 %v6827, %v7349
    %v7351 = vpop.f32.mrb[0].mxu0
    %v7352 = vadd.f32 %v6829, %v7351
    %7353 = vmatprep.mubr.bf16.mxu0 %v1525
    %7354 = vmatmul.mubr.bf16.gmra.mrb[0].mxu0 %v1524
    %v7355 = vpop.f32.mrb[0].mxu0
    %v7356 = vadd.f32 %v6833, %v7355
    %v7357 = vpop.f32.mrb[0].mxu0
    %v7358 = vadd.f32 %v6835, %v7357
    %v7359 = vpop.f32.mrb[0].mxu0
    %v7360 = vadd.f32 %v6837, %v7359
    %v7361 = vpop.f32.mrb[0].mxu0
    %v7362 = vadd.f32 %v6839, %v7361
    %7363 = vmatprep.mubr.bf16.mxu0 %v1531
    %7364 = vmatmul.mubr.bf16.gmra.mrb[0].mxu0 %v1530
    %v7365 = vpop.f32.mrb[0].mxu0
    %v7366 = vadd.f32 %v6843, %v7365
    %v7367 = vpop.f32.mrb[0].mxu0
    %v7368 = vadd.f32 %v6845, %v7367
    %v7369 = vpop.f32.mrb[0].mxu0
    %v7370 = vadd.f32 %v6847, %v7369
    %v7371 = vpop.f32.mrb[0].mxu0
    %v7372 = vadd.f32 %v6849, %v7371
    %7373 = vmatprep.mubr.bf16.mxu0 %v1537
    %7374 = vmatmul.mubr.bf16.gmra.mrb[0].mxu0 %v1536
    %v7375 = vpop.f32.mrb[0].mxu0
    %v7376 = vadd.f32 %v6853, %v7375
    %v7377 = vpop.f32.mrb[0].mxu0
    %v7378 = vadd.f32 %v6855, %v7377
    %v7379 = vpop.f32.mrb[0].mxu0
    %v7380 = vadd.f32 %v6857, %v7379
    %v7381 = vpop.f32.mrb[0].mxu0
    %v7382 = vadd.f32 %v6859, %v7381
    %7383 = vdwg.mxu0
    %7384 = vmatprep.subr.bf16.mxu0 %v2745
    %7385 = vmatpush1.bf16.msra.mxu0 %v2744
    %7386 = vmatprep.subr.bf16.mxu0 %v2751
    %7387 = vmatpush1.bf16.msra.mxu0 %v2750
    %7388 = vmatprep.subr.bf16.mxu0 %v2757
    %7389 = vmatpush1.bf16.msra.mxu0 %v2756
    %7390 = vmatprep.subr.bf16.mxu0 %v2763
    %7391 = vmatpush1.bf16.msra.mxu0 %v2762
    %7392 = vmatprep.subr.bf16.mxu0 %v2769
    %7393 = vmatpush1.bf16.msra.mxu0 %v2768
    %7394 = vmatprep.subr.bf16.mxu0 %v2775
    %7395 = vmatpush1.bf16.msra.mxu0 %v2774
    %7396 = vmatprep.subr.bf16.mxu0 %v2781
    %7397 = vmatpush1.bf16.msra.mxu0 %v2780
    %7398 = vmatprep.subr.bf16.mxu0 %v2787
    %7399 = vmatpush1.bf16.msra.mxu0 %v2786
    %7400 = vmatprep.subr.bf16.mxu0 %v2793
    %7401 = vmatpush1.bf16.msra.mxu0 %v2792
    %7402 = vmatprep.subr.bf16.mxu0 %v2799
    %7403 = vmatpush1.bf16.msra.mxu0 %v2798
    %7404 = vmatprep.subr.bf16.mxu0 0
    %7405 = vmatpush1.bf16.msra.mxu0 0
    %7406 = vmatprep.subr.bf16.mxu0 0
    %7407 = vmatpush1.bf16.msra.mxu0 0
    %7408 = vmatprep.subr.bf16.mxu0 0
    %7409 = vmatpush1.bf16.msra.mxu0 0
    %7410 = vmatprep.subr.bf16.mxu0 0
    %7411 = vmatpush1.bf16.msra.mxu0 0
    %7412 = vmatprep.subr.bf16.mxu0 0
    %7413 = vmatpush1.bf16.msra.mxu0 0
    %7414 = vmatprep.subr.bf16.mxu0 0
    %7415 = vmatpush1.bf16.msra.mxu0 0
    %7416 = vmatprep.mubr.bf16.mxu0 %v3054
    %7417 = vmatmul.mubr.bf16.gmra.mrb[0].mxu0 %v1250
    %v7418 = vpop.f32.mrb[0].mxu0
    %v7419 = vadd.f32 %v6896, %v7418
    %v7420 = vpop.f32.mrb[0].mxu0
    %v7421 = vadd.f32 %v6898, %v7420
    %v7422 = vpop.f32.mrb[0].mxu0
    %v7423 = vadd.f32 %v6900, %v7422
    %v7424 = vpop.f32.mrb[0].mxu0
    %v7425 = vadd.f32 %v6902, %v7424
    %7426 = vmatprep.mubr.bf16.mxu0 %v3057
    %7427 = vmatmul.mubr.bf16.gmra.mrb[0].mxu0 %v1256
    %v7428 = vpop.f32.mrb[0].mxu0
    %v7429 = vadd.f32 %v6906, %v7428
    %v7430 = vpop.f32.mrb[0].mxu0
    %v7431 = vadd.f32 %v6908, %v7430
    %v7432 = vpop.f32.mrb[0].mxu0
    %v7433 = vadd.f32 %v6910, %v7432
    %v7434 = vpop.f32.mrb[0].mxu0
    %v7435 = vadd.f32 %v6912, %v7434
    %7436 = vmatprep.mubr.bf16.mxu0 %v3060
    %7437 = vmatmul.mubr.bf16.gmra.mrb[0].mxu0 %v1262
    %v7438 = vpop.f32.mrb[0].mxu0
    %v7439 = vadd.f32 %v6916, %v7438
    %v7440 = vpop.f32.mrb[0].mxu0
    %v7441 = vadd.f32 %v6918, %v7440
    %v7442 = vpop.f32.mrb[0].mxu0
    %v7443 = vadd.f32 %v6920, %v7442
    %v7444 = vpop.f32.mrb[0].mxu0
    %v7445 = vadd.f32 %v6922, %v7444
    %7446 = vmatprep.mubr.bf16.mxu0 %v3063
    %7447 = vmatmul.mubr.bf16.gmra.mrb[0].mxu0 %v1268
    %v7448 = vpop.f32.mrb[0].mxu0
    %v7449 = vadd.f32 %v6926, %v7448
    %v7450 = vpop.f32.mrb[0].mxu0
    %v7451 = vadd.f32 %v6928, %v7450
    %v7452 = vpop.f32.mrb[0].mxu0
    %v7453 = vadd.f32 %v6930, %v7452
    %v7454 = vpop.f32.mrb[0].mxu0
    %v7455 = vadd.f32 %v6932, %v7454
    %7456 = vmatprep.mubr.bf16.mxu0 %v3066
    %7457 = vmatmul.mubr.bf16.gmra.mrb[0].mxu0 %v1274
    %v7458 = vpop.f32.mrb[0].mxu0
    %v7459 = vadd.f32 %v6936, %v7458
    %v7460 = vpop.f32.mrb[0].mxu0
    %v7461 = vadd.f32 %v6938, %v7460
    %v7462 = vpop.f32.mrb[0].mxu0
    %v7463 = vadd.f32 %v6940, %v7462
    %v7464 = vpop.f32.mrb[0].mxu0
    %v7465 = vadd.f32 %v6942, %v7464
    %7466 = vmatprep.mubr.bf16.mxu0 %v3069
    %7467 = vmatmul.mubr.bf16.gmra.mrb[0].mxu0 %v1280
    %v7468 = vpop.f32.mrb[0].mxu0
    %v7469 = vadd.f32 %v6946, %v7468
    %v7470 = vpop.f32.mrb[0].mxu0
    %v7471 = vadd.f32 %v6948, %v7470
    %v7472 = vpop.f32.mrb[0].mxu0
    %v7473 = vadd.f32 %v6950, %v7472
    %v7474 = vpop.f32.mrb[0].mxu0
    %v7475 = vadd.f32 %v6952, %v7474
    %7476 = vmatprep.mubr.bf16.mxu0 %v3072
    %7477 = vmatmul.mubr.bf16.gmra.mrb[0].mxu0 %v1286
    %v7478 = vpop.f32.mrb[0].mxu0
    %v7479 = vadd.f32 %v6956, %v7478
    %v7480 = vpop.f32.mrb[0].mxu0
    %v7481 = vadd.f32 %v6958, %v7480
    %v7482 = vpop.f32.mrb[0].mxu0
    %v7483 = vadd.f32 %v6960, %v7482
    %v7484 = vpop.f32.mrb[0].mxu0
    %v7485 = vadd.f32 %v6962, %v7484
    %7486 = vmatprep.mubr.bf16.mxu0 %v3075
    %7487 = vmatmul.mubr.bf16.gmra.mrb[0].mxu0 %v1292
    %v7488 = vpop.f32.mrb[0].mxu0
    %v7489 = vadd.f32 %v6966, %v7488
    %v7490 = vpop.f32.mrb[0].mxu0
    %v7491 = vadd.f32 %v6968, %v7490
    %v7492 = vpop.f32.mrb[0].mxu0
    %v7493 = vadd.f32 %v6970, %v7492
    %v7494 = vpop.f32.mrb[0].mxu0
    %v7495 = vadd.f32 %v6972, %v7494
    %7496 = vmatprep.mubr.bf16.mxu0 %v3078
    %7497 = vmatmul.mubr.bf16.gmra.mrb[0].mxu0 %v1298
    %v7498 = vpop.f32.mrb[0].mxu0
    %v7499 = vadd.f32 %v6976, %v7498
    %v7500 = vpop.f32.mrb[0].mxu0
    %v7501 = vadd.f32 %v6978, %v7500
    %v7502 = vpop.f32.mrb[0].mxu0
    %v7503 = vadd.f32 %v6980, %v7502
    %v7504 = vpop.f32.mrb[0].mxu0
    %v7505 = vadd.f32 %v6982, %v7504
    %7506 = vmatprep.mubr.bf16.mxu0 %v3081
    %7507 = vmatmul.mubr.bf16.gmra.mrb[0].mxu0 %v1304
    %v7508 = vpop.f32.mrb[0].mxu0
    %v7509 = vadd.f32 %v6986, %v7508
    %v7510 = vpop.f32.mrb[0].mxu0
    %v7511 = vadd.f32 %v6988, %v7510
    %v7512 = vpop.f32.mrb[0].mxu0
    %v7513 = vadd.f32 %v6990, %v7512
    %v7514 = vpop.f32.mrb[0].mxu0
    %v7515 = vadd.f32 %v6992, %v7514
    %7516 = vmatprep.mubr.bf16.mxu0 %v3084
    %7517 = vmatmul.mubr.bf16.gmra.mrb[0].mxu0 %v1310
    %v7518 = vpop.f32.mrb[0].mxu0
    %v7519 = vadd.f32 %v6996, %v7518
    %v7520 = vpop.f32.mrb[0].mxu0
    %v7521 = vadd.f32 %v6998, %v7520
    %v7522 = vpop.f32.mrb[0].mxu0
    %v7523 = vadd.f32 %v7000, %v7522
    %v7524 = vpop.f32.mrb[0].mxu0
    %v7525 = vadd.f32 %v7002, %v7524
    %7526 = vmatprep.mubr.bf16.mxu0 %v3087
    %7527 = vmatmul.mubr.bf16.gmra.mrb[0].mxu0 %v1316
    %v7528 = vpop.f32.mrb[0].mxu0
    %v7529 = vadd.f32 %v7006, %v7528
    %v7530 = vpop.f32.mrb[0].mxu0
    %v7531 = vadd.f32 %v7008, %v7530
    %v7532 = vpop.f32.mrb[0].mxu0
    %v7533 = vadd.f32 %v7010, %v7532
    %v7534 = vpop.f32.mrb[0].mxu0
    %v7535 = vadd.f32 %v7012, %v7534
    %7536 = vmatprep.mubr.bf16.mxu0 %v3090
    %7537 = vmatmul.mubr.bf16.gmra.mrb[0].mxu0 %v1322
    %v7538 = vpop.f32.mrb[0].mxu0
    %v7539 = vadd.f32 %v7016, %v7538
    %v7540 = vpop.f32.mrb[0].mxu0
    %v7541 = vadd.f32 %v7018, %v7540
    %v7542 = vpop.f32.mrb[0].mxu0
    %v7543 = vadd.f32 %v7020, %v7542
    %v7544 = vpop.f32.mrb[0].mxu0
    %v7545 = vadd.f32 %v7022, %v7544
    %7546 = vmatprep.mubr.bf16.mxu0 %v3093
    %7547 = vmatmul.mubr.bf16.gmra.mrb[0].mxu0 %v1328
    %v7548 = vpop.f32.mrb[0].mxu0
    %v7549 = vadd.f32 %v7026, %v7548
    %v7550 = vpop.f32.mrb[0].mxu0
    %v7551 = vadd.f32 %v7028, %v7550
    %v7552 = vpop.f32.mrb[0].mxu0
    %v7553 = vadd.f32 %v7030, %v7552
    %v7554 = vpop.f32.mrb[0].mxu0
    %v7555 = vadd.f32 %v7032, %v7554
    %7556 = vmatprep.mubr.bf16.mxu0 %v3096
    %7557 = vmatmul.mubr.bf16.gmra.mrb[0].mxu0 %v1334
    %v7558 = vpop.f32.mrb[0].mxu0
    %v7559 = vadd.f32 %v7036, %v7558
    %v7560 = vpop.f32.mrb[0].mxu0
    %v7561 = vadd.f32 %v7038, %v7560
    %v7562 = vpop.f32.mrb[0].mxu0
    %v7563 = vadd.f32 %v7040, %v7562
    %v7564 = vpop.f32.mrb[0].mxu0
    %v7565 = vadd.f32 %v7042, %v7564
    %7566 = vmatprep.mubr.bf16.mxu0 %v3099
    %7567 = vmatmul.mubr.bf16.gmra.mrb[0].mxu0 %v1340
    %v7568 = vpop.f32.mrb[0].mxu0
    %v7569 = vadd.f32 %v7046, %v7568
    %v7570 = vpop.f32.mrb[0].mxu0
    %v7571 = vadd.f32 %v7048, %v7570
    %v7572 = vpop.f32.mrb[0].mxu0
    %v7573 = vadd.f32 %v7050, %v7572
    %v7574 = vpop.f32.mrb[0].mxu0
    %v7575 = vadd.f32 %v7052, %v7574
    %7576 = vmatprep.mubr.bf16.mxu0 %v3102
    %7577 = vmatmul.mubr.bf16.gmra.mrb[0].mxu0 %v1346
    %v7578 = vpop.f32.mrb[0].mxu0
    %v7579 = vadd.f32 %v7056, %v7578
    %v7580 = vpop.f32.mrb[0].mxu0
    %v7581 = vadd.f32 %v7058, %v7580
    %v7582 = vpop.f32.mrb[0].mxu0
    %v7583 = vadd.f32 %v7060, %v7582
    %v7584 = vpop.f32.mrb[0].mxu0
    %v7585 = vadd.f32 %v7062, %v7584
    %7586 = vmatprep.mubr.bf16.mxu0 %v3105
    %7587 = vmatmul.mubr.bf16.gmra.mrb[0].mxu0 %v1352
    %v7588 = vpop.f32.mrb[0].mxu0
    %v7589 = vadd.f32 %v7066, %v7588
    %v7590 = vpop.f32.mrb[0].mxu0
    %v7591 = vadd.f32 %v7068, %v7590
    %v7592 = vpop.f32.mrb[0].mxu0
    %v7593 = vadd.f32 %v7070, %v7592
    %v7594 = vpop.f32.mrb[0].mxu0
    %v7595 = vadd.f32 %v7072, %v7594
    %7596 = vmatprep.mubr.bf16.mxu0 %v3108
    %7597 = vmatmul.mubr.bf16.gmra.mrb[0].mxu0 %v1358
    %v7598 = vpop.f32.mrb[0].mxu0
    %v7599 = vadd.f32 %v7076, %v7598
    %v7600 = vpop.f32.mrb[0].mxu0
    %v7601 = vadd.f32 %v7078, %v7600
    %v7602 = vpop.f32.mrb[0].mxu0
    %v7603 = vadd.f32 %v7080, %v7602
    %v7604 = vpop.f32.mrb[0].mxu0
    %v7605 = vadd.f32 %v7082, %v7604
    %7606 = vmatprep.mubr.bf16.mxu0 %v3111
    %7607 = vmatmul.mubr.bf16.gmra.mrb[0].mxu0 %v1364
    %v7608 = vpop.f32.mrb[0].mxu0
    %v7609 = vadd.f32 %v7086, %v7608
    %v7610 = vpop.f32.mrb[0].mxu0
    %v7611 = vadd.f32 %v7088, %v7610
    %v7612 = vpop.f32.mrb[0].mxu0
    %v7613 = vadd.f32 %v7090, %v7612
    %v7614 = vpop.f32.mrb[0].mxu0
    %v7615 = vadd.f32 %v7092, %v7614
    %7616 = vmatprep.mubr.bf16.mxu0 %v3114
    %7617 = vmatmul.mubr.bf16.gmra.mrb[0].mxu0 %v1370
    %v7618 = vpop.f32.mrb[0].mxu0
    %v7619 = vadd.f32 %v7096, %v7618
    %v7620 = vpop.f32.mrb[0].mxu0
    %v7621 = vadd.f32 %v7098, %v7620
    %v7622 = vpop.f32.mrb[0].mxu0
    %v7623 = vadd.f32 %v7100, %v7622
    %v7624 = vpop.f32.mrb[0].mxu0
    %v7625 = vadd.f32 %v7102, %v7624
    %7626 = vmatprep.mubr.bf16.mxu0 %v3117
    %7627 = vmatmul.mubr.bf16.gmra.mrb[0].mxu0 %v1376
    %v7628 = vpop.f32.mrb[0].mxu0
    %v7629 = vadd.f32 %v7106, %v7628
    %v7630 = vpop.f32.mrb[0].mxu0
    %v7631 = vadd.f32 %v7108, %v7630
    %v7632 = vpop.f32.mrb[0].mxu0
    %v7633 = vadd.f32 %v7110, %v7632
    %v7634 = vpop.f32.mrb[0].mxu0
    %v7635 = vadd.f32 %v7112, %v7634
    %7636 = vmatprep.mubr.bf16.mxu0 %v3120
    %7637 = vmatmul.mubr.bf16.gmra.mrb[0].mxu0 %v1382
    %v7638 = vpop.f32.mrb[0].mxu0
    %v7639 = vadd.f32 %v7116, %v7638
    %v7640 = vpop.f32.mrb[0].mxu0
    %v7641 = vadd.f32 %v7118, %v7640
    %v7642 = vpop.f32.mrb[0].mxu0
    %v7643 = vadd.f32 %v7120, %v7642
    %v7644 = vpop.f32.mrb[0].mxu0
    %v7645 = vadd.f32 %v7122, %v7644
    %7646 = vmatprep.mubr.bf16.mxu0 %v3123
    %7647 = vmatmul.mubr.bf16.gmra.mrb[0].mxu0 %v1388
    %v7648 = vpop.f32.mrb[0].mxu0
    %v7649 = vadd.f32 %v7126, %v7648
    %v7650 = vpop.f32.mrb[0].mxu0
    %v7651 = vadd.f32 %v7128, %v7650
    %v7652 = vpop.f32.mrb[0].mxu0
    %v7653 = vadd.f32 %v7130, %v7652
    %v7654 = vpop.f32.mrb[0].mxu0
    %v7655 = vadd.f32 %v7132, %v7654
    %7656 = vmatprep.mubr.bf16.mxu0 %v3126
    %7657 = vmatmul.mubr.bf16.gmra.mrb[0].mxu0 %v1394
    %v7658 = vpop.f32.mrb[0].mxu0
    %v7659 = vadd.f32 %v7136, %v7658
    %v7660 = vpop.f32.mrb[0].mxu0
    %v7661 = vadd.f32 %v7138, %v7660
    %v7662 = vpop.f32.mrb[0].mxu0
    %v7663 = vadd.f32 %v7140, %v7662
    %v7664 = vpop.f32.mrb[0].mxu0
    %v7665 = vadd.f32 %v7142, %v7664
    %7666 = vmatprep.mubr.bf16.mxu0 %v3129
    %7667 = vmatmul.mubr.bf16.gmra.mrb[0].mxu0 %v1400
    %v7668 = vpop.f32.mrb[0].mxu0
    %v7669 = vadd.f32 %v7146, %v7668
    %v7670 = vpop.f32.mrb[0].mxu0
    %v7671 = vadd.f32 %v7148, %v7670
    %v7672 = vpop.f32.mrb[0].mxu0
    %v7673 = vadd.f32 %v7150, %v7672
    %v7674 = vpop.f32.mrb[0].mxu0
    %v7675 = vadd.f32 %v7152, %v7674
    %7676 = vmatprep.mubr.bf16.mxu0 %v3132
    %7677 = vmatmul.mubr.bf16.gmra.mrb[0].mxu0 %v1406
    %v7678 = vpop.f32.mrb[0].mxu0
    %v7679 = vadd.f32 %v7156, %v7678
    %v7680 = vpop.f32.mrb[0].mxu0
    %v7681 = vadd.f32 %v7158, %v7680
    %v7682 = vpop.f32.mrb[0].mxu0
    %v7683 = vadd.f32 %v7160, %v7682
    %v7684 = vpop.f32.mrb[0].mxu0
    %v7685 = vadd.f32 %v7162, %v7684
    %7686 = vmatprep.mubr.bf16.mxu0 %v3135
    %7687 = vmatmul.mubr.bf16.gmra.mrb[0].mxu0 %v1412
    %v7688 = vpop.f32.mrb[0].mxu0
    %v7689 = vadd.f32 %v7166, %v7688
    %v7690 = vpop.f32.mrb[0].mxu0
    %v7691 = vadd.f32 %v7168, %v7690
    %v7692 = vpop.f32.mrb[0].mxu0
    %v7693 = vadd.f32 %v7170, %v7692
    %v7694 = vpop.f32.mrb[0].mxu0
    %v7695 = vadd.f32 %v7172, %v7694
    %7696 = vmatprep.mubr.bf16.mxu0 %v3138
    %7697 = vmatmul.mubr.bf16.gmra.mrb[0].mxu0 %v1418
    %v7698 = vpop.f32.mrb[0].mxu0
    %v7699 = vadd.f32 %v7176, %v7698
    %v7700 = vpop.f32.mrb[0].mxu0
    %v7701 = vadd.f32 %v7178, %v7700
    %v7702 = vpop.f32.mrb[0].mxu0
    %v7703 = vadd.f32 %v7180, %v7702
    %v7704 = vpop.f32.mrb[0].mxu0
    %v7705 = vadd.f32 %v7182, %v7704
    %7706 = vmatprep.mubr.bf16.mxu0 %v3141
    %7707 = vmatmul.mubr.bf16.gmra.mrb[0].mxu0 %v1424
    %v7708 = vpop.f32.mrb[0].mxu0
    %v7709 = vadd.f32 %v7186, %v7708
    %v7710 = vpop.f32.mrb[0].mxu0
    %v7711 = vadd.f32 %v7188, %v7710
    %v7712 = vpop.f32.mrb[0].mxu0
    %v7713 = vadd.f32 %v7190, %v7712
    %v7714 = vpop.f32.mrb[0].mxu0
    %v7715 = vadd.f32 %v7192, %v7714
    %7716 = vmatprep.mubr.bf16.mxu0 %v3144
    %7717 = vmatmul.mubr.bf16.gmra.mrb[0].mxu0 %v1430
    %v7718 = vpop.f32.mrb[0].mxu0
    %v7719 = vadd.f32 %v7196, %v7718
    %v7720 = vpop.f32.mrb[0].mxu0
    %v7721 = vadd.f32 %v7198, %v7720
    %v7722 = vpop.f32.mrb[0].mxu0
    %v7723 = vadd.f32 %v7200, %v7722
    %v7724 = vpop.f32.mrb[0].mxu0
    %v7725 = vadd.f32 %v7202, %v7724
    %7726 = vmatprep.mubr.bf16.mxu0 %v3147
    %7727 = vmatmul.mubr.bf16.gmra.mrb[0].mxu0 %v1436
    %v7728 = vpop.f32.mrb[0].mxu0
    %v7729 = vadd.f32 %v7206, %v7728
    %v7730 = vpop.f32.mrb[0].mxu0
    %v7731 = vadd.f32 %v7208, %v7730
    %v7732 = vpop.f32.mrb[0].mxu0
    %v7733 = vadd.f32 %v7210, %v7732
    %v7734 = vpop.f32.mrb[0].mxu0
    %v7735 = vadd.f32 %v7212, %v7734
    %7736 = vmatprep.mubr.bf16.mxu0 %v3150
    %7737 = vmatmul.mubr.bf16.gmra.mrb[0].mxu0 %v1442
    %v7738 = vpop.f32.mrb[0].mxu0
    %v7739 = vadd.f32 %v7216, %v7738
    %v7740 = vpop.f32.mrb[0].mxu0
    %v7741 = vadd.f32 %v7218, %v7740
    %v7742 = vpop.f32.mrb[0].mxu0
    %v7743 = vadd.f32 %v7220, %v7742
    %v7744 = vpop.f32.mrb[0].mxu0
    %v7745 = vadd.f32 %v7222, %v7744
    %7746 = vmatprep.mubr.bf16.mxu0 %v3153
    %7747 = vmatmul.mubr.bf16.gmra.mrb[0].mxu0 %v1448
    %v7748 = vpop.f32.mrb[0].mxu0
    %v7749 = vadd.f32 %v7226, %v7748
    %v7750 = vpop.f32.mrb[0].mxu0
    %v7751 = vadd.f32 %v7228, %v7750
    %v7752 = vpop.f32.mrb[0].mxu0
    %v7753 = vadd.f32 %v7230, %v7752
    %v7754 = vpop.f32.mrb[0].mxu0
    %v7755 = vadd.f32 %v7232, %v7754
    %7756 = vmatprep.mubr.bf16.mxu0 %v3156
    %7757 = vmatmul.mubr.bf16.gmra.mrb[0].mxu0 %v1454
    %v7758 = vpop.f32.mrb[0].mxu0
    %v7759 = vadd.f32 %v7236, %v7758
    %v7760 = vpop.f32.mrb[0].mxu0
    %v7761 = vadd.f32 %v7238, %v7760
    %v7762 = vpop.f32.mrb[0].mxu0
    %v7763 = vadd.f32 %v7240, %v7762
    %v7764 = vpop.f32.mrb[0].mxu0
    %v7765 = vadd.f32 %v7242, %v7764
    %7766 = vmatprep.mubr.bf16.mxu0 %v3159
    %7767 = vmatmul.mubr.bf16.gmra.mrb[0].mxu0 %v1460
    %v7768 = vpop.f32.mrb[0].mxu0
    %v7769 = vadd.f32 %v7246, %v7768
    %v7770 = vpop.f32.mrb[0].mxu0
    %v7771 = vadd.f32 %v7248, %v7770
    %v7772 = vpop.f32.mrb[0].mxu0
    %v7773 = vadd.f32 %v7250, %v7772
    %v7774 = vpop.f32.mrb[0].mxu0
    %v7775 = vadd.f32 %v7252, %v7774
    %7776 = vmatprep.mubr.bf16.mxu0 %v3162
    %7777 = vmatmul.mubr.bf16.gmra.mrb[0].mxu0 %v1466
    %v7778 = vpop.f32.mrb[0].mxu0
    %v7779 = vadd.f32 %v7256, %v7778
    %v7780 = vpop.f32.mrb[0].mxu0
    %v7781 = vadd.f32 %v7258, %v7780
    %v7782 = vpop.f32.mrb[0].mxu0
    %v7783 = vadd.f32 %v7260, %v7782
    %v7784 = vpop.f32.mrb[0].mxu0
    %v7785 = vadd.f32 %v7262, %v7784
    %7786 = vmatprep.mubr.bf16.mxu0 %v3165
    %7787 = vmatmul.mubr.bf16.gmra.mrb[0].mxu0 %v1472
    %v7788 = vpop.f32.mrb[0].mxu0
    %v7789 = vadd.f32 %v7266, %v7788
    %v7790 = vpop.f32.mrb[0].mxu0
    %v7791 = vadd.f32 %v7268, %v7790
    %v7792 = vpop.f32.mrb[0].mxu0
    %v7793 = vadd.f32 %v7270, %v7792
    %v7794 = vpop.f32.mrb[0].mxu0
    %v7795 = vadd.f32 %v7272, %v7794
    %7796 = vmatprep.mubr.bf16.mxu0 %v3168
    %7797 = vmatmul.mubr.bf16.gmra.mrb[0].mxu0 %v1478
    %v7798 = vpop.f32.mrb[0].mxu0
    %v7799 = vadd.f32 %v7276, %v7798
    %v7800 = vpop.f32.mrb[0].mxu0
    %v7801 = vadd.f32 %v7278, %v7800
    %v7802 = vpop.f32.mrb[0].mxu0
    %v7803 = vadd.f32 %v7280, %v7802
    %v7804 = vpop.f32.mrb[0].mxu0
    %v7805 = vadd.f32 %v7282, %v7804
    %7806 = vmatprep.mubr.bf16.mxu0 %v3171
    %7807 = vmatmul.mubr.bf16.gmra.mrb[0].mxu0 %v1484
    %v7808 = vpop.f32.mrb[0].mxu0
    %v7809 = vadd.f32 %v7286, %v7808
    %v7810 = vpop.f32.mrb[0].mxu0
    %v7811 = vadd.f32 %v7288, %v7810
    %v7812 = vpop.f32.mrb[0].mxu0
    %v7813 = vadd.f32 %v7290, %v7812
    %v7814 = vpop.f32.mrb[0].mxu0
    %v7815 = vadd.f32 %v7292, %v7814
    %7816 = vmatprep.mubr.bf16.mxu0 %v3174
    %7817 = vmatmul.mubr.bf16.gmra.mrb[0].mxu0 %v1490
    %v7818 = vpop.f32.mrb[0].mxu0
    %v7819 = vadd.f32 %v7296, %v7818
    %v7820 = vpop.f32.mrb[0].mxu0
    %v7821 = vadd.f32 %v7298, %v7820
    %v7822 = vpop.f32.mrb[0].mxu0
    %v7823 = vadd.f32 %v7300, %v7822
    %v7824 = vpop.f32.mrb[0].mxu0
    %v7825 = vadd.f32 %v7302, %v7824
    %7826 = vmatprep.mubr.bf16.mxu0 %v3177
    %7827 = vmatmul.mubr.bf16.gmra.mrb[0].mxu0 %v1496
    %v7828 = vpop.f32.mrb[0].mxu0
    %v7829 = vadd.f32 %v7306, %v7828
    %v7830 = vpop.f32.mrb[0].mxu0
    %v7831 = vadd.f32 %v7308, %v7830
    %v7832 = vpop.f32.mrb[0].mxu0
    %v7833 = vadd.f32 %v7310, %v7832
    %v7834 = vpop.f32.mrb[0].mxu0
    %v7835 = vadd.f32 %v7312, %v7834
    %7836 = vmatprep.mubr.bf16.mxu0 %v3180
    %7837 = vmatmul.mubr.bf16.gmra.mrb[0].mxu0 %v1502
    %v7838 = vpop.f32.mrb[0].mxu0
    %v7839 = vadd.f32 %v7316, %v7838
    %v7840 = vpop.f32.mrb[0].mxu0
    %v7841 = vadd.f32 %v7318, %v7840
    %v7842 = vpop.f32.mrb[0].mxu0
    %v7843 = vadd.f32 %v7320, %v7842
    %v7844 = vpop.f32.mrb[0].mxu0
    %v7845 = vadd.f32 %v7322, %v7844
    %7846 = vmatprep.mubr.bf16.mxu0 %v3183
    %7847 = vmatmul.mubr.bf16.gmra.mrb[0].mxu0 %v1508
    %v7848 = vpop.f32.mrb[0].mxu0
    %v7849 = vadd.f32 %v7326, %v7848
    %v7850 = vpop.f32.mrb[0].mxu0
    %v7851 = vadd.f32 %v7328, %v7850
    %v7852 = vpop.f32.mrb[0].mxu0
    %v7853 = vadd.f32 %v7330, %v7852
    %v7854 = vpop.f32.mrb[0].mxu0
    %v7855 = vadd.f32 %v7332, %v7854
    %7856 = vmatprep.mubr.bf16.mxu0 %v3186
    %7857 = vmatmul.mubr.bf16.gmra.mrb[0].mxu0 %v1514
    %v7858 = vpop.f32.mrb[0].mxu0
    %v7859 = vadd.f32 %v7336, %v7858
    %v7860 = vpop.f32.mrb[0].mxu0
    %v7861 = vadd.f32 %v7338, %v7860
    %v7862 = vpop.f32.mrb[0].mxu0
    %v7863 = vadd.f32 %v7340, %v7862
    %v7864 = vpop.f32.mrb[0].mxu0
    %v7865 = vadd.f32 %v7342, %v7864
    %7866 = vmatprep.mubr.bf16.mxu0 %v3189
    %7867 = vmatmul.mubr.bf16.gmra.mrb[0].mxu0 %v1520
    %v7868 = vpop.f32.mrb[0].mxu0
    %v7869 = vadd.f32 %v7346, %v7868
    %v7870 = vpop.f32.mrb[0].mxu0
    %v7871 = vadd.f32 %v7348, %v7870
    %v7872 = vpop.f32.mrb[0].mxu0
    %v7873 = vadd.f32 %v7350, %v7872
    %v7874 = vpop.f32.mrb[0].mxu0
    %v7875 = vadd.f32 %v7352, %v7874
    %7876 = vmatprep.mubr.bf16.mxu0 %v3192
    %7877 = vmatmul.mubr.bf16.gmra.mrb[0].mxu0 %v1526
    %v7878 = vpop.f32.mrb[0].mxu0
    %v7879 = vadd.f32 %v7356, %v7878
    %v7880 = vpop.f32.mrb[0].mxu0
    %v7881 = vadd.f32 %v7358, %v7880
    %v7882 = vpop.f32.mrb[0].mxu0
    %v7883 = vadd.f32 %v7360, %v7882
    %v7884 = vpop.f32.mrb[0].mxu0
    %v7885 = vadd.f32 %v7362, %v7884
    %7886 = vmatprep.mubr.bf16.mxu0 %v3195
    %7887 = vmatmul.mubr.bf16.gmra.mrb[0].mxu0 %v1532
    %v7888 = vpop.f32.mrb[0].mxu0
    %v7889 = vadd.f32 %v7366, %v7888
    %v7890 = vpop.f32.mrb[0].mxu0
    %v7891 = vadd.f32 %v7368, %v7890
    %v7892 = vpop.f32.mrb[0].mxu0
    %v7893 = vadd.f32 %v7370, %v7892
    %v7894 = vpop.f32.mrb[0].mxu0
    %v7895 = vadd.f32 %v7372, %v7894
    %7896 = vmatprep.mubr.bf16.mxu0 %v3198
    %7897 = vmatmul.mubr.bf16.gmra.mrb[0].mxu0 %v1538
    %v7898 = vpop.f32.mrb[0].mxu0
    %v7899 = vadd.f32 %v7376, %v7898
    %v7900 = vpop.f32.mrb[0].mxu0
    %v7901 = vadd.f32 %v7378, %v7900
    %v7902 = vpop.f32.mrb[0].mxu0
    %v7903 = vadd.f32 %v7380, %v7902
    %v7904 = vpop.f32.mrb[0].mxu0
    %v7905 = vadd.f32 %v7382, %v7904
    %7906 = vdwg.mxu0
    %v7907 = vadd.f32 %v4281, %v4285
    %v7908 = vadd.f32 %v7907, %v4291
    %v7909 = vadd.f32 %v7908, %v4295
    %v7910 = vadd.f32 %v7909, %v4301
    %v7911 = vadd.f32 %v7910, %v4305
    %v7912 = vadd.f32 %v7911, %v4311
    %v7913 = vadd.f32 %v7912, %v4315
    %v7914 = vadd.f32 %v7913, %v4321
    %v7915 = vadd.f32 %v7914, %v4325
    %v7916 = vadd.f32 %v7915, %v4331
    %v7917 = vadd.f32 %v7916, %v4335
    %v7918 = vadd.f32 %v7917, %v4341
    %v7919 = vadd.f32 %v7918, %v4345
    %v7920 = vadd.f32 %v7919, %v4351
    %v7921 = vadd.f32 %v7920, %v4355
    %v7922 = vadd.f32 %v7921, %v4361
    %v7923 = vadd.f32 %v7922, %v4365
    %v7924 = vadd.f32 %v7923, %v4371
    %v7925 = vadd.f32 %v7924, %v4375
    %v7926 = vadd.f32 %v7925, %v4381
    %v7927 = vadd.f32 %v7926, %v4385
    %v7928 = vadd.f32 %v7927, %v4391
    %v7929 = vadd.f32 %v7928, %v4395
    %v7930 = vadd.f32 %v7929, %v4401
    %v7931 = vadd.f32 %v7930, %v4405
    %v7932 = vadd.f32 %v7931, %v4411
    %v7933 = vadd.f32 %v7932, %v4415
    %v7934 = vadd.f32 %v7933, %v4421
    %v7935 = vadd.f32 %v7934, %v4425
    %v7936 = vadd.f32 %v7935, %v4431
    %v7937 = vadd.f32 %v7936, %v4435
    %v7938 = vadd.f32 %v7937, %v4441
    %v7939 = vadd.f32 %v7938, %v4445
    %v7940 = vadd.f32 %v7939, %v4451
    %v7941 = vadd.f32 %v7940, %v4455
    %v7942 = vadd.f32 %v7941, %v4461
    %v7943 = vadd.f32 %v7942, %v4465
    %v7944 = vadd.f32 %v7943, %v4471
    %v7945 = vadd.f32 %v7944, %v4475
    %v7946 = vadd.f32 %v7945, %v4481
    %v7947 = vadd.f32 %v7946, %v4485
    %v7948 = vadd.f32 %v7947, %v4491
    %v7949 = vadd.f32 %v7948, %v4495
    %v7950 = vadd.f32 %v7949, %v4501
    %v7951 = vadd.f32 %v7950, %v4505
    %v7952 = vadd.f32 %v7951, %v4511
    %v7953 = vadd.f32 %v7952, %v4515
    %v7954 = vadd.f32 %v7953, %v4521
    %v7955 = vadd.f32 %v7954, %v4525
    %v7956 = vadd.f32 %v7955, %v4531
    %v7957 = vadd.f32 %v7956, %v4535
    %v7958 = vadd.f32 %v7957, %v4541
    %v7959 = vadd.f32 %v7958, %v4545
    %v7960 = vadd.f32 %v7959, %v4551
    %v7961 = vadd.f32 %v7960, %v4555
    %v7962 = vadd.f32 %v7961, %v4561
    %v7963 = vadd.f32 %v7962, %v4565
    %v7964 = vadd.f32 %v7963, %v4571
    %v7965 = vadd.f32 %v7964, %v4575
    %v7966 = vadd.f32 %v7965, %v4581
    %v7967 = vadd.f32 %v7966, %v4585
    %v7968 = vadd.f32 %v7967, %v4591
    %v7969 = vadd.f32 %v7968, %v4595
    %v7970 = vadd.f32 %v7969, %v4601
    %v7971 = vadd.f32 %v7970, %v4605
    %v7972 = vadd.f32 %v7971, %v4611
    %v7973 = vadd.f32 %v7972, %v4615
    %v7974 = vadd.f32 %v7973, %v4621
    %v7975 = vadd.f32 %v7974, %v4625
    %v7976 = vadd.f32 %v7975, %v4631
    %v7977 = vadd.f32 %v7976, %v4635
    %v7978 = vadd.f32 %v7977, %v4641
    %v7979 = vadd.f32 %v7978, %v4645
    %v7980 = vadd.f32 %v7979, %v4651
    %v7981 = vadd.f32 %v7980, %v4655
    %v7982 = vadd.f32 %v7981, %v4661
    %v7983 = vadd.f32 %v7982, %v4665
    %v7984 = vadd.f32 %v7983, %v4671
    %v7985 = vadd.f32 %v7984, %v4675
    %v7986 = vadd.f32 %v7985, %v4681
    %v7987 = vadd.f32 %v7986, %v4685
    %v7988 = vadd.f32 %v7987, %v4691
    %v7989 = vadd.f32 %v7988, %v4695
    %v7990 = vadd.f32 %v7989, %v4701
    %v7991 = vadd.f32 %v7990, %v4705
    %v7992 = vadd.f32 %v7991, %v4711
    %v7993 = vadd.f32 %v7992, %v4715
    %v7994 = vadd.f32 %v7993, %v4721
    %v7995 = vadd.f32 %v7994, %v4725
    %v7996 = vadd.f32 %v7995, %v4731
    %v7997 = vadd.f32 %v7996, %v4735
    %v7998 = vadd.f32 %v7997, %v4741
    %v7999 = vadd.f32 %v7998, %v4745
    %v8000 = vadd.f32 %v7999, %v4751
    %v8001 = vadd.f32 %v8000, %v4755
    %v8002 = vadd.f32 %v8001, %v4761
    %v8003 = vadd.f32 %v8002, %v4765
    %v8004 = vrot.slane %v8003, 4
    %v8005 = vadd.f32 %v8003, %v8004
    %v8006 = vrot.slane %v8005, 2
    %v8007 = vadd.f32 %v8005, %v8006
    %v8008 = vrot.slane %v8007, 1
    %v8009 = vadd.f32 %v8007, %v8008
    %v8010 = vadd.f32 %v4283, %v4287
    %v8011 = vadd.f32 %v8010, %v4293
    %v8012 = vadd.f32 %v8011, %v4297
    %v8013 = vadd.f32 %v8012, %v4303
    %v8014 = vadd.f32 %v8013, %v4307
    %v8015 = vadd.f32 %v8014, %v4313
    %v8016 = vadd.f32 %v8015, %v4317
    %v8017 = vadd.f32 %v8016, %v4323
    %v8018 = vadd.f32 %v8017, %v4327
    %v8019 = vadd.f32 %v8018, %v4333
    %v8020 = vadd.f32 %v8019, %v4337
    %v8021 = vadd.f32 %v8020, %v4343
    %v8022 = vadd.f32 %v8021, %v4347
    %v8023 = vadd.f32 %v8022, %v4353
    %v8024 = vadd.f32 %v8023, %v4357
    %v8025 = vadd.f32 %v8024, %v4363
    %v8026 = vadd.f32 %v8025, %v4367
    %v8027 = vadd.f32 %v8026, %v4373
    %v8028 = vadd.f32 %v8027, %v4377
    %v8029 = vadd.f32 %v8028, %v4383
    %v8030 = vadd.f32 %v8029, %v4387
    %v8031 = vadd.f32 %v8030, %v4393
    %v8032 = vadd.f32 %v8031, %v4397
    %v8033 = vadd.f32 %v8032, %v4403
    %v8034 = vadd.f32 %v8033, %v4407
    %v8035 = vadd.f32 %v8034, %v4413
    %v8036 = vadd.f32 %v8035, %v4417
    %v8037 = vadd.f32 %v8036, %v4423
    %v8038 = vadd.f32 %v8037, %v4427
    %v8039 = vadd.f32 %v8038, %v4433
    %v8040 = vadd.f32 %v8039, %v4437
    %v8041 = vadd.f32 %v8040, %v4443
    %v8042 = vadd.f32 %v8041, %v4447
    %v8043 = vadd.f32 %v8042, %v4453
    %v8044 = vadd.f32 %v8043, %v4457
    %v8045 = vadd.f32 %v8044, %v4463
    %v8046 = vadd.f32 %v8045, %v4467
    %v8047 = vadd.f32 %v8046, %v4473
    %v8048 = vadd.f32 %v8047, %v4477
    %v8049 = vadd.f32 %v8048, %v4483
    %v8050 = vadd.f32 %v8049, %v4487
    %v8051 = vadd.f32 %v8050, %v4493
    %v8052 = vadd.f32 %v8051, %v4497
    %v8053 = vadd.f32 %v8052, %v4503
    %v8054 = vadd.f32 %v8053, %v4507
    %v8055 = vadd.f32 %v8054, %v4513
    %v8056 = vadd.f32 %v8055, %v4517
    %v8057 = vadd.f32 %v8056, %v4523
    %v8058 = vadd.f32 %v8057, %v4527
    %v8059 = vadd.f32 %v8058, %v4533
    %v8060 = vadd.f32 %v8059, %v4537
    %v8061 = vadd.f32 %v8060, %v4543
    %v8062 = vadd.f32 %v8061, %v4547
    %v8063 = vadd.f32 %v8062, %v4553
    %v8064 = vadd.f32 %v8063, %v4557
    %v8065 = vadd.f32 %v8064, %v4563
    %v8066 = vadd.f32 %v8065, %v4567
    %v8067 = vadd.f32 %v8066, %v4573
    %v8068 = vadd.f32 %v8067, %v4577
    %v8069 = vadd.f32 %v8068, %v4583
    %v8070 = vadd.f32 %v8069, %v4587
    %v8071 = vadd.f32 %v8070, %v4593
    %v8072 = vadd.f32 %v8071, %v4597
    %v8073 = vadd.f32 %v8072, %v4603
    %v8074 = vadd.f32 %v8073, %v4607
    %v8075 = vadd.f32 %v8074, %v4613
    %v8076 = vadd.f32 %v8075, %v4617
    %v8077 = vadd.f32 %v8076, %v4623
    %v8078 = vadd.f32 %v8077, %v4627
    %v8079 = vadd.f32 %v8078, %v4633
    %v8080 = vadd.f32 %v8079, %v4637
    %v8081 = vadd.f32 %v8080, %v4643
    %v8082 = vadd.f32 %v8081, %v4647
    %v8083 = vadd.f32 %v8082, %v4653
    %v8084 = vadd.f32 %v8083, %v4657
    %v8085 = vadd.f32 %v8084, %v4663
    %v8086 = vadd.f32 %v8085, %v4667
    %v8087 = vadd.f32 %v8086, %v4673
    %v8088 = vadd.f32 %v8087, %v4677
    %v8089 = vadd.f32 %v8088, %v4683
    %v8090 = vadd.f32 %v8089, %v4687
    %v8091 = vadd.f32 %v8090, %v4693
    %v8092 = vadd.f32 %v8091, %v4697
    %v8093 = vadd.f32 %v8092, %v4703
    %v8094 = vadd.f32 %v8093, %v4707
    %v8095 = vadd.f32 %v8094, %v4713
    %v8096 = vadd.f32 %v8095, %v4717
    %v8097 = vadd.f32 %v8096, %v4723
    %v8098 = vadd.f32 %v8097, %v4727
    %v8099 = vadd.f32 %v8098, %v4733
    %v8100 = vadd.f32 %v8099, %v4737
    %v8101 = vadd.f32 %v8100, %v4743
    %v8102 = vadd.f32 %v8101, %v4747
    %v8103 = vadd.f32 %v8102, %v4753
    %v8104 = vadd.f32 %v8103, %v4757
    %v8105 = vadd.f32 %v8104, %v4763
    %v8106 = vadd.f32 %v8105, %v4767
    %v8107 = vrot.slane %v8106, 4
    %v8108 = vadd.f32 %v8106, %v8107
    %v8109 = vrot.slane %v8108, 2
    %v8110 = vadd.f32 %v8108, %v8109
    %v8111 = vrot.slane %v8110, 1
    %v8112 = vadd.f32 %v8110, %v8111
    %v8113 = vadd.f32 %v5850, %v5854
    %v8114 = vadd.f32 %v8113, %v5860
    %v8115 = vadd.f32 %v8114, %v5864
    %v8116 = vadd.f32 %v8115, %v5870
    %v8117 = vadd.f32 %v8116, %v5874
    %v8118 = vadd.f32 %v8117, %v5880
    %v8119 = vadd.f32 %v8118, %v5884
    %v8120 = vadd.f32 %v8119, %v5890
    %v8121 = vadd.f32 %v8120, %v5894
    %v8122 = vadd.f32 %v8121, %v5900
    %v8123 = vadd.f32 %v8122, %v5904
    %v8124 = vadd.f32 %v8123, %v5910
    %v8125 = vadd.f32 %v8124, %v5914
    %v8126 = vadd.f32 %v8125, %v5920
    %v8127 = vadd.f32 %v8126, %v5924
    %v8128 = vadd.f32 %v8127, %v5930
    %v8129 = vadd.f32 %v8128, %v5934
    %v8130 = vadd.f32 %v8129, %v5940
    %v8131 = vadd.f32 %v8130, %v5944
    %v8132 = vadd.f32 %v8131, %v5950
    %v8133 = vadd.f32 %v8132, %v5954
    %v8134 = vadd.f32 %v8133, %v5960
    %v8135 = vadd.f32 %v8134, %v5964
    %v8136 = vadd.f32 %v8135, %v5970
    %v8137 = vadd.f32 %v8136, %v5974
    %v8138 = vadd.f32 %v8137, %v5980
    %v8139 = vadd.f32 %v8138, %v5984
    %v8140 = vadd.f32 %v8139, %v5990
    %v8141 = vadd.f32 %v8140, %v5994
    %v8142 = vadd.f32 %v8141, %v6000
    %v8143 = vadd.f32 %v8142, %v6004
    %v8144 = vadd.f32 %v8143, %v6010
    %v8145 = vadd.f32 %v8144, %v6014
    %v8146 = vadd.f32 %v8145, %v6020
    %v8147 = vadd.f32 %v8146, %v6024
    %v8148 = vadd.f32 %v8147, %v6030
    %v8149 = vadd.f32 %v8148, %v6034
    %v8150 = vadd.f32 %v8149, %v6040
    %v8151 = vadd.f32 %v8150, %v6044
    %v8152 = vadd.f32 %v8151, %v6050
    %v8153 = vadd.f32 %v8152, %v6054
    %v8154 = vadd.f32 %v8153, %v6060
    %v8155 = vadd.f32 %v8154, %v6064
    %v8156 = vadd.f32 %v8155, %v6070
    %v8157 = vadd.f32 %v8156, %v6074
    %v8158 = vadd.f32 %v8157, %v6080
    %v8159 = vadd.f32 %v8158, %v6084
    %v8160 = vadd.f32 %v8159, %v6090
    %v8161 = vadd.f32 %v8160, %v6094
    %v8162 = vadd.f32 %v8161, %v6100
    %v8163 = vadd.f32 %v8162, %v6104
    %v8164 = vadd.f32 %v8163, %v6110
    %v8165 = vadd.f32 %v8164, %v6114
    %v8166 = vadd.f32 %v8165, %v6120
    %v8167 = vadd.f32 %v8166, %v6124
    %v8168 = vadd.f32 %v8167, %v6130
    %v8169 = vadd.f32 %v8168, %v6134
    %v8170 = vadd.f32 %v8169, %v6140
    %v8171 = vadd.f32 %v8170, %v6144
    %v8172 = vadd.f32 %v8171, %v6150
    %v8173 = vadd.f32 %v8172, %v6154
    %v8174 = vadd.f32 %v8173, %v6160
    %v8175 = vadd.f32 %v8174, %v6164
    %v8176 = vadd.f32 %v8175, %v6170
    %v8177 = vadd.f32 %v8176, %v6174
    %v8178 = vadd.f32 %v8177, %v6180
    %v8179 = vadd.f32 %v8178, %v6184
    %v8180 = vadd.f32 %v8179, %v6190
    %v8181 = vadd.f32 %v8180, %v6194
    %v8182 = vadd.f32 %v8181, %v6200
    %v8183 = vadd.f32 %v8182, %v6204
    %v8184 = vadd.f32 %v8183, %v6210
    %v8185 = vadd.f32 %v8184, %v6214
    %v8186 = vadd.f32 %v8185, %v6220
    %v8187 = vadd.f32 %v8186, %v6224
    %v8188 = vadd.f32 %v8187, %v6230
    %v8189 = vadd.f32 %v8188, %v6234
    %v8190 = vadd.f32 %v8189, %v6240
    %v8191 = vadd.f32 %v8190, %v6244
    %v8192 = vadd.f32 %v8191, %v6250
    %v8193 = vadd.f32 %v8192, %v6254
    %v8194 = vadd.f32 %v8193, %v6260
    %v8195 = vadd.f32 %v8194, %v6264
    %v8196 = vadd.f32 %v8195, %v6270
    %v8197 = vadd.f32 %v8196, %v6274
    %v8198 = vadd.f32 %v8197, %v6280
    %v8199 = vadd.f32 %v8198, %v6284
    %v8200 = vadd.f32 %v8199, %v6290
    %v8201 = vadd.f32 %v8200, %v6294
    %v8202 = vadd.f32 %v8201, %v6300
    %v8203 = vadd.f32 %v8202, %v6304
    %v8204 = vadd.f32 %v8203, %v6310
    %v8205 = vadd.f32 %v8204, %v6314
    %v8206 = vadd.f32 %v8205, %v6320
    %v8207 = vadd.f32 %v8206, %v6324
    %v8208 = vadd.f32 %v8207, %v6330
    %v8209 = vadd.f32 %v8208, %v6334
    %v8210 = vrot.slane %v8209, 4
    %v8211 = vadd.f32 %v8209, %v8210
    %v8212 = vrot.slane %v8211, 2
    %v8213 = vadd.f32 %v8211, %v8212
    %v8214 = vrot.slane %v8213, 1
    %v8215 = vadd.f32 %v8213, %v8214
    %v8216 = vadd.f32 %v5852, %v5856
    %v8217 = vadd.f32 %v8216, %v5862
    %v8218 = vadd.f32 %v8217, %v5866
    %v8219 = vadd.f32 %v8218, %v5872
    %v8220 = vadd.f32 %v8219, %v5876
    %v8221 = vadd.f32 %v8220, %v5882
    %v8222 = vadd.f32 %v8221, %v5886
    %v8223 = vadd.f32 %v8222, %v5892
    %v8224 = vadd.f32 %v8223, %v5896
    %v8225 = vadd.f32 %v8224, %v5902
    %v8226 = vadd.f32 %v8225, %v5906
    %v8227 = vadd.f32 %v8226, %v5912
    %v8228 = vadd.f32 %v8227, %v5916
    %v8229 = vadd.f32 %v8228, %v5922
    %v8230 = vadd.f32 %v8229, %v5926
    %v8231 = vadd.f32 %v8230, %v5932
    %v8232 = vadd.f32 %v8231, %v5936
    %v8233 = vadd.f32 %v8232, %v5942
    %v8234 = vadd.f32 %v8233, %v5946
    %v8235 = vadd.f32 %v8234, %v5952
    %v8236 = vadd.f32 %v8235, %v5956
    %v8237 = vadd.f32 %v8236, %v5962
    %v8238 = vadd.f32 %v8237, %v5966
    %v8239 = vadd.f32 %v8238, %v5972
    %v8240 = vadd.f32 %v8239, %v5976
    %v8241 = vadd.f32 %v8240, %v5982
    %v8242 = vadd.f32 %v8241, %v5986
    %v8243 = vadd.f32 %v8242, %v5992
    %v8244 = vadd.f32 %v8243, %v5996
    %v8245 = vadd.f32 %v8244, %v6002
    %v8246 = vadd.f32 %v8245, %v6006
    %v8247 = vadd.f32 %v8246, %v6012
    %v8248 = vadd.f32 %v8247, %v6016
    %v8249 = vadd.f32 %v8248, %v6022
    %v8250 = vadd.f32 %v8249, %v6026
    %v8251 = vadd.f32 %v8250, %v6032
    %v8252 = vadd.f32 %v8251, %v6036
    %v8253 = vadd.f32 %v8252, %v6042
    %v8254 = vadd.f32 %v8253, %v6046
    %v8255 = vadd.f32 %v8254, %v6052
    %v8256 = vadd.f32 %v8255, %v6056
    %v8257 = vadd.f32 %v8256, %v6062
    %v8258 = vadd.f32 %v8257, %v6066
    %v8259 = vadd.f32 %v8258, %v6072
    %v8260 = vadd.f32 %v8259, %v6076
    %v8261 = vadd.f32 %v8260, %v6082
    %v8262 = vadd.f32 %v8261, %v6086
    %v8263 = vadd.f32 %v8262, %v6092
    %v8264 = vadd.f32 %v8263, %v6096
    %v8265 = vadd.f32 %v8264, %v6102
    %v8266 = vadd.f32 %v8265, %v6106
    %v8267 = vadd.f32 %v8266, %v6112
    %v8268 = vadd.f32 %v8267, %v6116
    %v8269 = vadd.f32 %v8268, %v6122
    %v8270 = vadd.f32 %v8269, %v6126
    %v8271 = vadd.f32 %v8270, %v6132
    %v8272 = vadd.f32 %v8271, %v6136
    %v8273 = vadd.f32 %v8272, %v6142
    %v8274 = vadd.f32 %v8273, %v6146
    %v8275 = vadd.f32 %v8274, %v6152
    %v8276 = vadd.f32 %v8275, %v6156
    %v8277 = vadd.f32 %v8276, %v6162
    %v8278 = vadd.f32 %v8277, %v6166
    %v8279 = vadd.f32 %v8278, %v6172
    %v8280 = vadd.f32 %v8279, %v6176
    %v8281 = vadd.f32 %v8280, %v6182
    %v8282 = vadd.f32 %v8281, %v6186
    %v8283 = vadd.f32 %v8282, %v6192
    %v8284 = vadd.f32 %v8283, %v6196
    %v8285 = vadd.f32 %v8284, %v6202
    %v8286 = vadd.f32 %v8285, %v6206
    %v8287 = vadd.f32 %v8286, %v6212
    %v8288 = vadd.f32 %v8287, %v6216
    %v8289 = vadd.f32 %v8288, %v6222
    %v8290 = vadd.f32 %v8289, %v6226
    %v8291 = vadd.f32 %v8290, %v6232
    %v8292 = vadd.f32 %v8291, %v6236
    %v8293 = vadd.f32 %v8292, %v6242
    %v8294 = vadd.f32 %v8293, %v6246
    %v8295 = vadd.f32 %v8294, %v6252
    %v8296 = vadd.f32 %v8295, %v6256
    %v8297 = vadd.f32 %v8296, %v6262
    %v8298 = vadd.f32 %v8297, %v6266
    %v8299 = vadd.f32 %v8298, %v6272
    %v8300 = vadd.f32 %v8299, %v6276
    %v8301 = vadd.f32 %v8300, %v6282
    %v8302 = vadd.f32 %v8301, %v6286
    %v8303 = vadd.f32 %v8302, %v6292
    %v8304 = vadd.f32 %v8303, %v6296
    %v8305 = vadd.f32 %v8304, %v6302
    %v8306 = vadd.f32 %v8305, %v6306
    %v8307 = vadd.f32 %v8306, %v6312
    %v8308 = vadd.f32 %v8307, %v6316
    %v8309 = vadd.f32 %v8308, %v6322
    %v8310 = vadd.f32 %v8309, %v6326
    %v8311 = vadd.f32 %v8310, %v6332
    %v8312 = vadd.f32 %v8311, %v6336
    %v8313 = vrot.slane %v8312, 4
    %v8314 = vadd.f32 %v8312, %v8313
    %v8315 = vrot.slane %v8314, 2
    %v8316 = vadd.f32 %v8314, %v8315
    %v8317 = vrot.slane %v8316, 1
    %v8318 = vadd.f32 %v8316, %v8317
    %v8319 = vadd.f32 %v7419, %v7423
    %v8320 = vadd.f32 %v8319, %v7429
    %v8321 = vadd.f32 %v8320, %v7433
    %v8322 = vadd.f32 %v8321, %v7439
    %v8323 = vadd.f32 %v8322, %v7443
    %v8324 = vadd.f32 %v8323, %v7449
    %v8325 = vadd.f32 %v8324, %v7453
    %v8326 = vadd.f32 %v8325, %v7459
    %v8327 = vadd.f32 %v8326, %v7463
    %v8328 = vadd.f32 %v8327, %v7469
    %v8329 = vadd.f32 %v8328, %v7473
    %v8330 = vadd.f32 %v8329, %v7479
    %v8331 = vadd.f32 %v8330, %v7483
    %v8332 = vadd.f32 %v8331, %v7489
    %v8333 = vadd.f32 %v8332, %v7493
    %v8334 = vadd.f32 %v8333, %v7499
    %v8335 = vadd.f32 %v8334, %v7503
    %v8336 = vadd.f32 %v8335, %v7509
    %v8337 = vadd.f32 %v8336, %v7513
    %v8338 = vadd.f32 %v8337, %v7519
    %v8339 = vadd.f32 %v8338, %v7523
    %v8340 = vadd.f32 %v8339, %v7529
    %v8341 = vadd.f32 %v8340, %v7533
    %v8342 = vadd.f32 %v8341, %v7539
    %v8343 = vadd.f32 %v8342, %v7543
    %v8344 = vadd.f32 %v8343, %v7549
    %v8345 = vadd.f32 %v8344, %v7553
    %v8346 = vadd.f32 %v8345, %v7559
    %v8347 = vadd.f32 %v8346, %v7563
    %v8348 = vadd.f32 %v8347, %v7569
    %v8349 = vadd.f32 %v8348, %v7573
    %v8350 = vadd.f32 %v8349, %v7579
    %v8351 = vadd.f32 %v8350, %v7583
    %v8352 = vadd.f32 %v8351, %v7589
    %v8353 = vadd.f32 %v8352, %v7593
    %v8354 = vadd.f32 %v8353, %v7599
    %v8355 = vadd.f32 %v8354, %v7603
    %v8356 = vadd.f32 %v8355, %v7609
    %v8357 = vadd.f32 %v8356, %v7613
    %v8358 = vadd.f32 %v8357, %v7619
    %v8359 = vadd.f32 %v8358, %v7623
    %v8360 = vadd.f32 %v8359, %v7629
    %v8361 = vadd.f32 %v8360, %v7633
    %v8362 = vadd.f32 %v8361, %v7639
    %v8363 = vadd.f32 %v8362, %v7643
    %v8364 = vadd.f32 %v8363, %v7649
    %v8365 = vadd.f32 %v8364, %v7653
    %v8366 = vadd.f32 %v8365, %v7659
    %v8367 = vadd.f32 %v8366, %v7663
    %v8368 = vadd.f32 %v8367, %v7669
    %v8369 = vadd.f32 %v8368, %v7673
    %v8370 = vadd.f32 %v8369, %v7679
    %v8371 = vadd.f32 %v8370, %v7683
    %v8372 = vadd.f32 %v8371, %v7689
    %v8373 = vadd.f32 %v8372, %v7693
    %v8374 = vadd.f32 %v8373, %v7699
    %v8375 = vadd.f32 %v8374, %v7703
    %v8376 = vadd.f32 %v8375, %v7709
    %v8377 = vadd.f32 %v8376, %v7713
    %v8378 = vadd.f32 %v8377, %v7719
    %v8379 = vadd.f32 %v8378, %v7723
    %v8380 = vadd.f32 %v8379, %v7729
    %v8381 = vadd.f32 %v8380, %v7733
    %v8382 = vadd.f32 %v8381, %v7739
    %v8383 = vadd.f32 %v8382, %v7743
    %v8384 = vadd.f32 %v8383, %v7749
    %v8385 = vadd.f32 %v8384, %v7753
    %v8386 = vadd.f32 %v8385, %v7759
    %v8387 = vadd.f32 %v8386, %v7763
    %v8388 = vadd.f32 %v8387, %v7769
    %v8389 = vadd.f32 %v8388, %v7773
    %v8390 = vadd.f32 %v8389, %v7779
    %v8391 = vadd.f32 %v8390, %v7783
    %v8392 = vadd.f32 %v8391, %v7789
    %v8393 = vadd.f32 %v8392, %v7793
    %v8394 = vadd.f32 %v8393, %v7799
    %v8395 = vadd.f32 %v8394, %v7803
    %v8396 = vadd.f32 %v8395, %v7809
    %v8397 = vadd.f32 %v8396, %v7813
    %v8398 = vadd.f32 %v8397, %v7819
    %v8399 = vadd.f32 %v8398, %v7823
    %v8400 = vadd.f32 %v8399, %v7829
    %v8401 = vadd.f32 %v8400, %v7833
    %v8402 = vadd.f32 %v8401, %v7839
    %v8403 = vadd.f32 %v8402, %v7843
    %v8404 = vadd.f32 %v8403, %v7849
    %v8405 = vadd.f32 %v8404, %v7853
    %v8406 = vadd.f32 %v8405, %v7859
    %v8407 = vadd.f32 %v8406, %v7863
    %v8408 = vadd.f32 %v8407, %v7869
    %v8409 = vadd.f32 %v8408, %v7873
    %v8410 = vadd.f32 %v8409, %v7879
    %v8411 = vadd.f32 %v8410, %v7883
    %v8412 = vadd.f32 %v8411, %v7889
    %v8413 = vadd.f32 %v8412, %v7893
    %v8414 = vadd.f32 %v8413, %v7899
    %v8415 = vadd.f32 %v8414, %v7903
    %v8416 = vrot.slane %v8415, 4
    %v8417 = vadd.f32 %v8415, %v8416
    %v8418 = vrot.slane %v8417, 2
    %v8419 = vadd.f32 %v8417, %v8418
    %v8420 = vrot.slane %v8419, 1
    %v8421 = vadd.f32 %v8419, %v8420
    %v8422 = vsel %vm3052, %v7421, 0.0
    %v8423 = vsel %vm3052, %v7425, 0.0
    %v8424 = vadd.f32 %v8422, %v8423
    %v8425 = vsel %vm3052, %v7431, 0.0
    %v8426 = vadd.f32 %v8424, %v8425
    %v8427 = vsel %vm3052, %v7435, 0.0
    %v8428 = vadd.f32 %v8426, %v8427
    %v8429 = vsel %vm3052, %v7441, 0.0
    %v8430 = vadd.f32 %v8428, %v8429
    %v8431 = vsel %vm3052, %v7445, 0.0
    %v8432 = vadd.f32 %v8430, %v8431
    %v8433 = vsel %vm3052, %v7451, 0.0
    %v8434 = vadd.f32 %v8432, %v8433
    %v8435 = vsel %vm3052, %v7455, 0.0
    %v8436 = vadd.f32 %v8434, %v8435
    %v8437 = vsel %vm3052, %v7461, 0.0
    %v8438 = vadd.f32 %v8436, %v8437
    %v8439 = vsel %vm3052, %v7465, 0.0
    %v8440 = vadd.f32 %v8438, %v8439
    %v8441 = vsel %vm3052, %v7471, 0.0
    %v8442 = vadd.f32 %v8440, %v8441
    %v8443 = vsel %vm3052, %v7475, 0.0
    %v8444 = vadd.f32 %v8442, %v8443
    %v8445 = vsel %vm3052, %v7481, 0.0
    %v8446 = vadd.f32 %v8444, %v8445
    %v8447 = vsel %vm3052, %v7485, 0.0
    %v8448 = vadd.f32 %v8446, %v8447
    %v8449 = vsel %vm3052, %v7491, 0.0
    %v8450 = vadd.f32 %v8448, %v8449
    %v8451 = vsel %vm3052, %v7495, 0.0
    %v8452 = vadd.f32 %v8450, %v8451
    %v8453 = vsel %vm3052, %v7501, 0.0
    %v8454 = vadd.f32 %v8452, %v8453
    %v8455 = vsel %vm3052, %v7505, 0.0
    %v8456 = vadd.f32 %v8454, %v8455
    %v8457 = vsel %vm3052, %v7511, 0.0
    %v8458 = vadd.f32 %v8456, %v8457
    %v8459 = vsel %vm3052, %v7515, 0.0
    %v8460 = vadd.f32 %v8458, %v8459
    %v8461 = vsel %vm3052, %v7521, 0.0
    %v8462 = vadd.f32 %v8460, %v8461
    %v8463 = vsel %vm3052, %v7525, 0.0
    %v8464 = vadd.f32 %v8462, %v8463
    %v8465 = vsel %vm3052, %v7531, 0.0
    %v8466 = vadd.f32 %v8464, %v8465
    %v8467 = vsel %vm3052, %v7535, 0.0
    %v8468 = vadd.f32 %v8466, %v8467
    %v8469 = vsel %vm3052, %v7541, 0.0
    %v8470 = vadd.f32 %v8468, %v8469
    %v8471 = vsel %vm3052, %v7545, 0.0
    %v8472 = vadd.f32 %v8470, %v8471
    %v8473 = vsel %vm3052, %v7551, 0.0
    %v8474 = vadd.f32 %v8472, %v8473
    %v8475 = vsel %vm3052, %v7555, 0.0
    %v8476 = vadd.f32 %v8474, %v8475
    %v8477 = vsel %vm3052, %v7561, 0.0
    %v8478 = vadd.f32 %v8476, %v8477
    %v8479 = vsel %vm3052, %v7565, 0.0
    %v8480 = vadd.f32 %v8478, %v8479
    %v8481 = vsel %vm3052, %v7571, 0.0
    %v8482 = vadd.f32 %v8480, %v8481
    %v8483 = vsel %vm3052, %v7575, 0.0
    %v8484 = vadd.f32 %v8482, %v8483
    %v8485 = vsel %vm3052, %v7581, 0.0
    %v8486 = vadd.f32 %v8484, %v8485
    %v8487 = vsel %vm3052, %v7585, 0.0
    %v8488 = vadd.f32 %v8486, %v8487
    %v8489 = vsel %vm3052, %v7591, 0.0
    %v8490 = vadd.f32 %v8488, %v8489
    %v8491 = vsel %vm3052, %v7595, 0.0
    %v8492 = vadd.f32 %v8490, %v8491
    %v8493 = vsel %vm3052, %v7601, 0.0
    %v8494 = vadd.f32 %v8492, %v8493
    %v8495 = vsel %vm3052, %v7605, 0.0
    %v8496 = vadd.f32 %v8494, %v8495
    %v8497 = vsel %vm3052, %v7611, 0.0
    %v8498 = vadd.f32 %v8496, %v8497
    %v8499 = vsel %vm3052, %v7615, 0.0
    %v8500 = vadd.f32 %v8498, %v8499
    %v8501 = vsel %vm3052, %v7621, 0.0
    %v8502 = vadd.f32 %v8500, %v8501
    %v8503 = vsel %vm3052, %v7625, 0.0
    %v8504 = vadd.f32 %v8502, %v8503
    %v8505 = vsel %vm3052, %v7631, 0.0
    %v8506 = vadd.f32 %v8504, %v8505
    %v8507 = vsel %vm3052, %v7635, 0.0
    %v8508 = vadd.f32 %v8506, %v8507
    %v8509 = vsel %vm3052, %v7641, 0.0
    %v8510 = vadd.f32 %v8508, %v8509
    %v8511 = vsel %vm3052, %v7645, 0.0
    %v8512 = vadd.f32 %v8510, %v8511
    %v8513 = vsel %vm3052, %v7651, 0.0
    %v8514 = vadd.f32 %v8512, %v8513
    %v8515 = vsel %vm3052, %v7655, 0.0
    %v8516 = vadd.f32 %v8514, %v8515
    %v8517 = vsel %vm3052, %v7661, 0.0
    %v8518 = vadd.f32 %v8516, %v8517
    %v8519 = vsel %vm3052, %v7665, 0.0
    %v8520 = vadd.f32 %v8518, %v8519
    %v8521 = vsel %vm3052, %v7671, 0.0
    %v8522 = vadd.f32 %v8520, %v8521
    %v8523 = vsel %vm3052, %v7675, 0.0
    %v8524 = vadd.f32 %v8522, %v8523
    %v8525 = vsel %vm3052, %v7681, 0.0
    %v8526 = vadd.f32 %v8524, %v8525
    %v8527 = vsel %vm3052, %v7685, 0.0
    %v8528 = vadd.f32 %v8526, %v8527
    %v8529 = vsel %vm3052, %v7691, 0.0
    %v8530 = vadd.f32 %v8528, %v8529
    %v8531 = vsel %vm3052, %v7695, 0.0
    %v8532 = vadd.f32 %v8530, %v8531
    %v8533 = vsel %vm3052, %v7701, 0.0
    %v8534 = vadd.f32 %v8532, %v8533
    %v8535 = vsel %vm3052, %v7705, 0.0
    %v8536 = vadd.f32 %v8534, %v8535
    %v8537 = vsel %vm3052, %v7711, 0.0
    %v8538 = vadd.f32 %v8536, %v8537
    %v8539 = vsel %vm3052, %v7715, 0.0
    %v8540 = vadd.f32 %v8538, %v8539
    %v8541 = vsel %vm3052, %v7721, 0.0
    %v8542 = vadd.f32 %v8540, %v8541
    %v8543 = vsel %vm3052, %v7725, 0.0
    %v8544 = vadd.f32 %v8542, %v8543
    %v8545 = vsel %vm3052, %v7731, 0.0
    %v8546 = vadd.f32 %v8544, %v8545
    %v8547 = vsel %vm3052, %v7735, 0.0
    %v8548 = vadd.f32 %v8546, %v8547
    %v8549 = vsel %vm3052, %v7741, 0.0
    %v8550 = vadd.f32 %v8548, %v8549
    %v8551 = vsel %vm3052, %v7745, 0.0
    %v8552 = vadd.f32 %v8550, %v8551
    %v8553 = vsel %vm3052, %v7751, 0.0
    %v8554 = vadd.f32 %v8552, %v8553
    %v8555 = vsel %vm3052, %v7755, 0.0
    %v8556 = vadd.f32 %v8554, %v8555
    %v8557 = vsel %vm3052, %v7761, 0.0
    %v8558 = vadd.f32 %v8556, %v8557
    %v8559 = vsel %vm3052, %v7765, 0.0
    %v8560 = vadd.f32 %v8558, %v8559
    %v8561 = vsel %vm3052, %v7771, 0.0
    %v8562 = vadd.f32 %v8560, %v8561
    %v8563 = vsel %vm3052, %v7775, 0.0
    %v8564 = vadd.f32 %v8562, %v8563
    %v8565 = vsel %vm3052, %v7781, 0.0
    %v8566 = vadd.f32 %v8564, %v8565
    %v8567 = vsel %vm3052, %v7785, 0.0
    %v8568 = vadd.f32 %v8566, %v8567
    %v8569 = vsel %vm3052, %v7791, 0.0
    %v8570 = vadd.f32 %v8568, %v8569
    %v8571 = vsel %vm3052, %v7795, 0.0
    %v8572 = vadd.f32 %v8570, %v8571
    %v8573 = vsel %vm3052, %v7801, 0.0
    %v8574 = vadd.f32 %v8572, %v8573
    %v8575 = vsel %vm3052, %v7805, 0.0
    %v8576 = vadd.f32 %v8574, %v8575
    %v8577 = vsel %vm3052, %v7811, 0.0
    %v8578 = vadd.f32 %v8576, %v8577
    %v8579 = vsel %vm3052, %v7815, 0.0
    %v8580 = vadd.f32 %v8578, %v8579
    %v8581 = vsel %vm3052, %v7821, 0.0
    %v8582 = vadd.f32 %v8580, %v8581
    %v8583 = vsel %vm3052, %v7825, 0.0
    %v8584 = vadd.f32 %v8582, %v8583
    %v8585 = vsel %vm3052, %v7831, 0.0
    %v8586 = vadd.f32 %v8584, %v8585
    %v8587 = vsel %vm3052, %v7835, 0.0
    %v8588 = vadd.f32 %v8586, %v8587
    %v8589 = vsel %vm3052, %v7841, 0.0
    %v8590 = vadd.f32 %v8588, %v8589
    %v8591 = vsel %vm3052, %v7845, 0.0
    %v8592 = vadd.f32 %v8590, %v8591
    %v8593 = vsel %vm3052, %v7851, 0.0
    %v8594 = vadd.f32 %v8592, %v8593
    %v8595 = vsel %vm3052, %v7855, 0.0
    %v8596 = vadd.f32 %v8594, %v8595
    %v8597 = vsel %vm3052, %v7861, 0.0
    %v8598 = vadd.f32 %v8596, %v8597
    %v8599 = vsel %vm3052, %v7865, 0.0
    %v8600 = vadd.f32 %v8598, %v8599
    %v8601 = vsel %vm3052, %v7871, 0.0
    %v8602 = vadd.f32 %v8600, %v8601
    %v8603 = vsel %vm3052, %v7875, 0.0
    %v8604 = vadd.f32 %v8602, %v8603
    %v8605 = vsel %vm3052, %v7881, 0.0
    %v8606 = vadd.f32 %v8604, %v8605
    %v8607 = vsel %vm3052, %v7885, 0.0
    %v8608 = vadd.f32 %v8606, %v8607
    %v8609 = vsel %vm3052, %v7891, 0.0
    %v8610 = vadd.f32 %v8608, %v8609
    %v8611 = vsel %vm3052, %v7895, 0.0
    %v8612 = vadd.f32 %v8610, %v8611
    %v8613 = vsel %vm3052, %v7901, 0.0
    %v8614 = vadd.f32 %v8612, %v8613
    %v8615 = vsel %vm3052, %v7905, 0.0
    %v8616 = vadd.f32 %v8614, %v8615
    %v8617 = vrot.slane %v8616, 4
    %v8618 = vadd.f32 %v8616, %v8617
    %v8619 = vrot.slane %v8618, 2
    %v8620 = vadd.f32 %v8618, %v8619
    %v8621 = vrot.slane %v8620, 1
    %v8622 = vadd.f32 %v8620, %v8621
    %v8623 = vmul.f32 %v8009, 0.0012755102
    %v8624 = vmul.f32 %v8112, 0.0012755102
    %v8625 = vmul.f32 %v8215, 0.0012755102
    %v8626 = vmul.f32 %v8318, 0.0012755102
    %v8627 = vmul.f32 %v8421, 0.0012755102
    %v8628 = vmul.f32 %v8622, 0.0012755102
    %v8629 = vsub.f32 %v4281, %v8623
    %v8630 = vsub.f32 %v4283, %v8624
    %v8631 = vsub.f32 %v5850, %v8625
    %v8632 = vsub.f32 %v5852, %v8626
    %v8633 = vsub.f32 %v7419, %v8627
    %v8634 = vsub.f32 %v7421, %v8628
    %v8635 = vsub.f32 %v4285, %v8623
    %v8636 = vsub.f32 %v4287, %v8624
    %v8637 = vsub.f32 %v5854, %v8625
    %v8638 = vsub.f32 %v5856, %v8626
    %v8639 = vsub.f32 %v7423, %v8627
    %v8640 = vsub.f32 %v7425, %v8628
    %v8641 = vsub.f32 %v4291, %v8623
    %v8642 = vsub.f32 %v4293, %v8624
    %v8643 = vsub.f32 %v5860, %v8625
    %v8644 = vsub.f32 %v5862, %v8626
    %v8645 = vsub.f32 %v7429, %v8627
    %v8646 = vsub.f32 %v7431, %v8628
    %v8647 = vsub.f32 %v4295, %v8623
    %v8648 = vsub.f32 %v4297, %v8624
    %v8649 = vsub.f32 %v5864, %v8625
    %v8650 = vsub.f32 %v5866, %v8626
    %v8651 = vsub.f32 %v7433, %v8627
    %v8652 = vsub.f32 %v7435, %v8628
    %v8653 = vsub.f32 %v4301, %v8623
    %v8654 = vsub.f32 %v4303, %v8624
    %v8655 = vsub.f32 %v5870, %v8625
    %v8656 = vsub.f32 %v5872, %v8626
    %v8657 = vsub.f32 %v7439, %v8627
    %v8658 = vsub.f32 %v7441, %v8628
    %v8659 = vsub.f32 %v4305, %v8623
    %v8660 = vsub.f32 %v4307, %v8624
    %v8661 = vsub.f32 %v5874, %v8625
    %v8662 = vsub.f32 %v5876, %v8626
    %v8663 = vsub.f32 %v7443, %v8627
    %v8664 = vsub.f32 %v7445, %v8628
    %v8665 = vsub.f32 %v4311, %v8623
    %v8666 = vsub.f32 %v4313, %v8624
    %v8667 = vsub.f32 %v5880, %v8625
    %v8668 = vsub.f32 %v5882, %v8626
    %v8669 = vsub.f32 %v7449, %v8627
    %v8670 = vsub.f32 %v7451, %v8628
    %v8671 = vsub.f32 %v4315, %v8623
    %v8672 = vsub.f32 %v4317, %v8624
    %v8673 = vsub.f32 %v5884, %v8625
    %v8674 = vsub.f32 %v5886, %v8626
    %v8675 = vsub.f32 %v7453, %v8627
    %v8676 = vsub.f32 %v7455, %v8628
    %v8677 = vsub.f32 %v4321, %v8623
    %v8678 = vsub.f32 %v4323, %v8624
    %v8679 = vsub.f32 %v5890, %v8625
    %v8680 = vsub.f32 %v5892, %v8626
    %v8681 = vsub.f32 %v7459, %v8627
    %v8682 = vsub.f32 %v7461, %v8628
    %v8683 = vsub.f32 %v4325, %v8623
    %v8684 = vsub.f32 %v4327, %v8624
    %v8685 = vsub.f32 %v5894, %v8625
    %v8686 = vsub.f32 %v5896, %v8626
    %v8687 = vsub.f32 %v7463, %v8627
    %v8688 = vsub.f32 %v7465, %v8628
    %v8689 = vsub.f32 %v4331, %v8623
    %v8690 = vsub.f32 %v4333, %v8624
    %v8691 = vsub.f32 %v5900, %v8625
    %v8692 = vsub.f32 %v5902, %v8626
    %v8693 = vsub.f32 %v7469, %v8627
    %v8694 = vsub.f32 %v7471, %v8628
    %v8695 = vsub.f32 %v4335, %v8623
    %v8696 = vsub.f32 %v4337, %v8624
    %v8697 = vsub.f32 %v5904, %v8625
    %v8698 = vsub.f32 %v5906, %v8626
    %v8699 = vsub.f32 %v7473, %v8627
    %v8700 = vsub.f32 %v7475, %v8628
    %v8701 = vsub.f32 %v4341, %v8623
    %v8702 = vsub.f32 %v4343, %v8624
    %v8703 = vsub.f32 %v5910, %v8625
    %v8704 = vsub.f32 %v5912, %v8626
    %v8705 = vsub.f32 %v7479, %v8627
    %v8706 = vsub.f32 %v7481, %v8628
    %v8707 = vsub.f32 %v4345, %v8623
    %v8708 = vsub.f32 %v4347, %v8624
    %v8709 = vsub.f32 %v5914, %v8625
    %v8710 = vsub.f32 %v5916, %v8626
    %v8711 = vsub.f32 %v7483, %v8627
    %v8712 = vsub.f32 %v7485, %v8628
    %v8713 = vsub.f32 %v4351, %v8623
    %v8714 = vsub.f32 %v4353, %v8624
    %v8715 = vsub.f32 %v5920, %v8625
    %v8716 = vsub.f32 %v5922, %v8626
    %v8717 = vsub.f32 %v7489, %v8627
    %v8718 = vsub.f32 %v7491, %v8628
    %v8719 = vsub.f32 %v4355, %v8623
    %v8720 = vsub.f32 %v4357, %v8624
    %v8721 = vsub.f32 %v5924, %v8625
    %v8722 = vsub.f32 %v5926, %v8626
    %v8723 = vsub.f32 %v7493, %v8627
    %v8724 = vsub.f32 %v7495, %v8628
    %v8725 = vsub.f32 %v4361, %v8623
    %v8726 = vsub.f32 %v4363, %v8624
    %v8727 = vsub.f32 %v5930, %v8625
    %v8728 = vsub.f32 %v5932, %v8626
    %v8729 = vsub.f32 %v7499, %v8627
    %v8730 = vsub.f32 %v7501, %v8628
    %v8731 = vsub.f32 %v4365, %v8623
    %v8732 = vsub.f32 %v4367, %v8624
    %v8733 = vsub.f32 %v5934, %v8625
    %v8734 = vsub.f32 %v5936, %v8626
    %v8735 = vsub.f32 %v7503, %v8627
    %v8736 = vsub.f32 %v7505, %v8628
    %v8737 = vsub.f32 %v4371, %v8623
    %v8738 = vsub.f32 %v4373, %v8624
    %v8739 = vsub.f32 %v5940, %v8625
    %v8740 = vsub.f32 %v5942, %v8626
    %v8741 = vsub.f32 %v7509, %v8627
    %v8742 = vsub.f32 %v7511, %v8628
    %v8743 = vsub.f32 %v4375, %v8623
    %v8744 = vsub.f32 %v4377, %v8624
    %v8745 = vsub.f32 %v5944, %v8625
    %v8746 = vsub.f32 %v5946, %v8626
    %v8747 = vsub.f32 %v7513, %v8627
    %v8748 = vsub.f32 %v7515, %v8628
    %v8749 = vsub.f32 %v4381, %v8623
    %v8750 = vsub.f32 %v4383, %v8624
    %v8751 = vsub.f32 %v5950, %v8625
    %v8752 = vsub.f32 %v5952, %v8626
    %v8753 = vsub.f32 %v7519, %v8627
    %v8754 = vsub.f32 %v7521, %v8628
    %v8755 = vsub.f32 %v4385, %v8623
    %v8756 = vsub.f32 %v4387, %v8624
    %v8757 = vsub.f32 %v5954, %v8625
    %v8758 = vsub.f32 %v5956, %v8626
    %v8759 = vsub.f32 %v7523, %v8627
    %v8760 = vsub.f32 %v7525, %v8628
    %v8761 = vsub.f32 %v4391, %v8623
    %v8762 = vsub.f32 %v4393, %v8624
    %v8763 = vsub.f32 %v5960, %v8625
    %v8764 = vsub.f32 %v5962, %v8626
    %v8765 = vsub.f32 %v7529, %v8627
    %v8766 = vsub.f32 %v7531, %v8628
    %v8767 = vsub.f32 %v4395, %v8623
    %v8768 = vsub.f32 %v4397, %v8624
    %v8769 = vsub.f32 %v5964, %v8625
    %v8770 = vsub.f32 %v5966, %v8626
    %v8771 = vsub.f32 %v7533, %v8627
    %v8772 = vsub.f32 %v7535, %v8628
    %v8773 = vsub.f32 %v4401, %v8623
    %v8774 = vsub.f32 %v4403, %v8624
    %v8775 = vsub.f32 %v5970, %v8625
    %v8776 = vsub.f32 %v5972, %v8626
    %v8777 = vsub.f32 %v7539, %v8627
    %v8778 = vsub.f32 %v7541, %v8628
    %v8779 = vsub.f32 %v4405, %v8623
    %v8780 = vsub.f32 %v4407, %v8624
    %v8781 = vsub.f32 %v5974, %v8625
    %v8782 = vsub.f32 %v5976, %v8626
    %v8783 = vsub.f32 %v7543, %v8627
    %v8784 = vsub.f32 %v7545, %v8628
    %v8785 = vsub.f32 %v4411, %v8623
    %v8786 = vsub.f32 %v4413, %v8624
    %v8787 = vsub.f32 %v5980, %v8625
    %v8788 = vsub.f32 %v5982, %v8626
    %v8789 = vsub.f32 %v7549, %v8627
    %v8790 = vsub.f32 %v7551, %v8628
    %v8791 = vsub.f32 %v4415, %v8623
    %v8792 = vsub.f32 %v4417, %v8624
    %v8793 = vsub.f32 %v5984, %v8625
    %v8794 = vsub.f32 %v5986, %v8626
    %v8795 = vsub.f32 %v7553, %v8627
    %v8796 = vsub.f32 %v7555, %v8628
    %v8797 = vsub.f32 %v4421, %v8623
    %v8798 = vsub.f32 %v4423, %v8624
    %v8799 = vsub.f32 %v5990, %v8625
    %v8800 = vsub.f32 %v5992, %v8626
    %v8801 = vsub.f32 %v7559, %v8627
    %v8802 = vsub.f32 %v7561, %v8628
    %v8803 = vsub.f32 %v4425, %v8623
    %v8804 = vsub.f32 %v4427, %v8624
    %v8805 = vsub.f32 %v5994, %v8625
    %v8806 = vsub.f32 %v5996, %v8626
    %v8807 = vsub.f32 %v7563, %v8627
    %v8808 = vsub.f32 %v7565, %v8628
    %v8809 = vsub.f32 %v4431, %v8623
    %v8810 = vsub.f32 %v4433, %v8624
    %v8811 = vsub.f32 %v6000, %v8625
    %v8812 = vsub.f32 %v6002, %v8626
    %v8813 = vsub.f32 %v7569, %v8627
    %v8814 = vsub.f32 %v7571, %v8628
    %v8815 = vsub.f32 %v4435, %v8623
    %v8816 = vsub.f32 %v4437, %v8624
    %v8817 = vsub.f32 %v6004, %v8625
    %v8818 = vsub.f32 %v6006, %v8626
    %v8819 = vsub.f32 %v7573, %v8627
    %v8820 = vsub.f32 %v7575, %v8628
    %v8821 = vsub.f32 %v4441, %v8623
    %v8822 = vsub.f32 %v4443, %v8624
    %v8823 = vsub.f32 %v6010, %v8625
    %v8824 = vsub.f32 %v6012, %v8626
    %v8825 = vsub.f32 %v7579, %v8627
    %v8826 = vsub.f32 %v7581, %v8628
    %v8827 = vsub.f32 %v4445, %v8623
    %v8828 = vsub.f32 %v4447, %v8624
    %v8829 = vsub.f32 %v6014, %v8625
    %v8830 = vsub.f32 %v6016, %v8626
    %v8831 = vsub.f32 %v7583, %v8627
    %v8832 = vsub.f32 %v7585, %v8628
    %v8833 = vsub.f32 %v4451, %v8623
    %v8834 = vsub.f32 %v4453, %v8624
    %v8835 = vsub.f32 %v6020, %v8625
    %v8836 = vsub.f32 %v6022, %v8626
    %v8837 = vsub.f32 %v7589, %v8627
    %v8838 = vsub.f32 %v7591, %v8628
    %v8839 = vsub.f32 %v4455, %v8623
    %v8840 = vsub.f32 %v4457, %v8624
    %v8841 = vsub.f32 %v6024, %v8625
    %v8842 = vsub.f32 %v6026, %v8626
    %v8843 = vsub.f32 %v7593, %v8627
    %v8844 = vsub.f32 %v7595, %v8628
    %v8845 = vsub.f32 %v4461, %v8623
    %v8846 = vsub.f32 %v4463, %v8624
    %v8847 = vsub.f32 %v6030, %v8625
    %v8848 = vsub.f32 %v6032, %v8626
    %v8849 = vsub.f32 %v7599, %v8627
    %v8850 = vsub.f32 %v7601, %v8628
    %v8851 = vsub.f32 %v4465, %v8623
    %v8852 = vsub.f32 %v4467, %v8624
    %v8853 = vsub.f32 %v6034, %v8625
    %v8854 = vsub.f32 %v6036, %v8626
    %v8855 = vsub.f32 %v7603, %v8627
    %v8856 = vsub.f32 %v7605, %v8628
    %v8857 = vsub.f32 %v4471, %v8623
    %v8858 = vsub.f32 %v4473, %v8624
    %v8859 = vsub.f32 %v6040, %v8625
    %v8860 = vsub.f32 %v6042, %v8626
    %v8861 = vsub.f32 %v7609, %v8627
    %v8862 = vsub.f32 %v7611, %v8628
    %v8863 = vsub.f32 %v4475, %v8623
    %v8864 = vsub.f32 %v4477, %v8624
    %v8865 = vsub.f32 %v6044, %v8625
    %v8866 = vsub.f32 %v6046, %v8626
    %v8867 = vsub.f32 %v7613, %v8627
    %v8868 = vsub.f32 %v7615, %v8628
    %v8869 = vsub.f32 %v4481, %v8623
    %v8870 = vsub.f32 %v4483, %v8624
    %v8871 = vsub.f32 %v6050, %v8625
    %v8872 = vsub.f32 %v6052, %v8626
    %v8873 = vsub.f32 %v7619, %v8627
    %v8874 = vsub.f32 %v7621, %v8628
    %v8875 = vsub.f32 %v4485, %v8623
    %v8876 = vsub.f32 %v4487, %v8624
    %v8877 = vsub.f32 %v6054, %v8625
    %v8878 = vsub.f32 %v6056, %v8626
    %v8879 = vsub.f32 %v7623, %v8627
    %v8880 = vsub.f32 %v7625, %v8628
    %v8881 = vsub.f32 %v4491, %v8623
    %v8882 = vsub.f32 %v4493, %v8624
    %v8883 = vsub.f32 %v6060, %v8625
    %v8884 = vsub.f32 %v6062, %v8626
    %v8885 = vsub.f32 %v7629, %v8627
    %v8886 = vsub.f32 %v7631, %v8628
    %v8887 = vsub.f32 %v4495, %v8623
    %v8888 = vsub.f32 %v4497, %v8624
    %v8889 = vsub.f32 %v6064, %v8625
    %v8890 = vsub.f32 %v6066, %v8626
    %v8891 = vsub.f32 %v7633, %v8627
    %v8892 = vsub.f32 %v7635, %v8628
    %v8893 = vsub.f32 %v4501, %v8623
    %v8894 = vsub.f32 %v4503, %v8624
    %v8895 = vsub.f32 %v6070, %v8625
    %v8896 = vsub.f32 %v6072, %v8626
    %v8897 = vsub.f32 %v7639, %v8627
    %v8898 = vsub.f32 %v7641, %v8628
    %v8899 = vsub.f32 %v4505, %v8623
    %v8900 = vsub.f32 %v4507, %v8624
    %v8901 = vsub.f32 %v6074, %v8625
    %v8902 = vsub.f32 %v6076, %v8626
    %v8903 = vsub.f32 %v7643, %v8627
    %v8904 = vsub.f32 %v7645, %v8628
    %v8905 = vsub.f32 %v4511, %v8623
    %v8906 = vsub.f32 %v4513, %v8624
    %v8907 = vsub.f32 %v6080, %v8625
    %v8908 = vsub.f32 %v6082, %v8626
    %v8909 = vsub.f32 %v7649, %v8627
    %v8910 = vsub.f32 %v7651, %v8628
    %v8911 = vsub.f32 %v4515, %v8623
    %v8912 = vsub.f32 %v4517, %v8624
    %v8913 = vsub.f32 %v6084, %v8625
    %v8914 = vsub.f32 %v6086, %v8626
    %v8915 = vsub.f32 %v7653, %v8627
    %v8916 = vsub.f32 %v7655, %v8628
    %v8917 = vsub.f32 %v4521, %v8623
    %v8918 = vsub.f32 %v4523, %v8624
    %v8919 = vsub.f32 %v6090, %v8625
    %v8920 = vsub.f32 %v6092, %v8626
    %v8921 = vsub.f32 %v7659, %v8627
    %v8922 = vsub.f32 %v7661, %v8628
    %v8923 = vsub.f32 %v4525, %v8623
    %v8924 = vsub.f32 %v4527, %v8624
    %v8925 = vsub.f32 %v6094, %v8625
    %v8926 = vsub.f32 %v6096, %v8626
    %v8927 = vsub.f32 %v7663, %v8627
    %v8928 = vsub.f32 %v7665, %v8628
    %v8929 = vsub.f32 %v4531, %v8623
    %v8930 = vsub.f32 %v4533, %v8624
    %v8931 = vsub.f32 %v6100, %v8625
    %v8932 = vsub.f32 %v6102, %v8626
    %v8933 = vsub.f32 %v7669, %v8627
    %v8934 = vsub.f32 %v7671, %v8628
    %v8935 = vsub.f32 %v4535, %v8623
    %v8936 = vsub.f32 %v4537, %v8624
    %v8937 = vsub.f32 %v6104, %v8625
    %v8938 = vsub.f32 %v6106, %v8626
    %v8939 = vsub.f32 %v7673, %v8627
    %v8940 = vsub.f32 %v7675, %v8628
    %v8941 = vsub.f32 %v4541, %v8623
    %v8942 = vsub.f32 %v4543, %v8624
    %v8943 = vsub.f32 %v6110, %v8625
    %v8944 = vsub.f32 %v6112, %v8626
    %v8945 = vsub.f32 %v7679, %v8627
    %v8946 = vsub.f32 %v7681, %v8628
    %v8947 = vsub.f32 %v4545, %v8623
    %v8948 = vsub.f32 %v4547, %v8624
    %v8949 = vsub.f32 %v6114, %v8625
    %v8950 = vsub.f32 %v6116, %v8626
    %v8951 = vsub.f32 %v7683, %v8627
    %v8952 = vsub.f32 %v7685, %v8628
    %v8953 = vsub.f32 %v4551, %v8623
    %v8954 = vsub.f32 %v4553, %v8624
    %v8955 = vsub.f32 %v6120, %v8625
    %v8956 = vsub.f32 %v6122, %v8626
    %v8957 = vsub.f32 %v7689, %v8627
    %v8958 = vsub.f32 %v7691, %v8628
    %v8959 = vsub.f32 %v4555, %v8623
    %v8960 = vsub.f32 %v4557, %v8624
    %v8961 = vsub.f32 %v6124, %v8625
    %v8962 = vsub.f32 %v6126, %v8626
    %v8963 = vsub.f32 %v7693, %v8627
    %v8964 = vsub.f32 %v7695, %v8628
    %v8965 = vsub.f32 %v4561, %v8623
    %v8966 = vsub.f32 %v4563, %v8624
    %v8967 = vsub.f32 %v6130, %v8625
    %v8968 = vsub.f32 %v6132, %v8626
    %v8969 = vsub.f32 %v7699, %v8627
    %v8970 = vsub.f32 %v7701, %v8628
    %v8971 = vsub.f32 %v4565, %v8623
    %v8972 = vsub.f32 %v4567, %v8624
    %v8973 = vsub.f32 %v6134, %v8625
    %v8974 = vsub.f32 %v6136, %v8626
    %v8975 = vsub.f32 %v7703, %v8627
    %v8976 = vsub.f32 %v7705, %v8628
    %v8977 = vsub.f32 %v4571, %v8623
    %v8978 = vsub.f32 %v4573, %v8624
    %v8979 = vsub.f32 %v6140, %v8625
    %v8980 = vsub.f32 %v6142, %v8626
    %v8981 = vsub.f32 %v7709, %v8627
    %v8982 = vsub.f32 %v7711, %v8628
    %v8983 = vsub.f32 %v4575, %v8623
    %v8984 = vsub.f32 %v4577, %v8624
    %v8985 = vsub.f32 %v6144, %v8625
    %v8986 = vsub.f32 %v6146, %v8626
    %v8987 = vsub.f32 %v7713, %v8627
    %v8988 = vsub.f32 %v7715, %v8628
    %v8989 = vsub.f32 %v4581, %v8623
    %v8990 = vsub.f32 %v4583, %v8624
    %v8991 = vsub.f32 %v6150, %v8625
    %v8992 = vsub.f32 %v6152, %v8626
    %v8993 = vsub.f32 %v7719, %v8627
    %v8994 = vsub.f32 %v7721, %v8628
    %v8995 = vsub.f32 %v4585, %v8623
    %v8996 = vsub.f32 %v4587, %v8624
    %v8997 = vsub.f32 %v6154, %v8625
    %v8998 = vsub.f32 %v6156, %v8626
    %v8999 = vsub.f32 %v7723, %v8627
    %v9000 = vsub.f32 %v7725, %v8628
    %v9001 = vsub.f32 %v4591, %v8623
    %v9002 = vsub.f32 %v4593, %v8624
    %v9003 = vsub.f32 %v6160, %v8625
    %v9004 = vsub.f32 %v6162, %v8626
    %v9005 = vsub.f32 %v7729, %v8627
    %v9006 = vsub.f32 %v7731, %v8628
    %v9007 = vsub.f32 %v4595, %v8623
    %v9008 = vsub.f32 %v4597, %v8624
    %v9009 = vsub.f32 %v6164, %v8625
    %v9010 = vsub.f32 %v6166, %v8626
    %v9011 = vsub.f32 %v7733, %v8627
    %v9012 = vsub.f32 %v7735, %v8628
    %v9013 = vsub.f32 %v4601, %v8623
    %v9014 = vsub.f32 %v4603, %v8624
    %v9015 = vsub.f32 %v6170, %v8625
    %v9016 = vsub.f32 %v6172, %v8626
    %v9017 = vsub.f32 %v7739, %v8627
    %v9018 = vsub.f32 %v7741, %v8628
    %v9019 = vsub.f32 %v4605, %v8623
    %v9020 = vsub.f32 %v4607, %v8624
    %v9021 = vsub.f32 %v6174, %v8625
    %v9022 = vsub.f32 %v6176, %v8626
    %v9023 = vsub.f32 %v7743, %v8627
    %v9024 = vsub.f32 %v7745, %v8628
    %v9025 = vsub.f32 %v4611, %v8623
    %v9026 = vsub.f32 %v4613, %v8624
    %v9027 = vsub.f32 %v6180, %v8625
    %v9028 = vsub.f32 %v6182, %v8626
    %v9029 = vsub.f32 %v7749, %v8627
    %v9030 = vsub.f32 %v7751, %v8628
    %v9031 = vsub.f32 %v4615, %v8623
    %v9032 = vsub.f32 %v4617, %v8624
    %v9033 = vsub.f32 %v6184, %v8625
    %v9034 = vsub.f32 %v6186, %v8626
    %v9035 = vsub.f32 %v7753, %v8627
    %v9036 = vsub.f32 %v7755, %v8628
    %v9037 = vsub.f32 %v4621, %v8623
    %v9038 = vsub.f32 %v4623, %v8624
    %v9039 = vsub.f32 %v6190, %v8625
    %v9040 = vsub.f32 %v6192, %v8626
    %v9041 = vsub.f32 %v7759, %v8627
    %v9042 = vsub.f32 %v7761, %v8628
    %v9043 = vsub.f32 %v4625, %v8623
    %v9044 = vsub.f32 %v4627, %v8624
    %v9045 = vsub.f32 %v6194, %v8625
    %v9046 = vsub.f32 %v6196, %v8626
    %v9047 = vsub.f32 %v7763, %v8627
    %v9048 = vsub.f32 %v7765, %v8628
    %v9049 = vsub.f32 %v4631, %v8623
    %v9050 = vsub.f32 %v4633, %v8624
    %v9051 = vsub.f32 %v6200, %v8625
    %v9052 = vsub.f32 %v6202, %v8626
    %v9053 = vsub.f32 %v7769, %v8627
    %v9054 = vsub.f32 %v7771, %v8628
    %v9055 = vsub.f32 %v4635, %v8623
    %v9056 = vsub.f32 %v4637, %v8624
    %v9057 = vsub.f32 %v6204, %v8625
    %v9058 = vsub.f32 %v6206, %v8626
    %v9059 = vsub.f32 %v7773, %v8627
    %v9060 = vsub.f32 %v7775, %v8628
    %v9061 = vsub.f32 %v4641, %v8623
    %v9062 = vsub.f32 %v4643, %v8624
    %v9063 = vsub.f32 %v6210, %v8625
    %v9064 = vsub.f32 %v6212, %v8626
    %v9065 = vsub.f32 %v7779, %v8627
    %v9066 = vsub.f32 %v7781, %v8628
    %v9067 = vsub.f32 %v4645, %v8623
    %v9068 = vsub.f32 %v4647, %v8624
    %v9069 = vsub.f32 %v6214, %v8625
    %v9070 = vsub.f32 %v6216, %v8626
    %v9071 = vsub.f32 %v7783, %v8627
    %v9072 = vsub.f32 %v7785, %v8628
    %v9073 = vsub.f32 %v4651, %v8623
    %v9074 = vsub.f32 %v4653, %v8624
    %v9075 = vsub.f32 %v6220, %v8625
    %v9076 = vsub.f32 %v6222, %v8626
    %v9077 = vsub.f32 %v7789, %v8627
    %v9078 = vsub.f32 %v7791, %v8628
    %v9079 = vsub.f32 %v4655, %v8623
    %v9080 = vsub.f32 %v4657, %v8624
    %v9081 = vsub.f32 %v6224, %v8625
    %v9082 = vsub.f32 %v6226, %v8626
    %v9083 = vsub.f32 %v7793, %v8627
    %v9084 = vsub.f32 %v7795, %v8628
    %v9085 = vsub.f32 %v4661, %v8623
    %v9086 = vsub.f32 %v4663, %v8624
    %v9087 = vsub.f32 %v6230, %v8625
    %v9088 = vsub.f32 %v6232, %v8626
    %v9089 = vsub.f32 %v7799, %v8627
    %v9090 = vsub.f32 %v7801, %v8628
    %v9091 = vsub.f32 %v4665, %v8623
    %v9092 = vsub.f32 %v4667, %v8624
    %v9093 = vsub.f32 %v6234, %v8625
    %v9094 = vsub.f32 %v6236, %v8626
    %v9095 = vsub.f32 %v7803, %v8627
    %v9096 = vsub.f32 %v7805, %v8628
    %v9097 = vsub.f32 %v4671, %v8623
    %v9098 = vsub.f32 %v4673, %v8624
    %v9099 = vsub.f32 %v6240, %v8625
    %v9100 = vsub.f32 %v6242, %v8626
    %v9101 = vsub.f32 %v7809, %v8627
    %v9102 = vsub.f32 %v7811, %v8628
    %v9103 = vsub.f32 %v4675, %v8623
    %v9104 = vsub.f32 %v4677, %v8624
    %v9105 = vsub.f32 %v6244, %v8625
    %v9106 = vsub.f32 %v6246, %v8626
    %v9107 = vsub.f32 %v7813, %v8627
    %v9108 = vsub.f32 %v7815, %v8628
    %v9109 = vsub.f32 %v4681, %v8623
    %v9110 = vsub.f32 %v4683, %v8624
    %v9111 = vsub.f32 %v6250, %v8625
    %v9112 = vsub.f32 %v6252, %v8626
    %v9113 = vsub.f32 %v7819, %v8627
    %v9114 = vsub.f32 %v7821, %v8628
    %v9115 = vsub.f32 %v4685, %v8623
    %v9116 = vsub.f32 %v4687, %v8624
    %v9117 = vsub.f32 %v6254, %v8625
    %v9118 = vsub.f32 %v6256, %v8626
    %v9119 = vsub.f32 %v7823, %v8627
    %v9120 = vsub.f32 %v7825, %v8628
    %v9121 = vsub.f32 %v4691, %v8623
    %v9122 = vsub.f32 %v4693, %v8624
    %v9123 = vsub.f32 %v6260, %v8625
    %v9124 = vsub.f32 %v6262, %v8626
    %v9125 = vsub.f32 %v7829, %v8627
    %v9126 = vsub.f32 %v7831, %v8628
    %v9127 = vsub.f32 %v4695, %v8623
    %v9128 = vsub.f32 %v4697, %v8624
    %v9129 = vsub.f32 %v6264, %v8625
    %v9130 = vsub.f32 %v6266, %v8626
    %v9131 = vsub.f32 %v7833, %v8627
    %v9132 = vsub.f32 %v7835, %v8628
    %v9133 = vsub.f32 %v4701, %v8623
    %v9134 = vsub.f32 %v4703, %v8624
    %v9135 = vsub.f32 %v6270, %v8625
    %v9136 = vsub.f32 %v6272, %v8626
    %v9137 = vsub.f32 %v7839, %v8627
    %v9138 = vsub.f32 %v7841, %v8628
    %v9139 = vsub.f32 %v4705, %v8623
    %v9140 = vsub.f32 %v4707, %v8624
    %v9141 = vsub.f32 %v6274, %v8625
    %v9142 = vsub.f32 %v6276, %v8626
    %v9143 = vsub.f32 %v7843, %v8627
    %v9144 = vsub.f32 %v7845, %v8628
    %v9145 = vsub.f32 %v4711, %v8623
    %v9146 = vsub.f32 %v4713, %v8624
    %v9147 = vsub.f32 %v6280, %v8625
    %v9148 = vsub.f32 %v6282, %v8626
    %v9149 = vsub.f32 %v7849, %v8627
    %v9150 = vsub.f32 %v7851, %v8628
    %v9151 = vsub.f32 %v4715, %v8623
    %v9152 = vsub.f32 %v4717, %v8624
    %v9153 = vsub.f32 %v6284, %v8625
    %v9154 = vsub.f32 %v6286, %v8626
    %v9155 = vsub.f32 %v7853, %v8627
    %v9156 = vsub.f32 %v7855, %v8628
    %v9157 = vsub.f32 %v4721, %v8623
    %v9158 = vsub.f32 %v4723, %v8624
    %v9159 = vsub.f32 %v6290, %v8625
    %v9160 = vsub.f32 %v6292, %v8626
    %v9161 = vsub.f32 %v7859, %v8627
    %v9162 = vsub.f32 %v7861, %v8628
    %v9163 = vsub.f32 %v4725, %v8623
    %v9164 = vsub.f32 %v4727, %v8624
    %v9165 = vsub.f32 %v6294, %v8625
    %v9166 = vsub.f32 %v6296, %v8626
    %v9167 = vsub.f32 %v7863, %v8627
    %v9168 = vsub.f32 %v7865, %v8628
    %v9169 = vsub.f32 %v4731, %v8623
    %v9170 = vsub.f32 %v4733, %v8624
    %v9171 = vsub.f32 %v6300, %v8625
    %v9172 = vsub.f32 %v6302, %v8626
    %v9173 = vsub.f32 %v7869, %v8627
    %v9174 = vsub.f32 %v7871, %v8628
    %v9175 = vsub.f32 %v4735, %v8623
    %v9176 = vsub.f32 %v4737, %v8624
    %v9177 = vsub.f32 %v6304, %v8625
    %v9178 = vsub.f32 %v6306, %v8626
    %v9179 = vsub.f32 %v7873, %v8627
    %v9180 = vsub.f32 %v7875, %v8628
    %v9181 = vsub.f32 %v4741, %v8623
    %v9182 = vsub.f32 %v4743, %v8624
    %v9183 = vsub.f32 %v6310, %v8625
    %v9184 = vsub.f32 %v6312, %v8626
    %v9185 = vsub.f32 %v7879, %v8627
    %v9186 = vsub.f32 %v7881, %v8628
    %v9187 = vsub.f32 %v4745, %v8623
    %v9188 = vsub.f32 %v4747, %v8624
    %v9189 = vsub.f32 %v6314, %v8625
    %v9190 = vsub.f32 %v6316, %v8626
    %v9191 = vsub.f32 %v7883, %v8627
    %v9192 = vsub.f32 %v7885, %v8628
    %v9193 = vsub.f32 %v4751, %v8623
    %v9194 = vsub.f32 %v4753, %v8624
    %v9195 = vsub.f32 %v6320, %v8625
    %v9196 = vsub.f32 %v6322, %v8626
    %v9197 = vsub.f32 %v7889, %v8627
    %v9198 = vsub.f32 %v7891, %v8628
    %v9199 = vsub.f32 %v4755, %v8623
    %v9200 = vsub.f32 %v4757, %v8624
    %v9201 = vsub.f32 %v6324, %v8625
    %v9202 = vsub.f32 %v6326, %v8626
    %v9203 = vsub.f32 %v7893, %v8627
    %v9204 = vsub.f32 %v7895, %v8628
    %v9205 = vsub.f32 %v4761, %v8623
    %v9206 = vsub.f32 %v4763, %v8624
    %v9207 = vsub.f32 %v6330, %v8625
    %v9208 = vsub.f32 %v6332, %v8626
    %v9209 = vsub.f32 %v7899, %v8627
    %v9210 = vsub.f32 %v7901, %v8628
    %v9211 = vsub.f32 %v4765, %v8623
    %v9212 = vsub.f32 %v4767, %v8624
    %v9213 = vsub.f32 %v6334, %v8625
    %v9214 = vsub.f32 %v6336, %v8626
    %v9215 = vsub.f32 %v7903, %v8627
    %v9216 = vsub.f32 %v7905, %v8628
    %v9217 = vmul.f32 %v8629, %v8629
    %v9218 = vmul.f32 %v8630, %v8630
    %v9219 = vmul.f32 %v8631, %v8631
    %v9220 = vmul.f32 %v8632, %v8632
    %v9221 = vmul.f32 %v8633, %v8633
    %v9222 = vmul.f32 %v8634, %v8634
    %v9223 = vmul.f32 %v8635, %v8635
    %v9224 = vmul.f32 %v8636, %v8636
    %v9225 = vmul.f32 %v8637, %v8637
    %v9226 = vmul.f32 %v8638, %v8638
    %v9227 = vmul.f32 %v8639, %v8639
    %v9228 = vmul.f32 %v8640, %v8640
    %v9229 = vmul.f32 %v8641, %v8641
    %v9230 = vmul.f32 %v8642, %v8642
    %v9231 = vmul.f32 %v8643, %v8643
    %v9232 = vmul.f32 %v8644, %v8644
    %v9233 = vmul.f32 %v8645, %v8645
    %v9234 = vmul.f32 %v8646, %v8646
    %v9235 = vmul.f32 %v8647, %v8647
    %v9236 = vmul.f32 %v8648, %v8648
    %v9237 = vmul.f32 %v8649, %v8649
    %v9238 = vmul.f32 %v8650, %v8650
    %v9239 = vmul.f32 %v8651, %v8651
    %v9240 = vmul.f32 %v8652, %v8652
    %v9241 = vmul.f32 %v8653, %v8653
    %v9242 = vmul.f32 %v8654, %v8654
    %v9243 = vmul.f32 %v8655, %v8655
    %v9244 = vmul.f32 %v8656, %v8656
    %v9245 = vmul.f32 %v8657, %v8657
    %v9246 = vmul.f32 %v8658, %v8658
    %v9247 = vmul.f32 %v8659, %v8659
    %v9248 = vmul.f32 %v8660, %v8660
    %v9249 = vmul.f32 %v8661, %v8661
    %v9250 = vmul.f32 %v8662, %v8662
    %v9251 = vmul.f32 %v8663, %v8663
    %v9252 = vmul.f32 %v8664, %v8664
    %v9253 = vmul.f32 %v8665, %v8665
    %v9254 = vmul.f32 %v8666, %v8666
    %v9255 = vmul.f32 %v8667, %v8667
    %v9256 = vmul.f32 %v8668, %v8668
    %v9257 = vmul.f32 %v8669, %v8669
    %v9258 = vmul.f32 %v8670, %v8670
    %v9259 = vmul.f32 %v8671, %v8671
    %v9260 = vmul.f32 %v8672, %v8672
    %v9261 = vmul.f32 %v8673, %v8673
    %v9262 = vmul.f32 %v8674, %v8674
    %v9263 = vmul.f32 %v8675, %v8675
    %v9264 = vmul.f32 %v8676, %v8676
    %v9265 = vmul.f32 %v8677, %v8677
    %v9266 = vmul.f32 %v8678, %v8678
    %v9267 = vmul.f32 %v8679, %v8679
    %v9268 = vmul.f32 %v8680, %v8680
    %v9269 = vmul.f32 %v8681, %v8681
    %v9270 = vmul.f32 %v8682, %v8682
    %v9271 = vmul.f32 %v8683, %v8683
    %v9272 = vmul.f32 %v8684, %v8684
    %v9273 = vmul.f32 %v8685, %v8685
    %v9274 = vmul.f32 %v8686, %v8686
    %v9275 = vmul.f32 %v8687, %v8687
    %v9276 = vmul.f32 %v8688, %v8688
    %v9277 = vmul.f32 %v8689, %v8689
    %v9278 = vmul.f32 %v8690, %v8690
    %v9279 = vmul.f32 %v8691, %v8691
    %v9280 = vmul.f32 %v8692, %v8692
    %v9281 = vmul.f32 %v8693, %v8693
    %v9282 = vmul.f32 %v8694, %v8694
    %v9283 = vmul.f32 %v8695, %v8695
    %v9284 = vmul.f32 %v8696, %v8696
    %v9285 = vmul.f32 %v8697, %v8697
    %v9286 = vmul.f32 %v8698, %v8698
    %v9287 = vmul.f32 %v8699, %v8699
    %v9288 = vmul.f32 %v8700, %v8700
    %v9289 = vmul.f32 %v8701, %v8701
    %v9290 = vmul.f32 %v8702, %v8702
    %v9291 = vmul.f32 %v8703, %v8703
    %v9292 = vmul.f32 %v8704, %v8704
    %v9293 = vmul.f32 %v8705, %v8705
    %v9294 = vmul.f32 %v8706, %v8706
    %v9295 = vmul.f32 %v8707, %v8707
    %v9296 = vmul.f32 %v8708, %v8708
    %v9297 = vmul.f32 %v8709, %v8709
    %v9298 = vmul.f32 %v8710, %v8710
    %v9299 = vmul.f32 %v8711, %v8711
    %v9300 = vmul.f32 %v8712, %v8712
    %v9301 = vmul.f32 %v8713, %v8713
    %v9302 = vmul.f32 %v8714, %v8714
    %v9303 = vmul.f32 %v8715, %v8715
    %v9304 = vmul.f32 %v8716, %v8716
    %v9305 = vmul.f32 %v8717, %v8717
    %v9306 = vmul.f32 %v8718, %v8718
    %v9307 = vmul.f32 %v8719, %v8719
    %v9308 = vmul.f32 %v8720, %v8720
    %v9309 = vmul.f32 %v8721, %v8721
    %v9310 = vmul.f32 %v8722, %v8722
    %v9311 = vmul.f32 %v8723, %v8723
    %v9312 = vmul.f32 %v8724, %v8724
    %v9313 = vmul.f32 %v8725, %v8725
    %v9314 = vmul.f32 %v8726, %v8726
    %v9315 = vmul.f32 %v8727, %v8727
    %v9316 = vmul.f32 %v8728, %v8728
    %v9317 = vmul.f32 %v8729, %v8729
    %v9318 = vmul.f32 %v8730, %v8730
    %v9319 = vmul.f32 %v8731, %v8731
    %v9320 = vmul.f32 %v8732, %v8732
    %v9321 = vmul.f32 %v8733, %v8733
    %v9322 = vmul.f32 %v8734, %v8734
    %v9323 = vmul.f32 %v8735, %v8735
    %v9324 = vmul.f32 %v8736, %v8736
    %v9325 = vmul.f32 %v8737, %v8737
    %v9326 = vmul.f32 %v8738, %v8738
    %v9327 = vmul.f32 %v8739, %v8739
    %v9328 = vmul.f32 %v8740, %v8740
    %v9329 = vmul.f32 %v8741, %v8741
    %v9330 = vmul.f32 %v8742, %v8742
    %v9331 = vmul.f32 %v8743, %v8743
    %v9332 = vmul.f32 %v8744, %v8744
    %v9333 = vmul.f32 %v8745, %v8745
    %v9334 = vmul.f32 %v8746, %v8746
    %v9335 = vmul.f32 %v8747, %v8747
    %v9336 = vmul.f32 %v8748, %v8748
    %v9337 = vmul.f32 %v8749, %v8749
    %v9338 = vmul.f32 %v8750, %v8750
    %v9339 = vmul.f32 %v8751, %v8751
    %v9340 = vmul.f32 %v8752, %v8752
    %v9341 = vmul.f32 %v8753, %v8753
    %v9342 = vmul.f32 %v8754, %v8754
    %v9343 = vmul.f32 %v8755, %v8755
    %v9344 = vmul.f32 %v8756, %v8756
    %v9345 = vmul.f32 %v8757, %v8757
    %v9346 = vmul.f32 %v8758, %v8758
    %v9347 = vmul.f32 %v8759, %v8759
    %v9348 = vmul.f32 %v8760, %v8760
    %v9349 = vmul.f32 %v8761, %v8761
    %v9350 = vmul.f32 %v8762, %v8762
    %v9351 = vmul.f32 %v8763, %v8763
    %v9352 = vmul.f32 %v8764, %v8764
    %v9353 = vmul.f32 %v8765, %v8765
    %v9354 = vmul.f32 %v8766, %v8766
    %v9355 = vmul.f32 %v8767, %v8767
    %v9356 = vmul.f32 %v8768, %v8768
    %v9357 = vmul.f32 %v8769, %v8769
    %v9358 = vmul.f32 %v8770, %v8770
    %v9359 = vmul.f32 %v8771, %v8771
    %v9360 = vmul.f32 %v8772, %v8772
    %v9361 = vmul.f32 %v8773, %v8773
    %v9362 = vmul.f32 %v8774, %v8774
    %v9363 = vmul.f32 %v8775, %v8775
    %v9364 = vmul.f32 %v8776, %v8776
    %v9365 = vmul.f32 %v8777, %v8777
    %v9366 = vmul.f32 %v8778, %v8778
    %v9367 = vmul.f32 %v8779, %v8779
    %v9368 = vmul.f32 %v8780, %v8780
    %v9369 = vmul.f32 %v8781, %v8781
    %v9370 = vmul.f32 %v8782, %v8782
    %v9371 = vmul.f32 %v8783, %v8783
    %v9372 = vmul.f32 %v8784, %v8784
    %v9373 = vmul.f32 %v8785, %v8785
    %v9374 = vmul.f32 %v8786, %v8786
    %v9375 = vmul.f32 %v8787, %v8787
    %v9376 = vmul.f32 %v8788, %v8788
    %v9377 = vmul.f32 %v8789, %v8789
    %v9378 = vmul.f32 %v8790, %v8790
    %v9379 = vmul.f32 %v8791, %v8791
    %v9380 = vmul.f32 %v8792, %v8792
    %v9381 = vmul.f32 %v8793, %v8793
    %v9382 = vmul.f32 %v8794, %v8794
    %v9383 = vmul.f32 %v8795, %v8795
    %v9384 = vmul.f32 %v8796, %v8796
    %v9385 = vmul.f32 %v8797, %v8797
    %v9386 = vmul.f32 %v8798, %v8798
    %v9387 = vmul.f32 %v8799, %v8799
    %v9388 = vmul.f32 %v8800, %v8800
    %v9389 = vmul.f32 %v8801, %v8801
    %v9390 = vmul.f32 %v8802, %v8802
    %v9391 = vmul.f32 %v8803, %v8803
    %v9392 = vmul.f32 %v8804, %v8804
    %v9393 = vmul.f32 %v8805, %v8805
    %v9394 = vmul.f32 %v8806, %v8806
    %v9395 = vmul.f32 %v8807, %v8807
    %v9396 = vmul.f32 %v8808, %v8808
    %v9397 = vmul.f32 %v8809, %v8809
    %v9398 = vmul.f32 %v8810, %v8810
    %v9399 = vmul.f32 %v8811, %v8811
    %v9400 = vmul.f32 %v8812, %v8812
    %v9401 = vmul.f32 %v8813, %v8813
    %v9402 = vmul.f32 %v8814, %v8814
    %v9403 = vmul.f32 %v8815, %v8815
    %v9404 = vmul.f32 %v8816, %v8816
    %v9405 = vmul.f32 %v8817, %v8817
    %v9406 = vmul.f32 %v8818, %v8818
    %v9407 = vmul.f32 %v8819, %v8819
    %v9408 = vmul.f32 %v8820, %v8820
    %v9409 = vmul.f32 %v8821, %v8821
    %v9410 = vmul.f32 %v8822, %v8822
    %v9411 = vmul.f32 %v8823, %v8823
    %v9412 = vmul.f32 %v8824, %v8824
    %v9413 = vmul.f32 %v8825, %v8825
    %v9414 = vmul.f32 %v8826, %v8826
    %v9415 = vmul.f32 %v8827, %v8827
    %v9416 = vmul.f32 %v8828, %v8828
    %v9417 = vmul.f32 %v8829, %v8829
    %v9418 = vmul.f32 %v8830, %v8830
    %v9419 = vmul.f32 %v8831, %v8831
    %v9420 = vmul.f32 %v8832, %v8832
    %v9421 = vmul.f32 %v8833, %v8833
    %v9422 = vmul.f32 %v8834, %v8834
    %v9423 = vmul.f32 %v8835, %v8835
    %v9424 = vmul.f32 %v8836, %v8836
    %v9425 = vmul.f32 %v8837, %v8837
    %v9426 = vmul.f32 %v8838, %v8838
    %v9427 = vmul.f32 %v8839, %v8839
    %v9428 = vmul.f32 %v8840, %v8840
    %v9429 = vmul.f32 %v8841, %v8841
    %v9430 = vmul.f32 %v8842, %v8842
    %v9431 = vmul.f32 %v8843, %v8843
    %v9432 = vmul.f32 %v8844, %v8844
    %v9433 = vmul.f32 %v8845, %v8845
    %v9434 = vmul.f32 %v8846, %v8846
    %v9435 = vmul.f32 %v8847, %v8847
    %v9436 = vmul.f32 %v8848, %v8848
    %v9437 = vmul.f32 %v8849, %v8849
    %v9438 = vmul.f32 %v8850, %v8850
    %v9439 = vmul.f32 %v8851, %v8851
    %v9440 = vmul.f32 %v8852, %v8852
    %v9441 = vmul.f32 %v8853, %v8853
    %v9442 = vmul.f32 %v8854, %v8854
    %v9443 = vmul.f32 %v8855, %v8855
    %v9444 = vmul.f32 %v8856, %v8856
    %v9445 = vmul.f32 %v8857, %v8857
    %v9446 = vmul.f32 %v8858, %v8858
    %v9447 = vmul.f32 %v8859, %v8859
    %v9448 = vmul.f32 %v8860, %v8860
    %v9449 = vmul.f32 %v8861, %v8861
    %v9450 = vmul.f32 %v8862, %v8862
    %v9451 = vmul.f32 %v8863, %v8863
    %v9452 = vmul.f32 %v8864, %v8864
    %v9453 = vmul.f32 %v8865, %v8865
    %v9454 = vmul.f32 %v8866, %v8866
    %v9455 = vmul.f32 %v8867, %v8867
    %v9456 = vmul.f32 %v8868, %v8868
    %v9457 = vmul.f32 %v8869, %v8869
    %v9458 = vmul.f32 %v8870, %v8870
    %v9459 = vmul.f32 %v8871, %v8871
    %v9460 = vmul.f32 %v8872, %v8872
    %v9461 = vmul.f32 %v8873, %v8873
    %v9462 = vmul.f32 %v8874, %v8874
    %v9463 = vmul.f32 %v8875, %v8875
    %v9464 = vmul.f32 %v8876, %v8876
    %v9465 = vmul.f32 %v8877, %v8877
    %v9466 = vmul.f32 %v8878, %v8878
    %v9467 = vmul.f32 %v8879, %v8879
    %v9468 = vmul.f32 %v8880, %v8880
    %v9469 = vmul.f32 %v8881, %v8881
    %v9470 = vmul.f32 %v8882, %v8882
    %v9471 = vmul.f32 %v8883, %v8883
    %v9472 = vmul.f32 %v8884, %v8884
    %v9473 = vmul.f32 %v8885, %v8885
    %v9474 = vmul.f32 %v8886, %v8886
    %v9475 = vmul.f32 %v8887, %v8887
    %v9476 = vmul.f32 %v8888, %v8888
    %v9477 = vmul.f32 %v8889, %v8889
    %v9478 = vmul.f32 %v8890, %v8890
    %v9479 = vmul.f32 %v8891, %v8891
    %v9480 = vmul.f32 %v8892, %v8892
    %v9481 = vmul.f32 %v8893, %v8893
    %v9482 = vmul.f32 %v8894, %v8894
    %v9483 = vmul.f32 %v8895, %v8895
    %v9484 = vmul.f32 %v8896, %v8896
    %v9485 = vmul.f32 %v8897, %v8897
    %v9486 = vmul.f32 %v8898, %v8898
    %v9487 = vmul.f32 %v8899, %v8899
    %v9488 = vmul.f32 %v8900, %v8900
    %v9489 = vmul.f32 %v8901, %v8901
    %v9490 = vmul.f32 %v8902, %v8902
    %v9491 = vmul.f32 %v8903, %v8903
    %v9492 = vmul.f32 %v8904, %v8904
    %v9493 = vmul.f32 %v8905, %v8905
    %v9494 = vmul.f32 %v8906, %v8906
    %v9495 = vmul.f32 %v8907, %v8907
    %v9496 = vmul.f32 %v8908, %v8908
    %v9497 = vmul.f32 %v8909, %v8909
    %v9498 = vmul.f32 %v8910, %v8910
    %v9499 = vmul.f32 %v8911, %v8911
    %v9500 = vmul.f32 %v8912, %v8912
    %v9501 = vmul.f32 %v8913, %v8913
    %v9502 = vmul.f32 %v8914, %v8914
    %v9503 = vmul.f32 %v8915, %v8915
    %v9504 = vmul.f32 %v8916, %v8916
    %v9505 = vmul.f32 %v8917, %v8917
    %v9506 = vmul.f32 %v8918, %v8918
    %v9507 = vmul.f32 %v8919, %v8919
    %v9508 = vmul.f32 %v8920, %v8920
    %v9509 = vmul.f32 %v8921, %v8921
    %v9510 = vmul.f32 %v8922, %v8922
    %v9511 = vmul.f32 %v8923, %v8923
    %v9512 = vmul.f32 %v8924, %v8924
    %v9513 = vmul.f32 %v8925, %v8925
    %v9514 = vmul.f32 %v8926, %v8926
    %v9515 = vmul.f32 %v8927, %v8927
    %v9516 = vmul.f32 %v8928, %v8928
    %v9517 = vmul.f32 %v8929, %v8929
    %v9518 = vmul.f32 %v8930, %v8930
    %v9519 = vmul.f32 %v8931, %v8931
    %v9520 = vmul.f32 %v8932, %v8932
    %v9521 = vmul.f32 %v8933, %v8933
    %v9522 = vmul.f32 %v8934, %v8934
    %v9523 = vmul.f32 %v8935, %v8935
    %v9524 = vmul.f32 %v8936, %v8936
    %v9525 = vmul.f32 %v8937, %v8937
    %v9526 = vmul.f32 %v8938, %v8938
    %v9527 = vmul.f32 %v8939, %v8939
    %v9528 = vmul.f32 %v8940, %v8940
    %v9529 = vmul.f32 %v8941, %v8941
    %v9530 = vmul.f32 %v8942, %v8942
    %v9531 = vmul.f32 %v8943, %v8943
    %v9532 = vmul.f32 %v8944, %v8944
    %v9533 = vmul.f32 %v8945, %v8945
    %v9534 = vmul.f32 %v8946, %v8946
    %v9535 = vmul.f32 %v8947, %v8947
    %v9536 = vmul.f32 %v8948, %v8948
    %v9537 = vmul.f32 %v8949, %v8949
    %v9538 = vmul.f32 %v8950, %v8950
    %v9539 = vmul.f32 %v8951, %v8951
    %v9540 = vmul.f32 %v8952, %v8952
    %v9541 = vmul.f32 %v8953, %v8953
    %v9542 = vmul.f32 %v8954, %v8954
    %v9543 = vmul.f32 %v8955, %v8955
    %v9544 = vmul.f32 %v8956, %v8956
    %v9545 = vmul.f32 %v8957, %v8957
    %v9546 = vmul.f32 %v8958, %v8958
    %v9547 = vmul.f32 %v8959, %v8959
    %v9548 = vmul.f32 %v8960, %v8960
    %v9549 = vmul.f32 %v8961, %v8961
    %v9550 = vmul.f32 %v8962, %v8962
    %v9551 = vmul.f32 %v8963, %v8963
    %v9552 = vmul.f32 %v8964, %v8964
    %v9553 = vmul.f32 %v8965, %v8965
    %v9554 = vmul.f32 %v8966, %v8966
    %v9555 = vmul.f32 %v8967, %v8967
    %v9556 = vmul.f32 %v8968, %v8968
    %v9557 = vmul.f32 %v8969, %v8969
    %v9558 = vmul.f32 %v8970, %v8970
    %v9559 = vmul.f32 %v8971, %v8971
    %v9560 = vmul.f32 %v8972, %v8972
    %v9561 = vmul.f32 %v8973, %v8973
    %v9562 = vmul.f32 %v8974, %v8974
    %v9563 = vmul.f32 %v8975, %v8975
    %v9564 = vmul.f32 %v8976, %v8976
    %v9565 = vmul.f32 %v8977, %v8977
    %v9566 = vmul.f32 %v8978, %v8978
    %v9567 = vmul.f32 %v8979, %v8979
    %v9568 = vmul.f32 %v8980, %v8980
    %v9569 = vmul.f32 %v8981, %v8981
    %v9570 = vmul.f32 %v8982, %v8982
    %v9571 = vmul.f32 %v8983, %v8983
    %v9572 = vmul.f32 %v8984, %v8984
    %v9573 = vmul.f32 %v8985, %v8985
    %v9574 = vmul.f32 %v8986, %v8986
    %v9575 = vmul.f32 %v8987, %v8987
    %v9576 = vmul.f32 %v8988, %v8988
    %v9577 = vmul.f32 %v8989, %v8989
    %v9578 = vmul.f32 %v8990, %v8990
    %v9579 = vmul.f32 %v8991, %v8991
    %v9580 = vmul.f32 %v8992, %v8992
    %v9581 = vmul.f32 %v8993, %v8993
    %v9582 = vmul.f32 %v8994, %v8994
    %v9583 = vmul.f32 %v8995, %v8995
    %v9584 = vmul.f32 %v8996, %v8996
    %v9585 = vmul.f32 %v8997, %v8997
    %v9586 = vmul.f32 %v8998, %v8998
    %v9587 = vmul.f32 %v8999, %v8999
    %v9588 = vmul.f32 %v9000, %v9000
    %v9589 = vmul.f32 %v9001, %v9001
    %v9590 = vmul.f32 %v9002, %v9002
    %v9591 = vmul.f32 %v9003, %v9003
    %v9592 = vmul.f32 %v9004, %v9004
    %v9593 = vmul.f32 %v9005, %v9005
    %v9594 = vmul.f32 %v9006, %v9006
    %v9595 = vmul.f32 %v9007, %v9007
    %v9596 = vmul.f32 %v9008, %v9008
    %v9597 = vmul.f32 %v9009, %v9009
    %v9598 = vmul.f32 %v9010, %v9010
    %v9599 = vmul.f32 %v9011, %v9011
    %v9600 = vmul.f32 %v9012, %v9012
    %v9601 = vmul.f32 %v9013, %v9013
    %v9602 = vmul.f32 %v9014, %v9014
    %v9603 = vmul.f32 %v9015, %v9015
    %v9604 = vmul.f32 %v9016, %v9016
    %v9605 = vmul.f32 %v9017, %v9017
    %v9606 = vmul.f32 %v9018, %v9018
    %v9607 = vmul.f32 %v9019, %v9019
    %v9608 = vmul.f32 %v9020, %v9020
    %v9609 = vmul.f32 %v9021, %v9021
    %v9610 = vmul.f32 %v9022, %v9022
    %v9611 = vmul.f32 %v9023, %v9023
    %v9612 = vmul.f32 %v9024, %v9024
    %v9613 = vmul.f32 %v9025, %v9025
    %v9614 = vmul.f32 %v9026, %v9026
    %v9615 = vmul.f32 %v9027, %v9027
    %v9616 = vmul.f32 %v9028, %v9028
    %v9617 = vmul.f32 %v9029, %v9029
    %v9618 = vmul.f32 %v9030, %v9030
    %v9619 = vmul.f32 %v9031, %v9031
    %v9620 = vmul.f32 %v9032, %v9032
    %v9621 = vmul.f32 %v9033, %v9033
    %v9622 = vmul.f32 %v9034, %v9034
    %v9623 = vmul.f32 %v9035, %v9035
    %v9624 = vmul.f32 %v9036, %v9036
    %v9625 = vmul.f32 %v9037, %v9037
    %v9626 = vmul.f32 %v9038, %v9038
    %v9627 = vmul.f32 %v9039, %v9039
    %v9628 = vmul.f32 %v9040, %v9040
    %v9629 = vmul.f32 %v9041, %v9041
    %v9630 = vmul.f32 %v9042, %v9042
    %v9631 = vmul.f32 %v9043, %v9043
    %v9632 = vmul.f32 %v9044, %v9044
    %v9633 = vmul.f32 %v9045, %v9045
    %v9634 = vmul.f32 %v9046, %v9046
    %v9635 = vmul.f32 %v9047, %v9047
    %v9636 = vmul.f32 %v9048, %v9048
    %v9637 = vmul.f32 %v9049, %v9049
    %v9638 = vmul.f32 %v9050, %v9050
    %v9639 = vmul.f32 %v9051, %v9051
    %v9640 = vmul.f32 %v9052, %v9052
    %v9641 = vmul.f32 %v9053, %v9053
    %v9642 = vmul.f32 %v9054, %v9054
    %v9643 = vmul.f32 %v9055, %v9055
    %v9644 = vmul.f32 %v9056, %v9056
    %v9645 = vmul.f32 %v9057, %v9057
    %v9646 = vmul.f32 %v9058, %v9058
    %v9647 = vmul.f32 %v9059, %v9059
    %v9648 = vmul.f32 %v9060, %v9060
    %v9649 = vmul.f32 %v9061, %v9061
    %v9650 = vmul.f32 %v9062, %v9062
    %v9651 = vmul.f32 %v9063, %v9063
    %v9652 = vmul.f32 %v9064, %v9064
    %v9653 = vmul.f32 %v9065, %v9065
    %v9654 = vmul.f32 %v9066, %v9066
    %v9655 = vmul.f32 %v9067, %v9067
    %v9656 = vmul.f32 %v9068, %v9068
    %v9657 = vmul.f32 %v9069, %v9069
    %v9658 = vmul.f32 %v9070, %v9070
    %v9659 = vmul.f32 %v9071, %v9071
    %v9660 = vmul.f32 %v9072, %v9072
    %v9661 = vmul.f32 %v9073, %v9073
    %v9662 = vmul.f32 %v9074, %v9074
    %v9663 = vmul.f32 %v9075, %v9075
    %v9664 = vmul.f32 %v9076, %v9076
    %v9665 = vmul.f32 %v9077, %v9077
    %v9666 = vmul.f32 %v9078, %v9078
    %v9667 = vmul.f32 %v9079, %v9079
    %v9668 = vmul.f32 %v9080, %v9080
    %v9669 = vmul.f32 %v9081, %v9081
    %v9670 = vmul.f32 %v9082, %v9082
    %v9671 = vmul.f32 %v9083, %v9083
    %v9672 = vmul.f32 %v9084, %v9084
    %v9673 = vmul.f32 %v9085, %v9085
    %v9674 = vmul.f32 %v9086, %v9086
    %v9675 = vmul.f32 %v9087, %v9087
    %v9676 = vmul.f32 %v9088, %v9088
    %v9677 = vmul.f32 %v9089, %v9089
    %v9678 = vmul.f32 %v9090, %v9090
    %v9679 = vmul.f32 %v9091, %v9091
    %v9680 = vmul.f32 %v9092, %v9092
    %v9681 = vmul.f32 %v9093, %v9093
    %v9682 = vmul.f32 %v9094, %v9094
    %v9683 = vmul.f32 %v9095, %v9095
    %v9684 = vmul.f32 %v9096, %v9096
    %v9685 = vmul.f32 %v9097, %v9097
    %v9686 = vmul.f32 %v9098, %v9098
    %v9687 = vmul.f32 %v9099, %v9099
    %v9688 = vmul.f32 %v9100, %v9100
    %v9689 = vmul.f32 %v9101, %v9101
    %v9690 = vmul.f32 %v9102, %v9102
    %v9691 = vmul.f32 %v9103, %v9103
    %v9692 = vmul.f32 %v9104, %v9104
    %v9693 = vmul.f32 %v9105, %v9105
    %v9694 = vmul.f32 %v9106, %v9106
    %v9695 = vmul.f32 %v9107, %v9107
    %v9696 = vmul.f32 %v9108, %v9108
    %v9697 = vmul.f32 %v9109, %v9109
    %v9698 = vmul.f32 %v9110, %v9110
    %v9699 = vmul.f32 %v9111, %v9111
    %v9700 = vmul.f32 %v9112, %v9112
    %v9701 = vmul.f32 %v9113, %v9113
    %v9702 = vmul.f32 %v9114, %v9114
    %v9703 = vmul.f32 %v9115, %v9115
    %v9704 = vmul.f32 %v9116, %v9116
    %v9705 = vmul.f32 %v9117, %v9117
    %v9706 = vmul.f32 %v9118, %v9118
    %v9707 = vmul.f32 %v9119, %v9119
    %v9708 = vmul.f32 %v9120, %v9120
    %v9709 = vmul.f32 %v9121, %v9121
    %v9710 = vmul.f32 %v9122, %v9122
    %v9711 = vmul.f32 %v9123, %v9123
    %v9712 = vmul.f32 %v9124, %v9124
    %v9713 = vmul.f32 %v9125, %v9125
    %v9714 = vmul.f32 %v9126, %v9126
    %v9715 = vmul.f32 %v9127, %v9127
    %v9716 = vmul.f32 %v9128, %v9128
    %v9717 = vmul.f32 %v9129, %v9129
    %v9718 = vmul.f32 %v9130, %v9130
    %v9719 = vmul.f32 %v9131, %v9131
    %v9720 = vmul.f32 %v9132, %v9132
    %v9721 = vmul.f32 %v9133, %v9133
    %v9722 = vmul.f32 %v9134, %v9134
    %v9723 = vmul.f32 %v9135, %v9135
    %v9724 = vmul.f32 %v9136, %v9136
    %v9725 = vmul.f32 %v9137, %v9137
    %v9726 = vmul.f32 %v9138, %v9138
    %v9727 = vmul.f32 %v9139, %v9139
    %v9728 = vmul.f32 %v9140, %v9140
    %v9729 = vmul.f32 %v9141, %v9141
    %v9730 = vmul.f32 %v9142, %v9142
    %v9731 = vmul.f32 %v9143, %v9143
    %v9732 = vmul.f32 %v9144, %v9144
    %v9733 = vmul.f32 %v9145, %v9145
    %v9734 = vmul.f32 %v9146, %v9146
    %v9735 = vmul.f32 %v9147, %v9147
    %v9736 = vmul.f32 %v9148, %v9148
    %v9737 = vmul.f32 %v9149, %v9149
    %v9738 = vmul.f32 %v9150, %v9150
    %v9739 = vmul.f32 %v9151, %v9151
    %v9740 = vmul.f32 %v9152, %v9152
    %v9741 = vmul.f32 %v9153, %v9153
    %v9742 = vmul.f32 %v9154, %v9154
    %v9743 = vmul.f32 %v9155, %v9155
    %v9744 = vmul.f32 %v9156, %v9156
    %v9745 = vmul.f32 %v9157, %v9157
    %v9746 = vmul.f32 %v9158, %v9158
    %v9747 = vmul.f32 %v9159, %v9159
    %v9748 = vmul.f32 %v9160, %v9160
    %v9749 = vmul.f32 %v9161, %v9161
    %v9750 = vmul.f32 %v9162, %v9162
    %v9751 = vmul.f32 %v9163, %v9163
    %v9752 = vmul.f32 %v9164, %v9164
    %v9753 = vmul.f32 %v9165, %v9165
    %v9754 = vmul.f32 %v9166, %v9166
    %v9755 = vmul.f32 %v9167, %v9167
    %v9756 = vmul.f32 %v9168, %v9168
    %v9757 = vmul.f32 %v9169, %v9169
    %v9758 = vmul.f32 %v9170, %v9170
    %v9759 = vmul.f32 %v9171, %v9171
    %v9760 = vmul.f32 %v9172, %v9172
    %v9761 = vmul.f32 %v9173, %v9173
    %v9762 = vmul.f32 %v9174, %v9174
    %v9763 = vmul.f32 %v9175, %v9175
    %v9764 = vmul.f32 %v9176, %v9176
    %v9765 = vmul.f32 %v9177, %v9177
    %v9766 = vmul.f32 %v9178, %v9178
    %v9767 = vmul.f32 %v9179, %v9179
    %v9768 = vmul.f32 %v9180, %v9180
    %v9769 = vmul.f32 %v9181, %v9181
    %v9770 = vmul.f32 %v9182, %v9182
    %v9771 = vmul.f32 %v9183, %v9183
    %v9772 = vmul.f32 %v9184, %v9184
    %v9773 = vmul.f32 %v9185, %v9185
    %v9774 = vmul.f32 %v9186, %v9186
    %v9775 = vmul.f32 %v9187, %v9187
    %v9776 = vmul.f32 %v9188, %v9188
    %v9777 = vmul.f32 %v9189, %v9189
    %v9778 = vmul.f32 %v9190, %v9190
    %v9779 = vmul.f32 %v9191, %v9191
    %v9780 = vmul.f32 %v9192, %v9192
    %v9781 = vmul.f32 %v9193, %v9193
    %v9782 = vmul.f32 %v9194, %v9194
    %v9783 = vmul.f32 %v9195, %v9195
    %v9784 = vmul.f32 %v9196, %v9196
    %v9785 = vmul.f32 %v9197, %v9197
    %v9786 = vmul.f32 %v9198, %v9198
    %v9787 = vmul.f32 %v9199, %v9199
    %v9788 = vmul.f32 %v9200, %v9200
    %v9789 = vmul.f32 %v9201, %v9201
    %v9790 = vmul.f32 %v9202, %v9202
    %v9791 = vmul.f32 %v9203, %v9203
    %v9792 = vmul.f32 %v9204, %v9204
    %v9793 = vmul.f32 %v9205, %v9205
    %v9794 = vmul.f32 %v9206, %v9206
    %v9795 = vmul.f32 %v9207, %v9207
    %v9796 = vmul.f32 %v9208, %v9208
    %v9797 = vmul.f32 %v9209, %v9209
    %v9798 = vmul.f32 %v9210, %v9210
    %v9799 = vmul.f32 %v9211, %v9211
    %v9800 = vmul.f32 %v9212, %v9212
    %v9801 = vmul.f32 %v9213, %v9213
    %v9802 = vmul.f32 %v9214, %v9214
    %v9803 = vmul.f32 %v9215, %v9215
    %v9804 = vmul.f32 %v9216, %v9216
    %v9805 = vadd.f32 %v9217, %v9223
    %v9806 = vadd.f32 %v9805, %v9229
    %v9807 = vadd.f32 %v9806, %v9235
    %v9808 = vadd.f32 %v9807, %v9241
    %v9809 = vadd.f32 %v9808, %v9247
    %v9810 = vadd.f32 %v9809, %v9253
    %v9811 = vadd.f32 %v9810, %v9259
    %v9812 = vadd.f32 %v9811, %v9265
    %v9813 = vadd.f32 %v9812, %v9271
    %v9814 = vadd.f32 %v9813, %v9277
    %v9815 = vadd.f32 %v9814, %v9283
    %v9816 = vadd.f32 %v9815, %v9289
    %v9817 = vadd.f32 %v9816, %v9295
    %v9818 = vadd.f32 %v9817, %v9301
    %v9819 = vadd.f32 %v9818, %v9307
    %v9820 = vadd.f32 %v9819, %v9313
    %v9821 = vadd.f32 %v9820, %v9319
    %v9822 = vadd.f32 %v9821, %v9325
    %v9823 = vadd.f32 %v9822, %v9331
    %v9824 = vadd.f32 %v9823, %v9337
    %v9825 = vadd.f32 %v9824, %v9343
    %v9826 = vadd.f32 %v9825, %v9349
    %v9827 = vadd.f32 %v9826, %v9355
    %v9828 = vadd.f32 %v9827, %v9361
    %v9829 = vadd.f32 %v9828, %v9367
    %v9830 = vadd.f32 %v9829, %v9373
    %v9831 = vadd.f32 %v9830, %v9379
    %v9832 = vadd.f32 %v9831, %v9385
    %v9833 = vadd.f32 %v9832, %v9391
    %v9834 = vadd.f32 %v9833, %v9397
    %v9835 = vadd.f32 %v9834, %v9403
    %v9836 = vadd.f32 %v9835, %v9409
    %v9837 = vadd.f32 %v9836, %v9415
    %v9838 = vadd.f32 %v9837, %v9421
    %v9839 = vadd.f32 %v9838, %v9427
    %v9840 = vadd.f32 %v9839, %v9433
    %v9841 = vadd.f32 %v9840, %v9439
    %v9842 = vadd.f32 %v9841, %v9445
    %v9843 = vadd.f32 %v9842, %v9451
    %v9844 = vadd.f32 %v9843, %v9457
    %v9845 = vadd.f32 %v9844, %v9463
    %v9846 = vadd.f32 %v9845, %v9469
    %v9847 = vadd.f32 %v9846, %v9475
    %v9848 = vadd.f32 %v9847, %v9481
    %v9849 = vadd.f32 %v9848, %v9487
    %v9850 = vadd.f32 %v9849, %v9493
    %v9851 = vadd.f32 %v9850, %v9499
    %v9852 = vadd.f32 %v9851, %v9505
    %v9853 = vadd.f32 %v9852, %v9511
    %v9854 = vadd.f32 %v9853, %v9517
    %v9855 = vadd.f32 %v9854, %v9523
    %v9856 = vadd.f32 %v9855, %v9529
    %v9857 = vadd.f32 %v9856, %v9535
    %v9858 = vadd.f32 %v9857, %v9541
    %v9859 = vadd.f32 %v9858, %v9547
    %v9860 = vadd.f32 %v9859, %v9553
    %v9861 = vadd.f32 %v9860, %v9559
    %v9862 = vadd.f32 %v9861, %v9565
    %v9863 = vadd.f32 %v9862, %v9571
    %v9864 = vadd.f32 %v9863, %v9577
    %v9865 = vadd.f32 %v9864, %v9583
    %v9866 = vadd.f32 %v9865, %v9589
    %v9867 = vadd.f32 %v9866, %v9595
    %v9868 = vadd.f32 %v9867, %v9601
    %v9869 = vadd.f32 %v9868, %v9607
    %v9870 = vadd.f32 %v9869, %v9613
    %v9871 = vadd.f32 %v9870, %v9619
    %v9872 = vadd.f32 %v9871, %v9625
    %v9873 = vadd.f32 %v9872, %v9631
    %v9874 = vadd.f32 %v9873, %v9637
    %v9875 = vadd.f32 %v9874, %v9643
    %v9876 = vadd.f32 %v9875, %v9649
    %v9877 = vadd.f32 %v9876, %v9655
    %v9878 = vadd.f32 %v9877, %v9661
    %v9879 = vadd.f32 %v9878, %v9667
    %v9880 = vadd.f32 %v9879, %v9673
    %v9881 = vadd.f32 %v9880, %v9679
    %v9882 = vadd.f32 %v9881, %v9685
    %v9883 = vadd.f32 %v9882, %v9691
    %v9884 = vadd.f32 %v9883, %v9697
    %v9885 = vadd.f32 %v9884, %v9703
    %v9886 = vadd.f32 %v9885, %v9709
    %v9887 = vadd.f32 %v9886, %v9715
    %v9888 = vadd.f32 %v9887, %v9721
    %v9889 = vadd.f32 %v9888, %v9727
    %v9890 = vadd.f32 %v9889, %v9733
    %v9891 = vadd.f32 %v9890, %v9739
    %v9892 = vadd.f32 %v9891, %v9745
    %v9893 = vadd.f32 %v9892, %v9751
    %v9894 = vadd.f32 %v9893, %v9757
    %v9895 = vadd.f32 %v9894, %v9763
    %v9896 = vadd.f32 %v9895, %v9769
    %v9897 = vadd.f32 %v9896, %v9775
    %v9898 = vadd.f32 %v9897, %v9781
    %v9899 = vadd.f32 %v9898, %v9787
    %v9900 = vadd.f32 %v9899, %v9793
    %v9901 = vadd.f32 %v9900, %v9799
    %v9902 = vrot.slane %v9901, 4
    %v9903 = vadd.f32 %v9901, %v9902
    %v9904 = vrot.slane %v9903, 2
    %v9905 = vadd.f32 %v9903, %v9904
    %v9906 = vrot.slane %v9905, 1
    %v9907 = vadd.f32 %v9905, %v9906
    %v9908 = vadd.f32 %v9218, %v9224
    %v9909 = vadd.f32 %v9908, %v9230
    %v9910 = vadd.f32 %v9909, %v9236
    %v9911 = vadd.f32 %v9910, %v9242
    %v9912 = vadd.f32 %v9911, %v9248
    %v9913 = vadd.f32 %v9912, %v9254
    %v9914 = vadd.f32 %v9913, %v9260
    %v9915 = vadd.f32 %v9914, %v9266
    %v9916 = vadd.f32 %v9915, %v9272
    %v9917 = vadd.f32 %v9916, %v9278
    %v9918 = vadd.f32 %v9917, %v9284
    %v9919 = vadd.f32 %v9918, %v9290
    %v9920 = vadd.f32 %v9919, %v9296
    %v9921 = vadd.f32 %v9920, %v9302
    %v9922 = vadd.f32 %v9921, %v9308
    %v9923 = vadd.f32 %v9922, %v9314
    %v9924 = vadd.f32 %v9923, %v9320
    %v9925 = vadd.f32 %v9924, %v9326
    %v9926 = vadd.f32 %v9925, %v9332
    %v9927 = vadd.f32 %v9926, %v9338
    %v9928 = vadd.f32 %v9927, %v9344
    %v9929 = vadd.f32 %v9928, %v9350
    %v9930 = vadd.f32 %v9929, %v9356
    %v9931 = vadd.f32 %v9930, %v9362
    %v9932 = vadd.f32 %v9931, %v9368
    %v9933 = vadd.f32 %v9932, %v9374
    %v9934 = vadd.f32 %v9933, %v9380
    %v9935 = vadd.f32 %v9934, %v9386
    %v9936 = vadd.f32 %v9935, %v9392
    %v9937 = vadd.f32 %v9936, %v9398
    %v9938 = vadd.f32 %v9937, %v9404
    %v9939 = vadd.f32 %v9938, %v9410
    %v9940 = vadd.f32 %v9939, %v9416
    %v9941 = vadd.f32 %v9940, %v9422
    %v9942 = vadd.f32 %v9941, %v9428
    %v9943 = vadd.f32 %v9942, %v9434
    %v9944 = vadd.f32 %v9943, %v9440
    %v9945 = vadd.f32 %v9944, %v9446
    %v9946 = vadd.f32 %v9945, %v9452
    %v9947 = vadd.f32 %v9946, %v9458
    %v9948 = vadd.f32 %v9947, %v9464
    %v9949 = vadd.f32 %v9948, %v9470
    %v9950 = vadd.f32 %v9949, %v9476
    %v9951 = vadd.f32 %v9950, %v9482
    %v9952 = vadd.f32 %v9951, %v9488
    %v9953 = vadd.f32 %v9952, %v9494
    %v9954 = vadd.f32 %v9953, %v9500
    %v9955 = vadd.f32 %v9954, %v9506
    %v9956 = vadd.f32 %v9955, %v9512
    %v9957 = vadd.f32 %v9956, %v9518
    %v9958 = vadd.f32 %v9957, %v9524
    %v9959 = vadd.f32 %v9958, %v9530
    %v9960 = vadd.f32 %v9959, %v9536
    %v9961 = vadd.f32 %v9960, %v9542
    %v9962 = vadd.f32 %v9961, %v9548
    %v9963 = vadd.f32 %v9962, %v9554
    %v9964 = vadd.f32 %v9963, %v9560
    %v9965 = vadd.f32 %v9964, %v9566
    %v9966 = vadd.f32 %v9965, %v9572
    %v9967 = vadd.f32 %v9966, %v9578
    %v9968 = vadd.f32 %v9967, %v9584
    %v9969 = vadd.f32 %v9968, %v9590
    %v9970 = vadd.f32 %v9969, %v9596
    %v9971 = vadd.f32 %v9970, %v9602
    %v9972 = vadd.f32 %v9971, %v9608
    %v9973 = vadd.f32 %v9972, %v9614
    %v9974 = vadd.f32 %v9973, %v9620
    %v9975 = vadd.f32 %v9974, %v9626
    %v9976 = vadd.f32 %v9975, %v9632
    %v9977 = vadd.f32 %v9976, %v9638
    %v9978 = vadd.f32 %v9977, %v9644
    %v9979 = vadd.f32 %v9978, %v9650
    %v9980 = vadd.f32 %v9979, %v9656
    %v9981 = vadd.f32 %v9980, %v9662
    %v9982 = vadd.f32 %v9981, %v9668
    %v9983 = vadd.f32 %v9982, %v9674
    %v9984 = vadd.f32 %v9983, %v9680
    %v9985 = vadd.f32 %v9984, %v9686
    %v9986 = vadd.f32 %v9985, %v9692
    %v9987 = vadd.f32 %v9986, %v9698
    %v9988 = vadd.f32 %v9987, %v9704
    %v9989 = vadd.f32 %v9988, %v9710
    %v9990 = vadd.f32 %v9989, %v9716
    %v9991 = vadd.f32 %v9990, %v9722
    %v9992 = vadd.f32 %v9991, %v9728
    %v9993 = vadd.f32 %v9992, %v9734
    %v9994 = vadd.f32 %v9993, %v9740
    %v9995 = vadd.f32 %v9994, %v9746
    %v9996 = vadd.f32 %v9995, %v9752
    %v9997 = vadd.f32 %v9996, %v9758
    %v9998 = vadd.f32 %v9997, %v9764
    %v9999 = vadd.f32 %v9998, %v9770
    %v10000 = vadd.f32 %v9999, %v9776
    %v10001 = vadd.f32 %v10000, %v9782
    %v10002 = vadd.f32 %v10001, %v9788
    %v10003 = vadd.f32 %v10002, %v9794
    %v10004 = vadd.f32 %v10003, %v9800
    %v10005 = vrot.slane %v10004, 4
    %v10006 = vadd.f32 %v10004, %v10005
    %v10007 = vrot.slane %v10006, 2
    %v10008 = vadd.f32 %v10006, %v10007
    %v10009 = vrot.slane %v10008, 1
    %v10010 = vadd.f32 %v10008, %v10009
    %v10011 = vadd.f32 %v9219, %v9225
    %v10012 = vadd.f32 %v10011, %v9231
    %v10013 = vadd.f32 %v10012, %v9237
    %v10014 = vadd.f32 %v10013, %v9243
    %v10015 = vadd.f32 %v10014, %v9249
    %v10016 = vadd.f32 %v10015, %v9255
    %v10017 = vadd.f32 %v10016, %v9261
    %v10018 = vadd.f32 %v10017, %v9267
    %v10019 = vadd.f32 %v10018, %v9273
    %v10020 = vadd.f32 %v10019, %v9279
    %v10021 = vadd.f32 %v10020, %v9285
    %v10022 = vadd.f32 %v10021, %v9291
    %v10023 = vadd.f32 %v10022, %v9297
    %v10024 = vadd.f32 %v10023, %v9303
    %v10025 = vadd.f32 %v10024, %v9309
    %v10026 = vadd.f32 %v10025, %v9315
    %v10027 = vadd.f32 %v10026, %v9321
    %v10028 = vadd.f32 %v10027, %v9327
    %v10029 = vadd.f32 %v10028, %v9333
    %v10030 = vadd.f32 %v10029, %v9339
    %v10031 = vadd.f32 %v10030, %v9345
    %v10032 = vadd.f32 %v10031, %v9351
    %v10033 = vadd.f32 %v10032, %v9357
    %v10034 = vadd.f32 %v10033, %v9363
    %v10035 = vadd.f32 %v10034, %v9369
    %v10036 = vadd.f32 %v10035, %v9375
    %v10037 = vadd.f32 %v10036, %v9381
    %v10038 = vadd.f32 %v10037, %v9387
    %v10039 = vadd.f32 %v10038, %v9393
    %v10040 = vadd.f32 %v10039, %v9399
    %v10041 = vadd.f32 %v10040, %v9405
    %v10042 = vadd.f32 %v10041, %v9411
    %v10043 = vadd.f32 %v10042, %v9417
    %v10044 = vadd.f32 %v10043, %v9423
    %v10045 = vadd.f32 %v10044, %v9429
    %v10046 = vadd.f32 %v10045, %v9435
    %v10047 = vadd.f32 %v10046, %v9441
    %v10048 = vadd.f32 %v10047, %v9447
    %v10049 = vadd.f32 %v10048, %v9453
    %v10050 = vadd.f32 %v10049, %v9459
    %v10051 = vadd.f32 %v10050, %v9465
    %v10052 = vadd.f32 %v10051, %v9471
    %v10053 = vadd.f32 %v10052, %v9477
    %v10054 = vadd.f32 %v10053, %v9483
    %v10055 = vadd.f32 %v10054, %v9489
    %v10056 = vadd.f32 %v10055, %v9495
    %v10057 = vadd.f32 %v10056, %v9501
    %v10058 = vadd.f32 %v10057, %v9507
    %v10059 = vadd.f32 %v10058, %v9513
    %v10060 = vadd.f32 %v10059, %v9519
    %v10061 = vadd.f32 %v10060, %v9525
    %v10062 = vadd.f32 %v10061, %v9531
    %v10063 = vadd.f32 %v10062, %v9537
    %v10064 = vadd.f32 %v10063, %v9543
    %v10065 = vadd.f32 %v10064, %v9549
    %v10066 = vadd.f32 %v10065, %v9555
    %v10067 = vadd.f32 %v10066, %v9561
    %v10068 = vadd.f32 %v10067, %v9567
    %v10069 = vadd.f32 %v10068, %v9573
    %v10070 = vadd.f32 %v10069, %v9579
    %v10071 = vadd.f32 %v10070, %v9585
    %v10072 = vadd.f32 %v10071, %v9591
    %v10073 = vadd.f32 %v10072, %v9597
    %v10074 = vadd.f32 %v10073, %v9603
    %v10075 = vadd.f32 %v10074, %v9609
    %v10076 = vadd.f32 %v10075, %v9615
    %v10077 = vadd.f32 %v10076, %v9621
    %v10078 = vadd.f32 %v10077, %v9627
    %v10079 = vadd.f32 %v10078, %v9633
    %v10080 = vadd.f32 %v10079, %v9639
    %v10081 = vadd.f32 %v10080, %v9645
    %v10082 = vadd.f32 %v10081, %v9651
    %v10083 = vadd.f32 %v10082, %v9657
    %v10084 = vadd.f32 %v10083, %v9663
    %v10085 = vadd.f32 %v10084, %v9669
    %v10086 = vadd.f32 %v10085, %v9675
    %v10087 = vadd.f32 %v10086, %v9681
    %v10088 = vadd.f32 %v10087, %v9687
    %v10089 = vadd.f32 %v10088, %v9693
    %v10090 = vadd.f32 %v10089, %v9699
    %v10091 = vadd.f32 %v10090, %v9705
    %v10092 = vadd.f32 %v10091, %v9711
    %v10093 = vadd.f32 %v10092, %v9717
    %v10094 = vadd.f32 %v10093, %v9723
    %v10095 = vadd.f32 %v10094, %v9729
    %v10096 = vadd.f32 %v10095, %v9735
    %v10097 = vadd.f32 %v10096, %v9741
    %v10098 = vadd.f32 %v10097, %v9747
    %v10099 = vadd.f32 %v10098, %v9753
    %v10100 = vadd.f32 %v10099, %v9759
    %v10101 = vadd.f32 %v10100, %v9765
    %v10102 = vadd.f32 %v10101, %v9771
    %v10103 = vadd.f32 %v10102, %v9777
    %v10104 = vadd.f32 %v10103, %v9783
    %v10105 = vadd.f32 %v10104, %v9789
    %v10106 = vadd.f32 %v10105, %v9795
    %v10107 = vadd.f32 %v10106, %v9801
    %v10108 = vrot.slane %v10107, 4
    %v10109 = vadd.f32 %v10107, %v10108
    %v10110 = vrot.slane %v10109, 2
    %v10111 = vadd.f32 %v10109, %v10110
    %v10112 = vrot.slane %v10111, 1
    %v10113 = vadd.f32 %v10111, %v10112
    %v10114 = vadd.f32 %v9220, %v9226
    %v10115 = vadd.f32 %v10114, %v9232
    %v10116 = vadd.f32 %v10115, %v9238
    %v10117 = vadd.f32 %v10116, %v9244
    %v10118 = vadd.f32 %v10117, %v9250
    %v10119 = vadd.f32 %v10118, %v9256
    %v10120 = vadd.f32 %v10119, %v9262
    %v10121 = vadd.f32 %v10120, %v9268
    %v10122 = vadd.f32 %v10121, %v9274
    %v10123 = vadd.f32 %v10122, %v9280
    %v10124 = vadd.f32 %v10123, %v9286
    %v10125 = vadd.f32 %v10124, %v9292
    %v10126 = vadd.f32 %v10125, %v9298
    %v10127 = vadd.f32 %v10126, %v9304
    %v10128 = vadd.f32 %v10127, %v9310
    %v10129 = vadd.f32 %v10128, %v9316
    %v10130 = vadd.f32 %v10129, %v9322
    %v10131 = vadd.f32 %v10130, %v9328
    %v10132 = vadd.f32 %v10131, %v9334
    %v10133 = vadd.f32 %v10132, %v9340
    %v10134 = vadd.f32 %v10133, %v9346
    %v10135 = vadd.f32 %v10134, %v9352
    %v10136 = vadd.f32 %v10135, %v9358
    %v10137 = vadd.f32 %v10136, %v9364
    %v10138 = vadd.f32 %v10137, %v9370
    %v10139 = vadd.f32 %v10138, %v9376
    %v10140 = vadd.f32 %v10139, %v9382
    %v10141 = vadd.f32 %v10140, %v9388
    %v10142 = vadd.f32 %v10141, %v9394
    %v10143 = vadd.f32 %v10142, %v9400
    %v10144 = vadd.f32 %v10143, %v9406
    %v10145 = vadd.f32 %v10144, %v9412
    %v10146 = vadd.f32 %v10145, %v9418
    %v10147 = vadd.f32 %v10146, %v9424
    %v10148 = vadd.f32 %v10147, %v9430
    %v10149 = vadd.f32 %v10148, %v9436
    %v10150 = vadd.f32 %v10149, %v9442
    %v10151 = vadd.f32 %v10150, %v9448
    %v10152 = vadd.f32 %v10151, %v9454
    %v10153 = vadd.f32 %v10152, %v9460
    %v10154 = vadd.f32 %v10153, %v9466
    %v10155 = vadd.f32 %v10154, %v9472
    %v10156 = vadd.f32 %v10155, %v9478
    %v10157 = vadd.f32 %v10156, %v9484
    %v10158 = vadd.f32 %v10157, %v9490
    %v10159 = vadd.f32 %v10158, %v9496
    %v10160 = vadd.f32 %v10159, %v9502
    %v10161 = vadd.f32 %v10160, %v9508
    %v10162 = vadd.f32 %v10161, %v9514
    %v10163 = vadd.f32 %v10162, %v9520
    %v10164 = vadd.f32 %v10163, %v9526
    %v10165 = vadd.f32 %v10164, %v9532
    %v10166 = vadd.f32 %v10165, %v9538
    %v10167 = vadd.f32 %v10166, %v9544
    %v10168 = vadd.f32 %v10167, %v9550
    %v10169 = vadd.f32 %v10168, %v9556
    %v10170 = vadd.f32 %v10169, %v9562
    %v10171 = vadd.f32 %v10170, %v9568
    %v10172 = vadd.f32 %v10171, %v9574
    %v10173 = vadd.f32 %v10172, %v9580
    %v10174 = vadd.f32 %v10173, %v9586
    %v10175 = vadd.f32 %v10174, %v9592
    %v10176 = vadd.f32 %v10175, %v9598
    %v10177 = vadd.f32 %v10176, %v9604
    %v10178 = vadd.f32 %v10177, %v9610
    %v10179 = vadd.f32 %v10178, %v9616
    %v10180 = vadd.f32 %v10179, %v9622
    %v10181 = vadd.f32 %v10180, %v9628
    %v10182 = vadd.f32 %v10181, %v9634
    %v10183 = vadd.f32 %v10182, %v9640
    %v10184 = vadd.f32 %v10183, %v9646
    %v10185 = vadd.f32 %v10184, %v9652
    %v10186 = vadd.f32 %v10185, %v9658
    %v10187 = vadd.f32 %v10186, %v9664
    %v10188 = vadd.f32 %v10187, %v9670
    %v10189 = vadd.f32 %v10188, %v9676
    %v10190 = vadd.f32 %v10189, %v9682
    %v10191 = vadd.f32 %v10190, %v9688
    %v10192 = vadd.f32 %v10191, %v9694
    %v10193 = vadd.f32 %v10192, %v9700
    %v10194 = vadd.f32 %v10193, %v9706
    %v10195 = vadd.f32 %v10194, %v9712
    %v10196 = vadd.f32 %v10195, %v9718
    %v10197 = vadd.f32 %v10196, %v9724
    %v10198 = vadd.f32 %v10197, %v9730
    %v10199 = vadd.f32 %v10198, %v9736
    %v10200 = vadd.f32 %v10199, %v9742
    %v10201 = vadd.f32 %v10200, %v9748
    %v10202 = vadd.f32 %v10201, %v9754
    %v10203 = vadd.f32 %v10202, %v9760
    %v10204 = vadd.f32 %v10203, %v9766
    %v10205 = vadd.f32 %v10204, %v9772
    %v10206 = vadd.f32 %v10205, %v9778
    %v10207 = vadd.f32 %v10206, %v9784
    %v10208 = vadd.f32 %v10207, %v9790
    %v10209 = vadd.f32 %v10208, %v9796
    %v10210 = vadd.f32 %v10209, %v9802
    %v10211 = vrot.slane %v10210, 4
    %v10212 = vadd.f32 %v10210, %v10211
    %v10213 = vrot.slane %v10212, 2
    %v10214 = vadd.f32 %v10212, %v10213
    %v10215 = vrot.slane %v10214, 1
    %v10216 = vadd.f32 %v10214, %v10215
    %v10217 = vadd.f32 %v9221, %v9227
    %v10218 = vadd.f32 %v10217, %v9233
    %v10219 = vadd.f32 %v10218, %v9239
    %v10220 = vadd.f32 %v10219, %v9245
    %v10221 = vadd.f32 %v10220, %v9251
    %v10222 = vadd.f32 %v10221, %v9257
    %v10223 = vadd.f32 %v10222, %v9263
    %v10224 = vadd.f32 %v10223, %v9269
    %v10225 = vadd.f32 %v10224, %v9275
    %v10226 = vadd.f32 %v10225, %v9281
    %v10227 = vadd.f32 %v10226, %v9287
    %v10228 = vadd.f32 %v10227, %v9293
    %v10229 = vadd.f32 %v10228, %v9299
    %v10230 = vadd.f32 %v10229, %v9305
    %v10231 = vadd.f32 %v10230, %v9311
    %v10232 = vadd.f32 %v10231, %v9317
    %v10233 = vadd.f32 %v10232, %v9323
    %v10234 = vadd.f32 %v10233, %v9329
    %v10235 = vadd.f32 %v10234, %v9335
    %v10236 = vadd.f32 %v10235, %v9341
    %v10237 = vadd.f32 %v10236, %v9347
    %v10238 = vadd.f32 %v10237, %v9353
    %v10239 = vadd.f32 %v10238, %v9359
    %v10240 = vadd.f32 %v10239, %v9365
    %v10241 = vadd.f32 %v10240, %v9371
    %v10242 = vadd.f32 %v10241, %v9377
    %v10243 = vadd.f32 %v10242, %v9383
    %v10244 = vadd.f32 %v10243, %v9389
    %v10245 = vadd.f32 %v10244, %v9395
    %v10246 = vadd.f32 %v10245, %v9401
    %v10247 = vadd.f32 %v10246, %v9407
    %v10248 = vadd.f32 %v10247, %v9413
    %v10249 = vadd.f32 %v10248, %v9419
    %v10250 = vadd.f32 %v10249, %v9425
    %v10251 = vadd.f32 %v10250, %v9431
    %v10252 = vadd.f32 %v10251, %v9437
    %v10253 = vadd.f32 %v10252, %v9443
    %v10254 = vadd.f32 %v10253, %v9449
    %v10255 = vadd.f32 %v10254, %v9455
    %v10256 = vadd.f32 %v10255, %v9461
    %v10257 = vadd.f32 %v10256, %v9467
    %v10258 = vadd.f32 %v10257, %v9473
    %v10259 = vadd.f32 %v10258, %v9479
    %v10260 = vadd.f32 %v10259, %v9485
    %v10261 = vadd.f32 %v10260, %v9491
    %v10262 = vadd.f32 %v10261, %v9497
    %v10263 = vadd.f32 %v10262, %v9503
    %v10264 = vadd.f32 %v10263, %v9509
    %v10265 = vadd.f32 %v10264, %v9515
    %v10266 = vadd.f32 %v10265, %v9521
    %v10267 = vadd.f32 %v10266, %v9527
    %v10268 = vadd.f32 %v10267, %v9533
    %v10269 = vadd.f32 %v10268, %v9539
    %v10270 = vadd.f32 %v10269, %v9545
    %v10271 = vadd.f32 %v10270, %v9551
    %v10272 = vadd.f32 %v10271, %v9557
    %v10273 = vadd.f32 %v10272, %v9563
    %v10274 = vadd.f32 %v10273, %v9569
    %v10275 = vadd.f32 %v10274, %v9575
    %v10276 = vadd.f32 %v10275, %v9581
    %v10277 = vadd.f32 %v10276, %v9587
    %v10278 = vadd.f32 %v10277, %v9593
    %v10279 = vadd.f32 %v10278, %v9599
    %v10280 = vadd.f32 %v10279, %v9605
    %v10281 = vadd.f32 %v10280, %v9611
    %v10282 = vadd.f32 %v10281, %v9617
    %v10283 = vadd.f32 %v10282, %v9623
    %v10284 = vadd.f32 %v10283, %v9629
    %v10285 = vadd.f32 %v10284, %v9635
    %v10286 = vadd.f32 %v10285, %v9641
    %v10287 = vadd.f32 %v10286, %v9647
    %v10288 = vadd.f32 %v10287, %v9653
    %v10289 = vadd.f32 %v10288, %v9659
    %v10290 = vadd.f32 %v10289, %v9665
    %v10291 = vadd.f32 %v10290, %v9671
    %v10292 = vadd.f32 %v10291, %v9677
    %v10293 = vadd.f32 %v10292, %v9683
    %v10294 = vadd.f32 %v10293, %v9689
    %v10295 = vadd.f32 %v10294, %v9695
    %v10296 = vadd.f32 %v10295, %v9701
    %v10297 = vadd.f32 %v10296, %v9707
    %v10298 = vadd.f32 %v10297, %v9713
    %v10299 = vadd.f32 %v10298, %v9719
    %v10300 = vadd.f32 %v10299, %v9725
    %v10301 = vadd.f32 %v10300, %v9731
    %v10302 = vadd.f32 %v10301, %v9737
    %v10303 = vadd.f32 %v10302, %v9743
    %v10304 = vadd.f32 %v10303, %v9749
    %v10305 = vadd.f32 %v10304, %v9755
    %v10306 = vadd.f32 %v10305, %v9761
    %v10307 = vadd.f32 %v10306, %v9767
    %v10308 = vadd.f32 %v10307, %v9773
    %v10309 = vadd.f32 %v10308, %v9779
    %v10310 = vadd.f32 %v10309, %v9785
    %v10311 = vadd.f32 %v10310, %v9791
    %v10312 = vadd.f32 %v10311, %v9797
    %v10313 = vadd.f32 %v10312, %v9803
    %v10314 = vrot.slane %v10313, 4
    %v10315 = vadd.f32 %v10313, %v10314
    %v10316 = vrot.slane %v10315, 2
    %v10317 = vadd.f32 %v10315, %v10316
    %v10318 = vrot.slane %v10317, 1
    %v10319 = vadd.f32 %v10317, %v10318
    %v10320 = vsel %vm3052, %v9222, 0.0
    %v10321 = vsel %vm3052, %v9228, 0.0
    %v10322 = vadd.f32 %v10320, %v10321
    %v10323 = vsel %vm3052, %v9234, 0.0
    %v10324 = vadd.f32 %v10322, %v10323
    %v10325 = vsel %vm3052, %v9240, 0.0
    %v10326 = vadd.f32 %v10324, %v10325
    %v10327 = vsel %vm3052, %v9246, 0.0
    %v10328 = vadd.f32 %v10326, %v10327
    %v10329 = vsel %vm3052, %v9252, 0.0
    %v10330 = vadd.f32 %v10328, %v10329
    %v10331 = vsel %vm3052, %v9258, 0.0
    %v10332 = vadd.f32 %v10330, %v10331
    %v10333 = vsel %vm3052, %v9264, 0.0
    %v10334 = vadd.f32 %v10332, %v10333
    %v10335 = vsel %vm3052, %v9270, 0.0
    %v10336 = vadd.f32 %v10334, %v10335
    %v10337 = vsel %vm3052, %v9276, 0.0
    %v10338 = vadd.f32 %v10336, %v10337
    %v10339 = vsel %vm3052, %v9282, 0.0
    %v10340 = vadd.f32 %v10338, %v10339
    %v10341 = vsel %vm3052, %v9288, 0.0
    %v10342 = vadd.f32 %v10340, %v10341
    %v10343 = vsel %vm3052, %v9294, 0.0
    %v10344 = vadd.f32 %v10342, %v10343
    %v10345 = vsel %vm3052, %v9300, 0.0
    %v10346 = vadd.f32 %v10344, %v10345
    %v10347 = vsel %vm3052, %v9306, 0.0
    %v10348 = vadd.f32 %v10346, %v10347
    %v10349 = vsel %vm3052, %v9312, 0.0
    %v10350 = vadd.f32 %v10348, %v10349
    %v10351 = vsel %vm3052, %v9318, 0.0
    %v10352 = vadd.f32 %v10350, %v10351
    %v10353 = vsel %vm3052, %v9324, 0.0
    %v10354 = vadd.f32 %v10352, %v10353
    %v10355 = vsel %vm3052, %v9330, 0.0
    %v10356 = vadd.f32 %v10354, %v10355
    %v10357 = vsel %vm3052, %v9336, 0.0
    %v10358 = vadd.f32 %v10356, %v10357
    %v10359 = vsel %vm3052, %v9342, 0.0
    %v10360 = vadd.f32 %v10358, %v10359
    %v10361 = vsel %vm3052, %v9348, 0.0
    %v10362 = vadd.f32 %v10360, %v10361
    %v10363 = vsel %vm3052, %v9354, 0.0
    %v10364 = vadd.f32 %v10362, %v10363
    %v10365 = vsel %vm3052, %v9360, 0.0
    %v10366 = vadd.f32 %v10364, %v10365
    %v10367 = vsel %vm3052, %v9366, 0.0
    %v10368 = vadd.f32 %v10366, %v10367
    %v10369 = vsel %vm3052, %v9372, 0.0
    %v10370 = vadd.f32 %v10368, %v10369
    %v10371 = vsel %vm3052, %v9378, 0.0
    %v10372 = vadd.f32 %v10370, %v10371
    %v10373 = vsel %vm3052, %v9384, 0.0
    %v10374 = vadd.f32 %v10372, %v10373
    %v10375 = vsel %vm3052, %v9390, 0.0
    %v10376 = vadd.f32 %v10374, %v10375
    %v10377 = vsel %vm3052, %v9396, 0.0
    %v10378 = vadd.f32 %v10376, %v10377
    %v10379 = vsel %vm3052, %v9402, 0.0
    %v10380 = vadd.f32 %v10378, %v10379
    %v10381 = vsel %vm3052, %v9408, 0.0
    %v10382 = vadd.f32 %v10380, %v10381
    %v10383 = vsel %vm3052, %v9414, 0.0
    %v10384 = vadd.f32 %v10382, %v10383
    %v10385 = vsel %vm3052, %v9420, 0.0
    %v10386 = vadd.f32 %v10384, %v10385
    %v10387 = vsel %vm3052, %v9426, 0.0
    %v10388 = vadd.f32 %v10386, %v10387
    %v10389 = vsel %vm3052, %v9432, 0.0
    %v10390 = vadd.f32 %v10388, %v10389
    %v10391 = vsel %vm3052, %v9438, 0.0
    %v10392 = vadd.f32 %v10390, %v10391
    %v10393 = vsel %vm3052, %v9444, 0.0
    %v10394 = vadd.f32 %v10392, %v10393
    %v10395 = vsel %vm3052, %v9450, 0.0
    %v10396 = vadd.f32 %v10394, %v10395
    %v10397 = vsel %vm3052, %v9456, 0.0
    %v10398 = vadd.f32 %v10396, %v10397
    %v10399 = vsel %vm3052, %v9462, 0.0
    %v10400 = vadd.f32 %v10398, %v10399
    %v10401 = vsel %vm3052, %v9468, 0.0
    %v10402 = vadd.f32 %v10400, %v10401
    %v10403 = vsel %vm3052, %v9474, 0.0
    %v10404 = vadd.f32 %v10402, %v10403
    %v10405 = vsel %vm3052, %v9480, 0.0
    %v10406 = vadd.f32 %v10404, %v10405
    %v10407 = vsel %vm3052, %v9486, 0.0
    %v10408 = vadd.f32 %v10406, %v10407
    %v10409 = vsel %vm3052, %v9492, 0.0
    %v10410 = vadd.f32 %v10408, %v10409
    %v10411 = vsel %vm3052, %v9498, 0.0
    %v10412 = vadd.f32 %v10410, %v10411
    %v10413 = vsel %vm3052, %v9504, 0.0
    %v10414 = vadd.f32 %v10412, %v10413
    %v10415 = vsel %vm3052, %v9510, 0.0
    %v10416 = vadd.f32 %v10414, %v10415
    %v10417 = vsel %vm3052, %v9516, 0.0
    %v10418 = vadd.f32 %v10416, %v10417
    %v10419 = vsel %vm3052, %v9522, 0.0
    %v10420 = vadd.f32 %v10418, %v10419
    %v10421 = vsel %vm3052, %v9528, 0.0
    %v10422 = vadd.f32 %v10420, %v10421
    %v10423 = vsel %vm3052, %v9534, 0.0
    %v10424 = vadd.f32 %v10422, %v10423
    %v10425 = vsel %vm3052, %v9540, 0.0
    %v10426 = vadd.f32 %v10424, %v10425
    %v10427 = vsel %vm3052, %v9546, 0.0
    %v10428 = vadd.f32 %v10426, %v10427
    %v10429 = vsel %vm3052, %v9552, 0.0
    %v10430 = vadd.f32 %v10428, %v10429
    %v10431 = vsel %vm3052, %v9558, 0.0
    %v10432 = vadd.f32 %v10430, %v10431
    %v10433 = vsel %vm3052, %v9564, 0.0
    %v10434 = vadd.f32 %v10432, %v10433
    %v10435 = vsel %vm3052, %v9570, 0.0
    %v10436 = vadd.f32 %v10434, %v10435
    %v10437 = vsel %vm3052, %v9576, 0.0
    %v10438 = vadd.f32 %v10436, %v10437
    %v10439 = vsel %vm3052, %v9582, 0.0
    %v10440 = vadd.f32 %v10438, %v10439
    %v10441 = vsel %vm3052, %v9588, 0.0
    %v10442 = vadd.f32 %v10440, %v10441
    %v10443 = vsel %vm3052, %v9594, 0.0
    %v10444 = vadd.f32 %v10442, %v10443
    %v10445 = vsel %vm3052, %v9600, 0.0
    %v10446 = vadd.f32 %v10444, %v10445
    %v10447 = vsel %vm3052, %v9606, 0.0
    %v10448 = vadd.f32 %v10446, %v10447
    %v10449 = vsel %vm3052, %v9612, 0.0
    %v10450 = vadd.f32 %v10448, %v10449
    %v10451 = vsel %vm3052, %v9618, 0.0
    %v10452 = vadd.f32 %v10450, %v10451
    %v10453 = vsel %vm3052, %v9624, 0.0
    %v10454 = vadd.f32 %v10452, %v10453
    %v10455 = vsel %vm3052, %v9630, 0.0
    %v10456 = vadd.f32 %v10454, %v10455
    %v10457 = vsel %vm3052, %v9636, 0.0
    %v10458 = vadd.f32 %v10456, %v10457
    %v10459 = vsel %vm3052, %v9642, 0.0
    %v10460 = vadd.f32 %v10458, %v10459
    %v10461 = vsel %vm3052, %v9648, 0.0
    %v10462 = vadd.f32 %v10460, %v10461
    %v10463 = vsel %vm3052, %v9654, 0.0
    %v10464 = vadd.f32 %v10462, %v10463
    %v10465 = vsel %vm3052, %v9660, 0.0
    %v10466 = vadd.f32 %v10464, %v10465
    %v10467 = vsel %vm3052, %v9666, 0.0
    %v10468 = vadd.f32 %v10466, %v10467
    %v10469 = vsel %vm3052, %v9672, 0.0
    %v10470 = vadd.f32 %v10468, %v10469
    %v10471 = vsel %vm3052, %v9678, 0.0
    %v10472 = vadd.f32 %v10470, %v10471
    %v10473 = vsel %vm3052, %v9684, 0.0
    %v10474 = vadd.f32 %v10472, %v10473
    %v10475 = vsel %vm3052, %v9690, 0.0
    %v10476 = vadd.f32 %v10474, %v10475
    %v10477 = vsel %vm3052, %v9696, 0.0
    %v10478 = vadd.f32 %v10476, %v10477
    %v10479 = vsel %vm3052, %v9702, 0.0
    %v10480 = vadd.f32 %v10478, %v10479
    %v10481 = vsel %vm3052, %v9708, 0.0
    %v10482 = vadd.f32 %v10480, %v10481
    %v10483 = vsel %vm3052, %v9714, 0.0
    %v10484 = vadd.f32 %v10482, %v10483
    %v10485 = vsel %vm3052, %v9720, 0.0
    %v10486 = vadd.f32 %v10484, %v10485
    %v10487 = vsel %vm3052, %v9726, 0.0
    %v10488 = vadd.f32 %v10486, %v10487
    %v10489 = vsel %vm3052, %v9732, 0.0
    %v10490 = vadd.f32 %v10488, %v10489
    %v10491 = vsel %vm3052, %v9738, 0.0
    %v10492 = vadd.f32 %v10490, %v10491
    %v10493 = vsel %vm3052, %v9744, 0.0
    %v10494 = vadd.f32 %v10492, %v10493
    %v10495 = vsel %vm3052, %v9750, 0.0
    %v10496 = vadd.f32 %v10494, %v10495
    %v10497 = vsel %vm3052, %v9756, 0.0
    %v10498 = vadd.f32 %v10496, %v10497
    %v10499 = vsel %vm3052, %v9762, 0.0
    %v10500 = vadd.f32 %v10498, %v10499
    %v10501 = vsel %vm3052, %v9768, 0.0
    %v10502 = vadd.f32 %v10500, %v10501
    %v10503 = vsel %vm3052, %v9774, 0.0
    %v10504 = vadd.f32 %v10502, %v10503
    %v10505 = vsel %vm3052, %v9780, 0.0
    %v10506 = vadd.f32 %v10504, %v10505
    %v10507 = vsel %vm3052, %v9786, 0.0
    %v10508 = vadd.f32 %v10506, %v10507
    %v10509 = vsel %vm3052, %v9792, 0.0
    %v10510 = vadd.f32 %v10508, %v10509
    %v10511 = vsel %vm3052, %v9798, 0.0
    %v10512 = vadd.f32 %v10510, %v10511
    %v10513 = vsel %vm3052, %v9804, 0.0
    %v10514 = vadd.f32 %v10512, %v10513
    %v10515 = vrot.slane %v10514, 4
    %v10516 = vadd.f32 %v10514, %v10515
    %v10517 = vrot.slane %v10516, 2
    %v10518 = vadd.f32 %v10516, %v10517
    %v10519 = vrot.slane %v10518, 1
    %v10520 = vadd.f32 %v10518, %v10519
    %v10521 = vmul.f32 %v9907, 0.0012755102
    %v10522 = vmul.f32 %v10010, 0.0012755102
    %v10523 = vmul.f32 %v10113, 0.0012755102
    %v10524 = vmul.f32 %v10216, 0.0012755102
    %v10525 = vmul.f32 %v10319, 0.0012755102
    %v10526 = vmul.f32 %v10520, 0.0012755102
    %v10527 = vadd.f32 %v10521, 1e-05
    %v10528 = vadd.f32 %v10522, 1e-05
    %v10529 = vadd.f32 %v10523, 1e-05
    %v10530 = vadd.f32 %v10524, 1e-05
    %v10531 = vadd.f32 %v10525, 1e-05
    %v10532 = vadd.f32 %v10526, 1e-05
    %v10533 = vrsqrt.pop %v10527
    %v10534 = vrsqrt.pop %v10528
    %v10535 = vrsqrt.pop %v10529
    %v10536 = vrsqrt.pop %v10530
    %v10537 = vrsqrt.pop %v10531
    %v10538 = vrsqrt.pop %v10532
    %v10539 = vld [vmem:[#allocation7] sm:$0x3f]
    %v10541 = vlaneseq
    %v10542 = vshrl.u32 %v10541, 7
    %v10543 = vsub.s32 0, %v10542
    %v10544 = vrot.slane %v10539, %v10543
    %v10545 = vlaneseq
    %v10546 = vshrl.u32 %v10545, 7
    %v10547 = vsub.s32 1, %v10546
    %v10548 = vrot.slane %v10539, %v10547
    %v10549 = vlaneseq
    %v10550 = vshrl.u32 %v10549, 7
    %v10551 = vsub.s32 2, %v10550
    %v10552 = vrot.slane %v10539, %v10551
    %v10553 = vlaneseq
    %v10554 = vshrl.u32 %v10553, 7
    %v10555 = vsub.s32 3, %v10554
    %v10556 = vrot.slane %v10539, %v10555
    %v10557 = vlaneseq
    %v10558 = vshrl.u32 %v10557, 7
    %v10559 = vsub.s32 4, %v10558
    %v10560 = vrot.slane %v10539, %v10559
    %v10561 = vlaneseq
    %v10562 = vshrl.u32 %v10561, 7
    %v10563 = vsub.s32 5, %v10562
    %v10564 = vrot.slane %v10539, %v10563
    %v10571 = vmul.f32 %v10533, %v10544
    %v10572 = vmul.f32 %v10534, %v10548
    %v10573 = vmul.f32 %v10535, %v10552
    %v10574 = vmul.f32 %v10536, %v10556
    %v10575 = vmul.f32 %v10537, %v10560
    %v10576 = vmul.f32 %v10538, %v10564
    %v10577 = vlaneseq
    %v10578 = vshrl.u32 %v10577, 7
    %v10579 = vsub.s32 0, %v10578
    %v10580 = vrot.slane %v10571, %v10579
    %v10581 = vlaneseq
    %v10582 = vshrl.u32 %v10581, 7
    %v10583 = vsub.s32 0, %v10582
    %v10584 = vrot.slane %v10572, %v10583
    %v10585 = vlaneseq
    %v10586 = vshrl.u32 %v10585, 7
    %v10587 = vsub.s32 0, %v10586
    %v10588 = vrot.slane %v10573, %v10587
    %v10589 = vlaneseq
    %v10590 = vshrl.u32 %v10589, 7
    %v10591 = vsub.s32 0, %v10590
    %v10592 = vrot.slane %v10574, %v10591
    %v10593 = vlaneseq
    %v10594 = vshrl.u32 %v10593, 7
    %v10595 = vsub.s32 0, %v10594
    %v10596 = vrot.slane %v10575, %v10595
    %v10597 = vlaneseq
    %v10598 = vshrl.u32 %v10597, 7
    %v10599 = vsub.s32 0, %v10598
    %v10600 = vrot.slane %v10576, %v10599
    %v10601 = vmul.f32 %v8629, %v10580
    %v10602 = vmul.f32 %v8630, %v10584
    %v10603 = vmul.f32 %v8631, %v10588
    %v10604 = vmul.f32 %v8632, %v10592
    %v10605 = vmul.f32 %v8633, %v10596
    %v10606 = vmul.f32 %v8634, %v10600
    %v10607 = vmul.f32 %v8635, %v10580
    %v10608 = vmul.f32 %v8636, %v10584
    %v10609 = vmul.f32 %v8637, %v10588
    %v10610 = vmul.f32 %v8638, %v10592
    %v10611 = vmul.f32 %v8639, %v10596
    %v10612 = vmul.f32 %v8640, %v10600
    %v10613 = vmul.f32 %v8641, %v10580
    %v10614 = vmul.f32 %v8642, %v10584
    %v10615 = vmul.f32 %v8643, %v10588
    %v10616 = vmul.f32 %v8644, %v10592
    %v10617 = vmul.f32 %v8645, %v10596
    %v10618 = vmul.f32 %v8646, %v10600
    %v10619 = vmul.f32 %v8647, %v10580
    %v10620 = vmul.f32 %v8648, %v10584
    %v10621 = vmul.f32 %v8649, %v10588
    %v10622 = vmul.f32 %v8650, %v10592
    %v10623 = vmul.f32 %v8651, %v10596
    %v10624 = vmul.f32 %v8652, %v10600
    %v10625 = vmul.f32 %v8653, %v10580
    %v10626 = vmul.f32 %v8654, %v10584
    %v10627 = vmul.f32 %v8655, %v10588
    %v10628 = vmul.f32 %v8656, %v10592
    %v10629 = vmul.f32 %v8657, %v10596
    %v10630 = vmul.f32 %v8658, %v10600
    %v10631 = vmul.f32 %v8659, %v10580
    %v10632 = vmul.f32 %v8660, %v10584
    %v10633 = vmul.f32 %v8661, %v10588
    %v10634 = vmul.f32 %v8662, %v10592
    %v10635 = vmul.f32 %v8663, %v10596
    %v10636 = vmul.f32 %v8664, %v10600
    %v10637 = vmul.f32 %v8665, %v10580
    %v10638 = vmul.f32 %v8666, %v10584
    %v10639 = vmul.f32 %v8667, %v10588
    %v10640 = vmul.f32 %v8668, %v10592
    %v10641 = vmul.f32 %v8669, %v10596
    %v10642 = vmul.f32 %v8670, %v10600
    %v10643 = vmul.f32 %v8671, %v10580
    %v10644 = vmul.f32 %v8672, %v10584
    %v10645 = vmul.f32 %v8673, %v10588
    %v10646 = vmul.f32 %v8674, %v10592
    %v10647 = vmul.f32 %v8675, %v10596
    %v10648 = vmul.f32 %v8676, %v10600
    %v10649 = vmul.f32 %v8677, %v10580
    %v10650 = vmul.f32 %v8678, %v10584
    %v10651 = vmul.f32 %v8679, %v10588
    %v10652 = vmul.f32 %v8680, %v10592
    %v10653 = vmul.f32 %v8681, %v10596
    %v10654 = vmul.f32 %v8682, %v10600
    %v10655 = vmul.f32 %v8683, %v10580
    %v10656 = vmul.f32 %v8684, %v10584
    %v10657 = vmul.f32 %v8685, %v10588
    %v10658 = vmul.f32 %v8686, %v10592
    %v10659 = vmul.f32 %v8687, %v10596
    %v10660 = vmul.f32 %v8688, %v10600
    %v10661 = vmul.f32 %v8689, %v10580
    %v10662 = vmul.f32 %v8690, %v10584
    %v10663 = vmul.f32 %v8691, %v10588
    %v10664 = vmul.f32 %v8692, %v10592
    %v10665 = vmul.f32 %v8693, %v10596
    %v10666 = vmul.f32 %v8694, %v10600
    %v10667 = vmul.f32 %v8695, %v10580
    %v10668 = vmul.f32 %v8696, %v10584
    %v10669 = vmul.f32 %v8697, %v10588
    %v10670 = vmul.f32 %v8698, %v10592
    %v10671 = vmul.f32 %v8699, %v10596
    %v10672 = vmul.f32 %v8700, %v10600
    %v10673 = vmul.f32 %v8701, %v10580
    %v10674 = vmul.f32 %v8702, %v10584
    %v10675 = vmul.f32 %v8703, %v10588
    %v10676 = vmul.f32 %v8704, %v10592
    %v10677 = vmul.f32 %v8705, %v10596
    %v10678 = vmul.f32 %v8706, %v10600
    %v10679 = vmul.f32 %v8707, %v10580
    %v10680 = vmul.f32 %v8708, %v10584
    %v10681 = vmul.f32 %v8709, %v10588
    %v10682 = vmul.f32 %v8710, %v10592
    %v10683 = vmul.f32 %v8711, %v10596
    %v10684 = vmul.f32 %v8712, %v10600
    %v10685 = vmul.f32 %v8713, %v10580
    %v10686 = vmul.f32 %v8714, %v10584
    %v10687 = vmul.f32 %v8715, %v10588
    %v10688 = vmul.f32 %v8716, %v10592
    %v10689 = vmul.f32 %v8717, %v10596
    %v10690 = vmul.f32 %v8718, %v10600
    %v10691 = vmul.f32 %v8719, %v10580
    %v10692 = vmul.f32 %v8720, %v10584
    %v10693 = vmul.f32 %v8721, %v10588
    %v10694 = vmul.f32 %v8722, %v10592
    %v10695 = vmul.f32 %v8723, %v10596
    %v10696 = vmul.f32 %v8724, %v10600
    %v10697 = vmul.f32 %v8725, %v10580
    %v10698 = vmul.f32 %v8726, %v10584
    %v10699 = vmul.f32 %v8727, %v10588
    %v10700 = vmul.f32 %v8728, %v10592
    %v10701 = vmul.f32 %v8729, %v10596
    %v10702 = vmul.f32 %v8730, %v10600
    %v10703 = vmul.f32 %v8731, %v10580
    %v10704 = vmul.f32 %v8732, %v10584
    %v10705 = vmul.f32 %v8733, %v10588
    %v10706 = vmul.f32 %v8734, %v10592
    %v10707 = vmul.f32 %v8735, %v10596
    %v10708 = vmul.f32 %v8736, %v10600
    %v10709 = vmul.f32 %v8737, %v10580
    %v10710 = vmul.f32 %v8738, %v10584
    %v10711 = vmul.f32 %v8739, %v10588
    %v10712 = vmul.f32 %v8740, %v10592
    %v10713 = vmul.f32 %v8741, %v10596
    %v10714 = vmul.f32 %v8742, %v10600
    %v10715 = vmul.f32 %v8743, %v10580
    %v10716 = vmul.f32 %v8744, %v10584
    %v10717 = vmul.f32 %v8745, %v10588
    %v10718 = vmul.f32 %v8746, %v10592
    %v10719 = vmul.f32 %v8747, %v10596
    %v10720 = vmul.f32 %v8748, %v10600
    %v10721 = vmul.f32 %v8749, %v10580
    %v10722 = vmul.f32 %v8750, %v10584
    %v10723 = vmul.f32 %v8751, %v10588
    %v10724 = vmul.f32 %v8752, %v10592
    %v10725 = vmul.f32 %v8753, %v10596
    %v10726 = vmul.f32 %v8754, %v10600
    %v10727 = vmul.f32 %v8755, %v10580
    %v10728 = vmul.f32 %v8756, %v10584
    %v10729 = vmul.f32 %v8757, %v10588
    %v10730 = vmul.f32 %v8758, %v10592
    %v10731 = vmul.f32 %v8759, %v10596
    %v10732 = vmul.f32 %v8760, %v10600
    %v10733 = vmul.f32 %v8761, %v10580
    %v10734 = vmul.f32 %v8762, %v10584
    %v10735 = vmul.f32 %v8763, %v10588
    %v10736 = vmul.f32 %v8764, %v10592
    %v10737 = vmul.f32 %v8765, %v10596
    %v10738 = vmul.f32 %v8766, %v10600
    %v10739 = vmul.f32 %v8767, %v10580
    %v10740 = vmul.f32 %v8768, %v10584
    %v10741 = vmul.f32 %v8769, %v10588
    %v10742 = vmul.f32 %v8770, %v10592
    %v10743 = vmul.f32 %v8771, %v10596
    %v10744 = vmul.f32 %v8772, %v10600
    %v10745 = vmul.f32 %v8773, %v10580
    %v10746 = vmul.f32 %v8774, %v10584
    %v10747 = vmul.f32 %v8775, %v10588
    %v10748 = vmul.f32 %v8776, %v10592
    %v10749 = vmul.f32 %v8777, %v10596
    %v10750 = vmul.f32 %v8778, %v10600
    %v10751 = vmul.f32 %v8779, %v10580
    %v10752 = vmul.f32 %v8780, %v10584
    %v10753 = vmul.f32 %v8781, %v10588
    %v10754 = vmul.f32 %v8782, %v10592
    %v10755 = vmul.f32 %v8783, %v10596
    %v10756 = vmul.f32 %v8784, %v10600
    %v10757 = vmul.f32 %v8785, %v10580
    %v10758 = vmul.f32 %v8786, %v10584
    %v10759 = vmul.f32 %v8787, %v10588
    %v10760 = vmul.f32 %v8788, %v10592
    %v10761 = vmul.f32 %v8789, %v10596
    %v10762 = vmul.f32 %v8790, %v10600
    %v10763 = vmul.f32 %v8791, %v10580
    %v10764 = vmul.f32 %v8792, %v10584
    %v10765 = vmul.f32 %v8793, %v10588
    %v10766 = vmul.f32 %v8794, %v10592
    %v10767 = vmul.f32 %v8795, %v10596
    %v10768 = vmul.f32 %v8796, %v10600
    %v10769 = vmul.f32 %v8797, %v10580
    %v10770 = vmul.f32 %v8798, %v10584
    %v10771 = vmul.f32 %v8799, %v10588
    %v10772 = vmul.f32 %v8800, %v10592
    %v10773 = vmul.f32 %v8801, %v10596
    %v10774 = vmul.f32 %v8802, %v10600
    %v10775 = vmul.f32 %v8803, %v10580
    %v10776 = vmul.f32 %v8804, %v10584
    %v10777 = vmul.f32 %v8805, %v10588
    %v10778 = vmul.f32 %v8806, %v10592
    %v10779 = vmul.f32 %v8807, %v10596
    %v10780 = vmul.f32 %v8808, %v10600
    %v10781 = vmul.f32 %v8809, %v10580
    %v10782 = vmul.f32 %v8810, %v10584
    %v10783 = vmul.f32 %v8811, %v10588
    %v10784 = vmul.f32 %v8812, %v10592
    %v10785 = vmul.f32 %v8813, %v10596
    %v10786 = vmul.f32 %v8814, %v10600
    %v10787 = vmul.f32 %v8815, %v10580
    %v10788 = vmul.f32 %v8816, %v10584
    %v10789 = vmul.f32 %v8817, %v10588
    %v10790 = vmul.f32 %v8818, %v10592
    %v10791 = vmul.f32 %v8819, %v10596
    %v10792 = vmul.f32 %v8820, %v10600
    %v10793 = vmul.f32 %v8821, %v10580
    %v10794 = vmul.f32 %v8822, %v10584
    %v10795 = vmul.f32 %v8823, %v10588
    %v10796 = vmul.f32 %v8824, %v10592
    %v10797 = vmul.f32 %v8825, %v10596
    %v10798 = vmul.f32 %v8826, %v10600
    %v10799 = vmul.f32 %v8827, %v10580
    %v10800 = vmul.f32 %v8828, %v10584
    %v10801 = vmul.f32 %v8829, %v10588
    %v10802 = vmul.f32 %v8830, %v10592
    %v10803 = vmul.f32 %v8831, %v10596
    %v10804 = vmul.f32 %v8832, %v10600
    %v10805 = vmul.f32 %v8833, %v10580
    %v10806 = vmul.f32 %v8834, %v10584
    %v10807 = vmul.f32 %v8835, %v10588
    %v10808 = vmul.f32 %v8836, %v10592
    %v10809 = vmul.f32 %v8837, %v10596
    %v10810 = vmul.f32 %v8838, %v10600
    %v10811 = vmul.f32 %v8839, %v10580
    %v10812 = vmul.f32 %v8840, %v10584
    %v10813 = vmul.f32 %v8841, %v10588
    %v10814 = vmul.f32 %v8842, %v10592
    %v10815 = vmul.f32 %v8843, %v10596
    %v10816 = vmul.f32 %v8844, %v10600
    %v10817 = vmul.f32 %v8845, %v10580
    %v10818 = vmul.f32 %v8846, %v10584
    %v10819 = vmul.f32 %v8847, %v10588
    %v10820 = vmul.f32 %v8848, %v10592
    %v10821 = vmul.f32 %v8849, %v10596
    %v10822 = vmul.f32 %v8850, %v10600
    %v10823 = vmul.f32 %v8851, %v10580
    %v10824 = vmul.f32 %v8852, %v10584
    %v10825 = vmul.f32 %v8853, %v10588
    %v10826 = vmul.f32 %v8854, %v10592
    %v10827 = vmul.f32 %v8855, %v10596
    %v10828 = vmul.f32 %v8856, %v10600
    %v10829 = vmul.f32 %v8857, %v10580
    %v10830 = vmul.f32 %v8858, %v10584
    %v10831 = vmul.f32 %v8859, %v10588
    %v10832 = vmul.f32 %v8860, %v10592
    %v10833 = vmul.f32 %v8861, %v10596
    %v10834 = vmul.f32 %v8862, %v10600
    %v10835 = vmul.f32 %v8863, %v10580
    %v10836 = vmul.f32 %v8864, %v10584
    %v10837 = vmul.f32 %v8865, %v10588
    %v10838 = vmul.f32 %v8866, %v10592
    %v10839 = vmul.f32 %v8867, %v10596
    %v10840 = vmul.f32 %v8868, %v10600
    %v10841 = vmul.f32 %v8869, %v10580
    %v10842 = vmul.f32 %v8870, %v10584
    %v10843 = vmul.f32 %v8871, %v10588
    %v10844 = vmul.f32 %v8872, %v10592
    %v10845 = vmul.f32 %v8873, %v10596
    %v10846 = vmul.f32 %v8874, %v10600
    %v10847 = vmul.f32 %v8875, %v10580
    %v10848 = vmul.f32 %v8876, %v10584
    %v10849 = vmul.f32 %v8877, %v10588
    %v10850 = vmul.f32 %v8878, %v10592
    %v10851 = vmul.f32 %v8879, %v10596
    %v10852 = vmul.f32 %v8880, %v10600
    %v10853 = vmul.f32 %v8881, %v10580
    %v10854 = vmul.f32 %v8882, %v10584
    %v10855 = vmul.f32 %v8883, %v10588
    %v10856 = vmul.f32 %v8884, %v10592
    %v10857 = vmul.f32 %v8885, %v10596
    %v10858 = vmul.f32 %v8886, %v10600
    %v10859 = vmul.f32 %v8887, %v10580
    %v10860 = vmul.f32 %v8888, %v10584
    %v10861 = vmul.f32 %v8889, %v10588
    %v10862 = vmul.f32 %v8890, %v10592
    %v10863 = vmul.f32 %v8891, %v10596
    %v10864 = vmul.f32 %v8892, %v10600
    %v10865 = vmul.f32 %v8893, %v10580
    %v10866 = vmul.f32 %v8894, %v10584
    %v10867 = vmul.f32 %v8895, %v10588
    %v10868 = vmul.f32 %v8896, %v10592
    %v10869 = vmul.f32 %v8897, %v10596
    %v10870 = vmul.f32 %v8898, %v10600
    %v10871 = vmul.f32 %v8899, %v10580
    %v10872 = vmul.f32 %v8900, %v10584
    %v10873 = vmul.f32 %v8901, %v10588
    %v10874 = vmul.f32 %v8902, %v10592
    %v10875 = vmul.f32 %v8903, %v10596
    %v10876 = vmul.f32 %v8904, %v10600
    %v10877 = vmul.f32 %v8905, %v10580
    %v10878 = vmul.f32 %v8906, %v10584
    %v10879 = vmul.f32 %v8907, %v10588
    %v10880 = vmul.f32 %v8908, %v10592
    %v10881 = vmul.f32 %v8909, %v10596
    %v10882 = vmul.f32 %v8910, %v10600
    %v10883 = vmul.f32 %v8911, %v10580
    %v10884 = vmul.f32 %v8912, %v10584
    %v10885 = vmul.f32 %v8913, %v10588
    %v10886 = vmul.f32 %v8914, %v10592
    %v10887 = vmul.f32 %v8915, %v10596
    %v10888 = vmul.f32 %v8916, %v10600
    %v10889 = vmul.f32 %v8917, %v10580
    %v10890 = vmul.f32 %v8918, %v10584
    %v10891 = vmul.f32 %v8919, %v10588
    %v10892 = vmul.f32 %v8920, %v10592
    %v10893 = vmul.f32 %v8921, %v10596
    %v10894 = vmul.f32 %v8922, %v10600
    %v10895 = vmul.f32 %v8923, %v10580
    %v10896 = vmul.f32 %v8924, %v10584
    %v10897 = vmul.f32 %v8925, %v10588
    %v10898 = vmul.f32 %v8926, %v10592
    %v10899 = vmul.f32 %v8927, %v10596
    %v10900 = vmul.f32 %v8928, %v10600
    %v10901 = vmul.f32 %v8929, %v10580
    %v10902 = vmul.f32 %v8930, %v10584
    %v10903 = vmul.f32 %v8931, %v10588
    %v10904 = vmul.f32 %v8932, %v10592
    %v10905 = vmul.f32 %v8933, %v10596
    %v10906 = vmul.f32 %v8934, %v10600
    %v10907 = vmul.f32 %v8935, %v10580
    %v10908 = vmul.f32 %v8936, %v10584
    %v10909 = vmul.f32 %v8937, %v10588
    %v10910 = vmul.f32 %v8938, %v10592
    %v10911 = vmul.f32 %v8939, %v10596
    %v10912 = vmul.f32 %v8940, %v10600
    %v10913 = vmul.f32 %v8941, %v10580
    %v10914 = vmul.f32 %v8942, %v10584
    %v10915 = vmul.f32 %v8943, %v10588
    %v10916 = vmul.f32 %v8944, %v10592
    %v10917 = vmul.f32 %v8945, %v10596
    %v10918 = vmul.f32 %v8946, %v10600
    %v10919 = vmul.f32 %v8947, %v10580
    %v10920 = vmul.f32 %v8948, %v10584
    %v10921 = vmul.f32 %v8949, %v10588
    %v10922 = vmul.f32 %v8950, %v10592
    %v10923 = vmul.f32 %v8951, %v10596
    %v10924 = vmul.f32 %v8952, %v10600
    %v10925 = vmul.f32 %v8953, %v10580
    %v10926 = vmul.f32 %v8954, %v10584
    %v10927 = vmul.f32 %v8955, %v10588
    %v10928 = vmul.f32 %v8956, %v10592
    %v10929 = vmul.f32 %v8957, %v10596
    %v10930 = vmul.f32 %v8958, %v10600
    %v10931 = vmul.f32 %v8959, %v10580
    %v10932 = vmul.f32 %v8960, %v10584
    %v10933 = vmul.f32 %v8961, %v10588
    %v10934 = vmul.f32 %v8962, %v10592
    %v10935 = vmul.f32 %v8963, %v10596
    %v10936 = vmul.f32 %v8964, %v10600
    %v10937 = vmul.f32 %v8965, %v10580
    %v10938 = vmul.f32 %v8966, %v10584
    %v10939 = vmul.f32 %v8967, %v10588
    %v10940 = vmul.f32 %v8968, %v10592
    %v10941 = vmul.f32 %v8969, %v10596
    %v10942 = vmul.f32 %v8970, %v10600
    %v10943 = vmul.f32 %v8971, %v10580
    %v10944 = vmul.f32 %v8972, %v10584
    %v10945 = vmul.f32 %v8973, %v10588
    %v10946 = vmul.f32 %v8974, %v10592
    %v10947 = vmul.f32 %v8975, %v10596
    %v10948 = vmul.f32 %v8976, %v10600
    %v10949 = vmul.f32 %v8977, %v10580
    %v10950 = vmul.f32 %v8978, %v10584
    %v10951 = vmul.f32 %v8979, %v10588
    %v10952 = vmul.f32 %v8980, %v10592
    %v10953 = vmul.f32 %v8981, %v10596
    %v10954 = vmul.f32 %v8982, %v10600
    %v10955 = vmul.f32 %v8983, %v10580
    %v10956 = vmul.f32 %v8984, %v10584
    %v10957 = vmul.f32 %v8985, %v10588
    %v10958 = vmul.f32 %v8986, %v10592
    %v10959 = vmul.f32 %v8987, %v10596
    %v10960 = vmul.f32 %v8988, %v10600
    %v10961 = vmul.f32 %v8989, %v10580
    %v10962 = vmul.f32 %v8990, %v10584
    %v10963 = vmul.f32 %v8991, %v10588
    %v10964 = vmul.f32 %v8992, %v10592
    %v10965 = vmul.f32 %v8993, %v10596
    %v10966 = vmul.f32 %v8994, %v10600
    %v10967 = vmul.f32 %v8995, %v10580
    %v10968 = vmul.f32 %v8996, %v10584
    %v10969 = vmul.f32 %v8997, %v10588
    %v10970 = vmul.f32 %v8998, %v10592
    %v10971 = vmul.f32 %v8999, %v10596
    %v10972 = vmul.f32 %v9000, %v10600
    %v10973 = vmul.f32 %v9001, %v10580
    %v10974 = vmul.f32 %v9002, %v10584
    %v10975 = vmul.f32 %v9003, %v10588
    %v10976 = vmul.f32 %v9004, %v10592
    %v10977 = vmul.f32 %v9005, %v10596
    %v10978 = vmul.f32 %v9006, %v10600
    %v10979 = vmul.f32 %v9007, %v10580
    %v10980 = vmul.f32 %v9008, %v10584
    %v10981 = vmul.f32 %v9009, %v10588
    %v10982 = vmul.f32 %v9010, %v10592
    %v10983 = vmul.f32 %v9011, %v10596
    %v10984 = vmul.f32 %v9012, %v10600
    %v10985 = vmul.f32 %v9013, %v10580
    %v10986 = vmul.f32 %v9014, %v10584
    %v10987 = vmul.f32 %v9015, %v10588
    %v10988 = vmul.f32 %v9016, %v10592
    %v10989 = vmul.f32 %v9017, %v10596
    %v10990 = vmul.f32 %v9018, %v10600
    %v10991 = vmul.f32 %v9019, %v10580
    %v10992 = vmul.f32 %v9020, %v10584
    %v10993 = vmul.f32 %v9021, %v10588
    %v10994 = vmul.f32 %v9022, %v10592
    %v10995 = vmul.f32 %v9023, %v10596
    %v10996 = vmul.f32 %v9024, %v10600
    %v10997 = vmul.f32 %v9025, %v10580
    %v10998 = vmul.f32 %v9026, %v10584
    %v10999 = vmul.f32 %v9027, %v10588
    %v11000 = vmul.f32 %v9028, %v10592
    %v11001 = vmul.f32 %v9029, %v10596
    %v11002 = vmul.f32 %v9030, %v10600
    %v11003 = vmul.f32 %v9031, %v10580
    %v11004 = vmul.f32 %v9032, %v10584
    %v11005 = vmul.f32 %v9033, %v10588
    %v11006 = vmul.f32 %v9034, %v10592
    %v11007 = vmul.f32 %v9035, %v10596
    %v11008 = vmul.f32 %v9036, %v10600
    %v11009 = vmul.f32 %v9037, %v10580
    %v11010 = vmul.f32 %v9038, %v10584
    %v11011 = vmul.f32 %v9039, %v10588
    %v11012 = vmul.f32 %v9040, %v10592
    %v11013 = vmul.f32 %v9041, %v10596
    %v11014 = vmul.f32 %v9042, %v10600
    %v11015 = vmul.f32 %v9043, %v10580
    %v11016 = vmul.f32 %v9044, %v10584
    %v11017 = vmul.f32 %v9045, %v10588
    %v11018 = vmul.f32 %v9046, %v10592
    %v11019 = vmul.f32 %v9047, %v10596
    %v11020 = vmul.f32 %v9048, %v10600
    %v11021 = vmul.f32 %v9049, %v10580
    %v11022 = vmul.f32 %v9050, %v10584
    %v11023 = vmul.f32 %v9051, %v10588
    %v11024 = vmul.f32 %v9052, %v10592
    %v11025 = vmul.f32 %v9053, %v10596
    %v11026 = vmul.f32 %v9054, %v10600
    %v11027 = vmul.f32 %v9055, %v10580
    %v11028 = vmul.f32 %v9056, %v10584
    %v11029 = vmul.f32 %v9057, %v10588
    %v11030 = vmul.f32 %v9058, %v10592
    %v11031 = vmul.f32 %v9059, %v10596
    %v11032 = vmul.f32 %v9060, %v10600
    %v11033 = vmul.f32 %v9061, %v10580
    %v11034 = vmul.f32 %v9062, %v10584
    %v11035 = vmul.f32 %v9063, %v10588
    %v11036 = vmul.f32 %v9064, %v10592
    %v11037 = vmul.f32 %v9065, %v10596
    %v11038 = vmul.f32 %v9066, %v10600
    %v11039 = vmul.f32 %v9067, %v10580
    %v11040 = vmul.f32 %v9068, %v10584
    %v11041 = vmul.f32 %v9069, %v10588
    %v11042 = vmul.f32 %v9070, %v10592
    %v11043 = vmul.f32 %v9071, %v10596
    %v11044 = vmul.f32 %v9072, %v10600
    %v11045 = vmul.f32 %v9073, %v10580
    %v11046 = vmul.f32 %v9074, %v10584
    %v11047 = vmul.f32 %v9075, %v10588
    %v11048 = vmul.f32 %v9076, %v10592
    %v11049 = vmul.f32 %v9077, %v10596
    %v11050 = vmul.f32 %v9078, %v10600
    %v11051 = vmul.f32 %v9079, %v10580
    %v11052 = vmul.f32 %v9080, %v10584
    %v11053 = vmul.f32 %v9081, %v10588
    %v11054 = vmul.f32 %v9082, %v10592
    %v11055 = vmul.f32 %v9083, %v10596
    %v11056 = vmul.f32 %v9084, %v10600
    %v11057 = vmul.f32 %v9085, %v10580
    %v11058 = vmul.f32 %v9086, %v10584
    %v11059 = vmul.f32 %v9087, %v10588
    %v11060 = vmul.f32 %v9088, %v10592
    %v11061 = vmul.f32 %v9089, %v10596
    %v11062 = vmul.f32 %v9090, %v10600
    %v11063 = vmul.f32 %v9091, %v10580
    %v11064 = vmul.f32 %v9092, %v10584
    %v11065 = vmul.f32 %v9093, %v10588
    %v11066 = vmul.f32 %v9094, %v10592
    %v11067 = vmul.f32 %v9095, %v10596
    %v11068 = vmul.f32 %v9096, %v10600
    %v11069 = vmul.f32 %v9097, %v10580
    %v11070 = vmul.f32 %v9098, %v10584
    %v11071 = vmul.f32 %v9099, %v10588
    %v11072 = vmul.f32 %v9100, %v10592
    %v11073 = vmul.f32 %v9101, %v10596
    %v11074 = vmul.f32 %v9102, %v10600
    %v11075 = vmul.f32 %v9103, %v10580
    %v11076 = vmul.f32 %v9104, %v10584
    %v11077 = vmul.f32 %v9105, %v10588
    %v11078 = vmul.f32 %v9106, %v10592
    %v11079 = vmul.f32 %v9107, %v10596
    %v11080 = vmul.f32 %v9108, %v10600
    %v11081 = vmul.f32 %v9109, %v10580
    %v11082 = vmul.f32 %v9110, %v10584
    %v11083 = vmul.f32 %v9111, %v10588
    %v11084 = vmul.f32 %v9112, %v10592
    %v11085 = vmul.f32 %v9113, %v10596
    %v11086 = vmul.f32 %v9114, %v10600
    %v11087 = vmul.f32 %v9115, %v10580
    %v11088 = vmul.f32 %v9116, %v10584
    %v11089 = vmul.f32 %v9117, %v10588
    %v11090 = vmul.f32 %v9118, %v10592
    %v11091 = vmul.f32 %v9119, %v10596
    %v11092 = vmul.f32 %v9120, %v10600
    %v11093 = vmul.f32 %v9121, %v10580
    %v11094 = vmul.f32 %v9122, %v10584
    %v11095 = vmul.f32 %v9123, %v10588
    %v11096 = vmul.f32 %v9124, %v10592
    %v11097 = vmul.f32 %v9125, %v10596
    %v11098 = vmul.f32 %v9126, %v10600
    %v11099 = vmul.f32 %v9127, %v10580
    %v11100 = vmul.f32 %v9128, %v10584
    %v11101 = vmul.f32 %v9129, %v10588
    %v11102 = vmul.f32 %v9130, %v10592
    %v11103 = vmul.f32 %v9131, %v10596
    %v11104 = vmul.f32 %v9132, %v10600
    %v11105 = vmul.f32 %v9133, %v10580
    %v11106 = vmul.f32 %v9134, %v10584
    %v11107 = vmul.f32 %v9135, %v10588
    %v11108 = vmul.f32 %v9136, %v10592
    %v11109 = vmul.f32 %v9137, %v10596
    %v11110 = vmul.f32 %v9138, %v10600
    %v11111 = vmul.f32 %v9139, %v10580
    %v11112 = vmul.f32 %v9140, %v10584
    %v11113 = vmul.f32 %v9141, %v10588
    %v11114 = vmul.f32 %v9142, %v10592
    %v11115 = vmul.f32 %v9143, %v10596
    %v11116 = vmul.f32 %v9144, %v10600
    %v11117 = vmul.f32 %v9145, %v10580
    %v11118 = vmul.f32 %v9146, %v10584
    %v11119 = vmul.f32 %v9147, %v10588
    %v11120 = vmul.f32 %v9148, %v10592
    %v11121 = vmul.f32 %v9149, %v10596
    %v11122 = vmul.f32 %v9150, %v10600
    %v11123 = vmul.f32 %v9151, %v10580
    %v11124 = vmul.f32 %v9152, %v10584
    %v11125 = vmul.f32 %v9153, %v10588
    %v11126 = vmul.f32 %v9154, %v10592
    %v11127 = vmul.f32 %v9155, %v10596
    %v11128 = vmul.f32 %v9156, %v10600
    %v11129 = vmul.f32 %v9157, %v10580
    %v11130 = vmul.f32 %v9158, %v10584
    %v11131 = vmul.f32 %v9159, %v10588
    %v11132 = vmul.f32 %v9160, %v10592
    %v11133 = vmul.f32 %v9161, %v10596
    %v11134 = vmul.f32 %v9162, %v10600
    %v11135 = vmul.f32 %v9163, %v10580
    %v11136 = vmul.f32 %v9164, %v10584
    %v11137 = vmul.f32 %v9165, %v10588
    %v11138 = vmul.f32 %v9166, %v10592
    %v11139 = vmul.f32 %v9167, %v10596
    %v11140 = vmul.f32 %v9168, %v10600
    %v11141 = vmul.f32 %v9169, %v10580
    %v11142 = vmul.f32 %v9170, %v10584
    %v11143 = vmul.f32 %v9171, %v10588
    %v11144 = vmul.f32 %v9172, %v10592
    %v11145 = vmul.f32 %v9173, %v10596
    %v11146 = vmul.f32 %v9174, %v10600
    %v11147 = vmul.f32 %v9175, %v10580
    %v11148 = vmul.f32 %v9176, %v10584
    %v11149 = vmul.f32 %v9177, %v10588
    %v11150 = vmul.f32 %v9178, %v10592
    %v11151 = vmul.f32 %v9179, %v10596
    %v11152 = vmul.f32 %v9180, %v10600
    %v11153 = vmul.f32 %v9181, %v10580
    %v11154 = vmul.f32 %v9182, %v10584
    %v11155 = vmul.f32 %v9183, %v10588
    %v11156 = vmul.f32 %v9184, %v10592
    %v11157 = vmul.f32 %v9185, %v10596
    %v11158 = vmul.f32 %v9186, %v10600
    %v11159 = vmul.f32 %v9187, %v10580
    %v11160 = vmul.f32 %v9188, %v10584
    %v11161 = vmul.f32 %v9189, %v10588
    %v11162 = vmul.f32 %v9190, %v10592
    %v11163 = vmul.f32 %v9191, %v10596
    %v11164 = vmul.f32 %v9192, %v10600
    %v11165 = vmul.f32 %v9193, %v10580
    %v11166 = vmul.f32 %v9194, %v10584
    %v11167 = vmul.f32 %v9195, %v10588
    %v11168 = vmul.f32 %v9196, %v10592
    %v11169 = vmul.f32 %v9197, %v10596
    %v11170 = vmul.f32 %v9198, %v10600
    %v11171 = vmul.f32 %v9199, %v10580
    %v11172 = vmul.f32 %v9200, %v10584
    %v11173 = vmul.f32 %v9201, %v10588
    %v11174 = vmul.f32 %v9202, %v10592
    %v11175 = vmul.f32 %v9203, %v10596
    %v11176 = vmul.f32 %v9204, %v10600
    %v11177 = vmul.f32 %v9205, %v10580
    %v11178 = vmul.f32 %v9206, %v10584
    %v11179 = vmul.f32 %v9207, %v10588
    %v11180 = vmul.f32 %v9208, %v10592
    %v11181 = vmul.f32 %v9209, %v10596
    %v11182 = vmul.f32 %v9210, %v10600
    %v11183 = vmul.f32 %v9211, %v10580
    %v11184 = vmul.f32 %v9212, %v10584
    %v11185 = vmul.f32 %v9213, %v10588
    %v11186 = vmul.f32 %v9214, %v10592
    %v11187 = vmul.f32 %v9215, %v10596
    %v11188 = vmul.f32 %v9216, %v10600
    %v11189 = vld [vmem:[#allocation8] sm:$0x3f]
    %v11191 = vlaneseq
    %v11192 = vshrl.u32 %v11191, 7
    %v11193 = vsub.s32 0, %v11192
    %v11194 = vrot.slane %v11189, %v11193
    %v11195 = vlaneseq
    %v11196 = vshrl.u32 %v11195, 7
    %v11197 = vsub.s32 1, %v11196
    %v11198 = vrot.slane %v11189, %v11197
    %v11199 = vlaneseq
    %v11200 = vshrl.u32 %v11199, 7
    %v11201 = vsub.s32 2, %v11200
    %v11202 = vrot.slane %v11189, %v11201
    %v11203 = vlaneseq
    %v11204 = vshrl.u32 %v11203, 7
    %v11205 = vsub.s32 3, %v11204
    %v11206 = vrot.slane %v11189, %v11205
    %v11207 = vlaneseq
    %v11208 = vshrl.u32 %v11207, 7
    %v11209 = vsub.s32 4, %v11208
    %v11210 = vrot.slane %v11189, %v11209
    %v11211 = vlaneseq
    %v11212 = vshrl.u32 %v11211, 7
    %v11213 = vsub.s32 5, %v11212
    %v11214 = vrot.slane %v11189, %v11213
    %v11221 = vadd.f32 %v10601, %v11194
    %v11222 = vadd.f32 %v10602, %v11198
    %v11223 = vadd.f32 %v10603, %v11202
    %v11224 = vadd.f32 %v10604, %v11206
    %v11225 = vadd.f32 %v10605, %v11210
    %v11226 = vadd.f32 %v10606, %v11214
    %v11227 = vadd.f32 %v10607, %v11194
    %v11228 = vadd.f32 %v10608, %v11198
    %v11229 = vadd.f32 %v10609, %v11202
    %v11230 = vadd.f32 %v10610, %v11206
    %v11231 = vadd.f32 %v10611, %v11210
    %v11232 = vadd.f32 %v10612, %v11214
    %v11233 = vadd.f32 %v10613, %v11194
    %v11234 = vadd.f32 %v10614, %v11198
    %v11235 = vadd.f32 %v10615, %v11202
    %v11236 = vadd.f32 %v10616, %v11206
    %v11237 = vadd.f32 %v10617, %v11210
    %v11238 = vadd.f32 %v10618, %v11214
    %v11239 = vadd.f32 %v10619, %v11194
    %v11240 = vadd.f32 %v10620, %v11198
    %v11241 = vadd.f32 %v10621, %v11202
    %v11242 = vadd.f32 %v10622, %v11206
    %v11243 = vadd.f32 %v10623, %v11210
    %v11244 = vadd.f32 %v10624, %v11214
    %v11245 = vadd.f32 %v10625, %v11194
    %v11246 = vadd.f32 %v10626, %v11198
    %v11247 = vadd.f32 %v10627, %v11202
    %v11248 = vadd.f32 %v10628, %v11206
    %v11249 = vadd.f32 %v10629, %v11210
    %v11250 = vadd.f32 %v10630, %v11214
    %v11251 = vadd.f32 %v10631, %v11194
    %v11252 = vadd.f32 %v10632, %v11198
    %v11253 = vadd.f32 %v10633, %v11202
    %v11254 = vadd.f32 %v10634, %v11206
    %v11255 = vadd.f32 %v10635, %v11210
    %v11256 = vadd.f32 %v10636, %v11214
    %v11257 = vadd.f32 %v10637, %v11194
    %v11258 = vadd.f32 %v10638, %v11198
    %v11259 = vadd.f32 %v10639, %v11202
    %v11260 = vadd.f32 %v10640, %v11206
    %v11261 = vadd.f32 %v10641, %v11210
    %v11262 = vadd.f32 %v10642, %v11214
    %v11263 = vadd.f32 %v10643, %v11194
    %v11264 = vadd.f32 %v10644, %v11198
    %v11265 = vadd.f32 %v10645, %v11202
    %v11266 = vadd.f32 %v10646, %v11206
    %v11267 = vadd.f32 %v10647, %v11210
    %v11268 = vadd.f32 %v10648, %v11214
    %v11269 = vadd.f32 %v10649, %v11194
    %v11270 = vadd.f32 %v10650, %v11198
    %v11271 = vadd.f32 %v10651, %v11202
    %v11272 = vadd.f32 %v10652, %v11206
    %v11273 = vadd.f32 %v10653, %v11210
    %v11274 = vadd.f32 %v10654, %v11214
    %v11275 = vadd.f32 %v10655, %v11194
    %v11276 = vadd.f32 %v10656, %v11198
    %v11277 = vadd.f32 %v10657, %v11202
    %v11278 = vadd.f32 %v10658, %v11206
    %v11279 = vadd.f32 %v10659, %v11210
    %v11280 = vadd.f32 %v10660, %v11214
    %v11281 = vadd.f32 %v10661, %v11194
    %v11282 = vadd.f32 %v10662, %v11198
    %v11283 = vadd.f32 %v10663, %v11202
    %v11284 = vadd.f32 %v10664, %v11206
    %v11285 = vadd.f32 %v10665, %v11210
    %v11286 = vadd.f32 %v10666, %v11214
    %v11287 = vadd.f32 %v10667, %v11194
    %v11288 = vadd.f32 %v10668, %v11198
    %v11289 = vadd.f32 %v10669, %v11202
    %v11290 = vadd.f32 %v10670, %v11206
    %v11291 = vadd.f32 %v10671, %v11210
    %v11292 = vadd.f32 %v10672, %v11214
    %v11293 = vadd.f32 %v10673, %v11194
    %v11294 = vadd.f32 %v10674, %v11198
    %v11295 = vadd.f32 %v10675, %v11202
    %v11296 = vadd.f32 %v10676, %v11206
    %v11297 = vadd.f32 %v10677, %v11210
    %v11298 = vadd.f32 %v10678, %v11214
    %v11299 = vadd.f32 %v10679, %v11194
    %v11300 = vadd.f32 %v10680, %v11198
    %v11301 = vadd.f32 %v10681, %v11202
    %v11302 = vadd.f32 %v10682, %v11206
    %v11303 = vadd.f32 %v10683, %v11210
    %v11304 = vadd.f32 %v10684, %v11214
    %v11305 = vadd.f32 %v10685, %v11194
    %v11306 = vadd.f32 %v10686, %v11198
    %v11307 = vadd.f32 %v10687, %v11202
    %v11308 = vadd.f32 %v10688, %v11206
    %v11309 = vadd.f32 %v10689, %v11210
    %v11310 = vadd.f32 %v10690, %v11214
    %v11311 = vadd.f32 %v10691, %v11194
    %v11312 = vadd.f32 %v10692, %v11198
    %v11313 = vadd.f32 %v10693, %v11202
    %v11314 = vadd.f32 %v10694, %v11206
    %v11315 = vadd.f32 %v10695, %v11210
    %v11316 = vadd.f32 %v10696, %v11214
    %v11317 = vadd.f32 %v10697, %v11194
    %v11318 = vadd.f32 %v10698, %v11198
    %v11319 = vadd.f32 %v10699, %v11202
    %v11320 = vadd.f32 %v10700, %v11206
    %v11321 = vadd.f32 %v10701, %v11210
    %v11322 = vadd.f32 %v10702, %v11214
    %v11323 = vadd.f32 %v10703, %v11194
    %v11324 = vadd.f32 %v10704, %v11198
    %v11325 = vadd.f32 %v10705, %v11202
    %v11326 = vadd.f32 %v10706, %v11206
    %v11327 = vadd.f32 %v10707, %v11210
    %v11328 = vadd.f32 %v10708, %v11214
    %v11329 = vadd.f32 %v10709, %v11194
    %v11330 = vadd.f32 %v10710, %v11198
    %v11331 = vadd.f32 %v10711, %v11202
    %v11332 = vadd.f32 %v10712, %v11206
    %v11333 = vadd.f32 %v10713, %v11210
    %v11334 = vadd.f32 %v10714, %v11214
    %v11335 = vadd.f32 %v10715, %v11194
    %v11336 = vadd.f32 %v10716, %v11198
    %v11337 = vadd.f32 %v10717, %v11202
    %v11338 = vadd.f32 %v10718, %v11206
    %v11339 = vadd.f32 %v10719, %v11210
    %v11340 = vadd.f32 %v10720, %v11214
    %v11341 = vadd.f32 %v10721, %v11194
    %v11342 = vadd.f32 %v10722, %v11198
    %v11343 = vadd.f32 %v10723, %v11202
    %v11344 = vadd.f32 %v10724, %v11206
    %v11345 = vadd.f32 %v10725, %v11210
    %v11346 = vadd.f32 %v10726, %v11214
    %v11347 = vadd.f32 %v10727, %v11194
    %v11348 = vadd.f32 %v10728, %v11198
    %v11349 = vadd.f32 %v10729, %v11202
    %v11350 = vadd.f32 %v10730, %v11206
    %v11351 = vadd.f32 %v10731, %v11210
    %v11352 = vadd.f32 %v10732, %v11214
    %v11353 = vadd.f32 %v10733, %v11194
    %v11354 = vadd.f32 %v10734, %v11198
    %v11355 = vadd.f32 %v10735, %v11202
    %v11356 = vadd.f32 %v10736, %v11206
    %v11357 = vadd.f32 %v10737, %v11210
    %v11358 = vadd.f32 %v10738, %v11214
    %v11359 = vadd.f32 %v10739, %v11194
    %v11360 = vadd.f32 %v10740, %v11198
    %v11361 = vadd.f32 %v10741, %v11202
    %v11362 = vadd.f32 %v10742, %v11206
    %v11363 = vadd.f32 %v10743, %v11210
    %v11364 = vadd.f32 %v10744, %v11214
    %v11365 = vadd.f32 %v10745, %v11194
    %v11366 = vadd.f32 %v10746, %v11198
    %v11367 = vadd.f32 %v10747, %v11202
    %v11368 = vadd.f32 %v10748, %v11206
    %v11369 = vadd.f32 %v10749, %v11210
    %v11370 = vadd.f32 %v10750, %v11214
    %v11371 = vadd.f32 %v10751, %v11194
    %v11372 = vadd.f32 %v10752, %v11198
    %v11373 = vadd.f32 %v10753, %v11202
    %v11374 = vadd.f32 %v10754, %v11206
    %v11375 = vadd.f32 %v10755, %v11210
    %v11376 = vadd.f32 %v10756, %v11214
    %v11377 = vadd.f32 %v10757, %v11194
    %v11378 = vadd.f32 %v10758, %v11198
    %v11379 = vadd.f32 %v10759, %v11202
    %v11380 = vadd.f32 %v10760, %v11206
    %v11381 = vadd.f32 %v10761, %v11210
    %v11382 = vadd.f32 %v10762, %v11214
    %v11383 = vadd.f32 %v10763, %v11194
    %v11384 = vadd.f32 %v10764, %v11198
    %v11385 = vadd.f32 %v10765, %v11202
    %v11386 = vadd.f32 %v10766, %v11206
    %v11387 = vadd.f32 %v10767, %v11210
    %v11388 = vadd.f32 %v10768, %v11214
    %v11389 = vadd.f32 %v10769, %v11194
    %v11390 = vadd.f32 %v10770, %v11198
    %v11391 = vadd.f32 %v10771, %v11202
    %v11392 = vadd.f32 %v10772, %v11206
    %v11393 = vadd.f32 %v10773, %v11210
    %v11394 = vadd.f32 %v10774, %v11214
    %v11395 = vadd.f32 %v10775, %v11194
    %v11396 = vadd.f32 %v10776, %v11198
    %v11397 = vadd.f32 %v10777, %v11202
    %v11398 = vadd.f32 %v10778, %v11206
    %v11399 = vadd.f32 %v10779, %v11210
    %v11400 = vadd.f32 %v10780, %v11214
    %v11401 = vadd.f32 %v10781, %v11194
    %v11402 = vadd.f32 %v10782, %v11198
    %v11403 = vadd.f32 %v10783, %v11202
    %v11404 = vadd.f32 %v10784, %v11206
    %v11405 = vadd.f32 %v10785, %v11210
    %v11406 = vadd.f32 %v10786, %v11214
    %v11407 = vadd.f32 %v10787, %v11194
    %v11408 = vadd.f32 %v10788, %v11198
    %v11409 = vadd.f32 %v10789, %v11202
    %v11410 = vadd.f32 %v10790, %v11206
    %v11411 = vadd.f32 %v10791, %v11210
    %v11412 = vadd.f32 %v10792, %v11214
    %v11413 = vadd.f32 %v10793, %v11194
    %v11414 = vadd.f32 %v10794, %v11198
    %v11415 = vadd.f32 %v10795, %v11202
    %v11416 = vadd.f32 %v10796, %v11206
    %v11417 = vadd.f32 %v10797, %v11210
    %v11418 = vadd.f32 %v10798, %v11214
    %v11419 = vadd.f32 %v10799, %v11194
    %v11420 = vadd.f32 %v10800, %v11198
    %v11421 = vadd.f32 %v10801, %v11202
    %v11422 = vadd.f32 %v10802, %v11206
    %v11423 = vadd.f32 %v10803, %v11210
    %v11424 = vadd.f32 %v10804, %v11214
    %v11425 = vadd.f32 %v10805, %v11194
    %v11426 = vadd.f32 %v10806, %v11198
    %v11427 = vadd.f32 %v10807, %v11202
    %v11428 = vadd.f32 %v10808, %v11206
    %v11429 = vadd.f32 %v10809, %v11210
    %v11430 = vadd.f32 %v10810, %v11214
    %v11431 = vadd.f32 %v10811, %v11194
    %v11432 = vadd.f32 %v10812, %v11198
    %v11433 = vadd.f32 %v10813, %v11202
    %v11434 = vadd.f32 %v10814, %v11206
    %v11435 = vadd.f32 %v10815, %v11210
    %v11436 = vadd.f32 %v10816, %v11214
    %v11437 = vadd.f32 %v10817, %v11194
    %v11438 = vadd.f32 %v10818, %v11198
    %v11439 = vadd.f32 %v10819, %v11202
    %v11440 = vadd.f32 %v10820, %v11206
    %v11441 = vadd.f32 %v10821, %v11210
    %v11442 = vadd.f32 %v10822, %v11214
    %v11443 = vadd.f32 %v10823, %v11194
    %v11444 = vadd.f32 %v10824, %v11198
    %v11445 = vadd.f32 %v10825, %v11202
    %v11446 = vadd.f32 %v10826, %v11206
    %v11447 = vadd.f32 %v10827, %v11210
    %v11448 = vadd.f32 %v10828, %v11214
    %v11449 = vadd.f32 %v10829, %v11194
    %v11450 = vadd.f32 %v10830, %v11198
    %v11451 = vadd.f32 %v10831, %v11202
    %v11452 = vadd.f32 %v10832, %v11206
    %v11453 = vadd.f32 %v10833, %v11210
    %v11454 = vadd.f32 %v10834, %v11214
    %v11455 = vadd.f32 %v10835, %v11194
    %v11456 = vadd.f32 %v10836, %v11198
    %v11457 = vadd.f32 %v10837, %v11202
    %v11458 = vadd.f32 %v10838, %v11206
    %v11459 = vadd.f32 %v10839, %v11210
    %v11460 = vadd.f32 %v10840, %v11214
    %v11461 = vadd.f32 %v10841, %v11194
    %v11462 = vadd.f32 %v10842, %v11198
    %v11463 = vadd.f32 %v10843, %v11202
    %v11464 = vadd.f32 %v10844, %v11206
    %v11465 = vadd.f32 %v10845, %v11210
    %v11466 = vadd.f32 %v10846, %v11214
    %v11467 = vadd.f32 %v10847, %v11194
    %v11468 = vadd.f32 %v10848, %v11198
    %v11469 = vadd.f32 %v10849, %v11202
    %v11470 = vadd.f32 %v10850, %v11206
    %v11471 = vadd.f32 %v10851, %v11210
    %v11472 = vadd.f32 %v10852, %v11214
    %v11473 = vadd.f32 %v10853, %v11194
    %v11474 = vadd.f32 %v10854, %v11198
    %v11475 = vadd.f32 %v10855, %v11202
    %v11476 = vadd.f32 %v10856, %v11206
    %v11477 = vadd.f32 %v10857, %v11210
    %v11478 = vadd.f32 %v10858, %v11214
    %v11479 = vadd.f32 %v10859, %v11194
    %v11480 = vadd.f32 %v10860, %v11198
    %v11481 = vadd.f32 %v10861, %v11202
    %v11482 = vadd.f32 %v10862, %v11206
    %v11483 = vadd.f32 %v10863, %v11210
    %v11484 = vadd.f32 %v10864, %v11214
    %v11485 = vadd.f32 %v10865, %v11194
    %v11486 = vadd.f32 %v10866, %v11198
    %v11487 = vadd.f32 %v10867, %v11202
    %v11488 = vadd.f32 %v10868, %v11206
    %v11489 = vadd.f32 %v10869, %v11210
    %v11490 = vadd.f32 %v10870, %v11214
    %v11491 = vadd.f32 %v10871, %v11194
    %v11492 = vadd.f32 %v10872, %v11198
    %v11493 = vadd.f32 %v10873, %v11202
    %v11494 = vadd.f32 %v10874, %v11206
    %v11495 = vadd.f32 %v10875, %v11210
    %v11496 = vadd.f32 %v10876, %v11214
    %v11497 = vadd.f32 %v10877, %v11194
    %v11498 = vadd.f32 %v10878, %v11198
    %v11499 = vadd.f32 %v10879, %v11202
    %v11500 = vadd.f32 %v10880, %v11206
    %v11501 = vadd.f32 %v10881, %v11210
    %v11502 = vadd.f32 %v10882, %v11214
    %v11503 = vadd.f32 %v10883, %v11194
    %v11504 = vadd.f32 %v10884, %v11198
    %v11505 = vadd.f32 %v10885, %v11202
    %v11506 = vadd.f32 %v10886, %v11206
    %v11507 = vadd.f32 %v10887, %v11210
    %v11508 = vadd.f32 %v10888, %v11214
    %v11509 = vadd.f32 %v10889, %v11194
    %v11510 = vadd.f32 %v10890, %v11198
    %v11511 = vadd.f32 %v10891, %v11202
    %v11512 = vadd.f32 %v10892, %v11206
    %v11513 = vadd.f32 %v10893, %v11210
    %v11514 = vadd.f32 %v10894, %v11214
    %v11515 = vadd.f32 %v10895, %v11194
    %v11516 = vadd.f32 %v10896, %v11198
    %v11517 = vadd.f32 %v10897, %v11202
    %v11518 = vadd.f32 %v10898, %v11206
    %v11519 = vadd.f32 %v10899, %v11210
    %v11520 = vadd.f32 %v10900, %v11214
    %v11521 = vadd.f32 %v10901, %v11194
    %v11522 = vadd.f32 %v10902, %v11198
    %v11523 = vadd.f32 %v10903, %v11202
    %v11524 = vadd.f32 %v10904, %v11206
    %v11525 = vadd.f32 %v10905, %v11210
    %v11526 = vadd.f32 %v10906, %v11214
    %v11527 = vadd.f32 %v10907, %v11194
    %v11528 = vadd.f32 %v10908, %v11198
    %v11529 = vadd.f32 %v10909, %v11202
    %v11530 = vadd.f32 %v10910, %v11206
    %v11531 = vadd.f32 %v10911, %v11210
    %v11532 = vadd.f32 %v10912, %v11214
    %v11533 = vadd.f32 %v10913, %v11194
    %v11534 = vadd.f32 %v10914, %v11198
    %v11535 = vadd.f32 %v10915, %v11202
    %v11536 = vadd.f32 %v10916, %v11206
    %v11537 = vadd.f32 %v10917, %v11210
    %v11538 = vadd.f32 %v10918, %v11214
    %v11539 = vadd.f32 %v10919, %v11194
    %v11540 = vadd.f32 %v10920, %v11198
    %v11541 = vadd.f32 %v10921, %v11202
    %v11542 = vadd.f32 %v10922, %v11206
    %v11543 = vadd.f32 %v10923, %v11210
    %v11544 = vadd.f32 %v10924, %v11214
    %v11545 = vadd.f32 %v10925, %v11194
    %v11546 = vadd.f32 %v10926, %v11198
    %v11547 = vadd.f32 %v10927, %v11202
    %v11548 = vadd.f32 %v10928, %v11206
    %v11549 = vadd.f32 %v10929, %v11210
    %v11550 = vadd.f32 %v10930, %v11214
    %v11551 = vadd.f32 %v10931, %v11194
    %v11552 = vadd.f32 %v10932, %v11198
    %v11553 = vadd.f32 %v10933, %v11202
    %v11554 = vadd.f32 %v10934, %v11206
    %v11555 = vadd.f32 %v10935, %v11210
    %v11556 = vadd.f32 %v10936, %v11214
    %v11557 = vadd.f32 %v10937, %v11194
    %v11558 = vadd.f32 %v10938, %v11198
    %v11559 = vadd.f32 %v10939, %v11202
    %v11560 = vadd.f32 %v10940, %v11206
    %v11561 = vadd.f32 %v10941, %v11210
    %v11562 = vadd.f32 %v10942, %v11214
    %v11563 = vadd.f32 %v10943, %v11194
    %v11564 = vadd.f32 %v10944, %v11198
    %v11565 = vadd.f32 %v10945, %v11202
    %v11566 = vadd.f32 %v10946, %v11206
    %v11567 = vadd.f32 %v10947, %v11210
    %v11568 = vadd.f32 %v10948, %v11214
    %v11569 = vadd.f32 %v10949, %v11194
    %v11570 = vadd.f32 %v10950, %v11198
    %v11571 = vadd.f32 %v10951, %v11202
    %v11572 = vadd.f32 %v10952, %v11206
    %v11573 = vadd.f32 %v10953, %v11210
    %v11574 = vadd.f32 %v10954, %v11214
    %v11575 = vadd.f32 %v10955, %v11194
    %v11576 = vadd.f32 %v10956, %v11198
    %v11577 = vadd.f32 %v10957, %v11202
    %v11578 = vadd.f32 %v10958, %v11206
    %v11579 = vadd.f32 %v10959, %v11210
    %v11580 = vadd.f32 %v10960, %v11214
    %v11581 = vadd.f32 %v10961, %v11194
    %v11582 = vadd.f32 %v10962, %v11198
    %v11583 = vadd.f32 %v10963, %v11202
    %v11584 = vadd.f32 %v10964, %v11206
    %v11585 = vadd.f32 %v10965, %v11210
    %v11586 = vadd.f32 %v10966, %v11214
    %v11587 = vadd.f32 %v10967, %v11194
    %v11588 = vadd.f32 %v10968, %v11198
    %v11589 = vadd.f32 %v10969, %v11202
    %v11590 = vadd.f32 %v10970, %v11206
    %v11591 = vadd.f32 %v10971, %v11210
    %v11592 = vadd.f32 %v10972, %v11214
    %v11593 = vadd.f32 %v10973, %v11194
    %v11594 = vadd.f32 %v10974, %v11198
    %v11595 = vadd.f32 %v10975, %v11202
    %v11596 = vadd.f32 %v10976, %v11206
    %v11597 = vadd.f32 %v10977, %v11210
    %v11598 = vadd.f32 %v10978, %v11214
    %v11599 = vadd.f32 %v10979, %v11194
    %v11600 = vadd.f32 %v10980, %v11198
    %v11601 = vadd.f32 %v10981, %v11202
    %v11602 = vadd.f32 %v10982, %v11206
    %v11603 = vadd.f32 %v10983, %v11210
    %v11604 = vadd.f32 %v10984, %v11214
    %v11605 = vadd.f32 %v10985, %v11194
    %v11606 = vadd.f32 %v10986, %v11198
    %v11607 = vadd.f32 %v10987, %v11202
    %v11608 = vadd.f32 %v10988, %v11206
    %v11609 = vadd.f32 %v10989, %v11210
    %v11610 = vadd.f32 %v10990, %v11214
    %v11611 = vadd.f32 %v10991, %v11194
    %v11612 = vadd.f32 %v10992, %v11198
    %v11613 = vadd.f32 %v10993, %v11202
    %v11614 = vadd.f32 %v10994, %v11206
    %v11615 = vadd.f32 %v10995, %v11210
    %v11616 = vadd.f32 %v10996, %v11214
    %v11617 = vadd.f32 %v10997, %v11194
    %v11618 = vadd.f32 %v10998, %v11198
    %v11619 = vadd.f32 %v10999, %v11202
    %v11620 = vadd.f32 %v11000, %v11206
    %v11621 = vadd.f32 %v11001, %v11210
    %v11622 = vadd.f32 %v11002, %v11214
    %v11623 = vadd.f32 %v11003, %v11194
    %v11624 = vadd.f32 %v11004, %v11198
    %v11625 = vadd.f32 %v11005, %v11202
    %v11626 = vadd.f32 %v11006, %v11206
    %v11627 = vadd.f32 %v11007, %v11210
    %v11628 = vadd.f32 %v11008, %v11214
    %v11629 = vadd.f32 %v11009, %v11194
    %v11630 = vadd.f32 %v11010, %v11198
    %v11631 = vadd.f32 %v11011, %v11202
    %v11632 = vadd.f32 %v11012, %v11206
    %v11633 = vadd.f32 %v11013, %v11210
    %v11634 = vadd.f32 %v11014, %v11214
    %v11635 = vadd.f32 %v11015, %v11194
    %v11636 = vadd.f32 %v11016, %v11198
    %v11637 = vadd.f32 %v11017, %v11202
    %v11638 = vadd.f32 %v11018, %v11206
    %v11639 = vadd.f32 %v11019, %v11210
    %v11640 = vadd.f32 %v11020, %v11214
    %v11641 = vadd.f32 %v11021, %v11194
    %v11642 = vadd.f32 %v11022, %v11198
    %v11643 = vadd.f32 %v11023, %v11202
    %v11644 = vadd.f32 %v11024, %v11206
    %v11645 = vadd.f32 %v11025, %v11210
    %v11646 = vadd.f32 %v11026, %v11214
    %v11647 = vadd.f32 %v11027, %v11194
    %v11648 = vadd.f32 %v11028, %v11198
    %v11649 = vadd.f32 %v11029, %v11202
    %v11650 = vadd.f32 %v11030, %v11206
    %v11651 = vadd.f32 %v11031, %v11210
    %v11652 = vadd.f32 %v11032, %v11214
    %v11653 = vadd.f32 %v11033, %v11194
    %v11654 = vadd.f32 %v11034, %v11198
    %v11655 = vadd.f32 %v11035, %v11202
    %v11656 = vadd.f32 %v11036, %v11206
    %v11657 = vadd.f32 %v11037, %v11210
    %v11658 = vadd.f32 %v11038, %v11214
    %v11659 = vadd.f32 %v11039, %v11194
    %v11660 = vadd.f32 %v11040, %v11198
    %v11661 = vadd.f32 %v11041, %v11202
    %v11662 = vadd.f32 %v11042, %v11206
    %v11663 = vadd.f32 %v11043, %v11210
    %v11664 = vadd.f32 %v11044, %v11214
    %v11665 = vadd.f32 %v11045, %v11194
    %v11666 = vadd.f32 %v11046, %v11198
    %v11667 = vadd.f32 %v11047, %v11202
    %v11668 = vadd.f32 %v11048, %v11206
    %v11669 = vadd.f32 %v11049, %v11210
    %v11670 = vadd.f32 %v11050, %v11214
    %v11671 = vadd.f32 %v11051, %v11194
    %v11672 = vadd.f32 %v11052, %v11198
    %v11673 = vadd.f32 %v11053, %v11202
    %v11674 = vadd.f32 %v11054, %v11206
    %v11675 = vadd.f32 %v11055, %v11210
    %v11676 = vadd.f32 %v11056, %v11214
    %v11677 = vadd.f32 %v11057, %v11194
    %v11678 = vadd.f32 %v11058, %v11198
    %v11679 = vadd.f32 %v11059, %v11202
    %v11680 = vadd.f32 %v11060, %v11206
    %v11681 = vadd.f32 %v11061, %v11210
    %v11682 = vadd.f32 %v11062, %v11214
    %v11683 = vadd.f32 %v11063, %v11194
    %v11684 = vadd.f32 %v11064, %v11198
    %v11685 = vadd.f32 %v11065, %v11202
    %v11686 = vadd.f32 %v11066, %v11206
    %v11687 = vadd.f32 %v11067, %v11210
    %v11688 = vadd.f32 %v11068, %v11214
    %v11689 = vadd.f32 %v11069, %v11194
    %v11690 = vadd.f32 %v11070, %v11198
    %v11691 = vadd.f32 %v11071, %v11202
    %v11692 = vadd.f32 %v11072, %v11206
    %v11693 = vadd.f32 %v11073, %v11210
    %v11694 = vadd.f32 %v11074, %v11214
    %v11695 = vadd.f32 %v11075, %v11194
    %v11696 = vadd.f32 %v11076, %v11198
    %v11697 = vadd.f32 %v11077, %v11202
    %v11698 = vadd.f32 %v11078, %v11206
    %v11699 = vadd.f32 %v11079, %v11210
    %v11700 = vadd.f32 %v11080, %v11214
    %v11701 = vadd.f32 %v11081, %v11194
    %v11702 = vadd.f32 %v11082, %v11198
    %v11703 = vadd.f32 %v11083, %v11202
    %v11704 = vadd.f32 %v11084, %v11206
    %v11705 = vadd.f32 %v11085, %v11210
    %v11706 = vadd.f32 %v11086, %v11214
    %v11707 = vadd.f32 %v11087, %v11194
    %v11708 = vadd.f32 %v11088, %v11198
    %v11709 = vadd.f32 %v11089, %v11202
    %v11710 = vadd.f32 %v11090, %v11206
    %v11711 = vadd.f32 %v11091, %v11210
    %v11712 = vadd.f32 %v11092, %v11214
    %v11713 = vadd.f32 %v11093, %v11194
    %v11714 = vadd.f32 %v11094, %v11198
    %v11715 = vadd.f32 %v11095, %v11202
    %v11716 = vadd.f32 %v11096, %v11206
    %v11717 = vadd.f32 %v11097, %v11210
    %v11718 = vadd.f32 %v11098, %v11214
    %v11719 = vadd.f32 %v11099, %v11194
    %v11720 = vadd.f32 %v11100, %v11198
    %v11721 = vadd.f32 %v11101, %v11202
    %v11722 = vadd.f32 %v11102, %v11206
    %v11723 = vadd.f32 %v11103, %v11210
    %v11724 = vadd.f32 %v11104, %v11214
    %v11725 = vadd.f32 %v11105, %v11194
    %v11726 = vadd.f32 %v11106, %v11198
    %v11727 = vadd.f32 %v11107, %v11202
    %v11728 = vadd.f32 %v11108, %v11206
    %v11729 = vadd.f32 %v11109, %v11210
    %v11730 = vadd.f32 %v11110, %v11214
    %v11731 = vadd.f32 %v11111, %v11194
    %v11732 = vadd.f32 %v11112, %v11198
    %v11733 = vadd.f32 %v11113, %v11202
    %v11734 = vadd.f32 %v11114, %v11206
    %v11735 = vadd.f32 %v11115, %v11210
    %v11736 = vadd.f32 %v11116, %v11214
    %v11737 = vadd.f32 %v11117, %v11194
    %v11738 = vadd.f32 %v11118, %v11198
    %v11739 = vadd.f32 %v11119, %v11202
    %v11740 = vadd.f32 %v11120, %v11206
    %v11741 = vadd.f32 %v11121, %v11210
    %v11742 = vadd.f32 %v11122, %v11214
    %v11743 = vadd.f32 %v11123, %v11194
    %v11744 = vadd.f32 %v11124, %v11198
    %v11745 = vadd.f32 %v11125, %v11202
    %v11746 = vadd.f32 %v11126, %v11206
    %v11747 = vadd.f32 %v11127, %v11210
    %v11748 = vadd.f32 %v11128, %v11214
    %v11749 = vadd.f32 %v11129, %v11194
    %v11750 = vadd.f32 %v11130, %v11198
    %v11751 = vadd.f32 %v11131, %v11202
    %v11752 = vadd.f32 %v11132, %v11206
    %v11753 = vadd.f32 %v11133, %v11210
    %v11754 = vadd.f32 %v11134, %v11214
    %v11755 = vadd.f32 %v11135, %v11194
    %v11756 = vadd.f32 %v11136, %v11198
    %v11757 = vadd.f32 %v11137, %v11202
    %v11758 = vadd.f32 %v11138, %v11206
    %v11759 = vadd.f32 %v11139, %v11210
    %v11760 = vadd.f32 %v11140, %v11214
    %v11761 = vadd.f32 %v11141, %v11194
    %v11762 = vadd.f32 %v11142, %v11198
    %v11763 = vadd.f32 %v11143, %v11202
    %v11764 = vadd.f32 %v11144, %v11206
    %v11765 = vadd.f32 %v11145, %v11210
    %v11766 = vadd.f32 %v11146, %v11214
    %v11767 = vadd.f32 %v11147, %v11194
    %v11768 = vadd.f32 %v11148, %v11198
    %v11769 = vadd.f32 %v11149, %v11202
    %v11770 = vadd.f32 %v11150, %v11206
    %v11771 = vadd.f32 %v11151, %v11210
    %v11772 = vadd.f32 %v11152, %v11214
    %v11773 = vadd.f32 %v11153, %v11194
    %v11774 = vadd.f32 %v11154, %v11198
    %v11775 = vadd.f32 %v11155, %v11202
    %v11776 = vadd.f32 %v11156, %v11206
    %v11777 = vadd.f32 %v11157, %v11210
    %v11778 = vadd.f32 %v11158, %v11214
    %v11779 = vadd.f32 %v11159, %v11194
    %v11780 = vadd.f32 %v11160, %v11198
    %v11781 = vadd.f32 %v11161, %v11202
    %v11782 = vadd.f32 %v11162, %v11206
    %v11783 = vadd.f32 %v11163, %v11210
    %v11784 = vadd.f32 %v11164, %v11214
    %v11785 = vadd.f32 %v11165, %v11194
    %v11786 = vadd.f32 %v11166, %v11198
    %v11787 = vadd.f32 %v11167, %v11202
    %v11788 = vadd.f32 %v11168, %v11206
    %v11789 = vadd.f32 %v11169, %v11210
    %v11790 = vadd.f32 %v11170, %v11214
    %v11791 = vadd.f32 %v11171, %v11194
    %v11792 = vadd.f32 %v11172, %v11198
    %v11793 = vadd.f32 %v11173, %v11202
    %v11794 = vadd.f32 %v11174, %v11206
    %v11795 = vadd.f32 %v11175, %v11210
    %v11796 = vadd.f32 %v11176, %v11214
    %v11797 = vadd.f32 %v11177, %v11194
    %v11798 = vadd.f32 %v11178, %v11198
    %v11799 = vadd.f32 %v11179, %v11202
    %v11800 = vadd.f32 %v11180, %v11206
    %v11801 = vadd.f32 %v11181, %v11210
    %v11802 = vadd.f32 %v11182, %v11214
    %v11803 = vadd.f32 %v11183, %v11194
    %v11804 = vadd.f32 %v11184, %v11198
    %v11805 = vadd.f32 %v11185, %v11202
    %v11806 = vadd.f32 %v11186, %v11206
    %v11807 = vadd.f32 %v11187, %v11210
    %v11808 = vadd.f32 %v11188, %v11214
    %11809 = vst [vmem:[#allocation10] sm:$0xff] %v11221
    %11810 = vst [vmem:[#allocation10 + $0x8] sm:$0xff] %v11222
    %11811 = vst [vmem:[#allocation10 + $0x10] sm:$0xff] %v11223
    %11812 = vst [vmem:[#allocation10 + $0x18] sm:$0xff] %v11224
    %11813 = vst [vmem:[#allocation10 + $0x20] sm:$0xff] %v11225
    %11814 = vst.msk [vmem:[#allocation10 + $0x28] sm:$0xff] %vm3052, %v11226
    %11815 = vst [vmem:[#allocation10 + $0x30] sm:$0xff] %v11227
    %11816 = vst [vmem:[#allocation10 + $0x38] sm:$0xff] %v11228
    %11817 = vst [vmem:[#allocation10 + $0x40] sm:$0xff] %v11229
    %11818 = vst [vmem:[#allocation10 + $0x48] sm:$0xff] %v11230
    %11819 = vst [vmem:[#allocation10 + $0x50] sm:$0xff] %v11231
    %11820 = vst.msk [vmem:[#allocation10 + $0x58] sm:$0xff] %vm3052, %v11232
    %11821 = vst [vmem:[#allocation10 + $0x60] sm:$0xff] %v11233
    %11822 = vst [vmem:[#allocation10 + $0x68] sm:$0xff] %v11234
    %11823 = vst [vmem:[#allocation10 + $0x70] sm:$0xff] %v11235
    %11824 = vst [vmem:[#allocation10 + $0x78] sm:$0xff] %v11236
    %11825 = vst [vmem:[#allocation10 + $0x80] sm:$0xff] %v11237
    %11826 = vst.msk [vmem:[#allocation10 + $0x88] sm:$0xff] %vm3052, %v11238
    %11827 = vst [vmem:[#allocation10 + $0x90] sm:$0xff] %v11239
    %11828 = vst [vmem:[#allocation10 + $0x98] sm:$0xff] %v11240
    %11829 = vst [vmem:[#allocation10 + $0xa0] sm:$0xff] %v11241
    %11830 = vst [vmem:[#allocation10 + $0xa8] sm:$0xff] %v11242
    %11831 = vst [vmem:[#allocation10 + $0xb0] sm:$0xff] %v11243
    %11832 = vst.msk [vmem:[#allocation10 + $0xb8] sm:$0xff] %vm3052, %v11244
    %11833 = vst [vmem:[#allocation10 + $0xc0] sm:$0xff] %v11245
    %11834 = vst [vmem:[#allocation10 + $0xc8] sm:$0xff] %v11246
    %11835 = vst [vmem:[#allocation10 + $0xd0] sm:$0xff] %v11247
    %11836 = vst [vmem:[#allocation10 + $0xd8] sm:$0xff] %v11248
    %11837 = vst [vmem:[#allocation10 + $0xe0] sm:$0xff] %v11249
    %11838 = vst.msk [vmem:[#allocation10 + $0xe8] sm:$0xff] %vm3052, %v11250
    %11839 = vst [vmem:[#allocation10 + $0xf0] sm:$0xff] %v11251
    %11840 = vst [vmem:[#allocation10 + $0xf8] sm:$0xff] %v11252
    %11841 = vst [vmem:[#allocation10 + $0x100] sm:$0xff] %v11253
    %11842 = vst [vmem:[#allocation10 + $0x108] sm:$0xff] %v11254
    %11843 = vst [vmem:[#allocation10 + $0x110] sm:$0xff] %v11255
    %11844 = vst.msk [vmem:[#allocation10 + $0x118] sm:$0xff] %vm3052, %v11256
    %11845 = vst [vmem:[#allocation10 + $0x120] sm:$0xff] %v11257
    %11846 = vst [vmem:[#allocation10 + $0x128] sm:$0xff] %v11258
    %11847 = vst [vmem:[#allocation10 + $0x130] sm:$0xff] %v11259
    %11848 = vst [vmem:[#allocation10 + $0x138] sm:$0xff] %v11260
    %11849 = vst [vmem:[#allocation10 + $0x140] sm:$0xff] %v11261
    %11850 = vst.msk [vmem:[#allocation10 + $0x148] sm:$0xff] %vm3052, %v11262
    %11851 = vst [vmem:[#allocation10 + $0x150] sm:$0xff] %v11263
    %11852 = vst [vmem:[#allocation10 + $0x158] sm:$0xff] %v11264
    %11853 = vst [vmem:[#allocation10 + $0x160] sm:$0xff] %v11265
    %11854 = vst [vmem:[#allocation10 + $0x168] sm:$0xff] %v11266
    %11855 = vst [vmem:[#allocation10 + $0x170] sm:$0xff] %v11267
    %11856 = vst.msk [vmem:[#allocation10 + $0x178] sm:$0xff] %vm3052, %v11268
    %11857 = vst [vmem:[#allocation10 + $0x180] sm:$0xff] %v11269
    %11858 = vst [vmem:[#allocation10 + $0x188] sm:$0xff] %v11270
    %11859 = vst [vmem:[#allocation10 + $0x190] sm:$0xff] %v11271
    %11860 = vst [vmem:[#allocation10 + $0x198] sm:$0xff] %v11272
    %11861 = vst [vmem:[#allocation10 + $0x1a0] sm:$0xff] %v11273
    %11862 = vst.msk [vmem:[#allocation10 + $0x1a8] sm:$0xff] %vm3052, %v11274
    %11863 = vst [vmem:[#allocation10 + $0x1b0] sm:$0xff] %v11275
    %11864 = vst [vmem:[#allocation10 + $0x1b8] sm:$0xff] %v11276
    %11865 = vst [vmem:[#allocation10 + $0x1c0] sm:$0xff] %v11277
    %11866 = vst [vmem:[#allocation10 + $0x1c8] sm:$0xff] %v11278
    %11867 = vst [vmem:[#allocation10 + $0x1d0] sm:$0xff] %v11279
    %11868 = vst.msk [vmem:[#allocation10 + $0x1d8] sm:$0xff] %vm3052, %v11280
    %11869 = vst [vmem:[#allocation10 + $0x1e0] sm:$0xff] %v11281
    %11870 = vst [vmem:[#allocation10 + $0x1e8] sm:$0xff] %v11282
    %11871 = vst [vmem:[#allocation10 + $0x1f0] sm:$0xff] %v11283
    %11872 = vst [vmem:[#allocation10 + $0x1f8] sm:$0xff] %v11284
    %11873 = vst [vmem:[#allocation10 + $0x200] sm:$0xff] %v11285
    %11874 = vst.msk [vmem:[#allocation10 + $0x208] sm:$0xff] %vm3052, %v11286
    %11875 = vst [vmem:[#allocation10 + $0x210] sm:$0xff] %v11287
    %11876 = vst [vmem:[#allocation10 + $0x218] sm:$0xff] %v11288
    %11877 = vst [vmem:[#allocation10 + $0x220] sm:$0xff] %v11289
    %11878 = vst [vmem:[#allocation10 + $0x228] sm:$0xff] %v11290
    %11879 = vst [vmem:[#allocation10 + $0x230] sm:$0xff] %v11291
    %11880 = vst.msk [vmem:[#allocation10 + $0x238] sm:$0xff] %vm3052, %v11292
    %11881 = vst [vmem:[#allocation10 + $0x240] sm:$0xff] %v11293
    %11882 = vst [vmem:[#allocation10 + $0x248] sm:$0xff] %v11294
    %11883 = vst [vmem:[#allocation10 + $0x250] sm:$0xff] %v11295
    %11884 = vst [vmem:[#allocation10 + $0x258] sm:$0xff] %v11296
    %11885 = vst [vmem:[#allocation10 + $0x260] sm:$0xff] %v11297
    %11886 = vst.msk [vmem:[#allocation10 + $0x268] sm:$0xff] %vm3052, %v11298
    %11887 = vst [vmem:[#allocation10 + $0x270] sm:$0xff] %v11299
    %11888 = vst [vmem:[#allocation10 + $0x278] sm:$0xff] %v11300
    %11889 = vst [vmem:[#allocation10 + $0x280] sm:$0xff] %v11301
    %11890 = vst [vmem:[#allocation10 + $0x288] sm:$0xff] %v11302
    %11891 = vst [vmem:[#allocation10 + $0x290] sm:$0xff] %v11303
    %11892 = vst.msk [vmem:[#allocation10 + $0x298] sm:$0xff] %vm3052, %v11304
    %11893 = vst [vmem:[#allocation10 + $0x2a0] sm:$0xff] %v11305
    %11894 = vst [vmem:[#allocation10 + $0x2a8] sm:$0xff] %v11306
    %11895 = vst [vmem:[#allocation10 + $0x2b0] sm:$0xff] %v11307
    %11896 = vst [vmem:[#allocation10 + $0x2b8] sm:$0xff] %v11308
    %11897 = vst [vmem:[#allocation10 + $0x2c0] sm:$0xff] %v11309
    %11898 = vst.msk [vmem:[#allocation10 + $0x2c8] sm:$0xff] %vm3052, %v11310
    %11899 = vst [vmem:[#allocation10 + $0x2d0] sm:$0xff] %v11311
    %11900 = vst [vmem:[#allocation10 + $0x2d8] sm:$0xff] %v11312
    %11901 = vst [vmem:[#allocation10 + $0x2e0] sm:$0xff] %v11313
    %11902 = vst [vmem:[#allocation10 + $0x2e8] sm:$0xff] %v11314
    %11903 = vst [vmem:[#allocation10 + $0x2f0] sm:$0xff] %v11315
    %11904 = vst.msk [vmem:[#allocation10 + $0x2f8] sm:$0xff] %vm3052, %v11316
    %11905 = vst [vmem:[#allocation10 + $0x300] sm:$0xff] %v11317
    %11906 = vst [vmem:[#allocation10 + $0x308] sm:$0xff] %v11318
    %11907 = vst [vmem:[#allocation10 + $0x310] sm:$0xff] %v11319
    %11908 = vst [vmem:[#allocation10 + $0x318] sm:$0xff] %v11320
    %11909 = vst [vmem:[#allocation10 + $0x320] sm:$0xff] %v11321
    %11910 = vst.msk [vmem:[#allocation10 + $0x328] sm:$0xff] %vm3052, %v11322
    %11911 = vst [vmem:[#allocation10 + $0x330] sm:$0xff] %v11323
    %11912 = vst [vmem:[#allocation10 + $0x338] sm:$0xff] %v11324
    %11913 = vst [vmem:[#allocation10 + $0x340] sm:$0xff] %v11325
    %11914 = vst [vmem:[#allocation10 + $0x348] sm:$0xff] %v11326
    %11915 = vst [vmem:[#allocation10 + $0x350] sm:$0xff] %v11327
    %11916 = vst.msk [vmem:[#allocation10 + $0x358] sm:$0xff] %vm3052, %v11328
    %11917 = vst [vmem:[#allocation10 + $0x360] sm:$0xff] %v11329
    %11918 = vst [vmem:[#allocation10 + $0x368] sm:$0xff] %v11330
    %11919 = vst [vmem:[#allocation10 + $0x370] sm:$0xff] %v11331
    %11920 = vst [vmem:[#allocation10 + $0x378] sm:$0xff] %v11332
    %11921 = vst [vmem:[#allocation10 + $0x380] sm:$0xff] %v11333
    %11922 = vst.msk [vmem:[#allocation10 + $0x388] sm:$0xff] %vm3052, %v11334
    %11923 = vst [vmem:[#allocation10 + $0x390] sm:$0xff] %v11335
    %11924 = vst [vmem:[#allocation10 + $0x398] sm:$0xff] %v11336
    %11925 = vst [vmem:[#allocation10 + $0x3a0] sm:$0xff] %v11337
    %11926 = vst [vmem:[#allocation10 + $0x3a8] sm:$0xff] %v11338
    %11927 = vst [vmem:[#allocation10 + $0x3b0] sm:$0xff] %v11339
    %11928 = vst.msk [vmem:[#allocation10 + $0x3b8] sm:$0xff] %vm3052, %v11340
    %11929 = vst [vmem:[#allocation10 + $0x3c0] sm:$0xff] %v11341
    %11930 = vst [vmem:[#allocation10 + $0x3c8] sm:$0xff] %v11342
    %11931 = vst [vmem:[#allocation10 + $0x3d0] sm:$0xff] %v11343
    %11932 = vst [vmem:[#allocation10 + $0x3d8] sm:$0xff] %v11344
    %11933 = vst [vmem:[#allocation10 + $0x3e0] sm:$0xff] %v11345
    %11934 = vst.msk [vmem:[#allocation10 + $0x3e8] sm:$0xff] %vm3052, %v11346
    %11935 = vst [vmem:[#allocation10 + $0x3f0] sm:$0xff] %v11347
    %11936 = vst [vmem:[#allocation10 + $0x3f8] sm:$0xff] %v11348
    %11937 = vst [vmem:[#allocation10 + $0x400] sm:$0xff] %v11349
    %11938 = vst [vmem:[#allocation10 + $0x408] sm:$0xff] %v11350
    %11939 = vst [vmem:[#allocation10 + $0x410] sm:$0xff] %v11351
    %11940 = vst.msk [vmem:[#allocation10 + $0x418] sm:$0xff] %vm3052, %v11352
    %11941 = vst [vmem:[#allocation10 + $0x420] sm:$0xff] %v11353
    %11942 = vst [vmem:[#allocation10 + $0x428] sm:$0xff] %v11354
    %11943 = vst [vmem:[#allocation10 + $0x430] sm:$0xff] %v11355
    %11944 = vst [vmem:[#allocation10 + $0x438] sm:$0xff] %v11356
    %11945 = vst [vmem:[#allocation10 + $0x440] sm:$0xff] %v11357
    %11946 = vst.msk [vmem:[#allocation10 + $0x448] sm:$0xff] %vm3052, %v11358
    %11947 = vst [vmem:[#allocation10 + $0x450] sm:$0xff] %v11359
    %11948 = vst [vmem:[#allocation10 + $0x458] sm:$0xff] %v11360
    %11949 = vst [vmem:[#allocation10 + $0x460] sm:$0xff] %v11361
    %11950 = vst [vmem:[#allocation10 + $0x468] sm:$0xff] %v11362
    %11951 = vst [vmem:[#allocation10 + $0x470] sm:$0xff] %v11363
    %11952 = vst.msk [vmem:[#allocation10 + $0x478] sm:$0xff] %vm3052, %v11364
    %11953 = vst [vmem:[#allocation10 + $0x480] sm:$0xff] %v11365
    %11954 = vst [vmem:[#allocation10 + $0x488] sm:$0xff] %v11366
    %11955 = vst [vmem:[#allocation10 + $0x490] sm:$0xff] %v11367
    %11956 = vst [vmem:[#allocation10 + $0x498] sm:$0xff] %v11368
    %11957 = vst [vmem:[#allocation10 + $0x4a0] sm:$0xff] %v11369
    %11958 = vst.msk [vmem:[#allocation10 + $0x4a8] sm:$0xff] %vm3052, %v11370
    %11959 = vst [vmem:[#allocation10 + $0x4b0] sm:$0xff] %v11371
    %11960 = vst [vmem:[#allocation10 + $0x4b8] sm:$0xff] %v11372
    %11961 = vst [vmem:[#allocation10 + $0x4c0] sm:$0xff] %v11373
    %11962 = vst [vmem:[#allocation10 + $0x4c8] sm:$0xff] %v11374
    %11963 = vst [vmem:[#allocation10 + $0x4d0] sm:$0xff] %v11375
    %11964 = vst.msk [vmem:[#allocation10 + $0x4d8] sm:$0xff] %vm3052, %v11376
    %11965 = vst [vmem:[#allocation10 + $0x4e0] sm:$0xff] %v11377
    %11966 = vst [vmem:[#allocation10 + $0x4e8] sm:$0xff] %v11378
    %11967 = vst [vmem:[#allocation10 + $0x4f0] sm:$0xff] %v11379
    %11968 = vst [vmem:[#allocation10 + $0x4f8] sm:$0xff] %v11380
    %11969 = vst [vmem:[#allocation10 + $0x500] sm:$0xff] %v11381
    %11970 = vst.msk [vmem:[#allocation10 + $0x508] sm:$0xff] %vm3052, %v11382
    %11971 = vst [vmem:[#allocation10 + $0x510] sm:$0xff] %v11383
    %11972 = vst [vmem:[#allocation10 + $0x518] sm:$0xff] %v11384
    %11973 = vst [vmem:[#allocation10 + $0x520] sm:$0xff] %v11385
    %11974 = vst [vmem:[#allocation10 + $0x528] sm:$0xff] %v11386
    %11975 = vst [vmem:[#allocation10 + $0x530] sm:$0xff] %v11387
    %11976 = vst.msk [vmem:[#allocation10 + $0x538] sm:$0xff] %vm3052, %v11388
    %11977 = vst [vmem:[#allocation10 + $0x540] sm:$0xff] %v11389
    %11978 = vst [vmem:[#allocation10 + $0x548] sm:$0xff] %v11390
    %11979 = vst [vmem:[#allocation10 + $0x550] sm:$0xff] %v11391
    %11980 = vst [vmem:[#allocation10 + $0x558] sm:$0xff] %v11392
    %11981 = vst [vmem:[#allocation10 + $0x560] sm:$0xff] %v11393
    %11982 = vst.msk [vmem:[#allocation10 + $0x568] sm:$0xff] %vm3052, %v11394
    %11983 = vst [vmem:[#allocation10 + $0x570] sm:$0xff] %v11395
    %11984 = vst [vmem:[#allocation10 + $0x578] sm:$0xff] %v11396
    %11985 = vst [vmem:[#allocation10 + $0x580] sm:$0xff] %v11397
    %11986 = vst [vmem:[#allocation10 + $0x588] sm:$0xff] %v11398
    %11987 = vst [vmem:[#allocation10 + $0x590] sm:$0xff] %v11399
    %11988 = vst.msk [vmem:[#allocation10 + $0x598] sm:$0xff] %vm3052, %v11400
    %11989 = vst [vmem:[#allocation10 + $0x5a0] sm:$0xff] %v11401
    %11990 = vst [vmem:[#allocation10 + $0x5a8] sm:$0xff] %v11402
    %11991 = vst [vmem:[#allocation10 + $0x5b0] sm:$0xff] %v11403
    %11992 = vst [vmem:[#allocation10 + $0x5b8] sm:$0xff] %v11404
    %11993 = vst [vmem:[#allocation10 + $0x5c0] sm:$0xff] %v11405
    %11994 = vst.msk [vmem:[#allocation10 + $0x5c8] sm:$0xff] %vm3052, %v11406
    %11995 = vst [vmem:[#allocation10 + $0x5d0] sm:$0xff] %v11407
    %11996 = vst [vmem:[#allocation10 + $0x5d8] sm:$0xff] %v11408
    %11997 = vst [vmem:[#allocation10 + $0x5e0] sm:$0xff] %v11409
    %11998 = vst [vmem:[#allocation10 + $0x5e8] sm:$0xff] %v11410
    %11999 = vst [vmem:[#allocation10 + $0x5f0] sm:$0xff] %v11411
    %12000 = vst.msk [vmem:[#allocation10 + $0x5f8] sm:$0xff] %vm3052, %v11412
    %12001 = vst [vmem:[#allocation10 + $0x600] sm:$0xff] %v11413
    %12002 = vst [vmem:[#allocation10 + $0x608] sm:$0xff] %v11414
    %12003 = vst [vmem:[#allocation10 + $0x610] sm:$0xff] %v11415
    %12004 = vst [vmem:[#allocation10 + $0x618] sm:$0xff] %v11416
    %12005 = vst [vmem:[#allocation10 + $0x620] sm:$0xff] %v11417
    %12006 = vst.msk [vmem:[#allocation10 + $0x628] sm:$0xff] %vm3052, %v11418
    %12007 = vst [vmem:[#allocation10 + $0x630] sm:$0xff] %v11419
    %12008 = vst [vmem:[#allocation10 + $0x638] sm:$0xff] %v11420
    %12009 = vst [vmem:[#allocation10 + $0x640] sm:$0xff] %v11421
    %12010 = vst [vmem:[#allocation10 + $0x648] sm:$0xff] %v11422
    %12011 = vst [vmem:[#allocation10 + $0x650] sm:$0xff] %v11423
    %12012 = vst.msk [vmem:[#allocation10 + $0x658] sm:$0xff] %vm3052, %v11424
    %12013 = vst [vmem:[#allocation10 + $0x660] sm:$0xff] %v11425
    %12014 = vst [vmem:[#allocation10 + $0x668] sm:$0xff] %v11426
    %12015 = vst [vmem:[#allocation10 + $0x670] sm:$0xff] %v11427
    %12016 = vst [vmem:[#allocation10 + $0x678] sm:$0xff] %v11428
    %12017 = vst [vmem:[#allocation10 + $0x680] sm:$0xff] %v11429
    %12018 = vst.msk [vmem:[#allocation10 + $0x688] sm:$0xff] %vm3052, %v11430
    %12019 = vst [vmem:[#allocation10 + $0x690] sm:$0xff] %v11431
    %12020 = vst [vmem:[#allocation10 + $0x698] sm:$0xff] %v11432
    %12021 = vst [vmem:[#allocation10 + $0x6a0] sm:$0xff] %v11433
    %12022 = vst [vmem:[#allocation10 + $0x6a8] sm:$0xff] %v11434
    %12023 = vst [vmem:[#allocation10 + $0x6b0] sm:$0xff] %v11435
    %12024 = vst.msk [vmem:[#allocation10 + $0x6b8] sm:$0xff] %vm3052, %v11436
    %12025 = vst [vmem:[#allocation10 + $0x6c0] sm:$0xff] %v11437
    %12026 = vst [vmem:[#allocation10 + $0x6c8] sm:$0xff] %v11438
    %12027 = vst [vmem:[#allocation10 + $0x6d0] sm:$0xff] %v11439
    %12028 = vst [vmem:[#allocation10 + $0x6d8] sm:$0xff] %v11440
    %12029 = vst [vmem:[#allocation10 + $0x6e0] sm:$0xff] %v11441
    %12030 = vst.msk [vmem:[#allocation10 + $0x6e8] sm:$0xff] %vm3052, %v11442
    %12031 = vst [vmem:[#allocation10 + $0x6f0] sm:$0xff] %v11443
    %12032 = vst [vmem:[#allocation10 + $0x6f8] sm:$0xff] %v11444
    %12033 = vst [vmem:[#allocation10 + $0x700] sm:$0xff] %v11445
    %12034 = vst [vmem:[#allocation10 + $0x708] sm:$0xff] %v11446
    %12035 = vst [vmem:[#allocation10 + $0x710] sm:$0xff] %v11447
    %12036 = vst.msk [vmem:[#allocation10 + $0x718] sm:$0xff] %vm3052, %v11448
    %12037 = vst [vmem:[#allocation10 + $0x720] sm:$0xff] %v11449
    %12038 = vst [vmem:[#allocation10 + $0x728] sm:$0xff] %v11450
    %12039 = vst [vmem:[#allocation10 + $0x730] sm:$0xff] %v11451
    %12040 = vst [vmem:[#allocation10 + $0x738] sm:$0xff] %v11452
    %12041 = vst [vmem:[#allocation10 + $0x740] sm:$0xff] %v11453
    %12042 = vst.msk [vmem:[#allocation10 + $0x748] sm:$0xff] %vm3052, %v11454
    %12043 = vst [vmem:[#allocation10 + $0x750] sm:$0xff] %v11455
    %12044 = vst [vmem:[#allocation10 + $0x758] sm:$0xff] %v11456
    %12045 = vst [vmem:[#allocation10 + $0x760] sm:$0xff] %v11457
    %12046 = vst [vmem:[#allocation10 + $0x768] sm:$0xff] %v11458
    %12047 = vst [vmem:[#allocation10 + $0x770] sm:$0xff] %v11459
    %12048 = vst.msk [vmem:[#allocation10 + $0x778] sm:$0xff] %vm3052, %v11460
    %12049 = vst [vmem:[#allocation10 + $0x780] sm:$0xff] %v11461
    %12050 = vst [vmem:[#allocation10 + $0x788] sm:$0xff] %v11462
    %12051 = vst [vmem:[#allocation10 + $0x790] sm:$0xff] %v11463
    %12052 = vst [vmem:[#allocation10 + $0x798] sm:$0xff] %v11464
    %12053 = vst [vmem:[#allocation10 + $0x7a0] sm:$0xff] %v11465
    %12054 = vst.msk [vmem:[#allocation10 + $0x7a8] sm:$0xff] %vm3052, %v11466
    %12055 = vst [vmem:[#allocation10 + $0x7b0] sm:$0xff] %v11467
    %12056 = vst [vmem:[#allocation10 + $0x7b8] sm:$0xff] %v11468
    %12057 = vst [vmem:[#allocation10 + $0x7c0] sm:$0xff] %v11469
    %12058 = vst [vmem:[#allocation10 + $0x7c8] sm:$0xff] %v11470
    %12059 = vst [vmem:[#allocation10 + $0x7d0] sm:$0xff] %v11471
    %12060 = vst.msk [vmem:[#allocation10 + $0x7d8] sm:$0xff] %vm3052, %v11472
    %12061 = vst [vmem:[#allocation10 + $0x7e0] sm:$0xff] %v11473
    %12062 = vst [vmem:[#allocation10 + $0x7e8] sm:$0xff] %v11474
    %12063 = vst [vmem:[#allocation10 + $0x7f0] sm:$0xff] %v11475
    %12064 = vst [vmem:[#allocation10 + $0x7f8] sm:$0xff] %v11476
    %12065 = vst [vmem:[#allocation10 + $0x800] sm:$0xff] %v11477
    %12066 = vst.msk [vmem:[#allocation10 + $0x808] sm:$0xff] %vm3052, %v11478
    %12067 = vst [vmem:[#allocation10 + $0x810] sm:$0xff] %v11479
    %12068 = vst [vmem:[#allocation10 + $0x818] sm:$0xff] %v11480
    %12069 = vst [vmem:[#allocation10 + $0x820] sm:$0xff] %v11481
    %12070 = vst [vmem:[#allocation10 + $0x828] sm:$0xff] %v11482
    %12071 = vst [vmem:[#allocation10 + $0x830] sm:$0xff] %v11483
    %12072 = vst.msk [vmem:[#allocation10 + $0x838] sm:$0xff] %vm3052, %v11484
    %12073 = vst [vmem:[#allocation10 + $0x840] sm:$0xff] %v11485
    %12074 = vst [vmem:[#allocation10 + $0x848] sm:$0xff] %v11486
    %12075 = vst [vmem:[#allocation10 + $0x850] sm:$0xff] %v11487
    %12076 = vst [vmem:[#allocation10 + $0x858] sm:$0xff] %v11488
    %12077 = vst [vmem:[#allocation10 + $0x860] sm:$0xff] %v11489
    %12078 = vst.msk [vmem:[#allocation10 + $0x868] sm:$0xff] %vm3052, %v11490
    %12079 = vst [vmem:[#allocation10 + $0x870] sm:$0xff] %v11491
    %12080 = vst [vmem:[#allocation10 + $0x878] sm:$0xff] %v11492
    %12081 = vst [vmem:[#allocation10 + $0x880] sm:$0xff] %v11493
    %12082 = vst [vmem:[#allocation10 + $0x888] sm:$0xff] %v11494
    %12083 = vst [vmem:[#allocation10 + $0x890] sm:$0xff] %v11495
    %12084 = vst.msk [vmem:[#allocation10 + $0x898] sm:$0xff] %vm3052, %v11496
    %12085 = vst [vmem:[#allocation10 + $0x8a0] sm:$0xff] %v11497
    %12086 = vst [vmem:[#allocation10 + $0x8a8] sm:$0xff] %v11498
    %12087 = vst [vmem:[#allocation10 + $0x8b0] sm:$0xff] %v11499
    %12088 = vst [vmem:[#allocation10 + $0x8b8] sm:$0xff] %v11500
    %12089 = vst [vmem:[#allocation10 + $0x8c0] sm:$0xff] %v11501
    %12090 = vst.msk [vmem:[#allocation10 + $0x8c8] sm:$0xff] %vm3052, %v11502
    %12091 = vst [vmem:[#allocation10 + $0x8d0] sm:$0xff] %v11503
    %12092 = vst [vmem:[#allocation10 + $0x8d8] sm:$0xff] %v11504
    %12093 = vst [vmem:[#allocation10 + $0x8e0] sm:$0xff] %v11505
    %12094 = vst [vmem:[#allocation10 + $0x8e8] sm:$0xff] %v11506
    %12095 = vst [vmem:[#allocation10 + $0x8f0] sm:$0xff] %v11507
    %12096 = vst.msk [vmem:[#allocation10 + $0x8f8] sm:$0xff] %vm3052, %v11508
    %12097 = vst [vmem:[#allocation10 + $0x900] sm:$0xff] %v11509
    %12098 = vst [vmem:[#allocation10 + $0x908] sm:$0xff] %v11510
    %12099 = vst [vmem:[#allocation10 + $0x910] sm:$0xff] %v11511
    %12100 = vst [vmem:[#allocation10 + $0x918] sm:$0xff] %v11512
    %12101 = vst [vmem:[#allocation10 + $0x920] sm:$0xff] %v11513
    %12102 = vst.msk [vmem:[#allocation10 + $0x928] sm:$0xff] %vm3052, %v11514
    %12103 = vst [vmem:[#allocation10 + $0x930] sm:$0xff] %v11515
    %12104 = vst [vmem:[#allocation10 + $0x938] sm:$0xff] %v11516
    %12105 = vst [vmem:[#allocation10 + $0x940] sm:$0xff] %v11517
    %12106 = vst [vmem:[#allocation10 + $0x948] sm:$0xff] %v11518
    %12107 = vst [vmem:[#allocation10 + $0x950] sm:$0xff] %v11519
    %12108 = vst.msk [vmem:[#allocation10 + $0x958] sm:$0xff] %vm3052, %v11520
    %12109 = vst [vmem:[#allocation10 + $0x960] sm:$0xff] %v11521
    %12110 = vst [vmem:[#allocation10 + $0x968] sm:$0xff] %v11522
    %12111 = vst [vmem:[#allocation10 + $0x970] sm:$0xff] %v11523
    %12112 = vst [vmem:[#allocation10 + $0x978] sm:$0xff] %v11524
    %12113 = vst [vmem:[#allocation10 + $0x980] sm:$0xff] %v11525
    %12114 = vst.msk [vmem:[#allocation10 + $0x988] sm:$0xff] %vm3052, %v11526
    %12115 = vst [vmem:[#allocation10 + $0x990] sm:$0xff] %v11527
    %12116 = vst [vmem:[#allocation10 + $0x998] sm:$0xff] %v11528
    %12117 = vst [vmem:[#allocation10 + $0x9a0] sm:$0xff] %v11529
    %12118 = vst [vmem:[#allocation10 + $0x9a8] sm:$0xff] %v11530
    %12119 = vst [vmem:[#allocation10 + $0x9b0] sm:$0xff] %v11531
    %12120 = vst.msk [vmem:[#allocation10 + $0x9b8] sm:$0xff] %vm3052, %v11532
    %12121 = vst [vmem:[#allocation10 + $0x9c0] sm:$0xff] %v11533
    %12122 = vst [vmem:[#allocation10 + $0x9c8] sm:$0xff] %v11534
    %12123 = vst [vmem:[#allocation10 + $0x9d0] sm:$0xff] %v11535
    %12124 = vst [vmem:[#allocation10 + $0x9d8] sm:$0xff] %v11536
    %12125 = vst [vmem:[#allocation10 + $0x9e0] sm:$0xff] %v11537
    %12126 = vst.msk [vmem:[#allocation10 + $0x9e8] sm:$0xff] %vm3052, %v11538
    %12127 = vst [vmem:[#allocation10 + $0x9f0] sm:$0xff] %v11539
    %12128 = vst [vmem:[#allocation10 + $0x9f8] sm:$0xff] %v11540
    %12129 = vst [vmem:[#allocation10 + $0xa00] sm:$0xff] %v11541
    %12130 = vst [vmem:[#allocation10 + $0xa08] sm:$0xff] %v11542
    %12131 = vst [vmem:[#allocation10 + $0xa10] sm:$0xff] %v11543
    %12132 = vst.msk [vmem:[#allocation10 + $0xa18] sm:$0xff] %vm3052, %v11544
    %12133 = vst [vmem:[#allocation10 + $0xa20] sm:$0xff] %v11545
    %12134 = vst [vmem:[#allocation10 + $0xa28] sm:$0xff] %v11546
    %12135 = vst [vmem:[#allocation10 + $0xa30] sm:$0xff] %v11547
    %12136 = vst [vmem:[#allocation10 + $0xa38] sm:$0xff] %v11548
    %12137 = vst [vmem:[#allocation10 + $0xa40] sm:$0xff] %v11549
    %12138 = vst.msk [vmem:[#allocation10 + $0xa48] sm:$0xff] %vm3052, %v11550
    %12139 = vst [vmem:[#allocation10 + $0xa50] sm:$0xff] %v11551
    %12140 = vst [vmem:[#allocation10 + $0xa58] sm:$0xff] %v11552
    %12141 = vst [vmem:[#allocation10 + $0xa60] sm:$0xff] %v11553
    %12142 = vst [vmem:[#allocation10 + $0xa68] sm:$0xff] %v11554
    %12143 = vst [vmem:[#allocation10 + $0xa70] sm:$0xff] %v11555
    %12144 = vst.msk [vmem:[#allocation10 + $0xa78] sm:$0xff] %vm3052, %v11556
    %12145 = vst [vmem:[#allocation10 + $0xa80] sm:$0xff] %v11557
    %12146 = vst [vmem:[#allocation10 + $0xa88] sm:$0xff] %v11558
    %12147 = vst [vmem:[#allocation10 + $0xa90] sm:$0xff] %v11559
    %12148 = vst [vmem:[#allocation10 + $0xa98] sm:$0xff] %v11560
    %12149 = vst [vmem:[#allocation10 + $0xaa0] sm:$0xff] %v11561
    %12150 = vst.msk [vmem:[#allocation10 + $0xaa8] sm:$0xff] %vm3052, %v11562
    %12151 = vst [vmem:[#allocation10 + $0xab0] sm:$0xff] %v11563
    %12152 = vst [vmem:[#allocation10 + $0xab8] sm:$0xff] %v11564
    %12153 = vst [vmem:[#allocation10 + $0xac0] sm:$0xff] %v11565
    %12154 = vst [vmem:[#allocation10 + $0xac8] sm:$0xff] %v11566
    %12155 = vst [vmem:[#allocation10 + $0xad0] sm:$0xff] %v11567
    %12156 = vst.msk [vmem:[#allocation10 + $0xad8] sm:$0xff] %vm3052, %v11568
    %12157 = vst [vmem:[#allocation10 + $0xae0] sm:$0xff] %v11569
    %12158 = vst [vmem:[#allocation10 + $0xae8] sm:$0xff] %v11570
    %12159 = vst [vmem:[#allocation10 + $0xaf0] sm:$0xff] %v11571
    %12160 = vst [vmem:[#allocation10 + $0xaf8] sm:$0xff] %v11572
    %12161 = vst [vmem:[#allocation10 + $0xb00] sm:$0xff] %v11573
    %12162 = vst.msk [vmem:[#allocation10 + $0xb08] sm:$0xff] %vm3052, %v11574
    %12163 = vst [vmem:[#allocation10 + $0xb10] sm:$0xff] %v11575
    %12164 = vst [vmem:[#allocation10 + $0xb18] sm:$0xff] %v11576
    %12165 = vst [vmem:[#allocation10 + $0xb20] sm:$0xff] %v11577
    %12166 = vst [vmem:[#allocation10 + $0xb28] sm:$0xff] %v11578
    %12167 = vst [vmem:[#allocation10 + $0xb30] sm:$0xff] %v11579
    %12168 = vst.msk [vmem:[#allocation10 + $0xb38] sm:$0xff] %vm3052, %v11580
    %12169 = vst [vmem:[#allocation10 + $0xb40] sm:$0xff] %v11581
    %12170 = vst [vmem:[#allocation10 + $0xb48] sm:$0xff] %v11582
    %12171 = vst [vmem:[#allocation10 + $0xb50] sm:$0xff] %v11583
    %12172 = vst [vmem:[#allocation10 + $0xb58] sm:$0xff] %v11584
    %12173 = vst [vmem:[#allocation10 + $0xb60] sm:$0xff] %v11585
    %12174 = vst.msk [vmem:[#allocation10 + $0xb68] sm:$0xff] %vm3052, %v11586
    %12175 = vst [vmem:[#allocation10 + $0xb70] sm:$0xff] %v11587
    %12176 = vst [vmem:[#allocation10 + $0xb78] sm:$0xff] %v11588
    %12177 = vst [vmem:[#allocation10 + $0xb80] sm:$0xff] %v11589
    %12178 = vst [vmem:[#allocation10 + $0xb88] sm:$0xff] %v11590
    %12179 = vst [vmem:[#allocation10 + $0xb90] sm:$0xff] %v11591
    %12180 = vst.msk [vmem:[#allocation10 + $0xb98] sm:$0xff] %vm3052, %v11592
    %12181 = vst [vmem:[#allocation10 + $0xba0] sm:$0xff] %v11593
    %12182 = vst [vmem:[#allocation10 + $0xba8] sm:$0xff] %v11594
    %12183 = vst [vmem:[#allocation10 + $0xbb0] sm:$0xff] %v11595
    %12184 = vst [vmem:[#allocation10 + $0xbb8] sm:$0xff] %v11596
    %12185 = vst [vmem:[#allocation10 + $0xbc0] sm:$0xff] %v11597
    %12186 = vst.msk [vmem:[#allocation10 + $0xbc8] sm:$0xff] %vm3052, %v11598
    %12187 = vst [vmem:[#allocation10 + $0xbd0] sm:$0xff] %v11599
    %12188 = vst [vmem:[#allocation10 + $0xbd8] sm:$0xff] %v11600
    %12189 = vst [vmem:[#allocation10 + $0xbe0] sm:$0xff] %v11601
    %12190 = vst [vmem:[#allocation10 + $0xbe8] sm:$0xff] %v11602
    %12191 = vst [vmem:[#allocation10 + $0xbf0] sm:$0xff] %v11603
    %12192 = vst.msk [vmem:[#allocation10 + $0xbf8] sm:$0xff] %vm3052, %v11604
    %12193 = vst [vmem:[#allocation10 + $0xc00] sm:$0xff] %v11605
    %12194 = vst [vmem:[#allocation10 + $0xc08] sm:$0xff] %v11606
    %12195 = vst [vmem:[#allocation10 + $0xc10] sm:$0xff] %v11607
    %12196 = vst [vmem:[#allocation10 + $0xc18] sm:$0xff] %v11608
    %12197 = vst [vmem:[#allocation10 + $0xc20] sm:$0xff] %v11609
    %12198 = vst.msk [vmem:[#allocation10 + $0xc28] sm:$0xff] %vm3052, %v11610
    %12199 = vst [vmem:[#allocation10 + $0xc30] sm:$0xff] %v11611
    %12200 = vst [vmem:[#allocation10 + $0xc38] sm:$0xff] %v11612
    %12201 = vst [vmem:[#allocation10 + $0xc40] sm:$0xff] %v11613
    %12202 = vst [vmem:[#allocation10 + $0xc48] sm:$0xff] %v11614
    %12203 = vst [vmem:[#allocation10 + $0xc50] sm:$0xff] %v11615
    %12204 = vst.msk [vmem:[#allocation10 + $0xc58] sm:$0xff] %vm3052, %v11616
    %12205 = vst [vmem:[#allocation10 + $0xc60] sm:$0xff] %v11617
    %12206 = vst [vmem:[#allocation10 + $0xc68] sm:$0xff] %v11618
    %12207 = vst [vmem:[#allocation10 + $0xc70] sm:$0xff] %v11619
    %12208 = vst [vmem:[#allocation10 + $0xc78] sm:$0xff] %v11620
    %12209 = vst [vmem:[#allocation10 + $0xc80] sm:$0xff] %v11621
    %12210 = vst.msk [vmem:[#allocation10 + $0xc88] sm:$0xff] %vm3052, %v11622
    %12211 = vst [vmem:[#allocation10 + $0xc90] sm:$0xff] %v11623
    %12212 = vst [vmem:[#allocation10 + $0xc98] sm:$0xff] %v11624
    %12213 = vst [vmem:[#allocation10 + $0xca0] sm:$0xff] %v11625
    %12214 = vst [vmem:[#allocation10 + $0xca8] sm:$0xff] %v11626
    %12215 = vst [vmem:[#allocation10 + $0xcb0] sm:$0xff] %v11627
    %12216 = vst.msk [vmem:[#allocation10 + $0xcb8] sm:$0xff] %vm3052, %v11628
    %12217 = vst [vmem:[#allocation10 + $0xcc0] sm:$0xff] %v11629
    %12218 = vst [vmem:[#allocation10 + $0xcc8] sm:$0xff] %v11630
    %12219 = vst [vmem:[#allocation10 + $0xcd0] sm:$0xff] %v11631
    %12220 = vst [vmem:[#allocation10 + $0xcd8] sm:$0xff] %v11632
    %12221 = vst [vmem:[#allocation10 + $0xce0] sm:$0xff] %v11633
    %12222 = vst.msk [vmem:[#allocation10 + $0xce8] sm:$0xff] %vm3052, %v11634
    %12223 = vst [vmem:[#allocation10 + $0xcf0] sm:$0xff] %v11635
    %12224 = vst [vmem:[#allocation10 + $0xcf8] sm:$0xff] %v11636
    %12225 = vst [vmem:[#allocation10 + $0xd00] sm:$0xff] %v11637
    %12226 = vst [vmem:[#allocation10 + $0xd08] sm:$0xff] %v11638
    %12227 = vst [vmem:[#allocation10 + $0xd10] sm:$0xff] %v11639
    %12228 = vst.msk [vmem:[#allocation10 + $0xd18] sm:$0xff] %vm3052, %v11640
    %12229 = vst [vmem:[#allocation10 + $0xd20] sm:$0xff] %v11641
    %12230 = vst [vmem:[#allocation10 + $0xd28] sm:$0xff] %v11642
    %12231 = vst [vmem:[#allocation10 + $0xd30] sm:$0xff] %v11643
    %12232 = vst [vmem:[#allocation10 + $0xd38] sm:$0xff] %v11644
    %12233 = vst [vmem:[#allocation10 + $0xd40] sm:$0xff] %v11645
    %12234 = vst.msk [vmem:[#allocation10 + $0xd48] sm:$0xff] %vm3052, %v11646
    %12235 = vst [vmem:[#allocation10 + $0xd50] sm:$0xff] %v11647
    %12236 = vst [vmem:[#allocation10 + $0xd58] sm:$0xff] %v11648
    %12237 = vst [vmem:[#allocation10 + $0xd60] sm:$0xff] %v11649
    %12238 = vst [vmem:[#allocation10 + $0xd68] sm:$0xff] %v11650
    %12239 = vst [vmem:[#allocation10 + $0xd70] sm:$0xff] %v11651
    %12240 = vst.msk [vmem:[#allocation10 + $0xd78] sm:$0xff] %vm3052, %v11652
    %12241 = vst [vmem:[#allocation10 + $0xd80] sm:$0xff] %v11653
    %12242 = vst [vmem:[#allocation10 + $0xd88] sm:$0xff] %v11654
    %12243 = vst [vmem:[#allocation10 + $0xd90] sm:$0xff] %v11655
    %12244 = vst [vmem:[#allocation10 + $0xd98] sm:$0xff] %v11656
    %12245 = vst [vmem:[#allocation10 + $0xda0] sm:$0xff] %v11657
    %12246 = vst.msk [vmem:[#allocation10 + $0xda8] sm:$0xff] %vm3052, %v11658
    %12247 = vst [vmem:[#allocation10 + $0xdb0] sm:$0xff] %v11659
    %12248 = vst [vmem:[#allocation10 + $0xdb8] sm:$0xff] %v11660
    %12249 = vst [vmem:[#allocation10 + $0xdc0] sm:$0xff] %v11661
    %12250 = vst [vmem:[#allocation10 + $0xdc8] sm:$0xff] %v11662
    %12251 = vst [vmem:[#allocation10 + $0xdd0] sm:$0xff] %v11663
    %12252 = vst.msk [vmem:[#allocation10 + $0xdd8] sm:$0xff] %vm3052, %v11664
    %12253 = vst [vmem:[#allocation10 + $0xde0] sm:$0xff] %v11665
    %12254 = vst [vmem:[#allocation10 + $0xde8] sm:$0xff] %v11666
    %12255 = vst [vmem:[#allocation10 + $0xdf0] sm:$0xff] %v11667
    %12256 = vst [vmem:[#allocation10 + $0xdf8] sm:$0xff] %v11668
    %12257 = vst [vmem:[#allocation10 + $0xe00] sm:$0xff] %v11669
    %12258 = vst.msk [vmem:[#allocation10 + $0xe08] sm:$0xff] %vm3052, %v11670
    %12259 = vst [vmem:[#allocation10 + $0xe10] sm:$0xff] %v11671
    %12260 = vst [vmem:[#allocation10 + $0xe18] sm:$0xff] %v11672
    %12261 = vst [vmem:[#allocation10 + $0xe20] sm:$0xff] %v11673
    %12262 = vst [vmem:[#allocation10 + $0xe28] sm:$0xff] %v11674
    %12263 = vst [vmem:[#allocation10 + $0xe30] sm:$0xff] %v11675
    %12264 = vst.msk [vmem:[#allocation10 + $0xe38] sm:$0xff] %vm3052, %v11676
    %12265 = vst [vmem:[#allocation10 + $0xe40] sm:$0xff] %v11677
    %12266 = vst [vmem:[#allocation10 + $0xe48] sm:$0xff] %v11678
    %12267 = vst [vmem:[#allocation10 + $0xe50] sm:$0xff] %v11679
    %12268 = vst [vmem:[#allocation10 + $0xe58] sm:$0xff] %v11680
    %12269 = vst [vmem:[#allocation10 + $0xe60] sm:$0xff] %v11681
    %12270 = vst.msk [vmem:[#allocation10 + $0xe68] sm:$0xff] %vm3052, %v11682
    %12271 = vst [vmem:[#allocation10 + $0xe70] sm:$0xff] %v11683
    %12272 = vst [vmem:[#allocation10 + $0xe78] sm:$0xff] %v11684
    %12273 = vst [vmem:[#allocation10 + $0xe80] sm:$0xff] %v11685
    %12274 = vst [vmem:[#allocation10 + $0xe88] sm:$0xff] %v11686
    %12275 = vst [vmem:[#allocation10 + $0xe90] sm:$0xff] %v11687
    %12276 = vst.msk [vmem:[#allocation10 + $0xe98] sm:$0xff] %vm3052, %v11688
    %12277 = vst [vmem:[#allocation10 + $0xea0] sm:$0xff] %v11689
    %12278 = vst [vmem:[#allocation10 + $0xea8] sm:$0xff] %v11690
    %12279 = vst [vmem:[#allocation10 + $0xeb0] sm:$0xff] %v11691
    %12280 = vst [vmem:[#allocation10 + $0xeb8] sm:$0xff] %v11692
    %12281 = vst [vmem:[#allocation10 + $0xec0] sm:$0xff] %v11693
    %12282 = vst.msk [vmem:[#allocation10 + $0xec8] sm:$0xff] %vm3052, %v11694
    %12283 = vst [vmem:[#allocation10 + $0xed0] sm:$0xff] %v11695
    %12284 = vst [vmem:[#allocation10 + $0xed8] sm:$0xff] %v11696
    %12285 = vst [vmem:[#allocation10 + $0xee0] sm:$0xff] %v11697
    %12286 = vst [vmem:[#allocation10 + $0xee8] sm:$0xff] %v11698
    %12287 = vst [vmem:[#allocation10 + $0xef0] sm:$0xff] %v11699
    %12288 = vst.msk [vmem:[#allocation10 + $0xef8] sm:$0xff] %vm3052, %v11700
    %12289 = vst [vmem:[#allocation10 + $0xf00] sm:$0xff] %v11701
    %12290 = vst [vmem:[#allocation10 + $0xf08] sm:$0xff] %v11702
    %12291 = vst [vmem:[#allocation10 + $0xf10] sm:$0xff] %v11703
    %12292 = vst [vmem:[#allocation10 + $0xf18] sm:$0xff] %v11704
    %12293 = vst [vmem:[#allocation10 + $0xf20] sm:$0xff] %v11705
    %12294 = vst.msk [vmem:[#allocation10 + $0xf28] sm:$0xff] %vm3052, %v11706
    %12295 = vst [vmem:[#allocation10 + $0xf30] sm:$0xff] %v11707
    %12296 = vst [vmem:[#allocation10 + $0xf38] sm:$0xff] %v11708
    %12297 = vst [vmem:[#allocation10 + $0xf40] sm:$0xff] %v11709
    %12298 = vst [vmem:[#allocation10 + $0xf48] sm:$0xff] %v11710
    %12299 = vst [vmem:[#allocation10 + $0xf50] sm:$0xff] %v11711
    %12300 = vst.msk [vmem:[#allocation10 + $0xf58] sm:$0xff] %vm3052, %v11712
    %12301 = vst [vmem:[#allocation10 + $0xf60] sm:$0xff] %v11713
    %12302 = vst [vmem:[#allocation10 + $0xf68] sm:$0xff] %v11714
    %12303 = vst [vmem:[#allocation10 + $0xf70] sm:$0xff] %v11715
    %12304 = vst [vmem:[#allocation10 + $0xf78] sm:$0xff] %v11716
    %12305 = vst [vmem:[#allocation10 + $0xf80] sm:$0xff] %v11717
    %12306 = vst.msk [vmem:[#allocation10 + $0xf88] sm:$0xff] %vm3052, %v11718
    %12307 = vst [vmem:[#allocation10 + $0xf90] sm:$0xff] %v11719
    %12308 = vst [vmem:[#allocation10 + $0xf98] sm:$0xff] %v11720
    %12309 = vst [vmem:[#allocation10 + $0xfa0] sm:$0xff] %v11721
    %12310 = vst [vmem:[#allocation10 + $0xfa8] sm:$0xff] %v11722
    %12311 = vst [vmem:[#allocation10 + $0xfb0] sm:$0xff] %v11723
    %12312 = vst.msk [vmem:[#allocation10 + $0xfb8] sm:$0xff] %vm3052, %v11724
    %12313 = vst [vmem:[#allocation10 + $0xfc0] sm:$0xff] %v11725
    %12314 = vst [vmem:[#allocation10 + $0xfc8] sm:$0xff] %v11726
    %12315 = vst [vmem:[#allocation10 + $0xfd0] sm:$0xff] %v11727
    %12316 = vst [vmem:[#allocation10 + $0xfd8] sm:$0xff] %v11728
    %12317 = vst [vmem:[#allocation10 + $0xfe0] sm:$0xff] %v11729
    %12318 = vst.msk [vmem:[#allocation10 + $0xfe8] sm:$0xff] %vm3052, %v11730
    %12319 = vst [vmem:[#allocation10 + $0xff0] sm:$0xff] %v11731
    %12320 = vst [vmem:[#allocation10 + $0xff8] sm:$0xff] %v11732
    %12321 = vst [vmem:[#allocation10 + $0x1000] sm:$0xff] %v11733
    %12322 = vst [vmem:[#allocation10 + $0x1008] sm:$0xff] %v11734
    %12323 = vst [vmem:[#allocation10 + $0x1010] sm:$0xff] %v11735
    %12324 = vst.msk [vmem:[#allocation10 + $0x1018] sm:$0xff] %vm3052, %v11736
    %12325 = vst [vmem:[#allocation10 + $0x1020] sm:$0xff] %v11737
    %12326 = vst [vmem:[#allocation10 + $0x1028] sm:$0xff] %v11738
    %12327 = vst [vmem:[#allocation10 + $0x1030] sm:$0xff] %v11739
    %12328 = vst [vmem:[#allocation10 + $0x1038] sm:$0xff] %v11740
    %12329 = vst [vmem:[#allocation10 + $0x1040] sm:$0xff] %v11741
    %12330 = vst.msk [vmem:[#allocation10 + $0x1048] sm:$0xff] %vm3052, %v11742
    %12331 = vst [vmem:[#allocation10 + $0x1050] sm:$0xff] %v11743
    %12332 = vst [vmem:[#allocation10 + $0x1058] sm:$0xff] %v11744
    %12333 = vst [vmem:[#allocation10 + $0x1060] sm:$0xff] %v11745
    %12334 = vst [vmem:[#allocation10 + $0x1068] sm:$0xff] %v11746
    %12335 = vst [vmem:[#allocation10 + $0x1070] sm:$0xff] %v11747
    %12336 = vst.msk [vmem:[#allocation10 + $0x1078] sm:$0xff] %vm3052, %v11748
    %12337 = vst [vmem:[#allocation10 + $0x1080] sm:$0xff] %v11749
    %12338 = vst [vmem:[#allocation10 + $0x1088] sm:$0xff] %v11750
    %12339 = vst [vmem:[#allocation10 + $0x1090] sm:$0xff] %v11751
    %12340 = vst [vmem:[#allocation10 + $0x1098] sm:$0xff] %v11752
    %12341 = vst [vmem:[#allocation10 + $0x10a0] sm:$0xff] %v11753
    %12342 = vst.msk [vmem:[#allocation10 + $0x10a8] sm:$0xff] %vm3052, %v11754
    %12343 = vst [vmem:[#allocation10 + $0x10b0] sm:$0xff] %v11755
    %12344 = vst [vmem:[#allocation10 + $0x10b8] sm:$0xff] %v11756
    %12345 = vst [vmem:[#allocation10 + $0x10c0] sm:$0xff] %v11757
    %12346 = vst [vmem:[#allocation10 + $0x10c8] sm:$0xff] %v11758
    %12347 = vst [vmem:[#allocation10 + $0x10d0] sm:$0xff] %v11759
    %12348 = vst.msk [vmem:[#allocation10 + $0x10d8] sm:$0xff] %vm3052, %v11760
    %12349 = vst [vmem:[#allocation10 + $0x10e0] sm:$0xff] %v11761
    %12350 = vst [vmem:[#allocation10 + $0x10e8] sm:$0xff] %v11762
    %12351 = vst [vmem:[#allocation10 + $0x10f0] sm:$0xff] %v11763
    %12352 = vst [vmem:[#allocation10 + $0x10f8] sm:$0xff] %v11764
    %12353 = vst [vmem:[#allocation10 + $0x1100] sm:$0xff] %v11765
    %12354 = vst.msk [vmem:[#allocation10 + $0x1108] sm:$0xff] %vm3052, %v11766
    %12355 = vst [vmem:[#allocation10 + $0x1110] sm:$0xff] %v11767
    %12356 = vst [vmem:[#allocation10 + $0x1118] sm:$0xff] %v11768
    %12357 = vst [vmem:[#allocation10 + $0x1120] sm:$0xff] %v11769
    %12358 = vst [vmem:[#allocation10 + $0x1128] sm:$0xff] %v11770
    %12359 = vst [vmem:[#allocation10 + $0x1130] sm:$0xff] %v11771
    %12360 = vst.msk [vmem:[#allocation10 + $0x1138] sm:$0xff] %vm3052, %v11772
    %12361 = vst [vmem:[#allocation10 + $0x1140] sm:$0xff] %v11773
    %12362 = vst [vmem:[#allocation10 + $0x1148] sm:$0xff] %v11774
    %12363 = vst [vmem:[#allocation10 + $0x1150] sm:$0xff] %v11775
    %12364 = vst [vmem:[#allocation10 + $0x1158] sm:$0xff] %v11776
    %12365 = vst [vmem:[#allocation10 + $0x1160] sm:$0xff] %v11777
    %12366 = vst.msk [vmem:[#allocation10 + $0x1168] sm:$0xff] %vm3052, %v11778
    %12367 = vst [vmem:[#allocation10 + $0x1170] sm:$0xff] %v11779
    %12368 = vst [vmem:[#allocation10 + $0x1178] sm:$0xff] %v11780
    %12369 = vst [vmem:[#allocation10 + $0x1180] sm:$0xff] %v11781
    %12370 = vst [vmem:[#allocation10 + $0x1188] sm:$0xff] %v11782
    %12371 = vst [vmem:[#allocation10 + $0x1190] sm:$0xff] %v11783
    %12372 = vst.msk [vmem:[#allocation10 + $0x1198] sm:$0xff] %vm3052, %v11784
    %12373 = vst [vmem:[#allocation10 + $0x11a0] sm:$0xff] %v11785
    %12374 = vst [vmem:[#allocation10 + $0x11a8] sm:$0xff] %v11786
    %12375 = vst [vmem:[#allocation10 + $0x11b0] sm:$0xff] %v11787
    %12376 = vst [vmem:[#allocation10 + $0x11b8] sm:$0xff] %v11788
    %12377 = vst [vmem:[#allocation10 + $0x11c0] sm:$0xff] %v11789
    %12378 = vst.msk [vmem:[#allocation10 + $0x11c8] sm:$0xff] %vm3052, %v11790
    %12379 = vst [vmem:[#allocation10 + $0x11d0] sm:$0xff] %v11791
    %12380 = vst [vmem:[#allocation10 + $0x11d8] sm:$0xff] %v11792
    %12381 = vst [vmem:[#allocation10 + $0x11e0] sm:$0xff] %v11793
    %12382 = vst [vmem:[#allocation10 + $0x11e8] sm:$0xff] %v11794
    %12383 = vst [vmem:[#allocation10 + $0x11f0] sm:$0xff] %v11795
    %12384 = vst.msk [vmem:[#allocation10 + $0x11f8] sm:$0xff] %vm3052, %v11796
    %12385 = vst [vmem:[#allocation10 + $0x1200] sm:$0xff] %v11797
    %12386 = vst [vmem:[#allocation10 + $0x1208] sm:$0xff] %v11798
    %12387 = vst [vmem:[#allocation10 + $0x1210] sm:$0xff] %v11799
    %12388 = vst [vmem:[#allocation10 + $0x1218] sm:$0xff] %v11800
    %12389 = vst [vmem:[#allocation10 + $0x1220] sm:$0xff] %v11801
    %12390 = vst.msk [vmem:[#allocation10 + $0x1228] sm:$0xff] %vm3052, %v11802
    %12391 = vst [vmem:[#allocation10 + $0x1230] sm:$0xff] %v11803
    %12392 = vst [vmem:[#allocation10 + $0x1238] sm:$0xff] %v11804
    %12393 = vst [vmem:[#allocation10 + $0x1240] sm:$0xff] %v11805
    %12394 = vst [vmem:[#allocation10 + $0x1248] sm:$0xff] %v11806
    %12395 = vst [vmem:[#allocation10 + $0x1250] sm:$0xff] %v11807
    %12396 = vst.msk [vmem:[#allocation10 + $0x1258] sm:$0xff] %vm3052, %v11808
    // Predicated region
    $region34: #{tpu_custom_call.1} parent=1 // pred_check
      _
    $region35: #{tpu_custom_call.1} parent=1 // pred_check_branch
      %12398 = sbr.rel (0) target = $region37
    $region36: #{tpu_custom_call.1} parent=1 // pred_region
      %s12400 = ssub.s32 75264, 75264
      %12401 = vsyncadd [#allocation4], %s12400
      %s12402 = sshll.u32 [#allocation10], 4
      %s12403 = int_to_ptr.vmem [resolvable:$true] %s12402
      %12408 = dma.vmem_to_hbm [thread:$0]  %s12403, 75264, %s4, [#allocation4], 768, 768, 48
    $region37: #{tpu_custom_call.1} parent=1 // pred_fallthru
      _
    // Predicated region
    $region38: #{tpu_custom_call.1} parent=1 // pred_check
      _
    $region39: #{tpu_custom_call.1} parent=1 // pred_check_branch
      %12410 = sbr.rel (0) target = $region41
    $region40: #{tpu_custom_call.1} parent=1 // pred_region
      %12411 = dma.done [#allocation4], 75264
    $region41: #{tpu_custom_call.1} parent=1 // pred_fallthru
      _
    %12412 = vsyncpa [#allocation3], 1
    %12413 = vsyncpa [#allocation6], 1
    %12414 = vsyncpa [#allocation9], 1
    %12415 = vsyncpa [#allocation4], 1

</llo_original>
